<compile_context>
chip_gen: v6e
topology: v6e:2x2x1
jax: 0.10.0
libtpu: 0.0.40
codegen_flags: <defaults>
</compile_context>

<pallas_src>
import math

import jax
import jax.numpy as jnp
from jax.experimental import pallas as pl
from jax.experimental.pallas import tpu as pltpu


VMEM_LIMIT_BYTES = 48 * 1024 * 1024   # fits v5e/v6e (128 MiB) and v7x (64 MiB)


def _round_up(x, m):
    return ((x + m - 1) // m) * m


# ----------------------------- in-kernel helpers -----------------------------

def _ln(x_f32, g, b, eps=1e-5):
    """Row-wise LayerNorm in f32. g, b broadcast as (1, W)."""
    mean = jnp.mean(x_f32, axis=-1, keepdims=True)
    xc = x_f32 - mean
    var = jnp.mean(xc * xc, axis=-1, keepdims=True)
    return xc * jax.lax.rsqrt(var + eps) * g + b


# ----------------------- fused multi-layer transformer -----------------------

def _make_stack_kernel(n_heads, scale, has_pre_ln):
    def kernel(x_ref, pos_ref, mask_ref, pre_g_ref, pre_b_ref,
               ln1g_ref, ln1b_ref, wqkv_ref, bqkv_ref, wo_ref, bo_ref,
               ln2g_ref, ln2b_ref, w1_ref, b1_ref, w2_ref, b2_ref,
               o_ref, resid_ref):
        layer = pl.program_id(1)
        n_layers = pl.num_programs(1)
        Bg, S, W = x_ref.shape
        M = Bg * S
        Dh = W // n_heads

        # ---- prologue, fused into the first layer step: pos add (+ ln_pre) ----
        @pl.when(layer == 0)
        def _init():
            xin = x_ref[...].astype(jnp.float32) + pos_ref[...][None]
            xin = xin.reshape(M, W)
            if has_pre_ln:
                xin = _ln(xin, pre_g_ref[...], pre_b_ref[...])
            resid_ref[...] = xin

        x = resid_ref[...]                                       # [M, W] f32 residual

        # ---- attention: LN1 -> fused QKV -> per-head SDPA -> single out-proj ----
        h = _ln(x, ln1g_ref[0], ln1b_ref[0]).astype(jnp.bfloat16)
        qkv = (jnp.dot(h, wqkv_ref[0], preferred_element_type=jnp.float32)
               + bqkv_ref[0]).astype(jnp.bfloat16)               # [M, 3W] bf16, cast once

        head_outs = []
        # TODO(synk): at production H, pair Dh=64 heads so slices start on 128-lane
        # boundaries (or pre-reorder W_qkv on the host).
        for hd in range(n_heads):                                # small H, unrolled
            q = qkv[:, hd * Dh:(hd + 1) * Dh].reshape(Bg, S, Dh)
            k = qkv[:, W + hd * Dh:W + (hd + 1) * Dh].reshape(Bg, S, Dh)
            v = qkv[:, 2 * W + hd * Dh:2 * W + (hd + 1) * Dh].reshape(Bg, S, Dh)
            s = jnp.einsum('bqd,bkd->bqk', q, k,
                           preferred_element_type=jnp.float32) * scale
            s = s + mask_ref[...][None]                          # causal / pad-key mask
            mx = jnp.max(s, axis=-1, keepdims=True)
            p = jnp.exp(s - mx)
            # approx EUP reciprocal: fine for inference, use approx=False to
            # bit-match a framework softmax reference.
            p = p * pl.reciprocal(jnp.sum(p, axis=-1, keepdims=True), approx=True)
            o_h = jnp.einsum('bqk,bkd->bqd', p.astype(jnp.bfloat16), v,
                             preferred_element_type=jnp.float32)  # [Bg, S, Dh] f32
            head_outs.append(o_h.reshape(M, Dh))

        attn_in = jnp.concatenate(head_outs, axis=-1).astype(jnp.bfloat16)  # [M, W]
        attn = jnp.dot(attn_in, wo_ref[0],
                       preferred_element_type=jnp.float32) + bo_ref[0]      # one K=W matmul
        x = x + attn

        # ---- MLP: LN2 -> fc1 + QuickGELU -> fc2 ----
        h = _ln(x, ln2g_ref[0], ln2b_ref[0]).astype(jnp.bfloat16)
        h1 = jnp.dot(h, w1_ref[0], preferred_element_type=jnp.float32) + b1_ref[0]
        h1 = h1 * jax.nn.sigmoid(1.702 * h1)                     # QuickGELU (f32, v5e-safe)
        h2 = jnp.dot(h1.astype(jnp.bfloat16), w2_ref[0],
                     preferred_element_type=jnp.float32) + b2_ref[0]
        x = x + h2

        resid_ref[...] = x                                       # carry residual in f32 VMEM

        @pl.when(layer == n_layers - 1)
        def _fin():
            o_ref[...] = x.reshape(Bg, S, W).astype(o_ref.dtype)
    return kernel


def pallas_transformer_stack(x, blocks, n_heads, *, mask, pos_emb,
                             pre_g=None, pre_b=None):
    """x: [B, S, W] f32 activations (pos NOT yet added).  blocks: dict of stacked
    per-layer params with leading L dim.  Returns [B, S, W] f32."""
    B, S, W = x.shape
    L = blocks["ln1_g"].shape[0]
    Dm = blocks["mlp_w1"].shape[2]
    Dh = W // n_heads
    scale = 1.0 / math.sqrt(Dh)

    has_pre_ln = pre_g is not None
    if not has_pre_ln:
        pre_g = jnp.ones((1, W), jnp.float32)
        pre_b = jnp.zeros((1, W), jnp.float32)

    # Two batch groups when possible so v7x's two TensorCores split the work;
    # within a group the batch is folded into the matmul M dimension.
    G = 2 if (B % 2 == 0) else 1
    Bg = B // G

    def wspec(*shp):      # per-layer stacked weight: index_map picks the layer
        return pl.BlockSpec((1,) + shp, lambda g, l: (l,) + (0,) * len(shp))

    def cspec(*shp):      # constant (grid-invariant) operand
        return pl.BlockSpec(shp, lambda g, l: (0,) * len(shp))

    return pl.pallas_call(
        _make_stack_kernel(n_heads, scale, has_pre_ln),
        out_shape=jax.ShapeDtypeStruct((B, S, W), jnp.float32),
        grid=(G, L),
        in_specs=[
            pl.BlockSpec((Bg, S, W), lambda g, l: (g, 0, 0)),    # activations
            cspec(S, W),                                          # positional emb
            cspec(S, S),                                          # additive attn mask
            cspec(1, W), cspec(1, W),                             # ln_pre (optional)
            wspec(1, W), wspec(1, W),                             # ln1
            wspec(W, 3 * W), wspec(1, 3 * W),                     # fused QKV
            wspec(W, W), wspec(1, W),                             # out-proj
            wspec(1, W), wspec(1, W),                             # ln2
            wspec(W, Dm), wspec(1, Dm),                           # mlp fc1
            wspec(Dm, W), wspec(1, W),                            # mlp fc2
        ],
        out_specs=pl.BlockSpec((Bg, S, W), lambda g, l: (g, 0, 0)),
        scratch_shapes=[pltpu.VMEM((Bg * S, W), jnp.float32)],    # f32 residual stream
        compiler_params=pltpu.CompilerParams(
            dimension_semantics=("parallel", "arbitrary"),
            vmem_limit_bytes=VMEM_LIMIT_BYTES),
    )(x.astype(jnp.float32), pos_emb.astype(jnp.float32), mask,
      pre_g, pre_b,
      blocks["ln1_g"], blocks["ln1_b"], blocks["in_proj_w"], blocks["in_proj_b"],
      blocks["out_proj_w"], blocks["out_proj_b"], blocks["ln2_g"], blocks["ln2_b"],
      blocks["mlp_w1"], blocks["mlp_b1"], blocks["mlp_w2"], blocks["mlp_b2"])


# ------------------------ prologue / epilogue kernels ------------------------

def pallas_patch_embed(patches, conv_w):
    """Conv2d(kernel=stride=P, bias=False) as one patch matmul over all batches.
    patches: [B*Np, C*P*P] bf16 -> [B*Np, W] f32."""
    M, K = patches.shape
    _, N = conv_w.shape

    def kernel(p_ref, w_ref, o_ref):
        o_ref[...] = jnp.dot(p_ref[...], w_ref[...], preferred_element_type=jnp.float32)

    return pl.pallas_call(
        kernel,
        out_shape=jax.ShapeDtypeStruct((M, N), jnp.float32),
        grid=(1,),
        in_specs=[pl.BlockSpec((M, K), lambda i: (0, 0)),
                  pl.BlockSpec((K, N), lambda i: (0, 0))],
        out_specs=pl.BlockSpec((M, N), lambda i: (0, 0)),
        compiler_params=pltpu.CompilerParams(vmem_limit_bytes=VMEM_LIMIT_BYTES),
    )(patches, conv_w)


def pallas_ln_proj(x, g, b, w):
    """Fused final LayerNorm + projection on a few rows. x: [M, W] f32 -> [M, E] f32."""
    M, W = x.shape
    _, E = w.shape

    def kernel(x_ref, g_ref, b_ref, w_ref, o_ref):
        h = _ln(x_ref[...].astype(jnp.float32), g_ref[...], b_ref[...])
        o_ref[...] = jnp.dot(h.astype(jnp.bfloat16), w_ref[...],
                             preferred_element_type=jnp.float32)

    return pl.pallas_call(
        kernel,
        out_shape=jax.ShapeDtypeStruct((M, E), jnp.float32),
        grid=(1,),
        in_specs=[pl.BlockSpec((M, W), lambda i: (0, 0)),
                  pl.BlockSpec((1, W), lambda i: (0, 0)),
                  pl.BlockSpec((1, W), lambda i: (0, 0)),
                  pl.BlockSpec((W, E), lambda i: (0, 0))],
        out_specs=pl.BlockSpec((M, E), lambda i: (0, 0)),
        compiler_params=pltpu.CompilerParams(vmem_limit_bytes=VMEM_LIMIT_BYTES),
    )(x, g, b, w)


# ------------------------------ host-side helpers ------------------------------

def _attn_mask(S, valid_len=None, causal=False):
    """Additive [S, S] f32 mask: -1e9 on masked (future / padded-key) positions."""
    rows = jnp.arange(S)[:, None]
    cols = jnp.arange(S)[None, :]
    m = jnp.zeros((S, S), jnp.float32)
    if causal:
        m = jnp.where(cols > rows, -1e9, m)
    if valid_len is not None and valid_len < S:
        m = jnp.where(cols >= valid_len, -1e9, m)
    return m


# ------------------------------ CLIP encoders ------------------------------

def encode_image(x, vp, cfg):
    # x: [B, C, H, W] (NCHW)
    B, C, H, Wimg = x.shape
    P = cfg["patch"]
    W = cfg["vision_width"]
    gh, gw = H // P, Wimg // P
    Np = gh * gw
    # im2col for the patch conv (host/XLA side, one-time layout op).
    patches = x.reshape(B, C, gh, P, gw, P).transpose(0, 2, 4, 1, 3, 5)
    patches = patches.reshape(B * Np, C * P * P).astype(jnp.bfloat16)

    emb = pallas_patch_embed(patches, vp["conv_w"]).reshape(B, Np, W)
    cls = jnp.broadcast_to(vp["class_emb"].reshape(1, 1, W), (B, 1, W))
    xs = jnp.concatenate([cls, emb], axis=1)                      # [B, S_valid, W] f32

    S_valid = Np + 1
    S_pad = _round_up(S_valid, 8)                                 # 17 -> 24 sublane-friendly
    xs = jnp.pad(xs, ((0, 0), (0, S_pad - S_valid), (0, 0)))
    pos = jnp.pad(vp["pos_emb"], ((0, S_pad - S_valid), (0, 0)))
    mask = _attn_mask(S_pad, valid_len=S_valid, causal=False)     # mask padded keys

    xs = pallas_transformer_stack(xs, vp["blocks"], cfg["vision_heads"],
                                  mask=mask, pos_emb=pos,
                                  pre_g=vp["ln_pre_g"], pre_b=vp["ln_pre_b"])

    cls_out = xs[:, 0, :]                                         # [B, W] f32
    return pallas_ln_proj(cls_out, vp["ln_post_g"], vp["ln_post_b"], vp["proj"])


def encode_text(tokens, tp, cfg):
    # tokens: [N, L] int32
    N, L = tokens.shape
    x = jnp.take(tp["token_emb"], tokens, axis=0)                 # [N, L, W] f32 (pos added in-kernel)

    N_pad = _round_up(N, 2)                                       # even batch -> clean 2-TC split
    x = jnp.pad(x, ((0, N_pad - N), (0, 0), (0, 0)))
    mask = _attn_mask(L, causal=True)

    x = pallas_transformer_stack(x, tp["blocks"], cfg["text_heads"],
                                 mask=mask, pos_emb=tp["pos_emb"])
    x = x[:N]

    # LayerNorm is row-wise, so gathering the EOT rows first is equivalent to
    # ln_final over the full sequence followed by the gather.
    eot = jnp.argmax(tokens, axis=-1)                             # EOT has highest id
    feat = x[jnp.arange(N), eot]                                  # [N, W] f32
    return pallas_ln_proj(feat, tp["ln_final_g"], tp["ln_final_b"], tp["text_proj"])


def myclip_forward(x, tokens, params, cfg):
    image_features = encode_image(x, params["vision"], cfg)
    text_features = encode_text(tokens, params["text"], cfg)
    return image_features, text_features


# ----------------------------- param synthesis -----------------------------

def _block_params(key, width, mlp_ratio=4):
    ks = jax.random.split(key, 4)
    s = 0.02
    bf = jnp.bfloat16
    return {
        "ln1_g": jnp.ones((1, width), jnp.float32),
        "ln1_b": jnp.zeros((1, width), jnp.float32),
        "in_proj_w": (s * jax.random.normal(ks[0], (width, 3 * width), jnp.float32)).astype(bf),
        "in_proj_b": jnp.zeros((1, 3 * width), jnp.float32),
        "out_proj_w": (s * jax.random.normal(ks[1], (width, width), jnp.float32)).astype(bf),
        "out_proj_b": jnp.zeros((1, width), jnp.float32),
        "ln2_g": jnp.ones((1, width), jnp.float32),
        "ln2_b": jnp.zeros((1, width), jnp.float32),
        "mlp_w1": (s * jax.random.normal(ks[2], (width, mlp_ratio * width), jnp.float32)).astype(bf),
        "mlp_b1": jnp.zeros((1, mlp_ratio * width), jnp.float32),
        "mlp_w2": (s * jax.random.normal(ks[3], (mlp_ratio * width, width), jnp.float32)).astype(bf),
        "mlp_b2": jnp.zeros((1, width), jnp.float32),
    }


def _stack_blocks(keys, width):
    blocks = [_block_params(k, width) for k in keys]
    return {name: jnp.stack([b[name] for b in blocks], axis=0) for name in blocks[0]}


def init_params(cfg, seed=0):
    key = jax.random.PRNGKey(seed)
    kv, kt = jax.random.split(key)
    s = 0.02
    bf = jnp.bfloat16
    C, P, VW = cfg["channels"], cfg["patch"], cfg["vision_width"]
    n_patches = (cfg["image_size"] // P) ** 2
    kvs = jax.random.split(kv, 6 + cfg["vision_layers"])
    vision = {
        "conv_w": (s * jax.random.normal(kvs[0], (C * P * P, VW), jnp.float32)).astype(bf),
        "class_emb": s * jax.random.normal(kvs[1], (1, VW), jnp.float32),
        "pos_emb": s * jax.random.normal(kvs[2], (n_patches + 1, VW), jnp.float32),
        "ln_pre_g": jnp.ones((1, VW), jnp.float32),
        "ln_pre_b": jnp.zeros((1, VW), jnp.float32),
        "ln_post_g": jnp.ones((1, VW), jnp.float32),
        "ln_post_b": jnp.zeros((1, VW), jnp.float32),
        "proj": (s * jax.random.normal(kvs[3], (VW, cfg["embed_dim"]), jnp.float32)).astype(bf),
        "blocks": _stack_blocks(kvs[6:6 + cfg["vision_layers"]], VW),
    }
    TW = cfg["text_width"]
    kts = jax.random.split(kt, 4 + cfg["text_layers"])
    text = {
        "token_emb": s * jax.random.normal(kts[0], (cfg["vocab"], TW), jnp.float32),
        "pos_emb": s * jax.random.normal(kts[1], (cfg["context_len"], TW), jnp.float32),
        "ln_final_g": jnp.ones((1, TW), jnp.float32),
        "ln_final_b": jnp.zeros((1, TW), jnp.float32),
        "text_proj": (s * jax.random.normal(kts[2], (TW, cfg["embed_dim"]), jnp.float32)).astype(bf),
        "blocks": _stack_blocks(kts[4:4 + cfg["text_layers"]], TW),
    }
    return {"vision": vision, "text": text}


def tokenize(prompts, vocab, context_len):
    # Deterministic stand-in for m_clip.tokenize: [SOT] words... [EOT] pad(0).
    sot, eot = vocab - 2, vocab - 1
    out = []
    for p in prompts:
        words = p.replace(".", "").split()
        content = [(sum(ord(c) for c in w) % (vocab - 3)) + 1 for w in words]
        toks = [sot] + content[: context_len - 2] + [eot]
        toks = toks + [0] * (context_len - len(toks))
        out.append(toks[:context_len])
    return jnp.asarray(out, jnp.int32)


# ----------------------------------- main -----------------------------------

if __name__ == "__main__":
    cfg = dict(
        image_size=16, patch=4, channels=3,
        vision_width=128, vision_heads=2, vision_layers=2,
        text_width=128, text_heads=2, text_layers=2,
        vocab=64, context_len=8, embed_dim=128,
    )
    class_list = ["dense_residential", "forest", "river"]
    prompt_prefix = "This is a satellite image of a"
    prompts = [prompt_prefix + " " + n.replace("_", " ") + "." for n in class_list]

    params = init_params(cfg, seed=0)
    tokens = tokenize(prompts, cfg["vocab"], cfg["context_len"])            # [3, 8]

    key = jax.random.PRNGKey(0)
    x = jax.random.normal(key, (2, cfg["channels"], cfg["image_size"], cfg["image_size"]),
                          jnp.float32)                                       # NCHW

    fwd = jax.jit(lambda xx, tt, pp: myclip_forward(xx, tt, pp, cfg))
    image_features, text_features = fwd(x, tokens, params)
    jax.block_until_ready((image_features, text_features))

    assert image_features.shape == (2, cfg["embed_dim"])
    assert text_features.shape == (len(class_list), cfg["embed_dim"])
    assert bool(jnp.all(jnp.isfinite(image_features))) and bool(jnp.all(jnp.isfinite(text_features)))
    print("KERNEL_OK")
</pallas_src>

<mosaic_0001>
module attributes {stable_mosaic.version = 11 : i64} {
  func.func @kernel(%arg0: i32, %arg1: memref<2x128xf32, #tpu.memory_space<vmem>>, %arg2: memref<1x128xf32, #tpu.memory_space<vmem>>, %arg3: memref<1x128xf32, #tpu.memory_space<vmem>>, %arg4: memref<128x128xbf16, #tpu.memory_space<vmem>>, %arg5: memref<2x128xf32, #tpu.memory_space<vmem>>) attributes {dimension_semantics = [#tpu.dimension_semantics<arbitrary>], iteration_bounds = array<i64: 1>, scalar_prefetch = 0 : i64, scratch_operands = 0 : i64, tpu.core_type = #tpu.core_type<tc>, window_params = [{pipeline_mode = #tpu.pipeline_mode<synchronous>, transform_indices = @transform_0, window_bounds = array<i64: 2, 128>}, {pipeline_mode = #tpu.pipeline_mode<synchronous>, transform_indices = @transform_1, window_bounds = array<i64: 1, 128>}, {pipeline_mode = #tpu.pipeline_mode<synchronous>, transform_indices = @transform_2, window_bounds = array<i64: 1, 128>}, {pipeline_mode = #tpu.pipeline_mode<synchronous>, transform_indices = @transform_3, window_bounds = array<i64: 128, 128>}, {pipeline_mode = #tpu.pipeline_mode<synchronous>, transform_indices = @transform_4, window_bounds = array<i64: 2, 128>}]} {
    %c0 = arith.constant 0 : index
    %c0_0 = arith.constant 0 : index
    %0 = vector.load %arg1[%c0, %c0_0] : memref<2x128xf32, #tpu.memory_space<vmem>>, vector<2x128xf32>
    %c0_1 = arith.constant 0 : index
    %c0_2 = arith.constant 0 : index
    %1 = vector.load %arg2[%c0_1, %c0_2] : memref<1x128xf32, #tpu.memory_space<vmem>>, vector<1x128xf32>
    %c0_3 = arith.constant 0 : index
    %c0_4 = arith.constant 0 : index
    %2 = vector.load %arg3[%c0_3, %c0_4] : memref<1x128xf32, #tpu.memory_space<vmem>>, vector<1x128xf32>
    %cst = arith.constant dense<0.000000e+00> : vector<2xf32>
    %3 = vector.multi_reduction <add>, %0, %cst [1] : vector<2x128xf32> to vector<2xf32>
    %4 = vector.shape_cast %3 : vector<2xf32> to vector<2x1xf32>
    %cst_5 = arith.constant 1.280000e+02 : f32
    %5 = vector.broadcast %cst_5 : f32 to vector<2x1xf32>
    %6 = arith.divf %4, %5 : vector<2x1xf32>
    %7 = vector.broadcast %6 : vector<2x1xf32> to vector<2x128xf32>
    %8 = arith.subf %0, %7 : vector<2x128xf32>
    %9 = arith.mulf %8, %8 : vector<2x128xf32>
    %cst_6 = arith.constant dense<0.000000e+00> : vector<2xf32>
    %10 = vector.multi_reduction <add>, %9, %cst_6 [1] : vector<2x128xf32> to vector<2xf32>
    %11 = vector.shape_cast %10 : vector<2xf32> to vector<2x1xf32>
    %cst_7 = arith.constant 1.280000e+02 : f32
    %12 = vector.broadcast %cst_7 : f32 to vector<2x1xf32>
    %13 = arith.divf %11, %12 : vector<2x1xf32>
    %cst_8 = arith.constant 9.99999974E-6 : f32
    %14 = vector.broadcast %cst_8 : f32 to vector<2x1xf32>
    %15 = arith.addf %13, %14 : vector<2x1xf32>
    %16 = math.rsqrt %15 : vector<2x1xf32>
    %17 = vector.broadcast %16 : vector<2x1xf32> to vector<2x128xf32>
    %18 = arith.mulf %8, %17 : vector<2x128xf32>
    %19 = vector.broadcast %1 : vector<1x128xf32> to vector<2x128xf32>
    %20 = arith.mulf %18, %19 : vector<2x128xf32>
    %21 = vector.broadcast %2 : vector<1x128xf32> to vector<2x128xf32>
    %22 = arith.addf %20, %21 : vector<2x128xf32>
    %23 = arith.truncf %22 : vector<2x128xf32> to vector<2x128xbf16>
    %c0_9 = arith.constant 0 : index
    %c0_10 = arith.constant 0 : index
    %24 = vector.load %arg4[%c0_9, %c0_10] : memref<128x128xbf16, #tpu.memory_space<vmem>>, vector<128x128xbf16>
    %cst_11 = arith.constant dense<0.000000e+00> : vector<2x128xf32>
    %25 = tpu.matmul %23, %24, %cst_11 {dimension_numbers = #tpu.dot_dimension_numbers<[1], [0], [0], [1], [0, 0, 1, 1], [], []>} : vector<2x128xbf16>, vector<128x128xbf16>, vector<2x128xf32> -> vector<2x128xf32>
    %c0_12 = arith.constant 0 : index
    %c0_13 = arith.constant 0 : index
    %26 = vector.load %arg5[%c0_12, %c0_13] : memref<2x128xf32, #tpu.memory_space<vmem>>, vector<2x128xf32>
    tpu.vector_store %arg5[%c0_12, %c0_13], %25 {strides = array<i32>} : memref<2x128xf32, #tpu.memory_space<vmem>>, vector<2x128xf32>,
    return
  }
  func.func @transform_0(%arg0: i32) -> (i32, i32) {
    %c0_i32 = arith.constant 0 : i32
    %c0_i32_0 = arith.constant 0 : i32
    %c0_i32_1 = arith.constant 0 : i32
    return %c0_i32, %c0_i32_0 : i32, i32
  }
  func.func @transform_1(%arg0: i32) -> (i32, i32) {
    %c0_i32 = arith.constant 0 : i32
    %c0_i32_0 = arith.constant 0 : i32
    %c0_i32_1 = arith.constant 0 : i32
    return %c0_i32, %c0_i32_0 : i32, i32
  }
  func.func @transform_2(%arg0: i32) -> (i32, i32) {
    %c0_i32 = arith.constant 0 : i32
    %c0_i32_0 = arith.constant 0 : i32
    %c0_i32_1 = arith.constant 0 : i32
    return %c0_i32, %c0_i32_0 : i32, i32
  }
  func.func @transform_3(%arg0: i32) -> (i32, i32) {
    %c0_i32 = arith.constant 0 : i32
    %c0_i32_0 = arith.constant 0 : i32
    %c0_i32_1 = arith.constant 0 : i32
    return %c0_i32, %c0_i32_0 : i32, i32
  }
  func.func @transform_4(%arg0: i32) -> (i32, i32) {
    %c0_i32 = arith.constant 0 : i32
    %c0_i32_0 = arith.constant 0 : i32
    %c0_i32_1 = arith.constant 0 : i32
    return %c0_i32, %c0_i32_0 : i32, i32
  }
}

module attributes {stable_mosaic.version = 11 : i64} {
  func.func @kernel(%arg0: i32, %arg1: memref<32x48xbf16, #tpu.memory_space<vmem>>, %arg2: memref<48x128xbf16, #tpu.memory_space<vmem>>, %arg3: memref<32x128xf32, #tpu.memory_space<vmem>>) attributes {dimension_semantics = [#tpu.dimension_semantics<arbitrary>], iteration_bounds = array<i64: 1>, scalar_prefetch = 0 : i64, scratch_operands = 0 : i64, tpu.core_type = #tpu.core_type<tc>, window_params = [{pipeline_mode = #tpu.pipeline_mode<synchronous>, transform_indices = @transform_0, window_bounds = array<i64: 32, 48>}, {pipeline_mode = #tpu.pipeline_mode<synchronous>, transform_indices = @transform_1, window_bounds = array<i64: 48, 128>}, {pipeline_mode = #tpu.pipeline_mode<synchronous>, transform_indices = @transform_2, window_bounds = array<i64: 32, 128>}]} {
    %c0 = arith.constant 0 : index
    %c0_0 = arith.constant 0 : index
    %0 = vector.load %arg1[%c0, %c0_0] : memref<32x48xbf16, #tpu.memory_space<vmem>>, vector<32x48xbf16>
    %c0_1 = arith.constant 0 : index
    %c0_2 = arith.constant 0 : index
    %1 = vector.load %arg2[%c0_1, %c0_2] : memref<48x128xbf16, #tpu.memory_space<vmem>>, vector<48x128xbf16>
    %cst = arith.constant dense<0.000000e+00> : vector<32x128xf32>
    %2 = tpu.matmul %0, %1, %cst {dimension_numbers = #tpu.dot_dimension_numbers<[1], [0], [0], [1], [0, 0, 1, 1], [], []>} : vector<32x48xbf16>, vector<48x128xbf16>, vector<32x128xf32> -> vector<32x128xf32>
    %c0_3 = arith.constant 0 : index
    %c0_4 = arith.constant 0 : index
    %3 = vector.load %arg3[%c0_3, %c0_4] : memref<32x128xf32, #tpu.memory_space<vmem>>, vector<32x128xf32>
    tpu.vector_store %arg3[%c0_3, %c0_4], %2 {strides = array<i32>} : memref<32x128xf32, #tpu.memory_space<vmem>>, vector<32x128xf32>,
    return
  }
  func.func @transform_0(%arg0: i32) -> (i32, i32) {
    %c0_i32 = arith.constant 0 : i32
    %c0_i32_0 = arith.constant 0 : i32
    %c0_i32_1 = arith.constant 0 : i32
    return %c0_i32, %c0_i32_0 : i32, i32
  }
  func.func @transform_1(%arg0: i32) -> (i32, i32) {
    %c0_i32 = arith.constant 0 : i32
    %c0_i32_0 = arith.constant 0 : i32
    %c0_i32_1 = arith.constant 0 : i32
    return %c0_i32, %c0_i32_0 : i32, i32
  }
  func.func @transform_2(%arg0: i32) -> (i32, i32) {
    %c0_i32 = arith.constant 0 : i32
    %c0_i32_0 = arith.constant 0 : i32
    %c0_i32_1 = arith.constant 0 : i32
    return %c0_i32, %c0_i32_0 : i32, i32
  }
}

module attributes {stable_mosaic.version = 11 : i64} {
  func.func @kernel(%arg0: i32, %arg1: i32, %arg2: memref<1x24x128xf32, #tpu.memory_space<vmem>>, %arg3: memref<24x128xf32, #tpu.memory_space<vmem>>, %arg4: memref<24x24xf32, #tpu.memory_space<vmem>>, %arg5: memref<1x128xf32, #tpu.memory_space<vmem>>, %arg6: memref<1x128xf32, #tpu.memory_space<vmem>>, %arg7: memref<1x1x128xf32, #tpu.memory_space<vmem>>, %arg8: memref<1x1x128xf32, #tpu.memory_space<vmem>>, %arg9: memref<1x128x384xbf16, #tpu.memory_space<vmem>>, %arg10: memref<1x1x384xf32, #tpu.memory_space<vmem>>, %arg11: memref<1x128x128xbf16, #tpu.memory_space<vmem>>, %arg12: memref<1x1x128xf32, #tpu.memory_space<vmem>>, %arg13: memref<1x1x128xf32, #tpu.memory_space<vmem>>, %arg14: memref<1x1x128xf32, #tpu.memory_space<vmem>>, %arg15: memref<1x128x512xbf16, #tpu.memory_space<vmem>>, %arg16: memref<1x1x512xf32, #tpu.memory_space<vmem>>, %arg17: memref<1x512x128xbf16, #tpu.memory_space<vmem>>, %arg18: memref<1x1x128xf32, #tpu.memory_space<vmem>>, %arg19: memref<1x24x128xf32, #tpu.memory_space<vmem>>, %arg20: memref<24x128xf32, #tpu.memory_space<vmem>>) attributes {dimension_semantics = [#tpu.dimension_semantics<parallel>, #tpu.dimension_semantics<arbitrary>], iteration_bounds = array<i64: 2, 2>, scalar_prefetch = 0 : i64, scratch_operands = 1 : i64, tpu.core_type = #tpu.core_type<tc>, window_params = [{transform_indices = @transform_0, window_bounds = array<i64: 1, 24, 128>}, {pipeline_mode = #tpu.pipeline_mode<synchronous>, transform_indices = @transform_1, window_bounds = array<i64: 24, 128>}, {pipeline_mode = #tpu.pipeline_mode<synchronous>, transform_indices = @transform_2, window_bounds = array<i64: 24, 24>}, {pipeline_mode = #tpu.pipeline_mode<synchronous>, transform_indices = @transform_3, window_bounds = array<i64: 1, 128>}, {pipeline_mode = #tpu.pipeline_mode<synchronous>, transform_indices = @transform_4, window_bounds = array<i64: 1, 128>}, {transform_indices = @transform_5, window_bounds = array<i64: 1, 1, 128>}, {transform_indices = @transform_6, window_bounds = array<i64: 1, 1, 128>}, {transform_indices = @transform_7, window_bounds = array<i64: 1, 128, 384>}, {transform_indices = @transform_8, window_bounds = array<i64: 1, 1, 384>}, {transform_indices = @transform_9, window_bounds = array<i64: 1, 128, 128>}, {transform_indices = @transform_10, window_bounds = array<i64: 1, 1, 128>}, {transform_indices = @transform_11, window_bounds = array<i64: 1, 1, 128>}, {transform_indices = @transform_12, window_bounds = array<i64: 1, 1, 128>}, {transform_indices = @transform_13, window_bounds = array<i64: 1, 128, 512>}, {transform_indices = @transform_14, window_bounds = array<i64: 1, 1, 512>}, {transform_indices = @transform_15, window_bounds = array<i64: 1, 512, 128>}, {transform_indices = @transform_16, window_bounds = array<i64: 1, 1, 128>}, {transform_indices = @transform_17, window_bounds = array<i64: 1, 24, 128>}]} {
    %c0_i32 = arith.constant 0 : i32
    %0 = arith.cmpi eq, %arg1, %c0_i32 : i32
    %1 = arith.extui %0 : i1 to i32
    %c0_i32_0 = arith.constant 0 : i32
    %2 = arith.cmpi ne, %1, %c0_i32_0 : i32
    scf.if %2 {
      %c0_70 = arith.constant 0 : index
      %c0_71 = arith.constant 0 : index
      %c0_72 = arith.constant 0 : index
      %150 = vector.load %arg2[%c0_70, %c0_71, %c0_72] : memref<1x24x128xf32, #tpu.memory_space<vmem>>, vector<1x24x128xf32>
      %c0_73 = arith.constant 0 : index
      %c0_74 = arith.constant 0 : index
      %151 = vector.load %arg3[%c0_73, %c0_74] : memref<24x128xf32, #tpu.memory_space<vmem>>, vector<24x128xf32>
      %152 = vector.shape_cast %151 : vector<24x128xf32> to vector<1x24x128xf32>
      %153 = arith.addf %150, %152 : vector<1x24x128xf32>
      %154 = vector.shape_cast %153 : vector<1x24x128xf32> to vector<24x128xf32>
      %c0_75 = arith.constant 0 : index
      %c0_76 = arith.constant 0 : index
      %155 = vector.load %arg5[%c0_75, %c0_76] : memref<1x128xf32, #tpu.memory_space<vmem>>, vector<1x128xf32>
      %c0_77 = arith.constant 0 : index
      %c0_78 = arith.constant 0 : index
      %156 = vector.load %arg6[%c0_77, %c0_78] : memref<1x128xf32, #tpu.memory_space<vmem>>, vector<1x128xf32>
      %cst_79 = arith.constant dense<0.000000e+00> : vector<24xf32>
      %157 = vector.multi_reduction <add>, %154, %cst_79 [1] : vector<24x128xf32> to vector<24xf32>
      %158 = vector.shape_cast %157 : vector<24xf32> to vector<24x1xf32>
      %cst_80 = arith.constant 1.280000e+02 : f32
      %159 = vector.broadcast %cst_80 : f32 to vector<24x1xf32>
      %160 = arith.divf %158, %159 : vector<24x1xf32>
      %161 = vector.broadcast %160 : vector<24x1xf32> to vector<24x128xf32>
      %162 = arith.subf %154, %161 : vector<24x128xf32>
      %163 = arith.mulf %162, %162 : vector<24x128xf32>
      %cst_81 = arith.constant dense<0.000000e+00> : vector<24xf32>
      %164 = vector.multi_reduction <add>, %163, %cst_81 [1] : vector<24x128xf32> to vector<24xf32>
      %165 = vector.shape_cast %164 : vector<24xf32> to vector<24x1xf32>
      %cst_82 = arith.constant 1.280000e+02 : f32
      %166 = vector.broadcast %cst_82 : f32 to vector<24x1xf32>
      %167 = arith.divf %165, %166 : vector<24x1xf32>
      %cst_83 = arith.constant 9.99999974E-6 : f32
      %168 = vector.broadcast %cst_83 : f32 to vector<24x1xf32>
      %169 = arith.addf %167, %168 : vector<24x1xf32>
      %170 = math.rsqrt %169 : vector<24x1xf32>
      %171 = vector.broadcast %170 : vector<24x1xf32> to vector<24x128xf32>
      %172 = arith.mulf %162, %171 : vector<24x128xf32>
      %173 = vector.broadcast %155 : vector<1x128xf32> to vector<24x128xf32>
      %174 = arith.mulf %172, %173 : vector<24x128xf32>
      %175 = vector.broadcast %156 : vector<1x128xf32> to vector<24x128xf32>
      %176 = arith.addf %174, %175 : vector<24x128xf32>
      %c0_84 = arith.constant 0 : index
      %c0_85 = arith.constant 0 : index
      %177 = vector.load %arg20[%c0_84, %c0_85] : memref<24x128xf32, #tpu.memory_space<vmem>>, vector<24x128xf32>
      tpu.vector_store %arg20[%c0_84, %c0_85], %176 {strides = array<i32>} : memref<24x128xf32, #tpu.memory_space<vmem>>, vector<24x128xf32>,
    } else {
    }
    %c0 = arith.constant 0 : index
    %c0_1 = arith.constant 0 : index
    %3 = vector.load %arg20[%c0, %c0_1] : memref<24x128xf32, #tpu.memory_space<vmem>>, vector<24x128xf32>
    %c0_2 = arith.constant 0 : index
    %c0_3 = arith.constant 0 : index
    %c0_4 = arith.constant 0 : index
    %4 = vector.load %arg7[%c0_2, %c0_3, %c0_4] : memref<1x1x128xf32, #tpu.memory_space<vmem>>, vector<1x1x128xf32>
    %5 = vector.shape_cast %4 : vector<1x1x128xf32> to vector<1x128xf32>
    %c0_5 = arith.constant 0 : index
    %c0_6 = arith.constant 0 : index
    %c0_7 = arith.constant 0 : index
    %6 = vector.load %arg8[%c0_5, %c0_6, %c0_7] : memref<1x1x128xf32, #tpu.memory_space<vmem>>, vector<1x1x128xf32>
    %7 = vector.shape_cast %6 : vector<1x1x128xf32> to vector<1x128xf32>
    %cst = arith.constant dense<0.000000e+00> : vector<24xf32>
    %8 = vector.multi_reduction <add>, %3, %cst [1] : vector<24x128xf32> to vector<24xf32>
    %9 = vector.shape_cast %8 : vector<24xf32> to vector<24x1xf32>
    %cst_8 = arith.constant 1.280000e+02 : f32
    %10 = vector.broadcast %cst_8 : f32 to vector<24x1xf32>
    %11 = arith.divf %9, %10 : vector<24x1xf32>
    %12 = vector.broadcast %11 : vector<24x1xf32> to vector<24x128xf32>
    %13 = arith.subf %3, %12 : vector<24x128xf32>
    %14 = arith.mulf %13, %13 : vector<24x128xf32>
    %cst_9 = arith.constant dense<0.000000e+00> : vector<24xf32>
    %15 = vector.multi_reduction <add>, %14, %cst_9 [1] : vector<24x128xf32> to vector<24xf32>
    %16 = vector.shape_cast %15 : vector<24xf32> to vector<24x1xf32>
    %cst_10 = arith.constant 1.280000e+02 : f32
    %17 = vector.broadcast %cst_10 : f32 to vector<24x1xf32>
    %18 = arith.divf %16, %17 : vector<24x1xf32>
    %cst_11 = arith.constant 9.99999974E-6 : f32
    %19 = vector.broadcast %cst_11 : f32 to vector<24x1xf32>
    %20 = arith.addf %18, %19 : vector<24x1xf32>
    %21 = math.rsqrt %20 : vector<24x1xf32>
    %22 = vector.broadcast %21 : vector<24x1xf32> to vector<24x128xf32>
    %23 = arith.mulf %13, %22 : vector<24x128xf32>
    %24 = vector.broadcast %5 : vector<1x128xf32> to vector<24x128xf32>
    %25 = arith.mulf %23, %24 : vector<24x128xf32>
    %26 = vector.broadcast %7 : vector<1x128xf32> to vector<24x128xf32>
    %27 = arith.addf %25, %26 : vector<24x128xf32>
    %28 = arith.truncf %27 : vector<24x128xf32> to vector<24x128xbf16>
    %c0_12 = arith.constant 0 : index
    %c0_13 = arith.constant 0 : index
    %c0_14 = arith.constant 0 : index
    %29 = vector.load %arg9[%c0_12, %c0_13, %c0_14] : memref<1x128x384xbf16, #tpu.memory_space<vmem>>, vector<1x128x384xbf16>
    %30 = vector.shape_cast %29 : vector<1x128x384xbf16> to vector<128x384xbf16>
    %cst_15 = arith.constant dense<0.000000e+00> : vector<24x384xf32>
    %31 = tpu.matmul %28, %30, %cst_15 {dimension_numbers = #tpu.dot_dimension_numbers<[1], [0], [0], [1], [0, 0, 1, 1], [], []>} : vector<24x128xbf16>, vector<128x384xbf16>, vector<24x384xf32> -> vector<24x384xf32>
    %c0_16 = arith.constant 0 : index
    %c0_17 = arith.constant 0 : index
    %c0_18 = arith.constant 0 : index
    %32 = vector.load %arg10[%c0_16, %c0_17, %c0_18] : memref<1x1x384xf32, #tpu.memory_space<vmem>>, vector<1x1x384xf32>
    %33 = vector.shape_cast %32 : vector<1x1x384xf32> to vector<1x384xf32>
    %34 = vector.broadcast %33 : vector<1x384xf32> to vector<24x384xf32>
    %35 = arith.addf %31, %34 : vector<24x384xf32>
    %36 = arith.truncf %35 : vector<24x384xf32> to vector<24x384xbf16>
    %37 = vector.extract_strided_slice %36 {offsets = [0, 0], sizes = [24, 64], strides = [1, 1]} : vector<24x384xbf16> to vector<24x64xbf16>
    %38 = vector.shape_cast %37 : vector<24x64xbf16> to vector<1x24x64xbf16>
    %39 = vector.extract_strided_slice %36 {offsets = [0, 128], sizes = [24, 64], strides = [1, 1]} : vector<24x384xbf16> to vector<24x64xbf16>
    %40 = vector.shape_cast %39 : vector<24x64xbf16> to vector<1x24x64xbf16>
    %41 = vector.extract_strided_slice %36 {offsets = [0, 256], sizes = [24, 64], strides = [1, 1]} : vector<24x384xbf16> to vector<24x64xbf16>
    %42 = vector.shape_cast %41 : vector<24x64xbf16> to vector<1x24x64xbf16>
    "tpu.trace_start"() <{level = 10 : i32, message = "bqd,bkd->bqk"}> : () -> ()
    %cst_19 = arith.constant dense<0.000000e+00> : vector<1x24x24xf32>
    %43 = tpu.matmul %38, %40, %cst_19 {dimension_numbers = #tpu.dot_dimension_numbers<[2], [2], [1], [1], [0, 0, 0, 1, 1, 1], [0], [0]>} : vector<1x24x64xbf16>, vector<1x24x64xbf16>, vector<1x24x24xf32> -> vector<1x24x24xf32>
    "tpu.trace_stop"() : () -> ()
    %cst_20 = arith.constant 1.250000e-01 : f32
    %44 = vector.broadcast %cst_20 : f32 to vector<1x24x24xf32>
    %45 = arith.mulf %43, %44 : vector<1x24x24xf32>
    %c0_21 = arith.constant 0 : index
    %c0_22 = arith.constant 0 : index
    %46 = vector.load %arg4[%c0_21, %c0_22] : memref<24x24xf32, #tpu.memory_space<vmem>>, vector<24x24xf32>
    %47 = vector.shape_cast %46 : vector<24x24xf32> to vector<1x24x24xf32>
    %48 = arith.addf %45, %47 : vector<1x24x24xf32>
    %cst_23 = arith.constant dense<0xFF800000> : vector<1x24xf32>
    %49 = vector.multi_reduction <maximumf>, %48, %cst_23 [2] : vector<1x24x24xf32> to vector<1x24xf32>
    %50 = vector.shape_cast %49 : vector<1x24xf32> to vector<1x24x1xf32>
    %51 = vector.broadcast %50 : vector<1x24x1xf32> to vector<1x24x24xf32>
    %52 = arith.subf %48, %51 : vector<1x24x24xf32>
    %53 = math.exp %52 : vector<1x24x24xf32>
    %cst_24 = arith.constant dense<0.000000e+00> : vector<1x24xf32>
    %54 = vector.multi_reduction <add>, %53, %cst_24 [2] : vector<1x24x24xf32> to vector<1x24xf32>
    %55 = vector.shape_cast %54 : vector<1x24xf32> to vector<1x24x1xf32>
    %56 = tpu.reciprocal %55 {approx = true} : vector<1x24x1xf32> -> vector<1x24x1xf32>
    %57 = vector.broadcast %56 : vector<1x24x1xf32> to vector<1x24x24xf32>
    %58 = arith.mulf %53, %57 : vector<1x24x24xf32>
    %59 = arith.truncf %58 : vector<1x24x24xf32> to vector<1x24x24xbf16>
    "tpu.trace_start"() <{level = 10 : i32, message = "bqk,bkd->bqd"}> : () -> ()
    %cst_25 = arith.constant dense<0.000000e+00> : vector<1x24x64xf32>
    %60 = tpu.matmul %59, %42, %cst_25 {dimension_numbers = #tpu.dot_dimension_numbers<[2], [1], [1], [2], [0, 0, 0, 1, 1, 2], [0], [0]>} : vector<1x24x24xbf16>, vector<1x24x64xbf16>, vector<1x24x64xf32> -> vector<1x24x64xf32>
    "tpu.trace_stop"() : () -> ()
    %61 = vector.shape_cast %60 : vector<1x24x64xf32> to vector<24x64xf32>
    %62 = vector.extract_strided_slice %36 {offsets = [0, 64], sizes = [24, 64], strides = [1, 1]} : vector<24x384xbf16> to vector<24x64xbf16>
    %63 = vector.shape_cast %62 : vector<24x64xbf16> to vector<1x24x64xbf16>
    %64 = vector.extract_strided_slice %36 {offsets = [0, 192], sizes = [24, 64], strides = [1, 1]} : vector<24x384xbf16> to vector<24x64xbf16>
    %65 = vector.shape_cast %64 : vector<24x64xbf16> to vector<1x24x64xbf16>
    %66 = vector.extract_strided_slice %36 {offsets = [0, 320], sizes = [24, 64], strides = [1, 1]} : vector<24x384xbf16> to vector<24x64xbf16>
    %67 = vector.shape_cast %66 : vector<24x64xbf16> to vector<1x24x64xbf16>
    "tpu.trace_start"() <{level = 10 : i32, message = "bqd,bkd->bqk"}> : () -> ()
    %cst_26 = arith.constant dense<0.000000e+00> : vector<1x24x24xf32>
    %68 = tpu.matmul %63, %65, %cst_26 {dimension_numbers = #tpu.dot_dimension_numbers<[2], [2], [1], [1], [0, 0, 0, 1, 1, 1], [0], [0]>} : vector<1x24x64xbf16>, vector<1x24x64xbf16>, vector<1x24x24xf32> -> vector<1x24x24xf32>
    "tpu.trace_stop"() : () -> ()
    %cst_27 = arith.constant 1.250000e-01 : f32
    %69 = vector.broadcast %cst_27 : f32 to vector<1x24x24xf32>
    %70 = arith.mulf %68, %69 : vector<1x24x24xf32>
    %c0_28 = arith.constant 0 : index
    %c0_29 = arith.constant 0 : index
    %71 = vector.load %arg4[%c0_28, %c0_29] : memref<24x24xf32, #tpu.memory_space<vmem>>, vector<24x24xf32>
    %72 = vector.shape_cast %71 : vector<24x24xf32> to vector<1x24x24xf32>
    %73 = arith.addf %70, %72 : vector<1x24x24xf32>
    %cst_30 = arith.constant dense<0xFF800000> : vector<1x24xf32>
    %74 = vector.multi_reduction <maximumf>, %73, %cst_30 [2] : vector<1x24x24xf32> to vector<1x24xf32>
    %75 = vector.shape_cast %74 : vector<1x24xf32> to vector<1x24x1xf32>
    %76 = vector.broadcast %75 : vector<1x24x1xf32> to vector<1x24x24xf32>
    %77 = arith.subf %73, %76 : vector<1x24x24xf32>
    %78 = math.exp %77 : vector<1x24x24xf32>
    %cst_31 = arith.constant dense<0.000000e+00> : vector<1x24xf32>
    %79 = vector.multi_reduction <add>, %78, %cst_31 [2] : vector<1x24x24xf32> to vector<1x24xf32>
    %80 = vector.shape_cast %79 : vector<1x24xf32> to vector<1x24x1xf32>
    %81 = tpu.reciprocal %80 {approx = true} : vector<1x24x1xf32> -> vector<1x24x1xf32>
    %82 = vector.broadcast %81 : vector<1x24x1xf32> to vector<1x24x24xf32>
    %83 = arith.mulf %78, %82 : vector<1x24x24xf32>
    %84 = arith.truncf %83 : vector<1x24x24xf32> to vector<1x24x24xbf16>
    "tpu.trace_start"() <{level = 10 : i32, message = "bqk,bkd->bqd"}> : () -> ()
    %cst_32 = arith.constant dense<0.000000e+00> : vector<1x24x64xf32>
    %85 = tpu.matmul %84, %67, %cst_32 {dimension_numbers = #tpu.dot_dimension_numbers<[2], [1], [1], [2], [0, 0, 0, 1, 1, 2], [0], [0]>} : vector<1x24x24xbf16>, vector<1x24x64xbf16>, vector<1x24x64xf32> -> vector<1x24x64xf32>
    "tpu.trace_stop"() : () -> ()
    %86 = vector.shape_cast %85 : vector<1x24x64xf32> to vector<24x64xf32>
    %87 = tpu.concatenate %61, %86 in 1 : vector<24x64xf32>, vector<24x64xf32> -> vector<24x128xf32>
    %88 = arith.truncf %87 : vector<24x128xf32> to vector<24x128xbf16>
    %c0_33 = arith.constant 0 : index
    %c0_34 = arith.constant 0 : index
    %c0_35 = arith.constant 0 : index
    %89 = vector.load %arg11[%c0_33, %c0_34, %c0_35] : memref<1x128x128xbf16, #tpu.memory_space<vmem>>, vector<1x128x128xbf16>
    %90 = vector.shape_cast %89 : vector<1x128x128xbf16> to vector<128x128xbf16>
    %cst_36 = arith.constant dense<0.000000e+00> : vector<24x128xf32>
    %91 = tpu.matmul %88, %90, %cst_36 {dimension_numbers = #tpu.dot_dimension_numbers<[1], [0], [0], [1], [0, 0, 1, 1], [], []>} : vector<24x128xbf16>, vector<128x128xbf16>, vector<24x128xf32> -> vector<24x128xf32>
    %c0_37 = arith.constant 0 : index
    %c0_38 = arith.constant 0 : index
    %c0_39 = arith.constant 0 : index
    %92 = vector.load %arg12[%c0_37, %c0_38, %c0_39] : memref<1x1x128xf32, #tpu.memory_space<vmem>>, vector<1x1x128xf32>
    %93 = vector.shape_cast %92 : vector<1x1x128xf32> to vector<1x128xf32>
    %94 = vector.broadcast %93 : vector<1x128xf32> to vector<24x128xf32>
    %95 = arith.addf %91, %94 : vector<24x128xf32>
    %96 = arith.addf %3, %95 : vector<24x128xf32>
    %c0_40 = arith.constant 0 : index
    %c0_41 = arith.constant 0 : index
    %c0_42 = arith.constant 0 : index
    %97 = vector.load %arg13[%c0_40, %c0_41, %c0_42] : memref<1x1x128xf32, #tpu.memory_space<vmem>>, vector<1x1x128xf32>
    %98 = vector.shape_cast %97 : vector<1x1x128xf32> to vector<1x128xf32>
    %c0_43 = arith.constant 0 : index
    %c0_44 = arith.constant 0 : index
    %c0_45 = arith.constant 0 : index
    %99 = vector.load %arg14[%c0_43, %c0_44, %c0_45] : memref<1x1x128xf32, #tpu.memory_space<vmem>>, vector<1x1x128xf32>
    %100 = vector.shape_cast %99 : vector<1x1x128xf32> to vector<1x128xf32>
    %cst_46 = arith.constant dense<0.000000e+00> : vector<24xf32>
    %101 = vector.multi_reduction <add>, %96, %cst_46 [1] : vector<24x128xf32> to vector<24xf32>
    %102 = vector.shape_cast %101 : vector<24xf32> to vector<24x1xf32>
    %cst_47 = arith.constant 1.280000e+02 : f32
    %103 = vector.broadcast %cst_47 : f32 to vector<24x1xf32>
    %104 = arith.divf %102, %103 : vector<24x1xf32>
    %105 = vector.broadcast %104 : vector<24x1xf32> to vector<24x128xf32>
    %106 = arith.subf %96, %105 : vector<24x128xf32>
    %107 = arith.mulf %106, %106 : vector<24x128xf32>
    %cst_48 = arith.constant dense<0.000000e+00> : vector<24xf32>
    %108 = vector.multi_reduction <add>, %107, %cst_48 [1] : vector<24x128xf32> to vector<24xf32>
    %109 = vector.shape_cast %108 : vector<24xf32> to vector<24x1xf32>
    %cst_49 = arith.constant 1.280000e+02 : f32
    %110 = vector.broadcast %cst_49 : f32 to vector<24x1xf32>
    %111 = arith.divf %109, %110 : vector<24x1xf32>
    %cst_50 = arith.constant 9.99999974E-6 : f32
    %112 = vector.broadcast %cst_50 : f32 to vector<24x1xf32>
    %113 = arith.addf %111, %112 : vector<24x1xf32>
    %114 = math.rsqrt %113 : vector<24x1xf32>
    %115 = vector.broadcast %114 : vector<24x1xf32> to vector<24x128xf32>
    %116 = arith.mulf %106, %115 : vector<24x128xf32>
    %117 = vector.broadcast %98 : vector<1x128xf32> to vector<24x128xf32>
    %118 = arith.mulf %116, %117 : vector<24x128xf32>
    %119 = vector.broadcast %100 : vector<1x128xf32> to vector<24x128xf32>
    %120 = arith.addf %118, %119 : vector<24x128xf32>
    %121 = arith.truncf %120 : vector<24x128xf32> to vector<24x128xbf16>
    %c0_51 = arith.constant 0 : index
    %c0_52 = arith.constant 0 : index
    %c0_53 = arith.constant 0 : index
    %122 = vector.load %arg15[%c0_51, %c0_52, %c0_53] : memref<1x128x512xbf16, #tpu.memory_space<vmem>>, vector<1x128x512xbf16>
    %123 = vector.shape_cast %122 : vector<1x128x512xbf16> to vector<128x512xbf16>
    %cst_54 = arith.constant dense<0.000000e+00> : vector<24x512xf32>
    %124 = tpu.matmul %121, %123, %cst_54 {dimension_numbers = #tpu.dot_dimension_numbers<[1], [0], [0], [1], [0, 0, 1, 1], [], []>} : vector<24x128xbf16>, vector<128x512xbf16>, vector<24x512xf32> -> vector<24x512xf32>
    %c0_55 = arith.constant 0 : index
    %c0_56 = arith.constant 0 : index
    %c0_57 = arith.constant 0 : index
    %125 = vector.load %arg16[%c0_55, %c0_56, %c0_57] : memref<1x1x512xf32, #tpu.memory_space<vmem>>, vector<1x1x512xf32>
    %126 = vector.shape_cast %125 : vector<1x1x512xf32> to vector<1x512xf32>
    %127 = vector.broadcast %126 : vector<1x512xf32> to vector<24x512xf32>
    %128 = arith.addf %124, %127 : vector<24x512xf32>
    %cst_58 = arith.constant 1.702000e+00 : f32
    %129 = vector.broadcast %cst_58 : f32 to vector<24x512xf32>
    %130 = arith.mulf %129, %128 : vector<24x512xf32>
    %131 = arith.negf %130 : vector<24x512xf32>
    %132 = math.exp %131 : vector<24x512xf32>
    %cst_59 = arith.constant 1.000000e+00 : f32
    %133 = vector.broadcast %cst_59 : f32 to vector<24x512xf32>
    %134 = arith.addf %133, %132 : vector<24x512xf32>
    %135 = arith.divf %133, %134 : vector<24x512xf32>
    %136 = arith.mulf %128, %135 : vector<24x512xf32>
    %137 = arith.truncf %136 : vector<24x512xf32> to vector<24x512xbf16>
    %c0_60 = arith.constant 0 : index
    %c0_61 = arith.constant 0 : index
    %c0_62 = arith.constant 0 : index
    %138 = vector.load %arg17[%c0_60, %c0_61, %c0_62] : memref<1x512x128xbf16, #tpu.memory_space<vmem>>, vector<1x512x128xbf16>
    %139 = vector.shape_cast %138 : vector<1x512x128xbf16> to vector<512x128xbf16>
    %cst_63 = arith.constant dense<0.000000e+00> : vector<24x128xf32>
    %140 = tpu.matmul %137, %139, %cst_63 {dimension_numbers = #tpu.dot_dimension_numbers<[1], [0], [0], [1], [0, 0, 1, 1], [], []>} : vector<24x512xbf16>, vector<512x128xbf16>, vector<24x128xf32> -> vector<24x128xf32>
    %c0_64 = arith.constant 0 : index
    %c0_65 = arith.constant 0 : index
    %c0_66 = arith.constant 0 : index
    %141 = vector.load %arg18[%c0_64, %c0_65, %c0_66] : memref<1x1x128xf32, #tpu.memory_space<vmem>>, vector<1x1x128xf32>
    %142 = vector.shape_cast %141 : vector<1x1x128xf32> to vector<1x128xf32>
    %143 = vector.broadcast %142 : vector<1x128xf32> to vector<24x128xf32>
    %144 = arith.addf %140, %143 : vector<24x128xf32>
    %145 = arith.addf %96, %144 : vector<24x128xf32>
    %c0_67 = arith.constant 0 : index
    %c0_68 = arith.constant 0 : index
    %146 = vector.load %arg20[%c0_67, %c0_68] : memref<24x128xf32, #tpu.memory_space<vmem>>, vector<24x128xf32>
    tpu.vector_store %arg20[%c0_67, %c0_68], %145 {strides = array<i32>} : memref<24x128xf32, #tpu.memory_space<vmem>>, vector<24x128xf32>,
    %c1_i32 = arith.constant 1 : i32
    %147 = arith.cmpi eq, %arg1, %c1_i32 : i32
    %148 = arith.extui %147 : i1 to i32
    %c0_i32_69 = arith.constant 0 : i32
    %149 = arith.cmpi ne, %148, %c0_i32_69 : i32
    scf.if %149 {
      %150 = vector.shape_cast %145 : vector<24x128xf32> to vector<1x24x128xf32>
      %c0_70 = arith.constant 0 : index
      %c0_71 = arith.constant 0 : index
      %c0_72 = arith.constant 0 : index
      %151 = vector.load %arg19[%c0_70, %c0_71, %c0_72] : memref<1x24x128xf32, #tpu.memory_space<vmem>>, vector<1x24x128xf32>
      tpu.vector_store %arg19[%c0_70, %c0_71, %c0_72], %150 {strides = array<i32>} : memref<1x24x128xf32, #tpu.memory_space<vmem>>, vector<1x24x128xf32>,
    } else {
    }
    return
  }
  func.func @transform_0(%arg0: i32, %arg1: i32) -> (i32, i32, i32) {
    %c0_i32 = arith.constant 0 : i32
    %c0_i32_0 = arith.constant 0 : i32
    %c0_i32_1 = arith.constant 0 : i32
    return %arg0, %c0_i32, %c0_i32_0 : i32, i32, i32
  }
  func.func @transform_1(%arg0: i32, %arg1: i32) -> (i32, i32) {
    %c0_i32 = arith.constant 0 : i32
    %c0_i32_0 = arith.constant 0 : i32
    %c0_i32_1 = arith.constant 0 : i32
    return %c0_i32, %c0_i32_0 : i32, i32
  }
  func.func @transform_2(%arg0: i32, %arg1: i32) -> (i32, i32) {
    %c0_i32 = arith.constant 0 : i32
    %c0_i32_0 = arith.constant 0 : i32
    %c0_i32_1 = arith.constant 0 : i32
    return %c0_i32, %c0_i32_0 : i32, i32
  }
  func.func @transform_3(%arg0: i32, %arg1: i32) -> (i32, i32) {
    %c0_i32 = arith.constant 0 : i32
    %c0_i32_0 = arith.constant 0 : i32
    %c0_i32_1 = arith.constant 0 : i32
    return %c0_i32, %c0_i32_0 : i32, i32
  }
  func.func @transform_4(%arg0: i32, %arg1: i32) -> (i32, i32) {
    %c0_i32 = arith.constant 0 : i32
    %c0_i32_0 = arith.constant 0 : i32
    %c0_i32_1 = arith.constant 0 : i32
    return %c0_i32, %c0_i32_0 : i32, i32
  }
  func.func @transform_5(%arg0: i32, %arg1: i32) -> (i32, i32, i32) {
    %c0_i32 = arith.constant 0 : i32
    %c0_i32_0 = arith.constant 0 : i32
    %c0_i32_1 = arith.constant 0 : i32
    return %arg1, %c0_i32, %c0_i32_0 : i32, i32, i32
  }
  func.func @transform_6(%arg0: i32, %arg1: i32) -> (i32, i32, i32) {
    %c0_i32 = arith.constant 0 : i32
    %c0_i32_0 = arith.constant 0 : i32
    %c0_i32_1 = arith.constant 0 : i32
    return %arg1, %c0_i32, %c0_i32_0 : i32, i32, i32
  }
  func.func @transform_7(%arg0: i32, %arg1: i32) -> (i32, i32, i32) {
    %c0_i32 = arith.constant 0 : i32
    %c0_i32_0 = arith.constant 0 : i32
    %c0_i32_1 = arith.constant 0 : i32
    return %arg1, %c0_i32, %c0_i32_0 : i32, i32, i32
  }
  func.func @transform_8(%arg0: i32, %arg1: i32) -> (i32, i32, i32) {
    %c0_i32 = arith.constant 0 : i32
    %c0_i32_0 = arith.constant 0 : i32
    %c0_i32_1 = arith.constant 0 : i32
    return %arg1, %c0_i32, %c0_i32_0 : i32, i32, i32
  }
  func.func @transform_9(%arg0: i32, %arg1: i32) -> (i32, i32, i32) {
    %c0_i32 = arith.constant 0 : i32
    %c0_i32_0 = arith.constant 0 : i32
    %c0_i32_1 = arith.constant 0 : i32
    return %arg1, %c0_i32, %c0_i32_0 : i32, i32, i32
  }
  func.func @transform_10(%arg0: i32, %arg1: i32) -> (i32, i32, i32) {
    %c0_i32 = arith.constant 0 : i32
    %c0_i32_0 = arith.constant 0 : i32
    %c0_i32_1 = arith.constant 0 : i32
    return %arg1, %c0_i32, %c0_i32_0 : i32, i32, i32
  }
  func.func @transform_11(%arg0: i32, %arg1: i32) -> (i32, i32, i32) {
    %c0_i32 = arith.constant 0 : i32
    %c0_i32_0 = arith.constant 0 : i32
    %c0_i32_1 = arith.constant 0 : i32
    return %arg1, %c0_i32, %c0_i32_0 : i32, i32, i32
  }
  func.func @transform_12(%arg0: i32, %arg1: i32) -> (i32, i32, i32) {
    %c0_i32 = arith.constant 0 : i32
    %c0_i32_0 = arith.constant 0 : i32
    %c0_i32_1 = arith.constant 0 : i32
    return %arg1, %c0_i32, %c0_i32_0 : i32, i32, i32
  }
  func.func @transform_13(%arg0: i32, %arg1: i32) -> (i32, i32, i32) {
    %c0_i32 = arith.constant 0 : i32
    %c0_i32_0 = arith.constant 0 : i32
    %c0_i32_1 = arith.constant 0 : i32
    return %arg1, %c0_i32, %c0_i32_0 : i32, i32, i32
  }
  func.func @transform_14(%arg0: i32, %arg1: i32) -> (i32, i32, i32) {
    %c0_i32 = arith.constant 0 : i32
    %c0_i32_0 = arith.constant 0 : i32
    %c0_i32_1 = arith.constant 0 : i32
    return %arg1, %c0_i32, %c0_i32_0 : i32, i32, i32
  }
  func.func @transform_15(%arg0: i32, %arg1: i32) -> (i32, i32, i32) {
    %c0_i32 = arith.constant 0 : i32
    %c0_i32_0 = arith.constant 0 : i32
    %c0_i32_1 = arith.constant 0 : i32
    return %arg1, %c0_i32, %c0_i32_0 : i32, i32, i32
  }
  func.func @transform_16(%arg0: i32, %arg1: i32) -> (i32, i32, i32) {
    %c0_i32 = arith.constant 0 : i32
    %c0_i32_0 = arith.constant 0 : i32
    %c0_i32_1 = arith.constant 0 : i32
    return %arg1, %c0_i32, %c0_i32_0 : i32, i32, i32
  }
  func.func @transform_17(%arg0: i32, %arg1: i32) -> (i32, i32, i32) {
    %c0_i32 = arith.constant 0 : i32
    %c0_i32_0 = arith.constant 0 : i32
    %c0_i32_1 = arith.constant 0 : i32
    return %arg0, %c0_i32, %c0_i32_0 : i32, i32, i32
  }
}

module attributes {stable_mosaic.version = 11 : i64} {
  func.func @kernel(%arg0: i32, %arg1: i32, %arg2: memref<2x8x128xf32, #tpu.memory_space<vmem>>, %arg3: memref<8x128xf32, #tpu.memory_space<vmem>>, %arg4: memref<8x8xf32, #tpu.memory_space<vmem>>, %arg5: memref<1x128xf32, #tpu.memory_space<vmem>>, %arg6: memref<1x128xf32, #tpu.memory_space<vmem>>, %arg7: memref<1x1x128xf32, #tpu.memory_space<vmem>>, %arg8: memref<1x1x128xf32, #tpu.memory_space<vmem>>, %arg9: memref<1x128x384xbf16, #tpu.memory_space<vmem>>, %arg10: memref<1x1x384xf32, #tpu.memory_space<vmem>>, %arg11: memref<1x128x128xbf16, #tpu.memory_space<vmem>>, %arg12: memref<1x1x128xf32, #tpu.memory_space<vmem>>, %arg13: memref<1x1x128xf32, #tpu.memory_space<vmem>>, %arg14: memref<1x1x128xf32, #tpu.memory_space<vmem>>, %arg15: memref<1x128x512xbf16, #tpu.memory_space<vmem>>, %arg16: memref<1x1x512xf32, #tpu.memory_space<vmem>>, %arg17: memref<1x512x128xbf16, #tpu.memory_space<vmem>>, %arg18: memref<1x1x128xf32, #tpu.memory_space<vmem>>, %arg19: memref<2x8x128xf32, #tpu.memory_space<vmem>>, %arg20: memref<16x128xf32, #tpu.memory_space<vmem>>) attributes {dimension_semantics = [#tpu.dimension_semantics<parallel>, #tpu.dimension_semantics<arbitrary>], iteration_bounds = array<i64: 2, 2>, scalar_prefetch = 0 : i64, scratch_operands = 1 : i64, tpu.core_type = #tpu.core_type<tc>, window_params = [{transform_indices = @transform_0, window_bounds = array<i64: 2, 8, 128>}, {pipeline_mode = #tpu.pipeline_mode<synchronous>, transform_indices = @transform_1, window_bounds = array<i64: 8, 128>}, {pipeline_mode = #tpu.pipeline_mode<synchronous>, transform_indices = @transform_2, window_bounds = array<i64: 8, 8>}, {pipeline_mode = #tpu.pipeline_mode<synchronous>, transform_indices = @transform_3, window_bounds = array<i64: 1, 128>}, {pipeline_mode = #tpu.pipeline_mode<synchronous>, transform_indices = @transform_4, window_bounds = array<i64: 1, 128>}, {transform_indices = @transform_5, window_bounds = array<i64: 1, 1, 128>}, {transform_indices = @transform_6, window_bounds = array<i64: 1, 1, 128>}, {transform_indices = @transform_7, window_bounds = array<i64: 1, 128, 384>}, {transform_indices = @transform_8, window_bounds = array<i64: 1, 1, 384>}, {transform_indices = @transform_9, window_bounds = array<i64: 1, 128, 128>}, {transform_indices = @transform_10, window_bounds = array<i64: 1, 1, 128>}, {transform_indices = @transform_11, window_bounds = array<i64: 1, 1, 128>}, {transform_indices = @transform_12, window_bounds = array<i64: 1, 1, 128>}, {transform_indices = @transform_13, window_bounds = array<i64: 1, 128, 512>}, {transform_indices = @transform_14, window_bounds = array<i64: 1, 1, 512>}, {transform_indices = @transform_15, window_bounds = array<i64: 1, 512, 128>}, {transform_indices = @transform_16, window_bounds = array<i64: 1, 1, 128>}, {transform_indices = @transform_17, window_bounds = array<i64: 2, 8, 128>}]} {
    %c0_i32 = arith.constant 0 : i32
    %0 = arith.cmpi eq, %arg1, %c0_i32 : i32
    %1 = arith.extui %0 : i1 to i32
    %c0_i32_0 = arith.constant 0 : i32
    %2 = arith.cmpi ne, %1, %c0_i32_0 : i32
    scf.if %2 {
      %c0_70 = arith.constant 0 : index
      %c0_71 = arith.constant 0 : index
      %c0_72 = arith.constant 0 : index
      %152 = vector.load %arg2[%c0_70, %c0_71, %c0_72] : memref<2x8x128xf32, #tpu.memory_space<vmem>>, vector<2x8x128xf32>
      %c0_73 = arith.constant 0 : index
      %c0_74 = arith.constant 0 : index
      %153 = vector.load %arg3[%c0_73, %c0_74] : memref<8x128xf32, #tpu.memory_space<vmem>>, vector<8x128xf32>
      %154 = vector.shape_cast %153 : vector<8x128xf32> to vector<1x8x128xf32>
      %155 = vector.broadcast %154 : vector<1x8x128xf32> to vector<2x8x128xf32>
      %156 = arith.addf %152, %155 : vector<2x8x128xf32>
      %157 = vector.shape_cast %156 : vector<2x8x128xf32> to vector<16x128xf32>
      %c0_75 = arith.constant 0 : index
      %c0_76 = arith.constant 0 : index
      %158 = vector.load %arg20[%c0_75, %c0_76] : memref<16x128xf32, #tpu.memory_space<vmem>>, vector<16x128xf32>
      tpu.vector_store %arg20[%c0_75, %c0_76], %157 {strides = array<i32>} : memref<16x128xf32, #tpu.memory_space<vmem>>, vector<16x128xf32>,
    } else {
    }
    %c0 = arith.constant 0 : index
    %c0_1 = arith.constant 0 : index
    %3 = vector.load %arg20[%c0, %c0_1] : memref<16x128xf32, #tpu.memory_space<vmem>>, vector<16x128xf32>
    %c0_2 = arith.constant 0 : index
    %c0_3 = arith.constant 0 : index
    %c0_4 = arith.constant 0 : index
    %4 = vector.load %arg7[%c0_2, %c0_3, %c0_4] : memref<1x1x128xf32, #tpu.memory_space<vmem>>, vector<1x1x128xf32>
    %5 = vector.shape_cast %4 : vector<1x1x128xf32> to vector<1x128xf32>
    %c0_5 = arith.constant 0 : index
    %c0_6 = arith.constant 0 : index
    %c0_7 = arith.constant 0 : index
    %6 = vector.load %arg8[%c0_5, %c0_6, %c0_7] : memref<1x1x128xf32, #tpu.memory_space<vmem>>, vector<1x1x128xf32>
    %7 = vector.shape_cast %6 : vector<1x1x128xf32> to vector<1x128xf32>
    %cst = arith.constant dense<0.000000e+00> : vector<16xf32>
    %8 = vector.multi_reduction <add>, %3, %cst [1] : vector<16x128xf32> to vector<16xf32>
    %9 = vector.shape_cast %8 : vector<16xf32> to vector<16x1xf32>
    %cst_8 = arith.constant 1.280000e+02 : f32
    %10 = vector.broadcast %cst_8 : f32 to vector<16x1xf32>
    %11 = arith.divf %9, %10 : vector<16x1xf32>
    %12 = vector.broadcast %11 : vector<16x1xf32> to vector<16x128xf32>
    %13 = arith.subf %3, %12 : vector<16x128xf32>
    %14 = arith.mulf %13, %13 : vector<16x128xf32>
    %cst_9 = arith.constant dense<0.000000e+00> : vector<16xf32>
    %15 = vector.multi_reduction <add>, %14, %cst_9 [1] : vector<16x128xf32> to vector<16xf32>
    %16 = vector.shape_cast %15 : vector<16xf32> to vector<16x1xf32>
    %cst_10 = arith.constant 1.280000e+02 : f32
    %17 = vector.broadcast %cst_10 : f32 to vector<16x1xf32>
    %18 = arith.divf %16, %17 : vector<16x1xf32>
    %cst_11 = arith.constant 9.99999974E-6 : f32
    %19 = vector.broadcast %cst_11 : f32 to vector<16x1xf32>
    %20 = arith.addf %18, %19 : vector<16x1xf32>
    %21 = math.rsqrt %20 : vector<16x1xf32>
    %22 = vector.broadcast %21 : vector<16x1xf32> to vector<16x128xf32>
    %23 = arith.mulf %13, %22 : vector<16x128xf32>
    %24 = vector.broadcast %5 : vector<1x128xf32> to vector<16x128xf32>
    %25 = arith.mulf %23, %24 : vector<16x128xf32>
    %26 = vector.broadcast %7 : vector<1x128xf32> to vector<16x128xf32>
    %27 = arith.addf %25, %26 : vector<16x128xf32>
    %28 = arith.truncf %27 : vector<16x128xf32> to vector<16x128xbf16>
    %c0_12 = arith.constant 0 : index
    %c0_13 = arith.constant 0 : index
    %c0_14 = arith.constant 0 : index
    %29 = vector.load %arg9[%c0_12, %c0_13, %c0_14] : memref<1x128x384xbf16, #tpu.memory_space<vmem>>, vector<1x128x384xbf16>
    %30 = vector.shape_cast %29 : vector<1x128x384xbf16> to vector<128x384xbf16>
    %cst_15 = arith.constant dense<0.000000e+00> : vector<16x384xf32>
    %31 = tpu.matmul %28, %30, %cst_15 {dimension_numbers = #tpu.dot_dimension_numbers<[1], [0], [0], [1], [0, 0, 1, 1], [], []>} : vector<16x128xbf16>, vector<128x384xbf16>, vector<16x384xf32> -> vector<16x384xf32>
    %c0_16 = arith.constant 0 : index
    %c0_17 = arith.constant 0 : index
    %c0_18 = arith.constant 0 : index
    %32 = vector.load %arg10[%c0_16, %c0_17, %c0_18] : memref<1x1x384xf32, #tpu.memory_space<vmem>>, vector<1x1x384xf32>
    %33 = vector.shape_cast %32 : vector<1x1x384xf32> to vector<1x384xf32>
    %34 = vector.broadcast %33 : vector<1x384xf32> to vector<16x384xf32>
    %35 = arith.addf %31, %34 : vector<16x384xf32>
    %36 = arith.truncf %35 : vector<16x384xf32> to vector<16x384xbf16>
    %37 = vector.extract_strided_slice %36 {offsets = [0, 0], sizes = [16, 64], strides = [1, 1]} : vector<16x384xbf16> to vector<16x64xbf16>
    %38 = vector.shape_cast %37 : vector<16x64xbf16> to vector<2x8x64xbf16>
    %39 = vector.extract_strided_slice %36 {offsets = [0, 128], sizes = [16, 64], strides = [1, 1]} : vector<16x384xbf16> to vector<16x64xbf16>
    %40 = vector.shape_cast %39 : vector<16x64xbf16> to vector<2x8x64xbf16>
    %41 = vector.extract_strided_slice %36 {offsets = [0, 256], sizes = [16, 64], strides = [1, 1]} : vector<16x384xbf16> to vector<16x64xbf16>
    %42 = vector.shape_cast %41 : vector<16x64xbf16> to vector<2x8x64xbf16>
    "tpu.trace_start"() <{level = 10 : i32, message = "bqd,bkd->bqk"}> : () -> ()
    %cst_19 = arith.constant dense<0.000000e+00> : vector<2x8x8xf32>
    %43 = tpu.matmul %38, %40, %cst_19 {dimension_numbers = #tpu.dot_dimension_numbers<[2], [2], [1], [1], [0, 0, 0, 1, 1, 1], [0], [0]>} : vector<2x8x64xbf16>, vector<2x8x64xbf16>, vector<2x8x8xf32> -> vector<2x8x8xf32>
    "tpu.trace_stop"() : () -> ()
    %cst_20 = arith.constant 1.250000e-01 : f32
    %44 = vector.broadcast %cst_20 : f32 to vector<2x8x8xf32>
    %45 = arith.mulf %43, %44 : vector<2x8x8xf32>
    %c0_21 = arith.constant 0 : index
    %c0_22 = arith.constant 0 : index
    %46 = vector.load %arg4[%c0_21, %c0_22] : memref<8x8xf32, #tpu.memory_space<vmem>>, vector<8x8xf32>
    %47 = vector.shape_cast %46 : vector<8x8xf32> to vector<1x8x8xf32>
    %48 = vector.broadcast %47 : vector<1x8x8xf32> to vector<2x8x8xf32>
    %49 = arith.addf %45, %48 : vector<2x8x8xf32>
    %cst_23 = arith.constant dense<0xFF800000> : vector<2x8xf32>
    %50 = vector.multi_reduction <maximumf>, %49, %cst_23 [2] : vector<2x8x8xf32> to vector<2x8xf32>
    %51 = vector.shape_cast %50 : vector<2x8xf32> to vector<2x8x1xf32>
    %52 = vector.broadcast %51 : vector<2x8x1xf32> to vector<2x8x8xf32>
    %53 = arith.subf %49, %52 : vector<2x8x8xf32>
    %54 = math.exp %53 : vector<2x8x8xf32>
    %cst_24 = arith.constant dense<0.000000e+00> : vector<2x8xf32>
    %55 = vector.multi_reduction <add>, %54, %cst_24 [2] : vector<2x8x8xf32> to vector<2x8xf32>
    %56 = vector.shape_cast %55 : vector<2x8xf32> to vector<2x8x1xf32>
    %57 = tpu.reciprocal %56 {approx = true} : vector<2x8x1xf32> -> vector<2x8x1xf32>
    %58 = vector.broadcast %57 : vector<2x8x1xf32> to vector<2x8x8xf32>
    %59 = arith.mulf %54, %58 : vector<2x8x8xf32>
    %60 = arith.truncf %59 : vector<2x8x8xf32> to vector<2x8x8xbf16>
    "tpu.trace_start"() <{level = 10 : i32, message = "bqk,bkd->bqd"}> : () -> ()
    %cst_25 = arith.constant dense<0.000000e+00> : vector<2x8x64xf32>
    %61 = tpu.matmul %60, %42, %cst_25 {dimension_numbers = #tpu.dot_dimension_numbers<[2], [1], [1], [2], [0, 0, 0, 1, 1, 2], [0], [0]>} : vector<2x8x8xbf16>, vector<2x8x64xbf16>, vector<2x8x64xf32> -> vector<2x8x64xf32>
    "tpu.trace_stop"() : () -> ()
    %62 = vector.shape_cast %61 : vector<2x8x64xf32> to vector<16x64xf32>
    %63 = vector.extract_strided_slice %36 {offsets = [0, 64], sizes = [16, 64], strides = [1, 1]} : vector<16x384xbf16> to vector<16x64xbf16>
    %64 = vector.shape_cast %63 : vector<16x64xbf16> to vector<2x8x64xbf16>
    %65 = vector.extract_strided_slice %36 {offsets = [0, 192], sizes = [16, 64], strides = [1, 1]} : vector<16x384xbf16> to vector<16x64xbf16>
    %66 = vector.shape_cast %65 : vector<16x64xbf16> to vector<2x8x64xbf16>
    %67 = vector.extract_strided_slice %36 {offsets = [0, 320], sizes = [16, 64], strides = [1, 1]} : vector<16x384xbf16> to vector<16x64xbf16>
    %68 = vector.shape_cast %67 : vector<16x64xbf16> to vector<2x8x64xbf16>
    "tpu.trace_start"() <{level = 10 : i32, message = "bqd,bkd->bqk"}> : () -> ()
    %cst_26 = arith.constant dense<0.000000e+00> : vector<2x8x8xf32>
    %69 = tpu.matmul %64, %66, %cst_26 {dimension_numbers = #tpu.dot_dimension_numbers<[2], [2], [1], [1], [0, 0, 0, 1, 1, 1], [0], [0]>} : vector<2x8x64xbf16>, vector<2x8x64xbf16>, vector<2x8x8xf32> -> vector<2x8x8xf32>
    "tpu.trace_stop"() : () -> ()
    %cst_27 = arith.constant 1.250000e-01 : f32
    %70 = vector.broadcast %cst_27 : f32 to vector<2x8x8xf32>
    %71 = arith.mulf %69, %70 : vector<2x8x8xf32>
    %c0_28 = arith.constant 0 : index
    %c0_29 = arith.constant 0 : index
    %72 = vector.load %arg4[%c0_28, %c0_29] : memref<8x8xf32, #tpu.memory_space<vmem>>, vector<8x8xf32>
    %73 = vector.shape_cast %72 : vector<8x8xf32> to vector<1x8x8xf32>
    %74 = vector.broadcast %73 : vector<1x8x8xf32> to vector<2x8x8xf32>
    %75 = arith.addf %71, %74 : vector<2x8x8xf32>
    %cst_30 = arith.constant dense<0xFF800000> : vector<2x8xf32>
    %76 = vector.multi_reduction <maximumf>, %75, %cst_30 [2] : vector<2x8x8xf32> to vector<2x8xf32>
    %77 = vector.shape_cast %76 : vector<2x8xf32> to vector<2x8x1xf32>
    %78 = vector.broadcast %77 : vector<2x8x1xf32> to vector<2x8x8xf32>
    %79 = arith.subf %75, %78 : vector<2x8x8xf32>
    %80 = math.exp %79 : vector<2x8x8xf32>
    %cst_31 = arith.constant dense<0.000000e+00> : vector<2x8xf32>
    %81 = vector.multi_reduction <add>, %80, %cst_31 [2] : vector<2x8x8xf32> to vector<2x8xf32>
    %82 = vector.shape_cast %81 : vector<2x8xf32> to vector<2x8x1xf32>
    %83 = tpu.reciprocal %82 {approx = true} : vector<2x8x1xf32> -> vector<2x8x1xf32>
    %84 = vector.broadcast %83 : vector<2x8x1xf32> to vector<2x8x8xf32>
    %85 = arith.mulf %80, %84 : vector<2x8x8xf32>
    %86 = arith.truncf %85 : vector<2x8x8xf32> to vector<2x8x8xbf16>
    "tpu.trace_start"() <{level = 10 : i32, message = "bqk,bkd->bqd"}> : () -> ()
    %cst_32 = arith.constant dense<0.000000e+00> : vector<2x8x64xf32>
    %87 = tpu.matmul %86, %68, %cst_32 {dimension_numbers = #tpu.dot_dimension_numbers<[2], [1], [1], [2], [0, 0, 0, 1, 1, 2], [0], [0]>} : vector<2x8x8xbf16>, vector<2x8x64xbf16>, vector<2x8x64xf32> -> vector<2x8x64xf32>
    "tpu.trace_stop"() : () -> ()
    %88 = vector.shape_cast %87 : vector<2x8x64xf32> to vector<16x64xf32>
    %89 = tpu.concatenate %62, %88 in 1 : vector<16x64xf32>, vector<16x64xf32> -> vector<16x128xf32>
    %90 = arith.truncf %89 : vector<16x128xf32> to vector<16x128xbf16>
    %c0_33 = arith.constant 0 : index
    %c0_34 = arith.constant 0 : index
    %c0_35 = arith.constant 0 : index
    %91 = vector.load %arg11[%c0_33, %c0_34, %c0_35] : memref<1x128x128xbf16, #tpu.memory_space<vmem>>, vector<1x128x128xbf16>
    %92 = vector.shape_cast %91 : vector<1x128x128xbf16> to vector<128x128xbf16>
    %cst_36 = arith.constant dense<0.000000e+00> : vector<16x128xf32>
    %93 = tpu.matmul %90, %92, %cst_36 {dimension_numbers = #tpu.dot_dimension_numbers<[1], [0], [0], [1], [0, 0, 1, 1], [], []>} : vector<16x128xbf16>, vector<128x128xbf16>, vector<16x128xf32> -> vector<16x128xf32>
    %c0_37 = arith.constant 0 : index
    %c0_38 = arith.constant 0 : index
    %c0_39 = arith.constant 0 : index
    %94 = vector.load %arg12[%c0_37, %c0_38, %c0_39] : memref<1x1x128xf32, #tpu.memory_space<vmem>>, vector<1x1x128xf32>
    %95 = vector.shape_cast %94 : vector<1x1x128xf32> to vector<1x128xf32>
    %96 = vector.broadcast %95 : vector<1x128xf32> to vector<16x128xf32>
    %97 = arith.addf %93, %96 : vector<16x128xf32>
    %98 = arith.addf %3, %97 : vector<16x128xf32>
    %c0_40 = arith.constant 0 : index
    %c0_41 = arith.constant 0 : index
    %c0_42 = arith.constant 0 : index
    %99 = vector.load %arg13[%c0_40, %c0_41, %c0_42] : memref<1x1x128xf32, #tpu.memory_space<vmem>>, vector<1x1x128xf32>
    %100 = vector.shape_cast %99 : vector<1x1x128xf32> to vector<1x128xf32>
    %c0_43 = arith.constant 0 : index
    %c0_44 = arith.constant 0 : index
    %c0_45 = arith.constant 0 : index
    %101 = vector.load %arg14[%c0_43, %c0_44, %c0_45] : memref<1x1x128xf32, #tpu.memory_space<vmem>>, vector<1x1x128xf32>
    %102 = vector.shape_cast %101 : vector<1x1x128xf32> to vector<1x128xf32>
    %cst_46 = arith.constant dense<0.000000e+00> : vector<16xf32>
    %103 = vector.multi_reduction <add>, %98, %cst_46 [1] : vector<16x128xf32> to vector<16xf32>
    %104 = vector.shape_cast %103 : vector<16xf32> to vector<16x1xf32>
    %cst_47 = arith.constant 1.280000e+02 : f32
    %105 = vector.broadcast %cst_47 : f32 to vector<16x1xf32>
    %106 = arith.divf %104, %105 : vector<16x1xf32>
    %107 = vector.broadcast %106 : vector<16x1xf32> to vector<16x128xf32>
    %108 = arith.subf %98, %107 : vector<16x128xf32>
    %109 = arith.mulf %108, %108 : vector<16x128xf32>
    %cst_48 = arith.constant dense<0.000000e+00> : vector<16xf32>
    %110 = vector.multi_reduction <add>, %109, %cst_48 [1] : vector<16x128xf32> to vector<16xf32>
    %111 = vector.shape_cast %110 : vector<16xf32> to vector<16x1xf32>
    %cst_49 = arith.constant 1.280000e+02 : f32
    %112 = vector.broadcast %cst_49 : f32 to vector<16x1xf32>
    %113 = arith.divf %111, %112 : vector<16x1xf32>
    %cst_50 = arith.constant 9.99999974E-6 : f32
    %114 = vector.broadcast %cst_50 : f32 to vector<16x1xf32>
    %115 = arith.addf %113, %114 : vector<16x1xf32>
    %116 = math.rsqrt %115 : vector<16x1xf32>
    %117 = vector.broadcast %116 : vector<16x1xf32> to vector<16x128xf32>
    %118 = arith.mulf %108, %117 : vector<16x128xf32>
    %119 = vector.broadcast %100 : vector<1x128xf32> to vector<16x128xf32>
    %120 = arith.mulf %118, %119 : vector<16x128xf32>
    %121 = vector.broadcast %102 : vector<1x128xf32> to vector<16x128xf32>
    %122 = arith.addf %120, %121 : vector<16x128xf32>
    %123 = arith.truncf %122 : vector<16x128xf32> to vector<16x128xbf16>
    %c0_51 = arith.constant 0 : index
    %c0_52 = arith.constant 0 : index
    %c0_53 = arith.constant 0 : index
    %124 = vector.load %arg15[%c0_51, %c0_52, %c0_53] : memref<1x128x512xbf16, #tpu.memory_space<vmem>>, vector<1x128x512xbf16>
    %125 = vector.shape_cast %124 : vector<1x128x512xbf16> to vector<128x512xbf16>
    %cst_54 = arith.constant dense<0.000000e+00> : vector<16x512xf32>
    %126 = tpu.matmul %123, %125, %cst_54 {dimension_numbers = #tpu.dot_dimension_numbers<[1], [0], [0], [1], [0, 0, 1, 1], [], []>} : vector<16x128xbf16>, vector<128x512xbf16>, vector<16x512xf32> -> vector<16x512xf32>
    %c0_55 = arith.constant 0 : index
    %c0_56 = arith.constant 0 : index
    %c0_57 = arith.constant 0 : index
    %127 = vector.load %arg16[%c0_55, %c0_56, %c0_57] : memref<1x1x512xf32, #tpu.memory_space<vmem>>, vector<1x1x512xf32>
    %128 = vector.shape_cast %127 : vector<1x1x512xf32> to vector<1x512xf32>
    %129 = vector.broadcast %128 : vector<1x512xf32> to vector<16x512xf32>
    %130 = arith.addf %126, %129 : vector<16x512xf32>
    %cst_58 = arith.constant 1.702000e+00 : f32
    %131 = vector.broadcast %cst_58 : f32 to vector<16x512xf32>
    %132 = arith.mulf %131, %130 : vector<16x512xf32>
    %133 = arith.negf %132 : vector<16x512xf32>
    %134 = math.exp %133 : vector<16x512xf32>
    %cst_59 = arith.constant 1.000000e+00 : f32
    %135 = vector.broadcast %cst_59 : f32 to vector<16x512xf32>
    %136 = arith.addf %135, %134 : vector<16x512xf32>
    %137 = arith.divf %135, %136 : vector<16x512xf32>
    %138 = arith.mulf %130, %137 : vector<16x512xf32>
    %139 = arith.truncf %138 : vector<16x512xf32> to vector<16x512xbf16>
    %c0_60 = arith.constant 0 : index
    %c0_61 = arith.constant 0 : index
    %c0_62 = arith.constant 0 : index
    %140 = vector.load %arg17[%c0_60, %c0_61, %c0_62] : memref<1x512x128xbf16, #tpu.memory_space<vmem>>, vector<1x512x128xbf16>
    %141 = vector.shape_cast %140 : vector<1x512x128xbf16> to vector<512x128xbf16>
    %cst_63 = arith.constant dense<0.000000e+00> : vector<16x128xf32>
    %142 = tpu.matmul %139, %141, %cst_63 {dimension_numbers = #tpu.dot_dimension_numbers<[1], [0], [0], [1], [0, 0, 1, 1], [], []>} : vector<16x512xbf16>, vector<512x128xbf16>, vector<16x128xf32> -> vector<16x128xf32>
    %c0_64 = arith.constant 0 : index
    %c0_65 = arith.constant 0 : index
    %c0_66 = arith.constant 0 : index
    %143 = vector.load %arg18[%c0_64, %c0_65, %c0_66] : memref<1x1x128xf32, #tpu.memory_space<vmem>>, vector<1x1x128xf32>
    %144 = vector.shape_cast %143 : vector<1x1x128xf32> to vector<1x128xf32>
    %145 = vector.broadcast %144 : vector<1x128xf32> to vector<16x128xf32>
    %146 = arith.addf %142, %145 : vector<16x128xf32>
    %147 = arith.addf %98, %146 : vector<16x128xf32>
    %c0_67 = arith.constant 0 : index
    %c0_68 = arith.constant 0 : index
    %148 = vector.load %arg20[%c0_67, %c0_68] : memref<16x128xf32, #tpu.memory_space<vmem>>, vector<16x128xf32>
    tpu.vector_store %arg20[%c0_67, %c0_68], %147 {strides = array<i32>} : memref<16x128xf32, #tpu.memory_space<vmem>>, vector<16x128xf32>,
    %c1_i32 = arith.constant 1 : i32
    %149 = arith.cmpi eq, %arg1, %c1_i32 : i32
    %150 = arith.extui %149 : i1 to i32
    %c0_i32_69 = arith.constant 0 : i32
    %151 = arith.cmpi ne, %150, %c0_i32_69 : i32
    scf.if %151 {
      %152 = vector.shape_cast %147 : vector<16x128xf32> to vector<2x8x128xf32>
      %c0_70 = arith.constant 0 : index
      %c0_71 = arith.constant 0 : index
      %c0_72 = arith.constant 0 : index
      %153 = vector.load %arg19[%c0_70, %c0_71, %c0_72] : memref<2x8x128xf32, #tpu.memory_space<vmem>>, vector<2x8x128xf32>
      tpu.vector_store %arg19[%c0_70, %c0_71, %c0_72], %152 {strides = array<i32>} : memref<2x8x128xf32, #tpu.memory_space<vmem>>, vector<2x8x128xf32>,
    } else {
    }
    return
  }
  func.func @transform_0(%arg0: i32, %arg1: i32) -> (i32, i32, i32) {
    %c0_i32 = arith.constant 0 : i32
    %c0_i32_0 = arith.constant 0 : i32
    %c0_i32_1 = arith.constant 0 : i32
    return %arg0, %c0_i32, %c0_i32_0 : i32, i32, i32
  }
  func.func @transform_1(%arg0: i32, %arg1: i32) -> (i32, i32) {
    %c0_i32 = arith.constant 0 : i32
    %c0_i32_0 = arith.constant 0 : i32
    %c0_i32_1 = arith.constant 0 : i32
    return %c0_i32, %c0_i32_0 : i32, i32
  }
  func.func @transform_2(%arg0: i32, %arg1: i32) -> (i32, i32) {
    %c0_i32 = arith.constant 0 : i32
    %c0_i32_0 = arith.constant 0 : i32
    %c0_i32_1 = arith.constant 0 : i32
    return %c0_i32, %c0_i32_0 : i32, i32
  }
  func.func @transform_3(%arg0: i32, %arg1: i32) -> (i32, i32) {
    %c0_i32 = arith.constant 0 : i32
    %c0_i32_0 = arith.constant 0 : i32
    %c0_i32_1 = arith.constant 0 : i32
    return %c0_i32, %c0_i32_0 : i32, i32
  }
  func.func @transform_4(%arg0: i32, %arg1: i32) -> (i32, i32) {
    %c0_i32 = arith.constant 0 : i32
    %c0_i32_0 = arith.constant 0 : i32
    %c0_i32_1 = arith.constant 0 : i32
    return %c0_i32, %c0_i32_0 : i32, i32
  }
  func.func @transform_5(%arg0: i32, %arg1: i32) -> (i32, i32, i32) {
    %c0_i32 = arith.constant 0 : i32
    %c0_i32_0 = arith.constant 0 : i32
    %c0_i32_1 = arith.constant 0 : i32
    return %arg1, %c0_i32, %c0_i32_0 : i32, i32, i32
  }
  func.func @transform_6(%arg0: i32, %arg1: i32) -> (i32, i32, i32) {
    %c0_i32 = arith.constant 0 : i32
    %c0_i32_0 = arith.constant 0 : i32
    %c0_i32_1 = arith.constant 0 : i32
    return %arg1, %c0_i32, %c0_i32_0 : i32, i32, i32
  }
  func.func @transform_7(%arg0: i32, %arg1: i32) -> (i32, i32, i32) {
    %c0_i32 = arith.constant 0 : i32
    %c0_i32_0 = arith.constant 0 : i32
    %c0_i32_1 = arith.constant 0 : i32
    return %arg1, %c0_i32, %c0_i32_0 : i32, i32, i32
  }
  func.func @transform_8(%arg0: i32, %arg1: i32) -> (i32, i32, i32) {
    %c0_i32 = arith.constant 0 : i32
    %c0_i32_0 = arith.constant 0 : i32
    %c0_i32_1 = arith.constant 0 : i32
    return %arg1, %c0_i32, %c0_i32_0 : i32, i32, i32
  }
  func.func @transform_9(%arg0: i32, %arg1: i32) -> (i32, i32, i32) {
    %c0_i32 = arith.constant 0 : i32
    %c0_i32_0 = arith.constant 0 : i32
    %c0_i32_1 = arith.constant 0 : i32
    return %arg1, %c0_i32, %c0_i32_0 : i32, i32, i32
  }
  func.func @transform_10(%arg0: i32, %arg1: i32) -> (i32, i32, i32) {
    %c0_i32 = arith.constant 0 : i32
    %c0_i32_0 = arith.constant 0 : i32
    %c0_i32_1 = arith.constant 0 : i32
    return %arg1, %c0_i32, %c0_i32_0 : i32, i32, i32
  }
  func.func @transform_11(%arg0: i32, %arg1: i32) -> (i32, i32, i32) {
    %c0_i32 = arith.constant 0 : i32
    %c0_i32_0 = arith.constant 0 : i32
    %c0_i32_1 = arith.constant 0 : i32
    return %arg1, %c0_i32, %c0_i32_0 : i32, i32, i32
  }
  func.func @transform_12(%arg0: i32, %arg1: i32) -> (i32, i32, i32) {
    %c0_i32 = arith.constant 0 : i32
    %c0_i32_0 = arith.constant 0 : i32
    %c0_i32_1 = arith.constant 0 : i32
    return %arg1, %c0_i32, %c0_i32_0 : i32, i32, i32
  }
  func.func @transform_13(%arg0: i32, %arg1: i32) -> (i32, i32, i32) {
    %c0_i32 = arith.constant 0 : i32
    %c0_i32_0 = arith.constant 0 : i32
    %c0_i32_1 = arith.constant 0 : i32
    return %arg1, %c0_i32, %c0_i32_0 : i32, i32, i32
  }
  func.func @transform_14(%arg0: i32, %arg1: i32) -> (i32, i32, i32) {
    %c0_i32 = arith.constant 0 : i32
    %c0_i32_0 = arith.constant 0 : i32
    %c0_i32_1 = arith.constant 0 : i32
    return %arg1, %c0_i32, %c0_i32_0 : i32, i32, i32
  }
  func.func @transform_15(%arg0: i32, %arg1: i32) -> (i32, i32, i32) {
    %c0_i32 = arith.constant 0 : i32
    %c0_i32_0 = arith.constant 0 : i32
    %c0_i32_1 = arith.constant 0 : i32
    return %arg1, %c0_i32, %c0_i32_0 : i32, i32, i32
  }
  func.func @transform_16(%arg0: i32, %arg1: i32) -> (i32, i32, i32) {
    %c0_i32 = arith.constant 0 : i32
    %c0_i32_0 = arith.constant 0 : i32
    %c0_i32_1 = arith.constant 0 : i32
    return %arg1, %c0_i32, %c0_i32_0 : i32, i32, i32
  }
  func.func @transform_17(%arg0: i32, %arg1: i32) -> (i32, i32, i32) {
    %c0_i32 = arith.constant 0 : i32
    %c0_i32_0 = arith.constant 0 : i32
    %c0_i32_1 = arith.constant 0 : i32
    return %arg0, %c0_i32, %c0_i32_0 : i32, i32, i32
  }
}

module attributes {stable_mosaic.version = 11 : i64} {
  func.func @kernel(%arg0: i32, %arg1: memref<3x128xf32, #tpu.memory_space<vmem>>, %arg2: memref<1x128xf32, #tpu.memory_space<vmem>>, %arg3: memref<1x128xf32, #tpu.memory_space<vmem>>, %arg4: memref<128x128xbf16, #tpu.memory_space<vmem>>, %arg5: memref<3x128xf32, #tpu.memory_space<vmem>>) attributes {dimension_semantics = [#tpu.dimension_semantics<arbitrary>], iteration_bounds = array<i64: 1>, scalar_prefetch = 0 : i64, scratch_operands = 0 : i64, tpu.core_type = #tpu.core_type<tc>, window_params = [{pipeline_mode = #tpu.pipeline_mode<synchronous>, transform_indices = @transform_0, window_bounds = array<i64: 3, 128>}, {pipeline_mode = #tpu.pipeline_mode<synchronous>, transform_indices = @transform_1, window_bounds = array<i64: 1, 128>}, {pipeline_mode = #tpu.pipeline_mode<synchronous>, transform_indices = @transform_2, window_bounds = array<i64: 1, 128>}, {pipeline_mode = #tpu.pipeline_mode<synchronous>, transform_indices = @transform_3, window_bounds = array<i64: 128, 128>}, {pipeline_mode = #tpu.pipeline_mode<synchronous>, transform_indices = @transform_4, window_bounds = array<i64: 3, 128>}]} {
    %c0 = arith.constant 0 : index
    %c0_0 = arith.constant 0 : index
    %0 = vector.load %arg1[%c0, %c0_0] : memref<3x128xf32, #tpu.memory_space<vmem>>, vector<3x128xf32>
    %c0_1 = arith.constant 0 : index
    %c0_2 = arith.constant 0 : index
    %1 = vector.load %arg2[%c0_1, %c0_2] : memref<1x128xf32, #tpu.memory_space<vmem>>, vector<1x128xf32>
    %c0_3 = arith.constant 0 : index
    %c0_4 = arith.constant 0 : index
    %2 = vector.load %arg3[%c0_3, %c0_4] : memref<1x128xf32, #tpu.memory_space<vmem>>, vector<1x128xf32>
    %cst = arith.constant dense<0.000000e+00> : vector<3xf32>
    %3 = vector.multi_reduction <add>, %0, %cst [1] : vector<3x128xf32> to vector<3xf32>
    %4 = vector.shape_cast %3 : vector<3xf32> to vector<3x1xf32>
    %cst_5 = arith.constant 1.280000e+02 : f32
    %5 = vector.broadcast %cst_5 : f32 to vector<3x1xf32>
    %6 = arith.divf %4, %5 : vector<3x1xf32>
    %7 = vector.broadcast %6 : vector<3x1xf32> to vector<3x128xf32>
    %8 = arith.subf %0, %7 : vector<3x128xf32>
    %9 = arith.mulf %8, %8 : vector<3x128xf32>
    %cst_6 = arith.constant dense<0.000000e+00> : vector<3xf32>
    %10 = vector.multi_reduction <add>, %9, %cst_6 [1] : vector<3x128xf32> to vector<3xf32>
    %11 = vector.shape_cast %10 : vector<3xf32> to vector<3x1xf32>
    %cst_7 = arith.constant 1.280000e+02 : f32
    %12 = vector.broadcast %cst_7 : f32 to vector<3x1xf32>
    %13 = arith.divf %11, %12 : vector<3x1xf32>
    %cst_8 = arith.constant 9.99999974E-6 : f32
    %14 = vector.broadcast %cst_8 : f32 to vector<3x1xf32>
    %15 = arith.addf %13, %14 : vector<3x1xf32>
    %16 = math.rsqrt %15 : vector<3x1xf32>
    %17 = vector.broadcast %16 : vector<3x1xf32> to vector<3x128xf32>
    %18 = arith.mulf %8, %17 : vector<3x128xf32>
    %19 = vector.broadcast %1 : vector<1x128xf32> to vector<3x128xf32>
    %20 = arith.mulf %18, %19 : vector<3x128xf32>
    %21 = vector.broadcast %2 : vector<1x128xf32> to vector<3x128xf32>
    %22 = arith.addf %20, %21 : vector<3x128xf32>
    %23 = arith.truncf %22 : vector<3x128xf32> to vector<3x128xbf16>
    %c0_9 = arith.constant 0 : index
    %c0_10 = arith.constant 0 : index
    %24 = vector.load %arg4[%c0_9, %c0_10] : memref<128x128xbf16, #tpu.memory_space<vmem>>, vector<128x128xbf16>
    %cst_11 = arith.constant dense<0.000000e+00> : vector<3x128xf32>
    %25 = tpu.matmul %23, %24, %cst_11 {dimension_numbers = #tpu.dot_dimension_numbers<[1], [0], [0], [1], [0, 0, 1, 1], [], []>} : vector<3x128xbf16>, vector<128x128xbf16>, vector<3x128xf32> -> vector<3x128xf32>
    %c0_12 = arith.constant 0 : index
    %c0_13 = arith.constant 0 : index
    %26 = vector.load %arg5[%c0_12, %c0_13] : memref<3x128xf32, #tpu.memory_space<vmem>>, vector<3x128xf32>
    tpu.vector_store %arg5[%c0_12, %c0_13], %25 {strides = array<i32>} : memref<3x128xf32, #tpu.memory_space<vmem>>, vector<3x128xf32>,
    return
  }
  func.func @transform_0(%arg0: i32) -> (i32, i32) {
    %c0_i32 = arith.constant 0 : i32
    %c0_i32_0 = arith.constant 0 : i32
    %c0_i32_1 = arith.constant 0 : i32
    return %c0_i32, %c0_i32_0 : i32, i32
  }
  func.func @transform_1(%arg0: i32) -> (i32, i32) {
    %c0_i32 = arith.constant 0 : i32
    %c0_i32_0 = arith.constant 0 : i32
    %c0_i32_1 = arith.constant 0 : i32
    return %c0_i32, %c0_i32_0 : i32, i32
  }
  func.func @transform_2(%arg0: i32) -> (i32, i32) {
    %c0_i32 = arith.constant 0 : i32
    %c0_i32_0 = arith.constant 0 : i32
    %c0_i32_1 = arith.constant 0 : i32
    return %c0_i32, %c0_i32_0 : i32, i32
  }
  func.func @transform_3(%arg0: i32) -> (i32, i32) {
    %c0_i32 = arith.constant 0 : i32
    %c0_i32_0 = arith.constant 0 : i32
    %c0_i32_1 = arith.constant 0 : i32
    return %c0_i32, %c0_i32_0 : i32, i32
  }
  func.func @transform_4(%arg0: i32) -> (i32, i32) {
    %c0_i32 = arith.constant 0 : i32
    %c0_i32_0 = arith.constant 0 : i32
    %c0_i32_1 = arith.constant 0 : i32
    return %c0_i32, %c0_i32_0 : i32, i32
  }
}

</mosaic_0001>

<llo_original>
// kernel: _lambda_.5
$region0: #{_lambda_.5}
  #allocation0 [shape = 'u32[]', space=smem, size = 0x4, offset = 0x4, fixed_abs, tag = 'smem constant byte address 0x4 - core index']
  #allocation1 [shape = 'u32[144,128]{1,0:T(1,128)}', space=vmem, size = 0x12000, scoped, tag = 'internal scratch']
  %s0 = inlined_call_operand.vmem [shape: bf16[32,48], index: 0, kind: input, shape index: {}]
  %s1 = inlined_call_operand.vmem [shape: bf16[48,128], index: 1, kind: input, shape index: {}]
  %s2 = inlined_call_operand.vmem [shape: f32[32,128], index: 2, kind: output, shape index: {}]
  %s3 = sld [smem:[#allocation0]]
  $region18: #{_lambda_.5} parent=0
    _
  %s5 = ssub.s32 1, %s3
  %s6 = scalar_select 0, %s5, %s3
  // Predicated region
  $region2: #{_lambda_.5} parent=0 // pred_check
    _
  $region3: #{_lambda_.5} parent=0 // pred_check_branch
    %8 = sbr.rel (0) target = $region5
  $region4: #{_lambda_.5} parent=0 // pred_region
    _
  $region5: #{_lambda_.5} parent=0 // pred_fallthru
    _
  // Predicated region
  $region6: #{_lambda_.5} parent=0 // pred_check
    _
  $region7: #{_lambda_.5} parent=0 // pred_check_branch
    %10 = sbr.rel (0) target = $region9
  $region8: #{_lambda_.5} parent=0 // pred_region
    _
  $region9: #{_lambda_.5} parent=0 // pred_fallthru
    _
  %v12 = vld [vmem:[%s0] sm:$0xf]
  %v13 = vld [vmem:[%s0 + $0x4] sm:$0xf]
  %v14 = vld [vmem:[%s0 + $0x8] sm:$0xf]
  %v15 = vld [vmem:[%s0 + $0xc] sm:$0xf]
  %v16 = vld [vmem:[%s1] sm:$0xf]
  %v17 = vld [vmem:[%s1 + $0x4] sm:$0xf]
  %v18 = vld [vmem:[%s1 + $0x8] sm:$0xf]
  %v19 = vld [vmem:[%s1 + $0xc] sm:$0xf]
  %v20 = vld [vmem:[%s1 + $0x10] sm:$0xf]
  %v21 = vld [vmem:[%s1 + $0x14] sm:$0xf]
  %v26 = vunpack.c.l.b16 %v12
  %v27 = vunpack.c.l.b16 %v13
  %v28 = vunpack.c.l.b16 %v14
  %v29 = vunpack.c.l.b16 %v15
  %v30 = vpack.c.b16 %v27, %v26
  %v31 = vpack.c.b16 %v29, %v28
  %v38 = vunpack.c.l.b16 %v16
  %v39 = vunpack.c.l.b16 %v17
  %v40 = vunpack.c.l.b16 %v18
  %v41 = vunpack.c.l.b16 %v19
  %v42 = vunpack.c.l.b16 %v20
  %v43 = vunpack.c.l.b16 %v21
  %v44 = vpack.c.b16 %v39, %v38
  %v45 = vpack.c.b16 %v41, %v40
  %v46 = vpack.c.b16 %v43, %v42
  %vm50 = vcmask 392192
  %v52 = vsel %vm50, %v30, 0
  %v55 = vsel %vm50, %v31, 0
  %57 = vmatprep.subr.bf16.mxu0 0
  %58 = vmatpush1.bf16.msra.mxu0 0
  %59 = vmatprep.subr.bf16.mxu0 0
  %60 = vmatpush1.bf16.msra.mxu0 0
  %61 = vmatprep.subr.bf16.mxu0 0
  %62 = vmatpush1.bf16.msra.mxu0 0
  %63 = vmatprep.subr.bf16.mxu0 0
  %64 = vmatpush1.bf16.msra.mxu0 0
  %65 = vmatprep.subr.bf16.mxu0 0
  %66 = vmatpush1.bf16.msra.mxu0 0
  %67 = vmatprep.subr.bf16.mxu0 0
  %68 = vmatpush1.bf16.msra.mxu0 %v46
  %69 = vmatprep.subr.bf16.mxu0 0
  %70 = vmatpush1.bf16.msra.mxu0 %v45
  %71 = vmatprep.subr.bf16.mxu0 0
  %72 = vmatpush1.bf16.msra.mxu0 %v44
  %73 = vmatprep.subr.bf16.mxu0 0
  %74 = vmatpush2.bf16.msra.mxu0 0
  %75 = vmatprep.subr.bf16.mxu0 0
  %76 = vmatpush2.bf16.msra.mxu0 0
  %77 = vmatprep.subr.bf16.mxu0 0
  %78 = vmatpush2.bf16.msra.mxu0 0
  %79 = vmatprep.subr.bf16.mxu0 0
  %80 = vmatpush2.bf16.msra.mxu0 0
  %81 = vmatprep.subr.bf16.mxu0 0
  %82 = vmatpush2.bf16.msra.mxu0 0
  %83 = vmatprep.subr.bf16.mxu0 0
  %84 = vmatpush2.bf16.msra.mxu0 0
  %85 = vmatprep.subr.bf16.mxu0 0
  %86 = vmatpush2.bf16.msra.mxu0 0
  %87 = vmatprep.subr.bf16.mxu0 0
  %88 = vmatpush2.bf16.msra.mxu0 0
  %89 = vmatprep.mubr.bf16.mxu0 0
  %90 = vmatmul.mubr.bf16.gmra.mxu0 %v52
  %v91 = vpop.f32.mrf.mxu0
  %v92 = vadd.f32 0.0, %v91
  %v93 = vpop.f32.mrf.mxu0
  %v94 = vpop.f32.mrf.mxu0
  %v95 = vadd.f32 0.0, %v94
  %v96 = vpop.f32.mrf.mxu0
  %97 = vmatprep.mubr.bf16.mxu0 0
  %98 = vmatmul.mubr.bf16.gmra.mxu0 %v55
  %v99 = vpop.f32.mrf.mxu0
  %v100 = vadd.f32 0.0, %v99
  %v101 = vpop.f32.mrf.mxu0
  %v102 = vpop.f32.mrf.mxu0
  %v103 = vadd.f32 0.0, %v102
  %v104 = vpop.f32.mrf.mxu0
  %105 = vdwg.mxu0
  %106 = vst [vmem:[%s2] sm:$0xff] %v92
  %107 = vst [vmem:[%s2 + $0x8] sm:$0xff] %v95
  %108 = vst [vmem:[%s2 + $0x10] sm:$0xff] %v100
  %109 = vst [vmem:[%s2 + $0x18] sm:$0xff] %v103
  // Predicated region
  $region10: #{_lambda_.5} parent=0 // pred_check
    _
  $region11: #{_lambda_.5} parent=0 // pred_check_branch
    %111 = sbr.rel (0) target = $region13
  $region12: #{_lambda_.5} parent=0 // pred_region
    _
  $region13: #{_lambda_.5} parent=0 // pred_fallthru
    _
  // Predicated region
  $region14: #{_lambda_.5} parent=0 // pred_check
    _
  $region15: #{_lambda_.5} parent=0 // pred_check_branch
    %113 = sbr.rel (0) target = $region17
  $region16: #{_lambda_.5} parent=0 // pred_region
    _
  $region17: #{_lambda_.5} parent=0 // pred_fallthru
    _

// kernel: _lambda_.7
$region0: #{_lambda_.7}
  #allocation0 [shape = 'u32[]', space=smem, size = 0x4, offset = 0x4, fixed_abs, tag = 'smem constant byte address 0x4 - core index']
  #allocation1 [shape = 'u32[144,128]{1,0:T(1,128)}', space=vmem, size = 0x12000, scoped, tag = 'internal scratch']
  %s0 = inlined_call_operand.vmem [shape: f32[2,128], index: 0, kind: input, shape index: {}]
  %s1 = inlined_call_operand.vmem [shape: f32[1,128], index: 1, kind: input, shape index: {}]
  %s2 = inlined_call_operand.vmem [shape: f32[1,128], index: 2, kind: input, shape index: {}]
  %s3 = inlined_call_operand.vmem [shape: bf16[128,128], index: 3, kind: input, shape index: {}]
  %s4 = inlined_call_operand.hbm [shape: f32[2,128], index: 4, kind: output, shape index: {}]
  %s5 = sld [smem:[#allocation0]]
  $region26: #{_lambda_.7} parent=0
    _
  %s7 = ssub.s32 1, %s5
  %s8 = scalar_select 0, %s7, %s5
  $region1: #{_lambda_.7} parent=0
    #allocation2 [shape = 'u8[1024]{0}', space=vmem, size = 0x400, scoped, tag = 'output window, operand 0, single buffered']
    #allocation3 [shape = 's32[1]{0}', space=sflag, size = 0x4, scoped, tag = 'scoped memory for _lambda_.7']
    %9 = vsyncpa [#allocation3], 0
    // Predicated region
    $region2: #{_lambda_.7} parent=1 // pred_check
      _
    $region3: #{_lambda_.7} parent=1 // pred_check_branch
      %11 = sbr.rel (0) target = $region5
    $region4: #{_lambda_.7} parent=1 // pred_region
      _
    $region5: #{_lambda_.7} parent=1 // pred_fallthru
      _
    // Predicated region
    $region6: #{_lambda_.7} parent=1 // pred_check
      _
    $region7: #{_lambda_.7} parent=1 // pred_check_branch
      %13 = sbr.rel (0) target = $region9
    $region8: #{_lambda_.7} parent=1 // pred_region
      _
    $region9: #{_lambda_.7} parent=1 // pred_fallthru
      _
    // Predicated region
    $region10: #{_lambda_.7} parent=1 // pred_check
      _
    $region11: #{_lambda_.7} parent=1 // pred_check_branch
      %15 = sbr.rel (0) target = $region13
    $region12: #{_lambda_.7} parent=1 // pred_region
      _
    $region13: #{_lambda_.7} parent=1 // pred_fallthru
      _
    // Predicated region
    $region14: #{_lambda_.7} parent=1 // pred_check
      _
    $region15: #{_lambda_.7} parent=1 // pred_check_branch
      %17 = sbr.rel (0) target = $region17
    $region16: #{_lambda_.7} parent=1 // pred_region
      _
    $region17: #{_lambda_.7} parent=1 // pred_fallthru
      _
    %v19 = vld [vmem:[%s0] sm:$0x3]
    %v20 = vld [vmem:[%s1] sm:$0x1]
    %v21 = vld [vmem:[%s2] sm:$0x1]
    %vm22 = vcmask 1041408
    %v23 = vsel %vm22, %v19, 0.0
    %24 = vadd.xlane.f32.xlu0 %v23
    %v25 = vpop.xlane.xlu0 %24
    %v26 = vrcp.pop 128.0
    %v27 = vmul.f32 %v25, %v26
    %v28 = vsub.f32 %v19, %v27
    %v29 = vmul.f32 %v28, %v28
    %v30 = vsel %vm22, %v29, 0.0
    %31 = vadd.xlane.f32.xlu0 %v30
    %v32 = vpop.xlane.xlu0 %31
    %v33 = vmul.f32 %v32, %v26
    %v34 = vadd.f32 %v33, 1e-05
    %v35 = vrsqrt.pop %v34
    %v36 = vmul.f32 %v28, %v35
    %v38 = vlaneseq
    %v39 = vshrl.u32 %v38, 7
    %v40 = vsub.s32 0, %v39
    %v41 = vrot.slane %v20, %v40
    %v43 = vmul.f32 %v36, %v41
    %v45 = vlaneseq
    %v46 = vshrl.u32 %v45, 7
    %v47 = vsub.s32 0, %v46
    %v48 = vrot.slane %v21, %v47
    %v50 = vadd.f32 %v43, %v48
    %v51 = vpack.c.bf16 %v50, %v50
    %v52 = vld [vmem:[%s3] sm:$0xf]
    %v53 = vld [vmem:[%s3 + $0x4] sm:$0xf]
    %v54 = vld [vmem:[%s3 + $0x8] sm:$0xf]
    %v55 = vld [vmem:[%s3 + $0xc] sm:$0xf]
    %v56 = vld [vmem:[%s3 + $0x10] sm:$0xf]
    %v57 = vld [vmem:[%s3 + $0x14] sm:$0xf]
    %v58 = vld [vmem:[%s3 + $0x18] sm:$0xf]
    %v59 = vld [vmem:[%s3 + $0x1c] sm:$0xf]
    %v60 = vld [vmem:[%s3 + $0x20] sm:$0xf]
    %v61 = vld [vmem:[%s3 + $0x24] sm:$0xf]
    %v62 = vld [vmem:[%s3 + $0x28] sm:$0xf]
    %v63 = vld [vmem:[%s3 + $0x2c] sm:$0xf]
    %v64 = vld [vmem:[%s3 + $0x30] sm:$0xf]
    %v65 = vld [vmem:[%s3 + $0x34] sm:$0xf]
    %v66 = vld [vmem:[%s3 + $0x38] sm:$0xf]
    %v67 = vld [vmem:[%s3 + $0x3c] sm:$0xf]
    %v84 = vunpack.c.l.b16 %v52
    %v85 = vunpack.c.l.b16 %v53
    %v86 = vunpack.c.l.b16 %v54
    %v87 = vunpack.c.l.b16 %v55
    %v88 = vunpack.c.l.b16 %v56
    %v89 = vunpack.c.l.b16 %v57
    %v90 = vunpack.c.l.b16 %v58
    %v91 = vunpack.c.l.b16 %v59
    %v92 = vunpack.c.l.b16 %v60
    %v93 = vunpack.c.l.b16 %v61
    %v94 = vunpack.c.l.b16 %v62
    %v95 = vunpack.c.l.b16 %v63
    %v96 = vunpack.c.l.b16 %v64
    %v97 = vunpack.c.l.b16 %v65
    %v98 = vunpack.c.l.b16 %v66
    %v99 = vunpack.c.l.b16 %v67
    %v100 = vpack.c.b16 %v85, %v84
    %v101 = vpack.c.b16 %v87, %v86
    %v102 = vpack.c.b16 %v89, %v88
    %v103 = vpack.c.b16 %v91, %v90
    %v104 = vpack.c.b16 %v93, %v92
    %v105 = vpack.c.b16 %v95, %v94
    %v106 = vpack.c.b16 %v97, %v96
    %v107 = vpack.c.b16 %v99, %v98
    %116 = vmatprep.subr.bf16.mxu0 0
    %117 = vmatpush1.bf16.msra.mxu0 %v107
    %118 = vmatprep.subr.bf16.mxu0 0
    %119 = vmatpush1.bf16.msra.mxu0 %v106
    %120 = vmatprep.subr.bf16.mxu0 0
    %121 = vmatpush1.bf16.msra.mxu0 %v105
    %122 = vmatprep.subr.bf16.mxu0 0
    %123 = vmatpush1.bf16.msra.mxu0 %v104
    %124 = vmatprep.subr.bf16.mxu0 0
    %125 = vmatpush1.bf16.msra.mxu0 %v103
    %126 = vmatprep.subr.bf16.mxu0 0
    %127 = vmatpush1.bf16.msra.mxu0 %v102
    %128 = vmatprep.subr.bf16.mxu0 0
    %129 = vmatpush1.bf16.msra.mxu0 %v101
    %130 = vmatprep.subr.bf16.mxu0 0
    %131 = vmatpush1.bf16.msra.mxu0 %v100
    %132 = vmatprep.subr.bf16.mxu0 0
    %133 = vmatpush2.bf16.msra.mxu0 0
    %134 = vmatprep.subr.bf16.mxu0 0
    %135 = vmatpush2.bf16.msra.mxu0 0
    %136 = vmatprep.subr.bf16.mxu0 0
    %137 = vmatpush2.bf16.msra.mxu0 0
    %138 = vmatprep.subr.bf16.mxu0 0
    %139 = vmatpush2.bf16.msra.mxu0 0
    %140 = vmatprep.subr.bf16.mxu0 0
    %141 = vmatpush2.bf16.msra.mxu0 0
    %142 = vmatprep.subr.bf16.mxu0 0
    %143 = vmatpush2.bf16.msra.mxu0 0
    %144 = vmatprep.subr.bf16.mxu0 0
    %145 = vmatpush2.bf16.msra.mxu0 0
    %146 = vmatprep.subr.bf16.mxu0 0
    %147 = vmatpush2.bf16.msra.mxu0 0
    %148 = vmatprep.mubr.bf16.mxu0 0
    %149 = vmatmul.mubr.bf16.gmra.mxu0 %v51
    %v150 = vpop.f32.mrf.mxu0
    %v151 = vadd.f32 0.0, %v150
    %v152 = vpop.f32.mrf.mxu0
    %v153 = vpop.f32.mrf.mxu0
    %v154 = vpop.f32.mrf.mxu0
    %155 = vdwg.mxu0
    %156 = vst [vmem:[#allocation2] sm:$0x3] %v151
    // Predicated region
    $region18: #{_lambda_.7} parent=1 // pred_check
      _
    $region19: #{_lambda_.7} parent=1 // pred_check_branch
      %158 = sbr.rel (0) target = $region21
    $region20: #{_lambda_.7} parent=1 // pred_region
      %s160 = ssub.s32 32, 32
      %161 = vsyncadd [#allocation3], %s160
      %s163 = sshll.u32 [#allocation2], 4
      %s164 = int_to_ptr.vmem [resolvable:$true] %s163
      %166 = dma.vmem_to_hbm [thread:$0]  %s164, 32, %s4, [#allocation3]
    $region21: #{_lambda_.7} parent=1 // pred_fallthru
      _
    // Predicated region
    $region22: #{_lambda_.7} parent=1 // pred_check
      _
    $region23: #{_lambda_.7} parent=1 // pred_check_branch
      %168 = sbr.rel (0) target = $region25
    $region24: #{_lambda_.7} parent=1 // pred_region
      %169 = dma.done [#allocation3], 32
    $region25: #{_lambda_.7} parent=1 // pred_fallthru
      _
    %170 = vsyncpa [#allocation3], 1

// kernel: _lambda_.9
$region0: #{_lambda_.9}
  #allocation0 [shape = 'u32[]', space=smem, size = 0x4, offset = 0x4, fixed_abs, tag = 'smem constant byte address 0x4 - core index']
  #allocation1 [shape = 'u32[144,128]{1,0:T(1,128)}', space=vmem, size = 0x12000, scoped, tag = 'internal scratch']
  %s0 = inlined_call_operand.vmem [shape: f32[3,128], index: 0, kind: input, shape index: {}]
  %s1 = inlined_call_operand.vmem [shape: f32[1,128], index: 1, kind: input, shape index: {}]
  %s2 = inlined_call_operand.vmem [shape: f32[1,128], index: 2, kind: input, shape index: {}]
  %s3 = inlined_call_operand.vmem [shape: bf16[128,128], index: 3, kind: input, shape index: {}]
  %s4 = inlined_call_operand.hbm [shape: f32[3,128], index: 4, kind: output, shape index: {}]
  %s5 = sld [smem:[#allocation0]]
  $region26: #{_lambda_.9} parent=0
    _
  %s7 = ssub.s32 1, %s5
  %s8 = scalar_select 0, %s7, %s5
  $region1: #{_lambda_.9} parent=0
    #allocation2 [shape = 'u8[2048]{0}', space=vmem, size = 0x800, scoped, tag = 'output window, operand 0, single buffered']
    #allocation3 [shape = 's32[1]{0}', space=sflag, size = 0x4, scoped, tag = 'scoped memory for _lambda_.9']
    %9 = vsyncpa [#allocation3], 0
    // Predicated region
    $region2: #{_lambda_.9} parent=1 // pred_check
      _
    $region3: #{_lambda_.9} parent=1 // pred_check_branch
      %11 = sbr.rel (0) target = $region5
    $region4: #{_lambda_.9} parent=1 // pred_region
      _
    $region5: #{_lambda_.9} parent=1 // pred_fallthru
      _
    // Predicated region
    $region6: #{_lambda_.9} parent=1 // pred_check
      _
    $region7: #{_lambda_.9} parent=1 // pred_check_branch
      %13 = sbr.rel (0) target = $region9
    $region8: #{_lambda_.9} parent=1 // pred_region
      _
    $region9: #{_lambda_.9} parent=1 // pred_fallthru
      _
    // Predicated region
    $region10: #{_lambda_.9} parent=1 // pred_check
      _
    $region11: #{_lambda_.9} parent=1 // pred_check_branch
      %15 = sbr.rel (0) target = $region13
    $region12: #{_lambda_.9} parent=1 // pred_region
      _
    $region13: #{_lambda_.9} parent=1 // pred_fallthru
      _
    // Predicated region
    $region14: #{_lambda_.9} parent=1 // pred_check
      _
    $region15: #{_lambda_.9} parent=1 // pred_check_branch
      %17 = sbr.rel (0) target = $region17
    $region16: #{_lambda_.9} parent=1 // pred_region
      _
    $region17: #{_lambda_.9} parent=1 // pred_fallthru
      _
    %v19 = vld [vmem:[%s0] sm:$0x7]
    %v20 = vld [vmem:[%s1] sm:$0x1]
    %v21 = vld [vmem:[%s2] sm:$0x1]
    %vm22 = vcmask 1042432
    %v23 = vsel %vm22, %v19, 0.0
    %24 = vadd.xlane.f32.xlu0 %v23
    %v25 = vpop.xlane.xlu0 %24
    %v26 = vrcp.pop 128.0
    %v27 = vmul.f32 %v25, %v26
    %v28 = vsub.f32 %v19, %v27
    %v29 = vmul.f32 %v28, %v28
    %v30 = vsel %vm22, %v29, 0.0
    %31 = vadd.xlane.f32.xlu0 %v30
    %v32 = vpop.xlane.xlu0 %31
    %v33 = vmul.f32 %v32, %v26
    %v34 = vadd.f32 %v33, 1e-05
    %v35 = vrsqrt.pop %v34
    %v36 = vmul.f32 %v28, %v35
    %v38 = vlaneseq
    %v39 = vshrl.u32 %v38, 7
    %v40 = vsub.s32 0, %v39
    %v41 = vrot.slane %v20, %v40
    %v43 = vmul.f32 %v36, %v41
    %v45 = vlaneseq
    %v46 = vshrl.u32 %v45, 7
    %v47 = vsub.s32 0, %v46
    %v48 = vrot.slane %v21, %v47
    %v50 = vadd.f32 %v43, %v48
    %v51 = vpack.c.bf16 %v50, %v50
    %v52 = vld [vmem:[%s3] sm:$0xf]
    %v53 = vld [vmem:[%s3 + $0x4] sm:$0xf]
    %v54 = vld [vmem:[%s3 + $0x8] sm:$0xf]
    %v55 = vld [vmem:[%s3 + $0xc] sm:$0xf]
    %v56 = vld [vmem:[%s3 + $0x10] sm:$0xf]
    %v57 = vld [vmem:[%s3 + $0x14] sm:$0xf]
    %v58 = vld [vmem:[%s3 + $0x18] sm:$0xf]
    %v59 = vld [vmem:[%s3 + $0x1c] sm:$0xf]
    %v60 = vld [vmem:[%s3 + $0x20] sm:$0xf]
    %v61 = vld [vmem:[%s3 + $0x24] sm:$0xf]
    %v62 = vld [vmem:[%s3 + $0x28] sm:$0xf]
    %v63 = vld [vmem:[%s3 + $0x2c] sm:$0xf]
    %v64 = vld [vmem:[%s3 + $0x30] sm:$0xf]
    %v65 = vld [vmem:[%s3 + $0x34] sm:$0xf]
    %v66 = vld [vmem:[%s3 + $0x38] sm:$0xf]
    %v67 = vld [vmem:[%s3 + $0x3c] sm:$0xf]
    %v84 = vunpack.c.l.b16 %v52
    %v85 = vunpack.c.l.b16 %v53
    %v86 = vunpack.c.l.b16 %v54
    %v87 = vunpack.c.l.b16 %v55
    %v88 = vunpack.c.l.b16 %v56
    %v89 = vunpack.c.l.b16 %v57
    %v90 = vunpack.c.l.b16 %v58
    %v91 = vunpack.c.l.b16 %v59
    %v92 = vunpack.c.l.b16 %v60
    %v93 = vunpack.c.l.b16 %v61
    %v94 = vunpack.c.l.b16 %v62
    %v95 = vunpack.c.l.b16 %v63
    %v96 = vunpack.c.l.b16 %v64
    %v97 = vunpack.c.l.b16 %v65
    %v98 = vunpack.c.l.b16 %v66
    %v99 = vunpack.c.l.b16 %v67
    %v100 = vpack.c.b16 %v85, %v84
    %v101 = vpack.c.b16 %v87, %v86
    %v102 = vpack.c.b16 %v89, %v88
    %v103 = vpack.c.b16 %v91, %v90
    %v104 = vpack.c.b16 %v93, %v92
    %v105 = vpack.c.b16 %v95, %v94
    %v106 = vpack.c.b16 %v97, %v96
    %v107 = vpack.c.b16 %v99, %v98
    %116 = vmatprep.subr.bf16.mxu0 0
    %117 = vmatpush1.bf16.msra.mxu0 %v107
    %118 = vmatprep.subr.bf16.mxu0 0
    %119 = vmatpush1.bf16.msra.mxu0 %v106
    %120 = vmatprep.subr.bf16.mxu0 0
    %121 = vmatpush1.bf16.msra.mxu0 %v105
    %122 = vmatprep.subr.bf16.mxu0 0
    %123 = vmatpush1.bf16.msra.mxu0 %v104
    %124 = vmatprep.subr.bf16.mxu0 0
    %125 = vmatpush1.bf16.msra.mxu0 %v103
    %126 = vmatprep.subr.bf16.mxu0 0
    %127 = vmatpush1.bf16.msra.mxu0 %v102
    %128 = vmatprep.subr.bf16.mxu0 0
    %129 = vmatpush1.bf16.msra.mxu0 %v101
    %130 = vmatprep.subr.bf16.mxu0 0
    %131 = vmatpush1.bf16.msra.mxu0 %v100
    %132 = vmatprep.subr.bf16.mxu0 0
    %133 = vmatpush2.bf16.msra.mxu0 0
    %134 = vmatprep.subr.bf16.mxu0 0
    %135 = vmatpush2.bf16.msra.mxu0 0
    %136 = vmatprep.subr.bf16.mxu0 0
    %137 = vmatpush2.bf16.msra.mxu0 0
    %138 = vmatprep.subr.bf16.mxu0 0
    %139 = vmatpush2.bf16.msra.mxu0 0
    %140 = vmatprep.subr.bf16.mxu0 0
    %141 = vmatpush2.bf16.msra.mxu0 0
    %142 = vmatprep.subr.bf16.mxu0 0
    %143 = vmatpush2.bf16.msra.mxu0 0
    %144 = vmatprep.subr.bf16.mxu0 0
    %145 = vmatpush2.bf16.msra.mxu0 0
    %146 = vmatprep.subr.bf16.mxu0 0
    %147 = vmatpush2.bf16.msra.mxu0 0
    %148 = vmatprep.mubr.bf16.mxu0 0
    %149 = vmatmul.mubr.bf16.gmra.mxu0 %v51
    %v150 = vpop.f32.mrf.mxu0
    %v151 = vadd.f32 0.0, %v150
    %v152 = vpop.f32.mrf.mxu0
    %v153 = vpop.f32.mrf.mxu0
    %v154 = vpop.f32.mrf.mxu0
    %155 = vdwg.mxu0
    %156 = vst [vmem:[#allocation2] sm:$0x7] %v151
    // Predicated region
    $region18: #{_lambda_.9} parent=1 // pred_check
      _
    $region19: #{_lambda_.9} parent=1 // pred_check_branch
      %158 = sbr.rel (0) target = $region21
    $region20: #{_lambda_.9} parent=1 // pred_region
      %s160 = ssub.s32 64, 64
      %161 = vsyncadd [#allocation3], %s160
      %s163 = sshll.u32 [#allocation2], 4
      %s164 = int_to_ptr.vmem [resolvable:$true] %s163
      %166 = dma.vmem_to_hbm [thread:$0]  %s164, 64, %s4, [#allocation3]
    $region21: #{_lambda_.9} parent=1 // pred_fallthru
      _
    // Predicated region
    $region22: #{_lambda_.9} parent=1 // pred_check
      _
    $region23: #{_lambda_.9} parent=1 // pred_check_branch
      %168 = sbr.rel (0) target = $region25
    $region24: #{_lambda_.9} parent=1 // pred_region
      %169 = dma.done [#allocation3], 64
    $region25: #{_lambda_.9} parent=1 // pred_fallthru
      _
    %170 = vsyncpa [#allocation3], 1

// kernel: _lambda_.6
$region0: #{_lambda_.6}
  #allocation0 [shape = 'u32[]', space=smem, size = 0x4, offset = 0x4, fixed_abs, tag = 'smem constant byte address 0x4 - core index']
  #allocation1 [shape = 'u32[144,128]{1,0:T(1,128)}', space=vmem, size = 0x12000, scoped, tag = 'internal scratch']
  #allocation2 [shape = 'f32[24,128]{1,0:T(8,128)}', space=vmem, size = 0x3000, scoped, tag = 'scratch operand']
  %s0 = inlined_call_operand.vmem [shape: f32[2,24,128], index: 0, kind: input, shape index: {}]
  %s1 = inlined_call_operand.vmem [shape: f32[24,128], index: 1, kind: input, shape index: {}]
  %s2 = inlined_call_operand.vmem [shape: f32[24,24], index: 2, kind: input, shape index: {}]
  %s3 = inlined_call_operand.vmem [shape: f32[1,128], index: 3, kind: input, shape index: {}]
  %s4 = inlined_call_operand.vmem [shape: f32[1,128], index: 4, kind: input, shape index: {}]
  %s5 = inlined_call_operand.vmem [shape: f32[2,1,128], index: 5, kind: input, shape index: {}]
  %s6 = inlined_call_operand.vmem [shape: f32[2,1,128], index: 6, kind: input, shape index: {}]
  %s7 = inlined_call_operand.hbm [shape: bf16[2,128,384], index: 7, kind: input, shape index: {}]
  %s8 = inlined_call_operand.vmem [shape: f32[2,1,384], index: 8, kind: input, shape index: {}]
  %s9 = inlined_call_operand.vmem [shape: bf16[2,128,128], index: 9, kind: input, shape index: {}]
  %s10 = inlined_call_operand.vmem [shape: f32[2,1,128], index: 10, kind: input, shape index: {}]
  %s11 = inlined_call_operand.vmem [shape: f32[2,1,128], index: 11, kind: input, shape index: {}]
  %s12 = inlined_call_operand.vmem [shape: f32[2,1,128], index: 12, kind: input, shape index: {}]
  %s13 = inlined_call_operand.vmem [shape: bf16[2,128,512], index: 13, kind: input, shape index: {}]
  %s14 = inlined_call_operand.vmem [shape: f32[2,1,512], index: 14, kind: input, shape index: {}]
  %s15 = inlined_call_operand.vmem [shape: bf16[2,512,128], index: 15, kind: input, shape index: {}]
  %s16 = inlined_call_operand.vmem [shape: f32[2,1,128], index: 16, kind: input, shape index: {}]
  %s17 = inlined_call_operand.vmem [shape: f32[2,24,128], index: 17, kind: output, shape index: {}]
  %s18 = sld [smem:[#allocation0]]
  $region113: #{_lambda_.6} parent=0
    _
  %s20 = ssub.s32 1, %s18
  %s21 = scalar_select 0, %s20, %s18
  $region1: #{_lambda_.6} parent=0
    #allocation3 [shape = 'u8[196608]{0}', space=vmem, size = 0x30000, scoped, tag = 'input window, operand 7']
    #allocation4 [shape = 's32[2]{0}', space=sflag, size = 0x8, scoped, tag = 'scoped memory for _lambda_.6']
    %22 = vsyncpa [#allocation4], 0
    %s23 = scalar_lea.sflag [#allocation4], 1
    %24 = vsyncpa %s23, 0
    loop: start=0, step=1, limit=6
    $region2: #{_lambda_.6} parent=1 // loop_pre_header
      _
    $region3: #{_lambda_.6} parent=1 // loop_header
      %s26 = sphi 0, %s30
      %p27 = scmp.ge.s32.totalorder %s26, 6
      %s33 = sphi 0, %s45
      %s34 = sphi 0, %s41
      %s35 = sphi 0, %s33
      %s36 = sphi 0, %s34
      %s37 = sphi 0, %s35
      %s38 = sphi 0, %s36
      %s48 = sphi 0, %s50
      %s51 = sphi 0, %s48
      %s52 = sphi 0, %s51
      %s68 = sphi 0, %s52
      %s72 = sphi 0, %s72
      %s74 = sphi 0, %s72
      %s75 = sphi 0, %s74
      %s89 = sphi 0, %s75
      %s93 = sphi 0, %s93
      %s95 = sphi 0, %s93
      %s96 = sphi 0, %s95
      %s110 = sphi 0, %s96
      %s114 = sphi 0, %s114
      %s116 = sphi 0, %s114
      %s117 = sphi 0, %s116
      %s131 = sphi 0, %s117
      %s135 = sphi 0, %s135
      %s137 = sphi 0, %s135
      %s138 = sphi 0, %s137
      %s152 = sphi 0, %s138
      %s158 = sphi 0, %s160
      %s161 = sphi 0, %s158
      %s162 = sphi 0, %s161
      %s178 = sphi 0, %s162
      %s184 = sphi 0, %s186
      %s187 = sphi 0, %s184
      %s188 = sphi 0, %s187
      %s204 = sphi 0, %s188
      %s210 = sphi 0, %s212
      %s213 = sphi 0, %s210
      %s214 = sphi 0, %s213
      %s230 = sphi 0, %s214
      %s236 = sphi 0, %s238
      %s239 = sphi 0, %s236
      %s240 = sphi 0, %s239
      %s256 = sphi 0, %s240
      %s262 = sphi 0, %s264
      %s265 = sphi 0, %s262
      %s266 = sphi 0, %s265
      %s282 = sphi 0, %s266
      %s288 = sphi 0, %s290
      %s291 = sphi 0, %s288
      %s292 = sphi 0, %s291
      %s308 = sphi 0, %s292
      %s314 = sphi 0, %s316
      %s317 = sphi 0, %s314
      %s318 = sphi 0, %s317
      %s334 = sphi 0, %s318
      %s340 = sphi 0, %s342
      %s343 = sphi 0, %s340
      %s344 = sphi 0, %s343
      %s360 = sphi 0, %s344
      %s366 = sphi 0, %s368
      %s369 = sphi 0, %s366
      %s370 = sphi 0, %s369
      %s386 = sphi 0, %s370
      %s392 = sphi 0, %s394
      %s395 = sphi 0, %s392
      %s396 = sphi 0, %s395
      %s412 = sphi 0, %s396
      %s418 = sphi 0, %s420
      %s421 = sphi 0, %s418
      %s422 = sphi 0, %s421
      %s438 = sphi 0, %s422
      %s444 = sphi 0, %s446
      %s447 = sphi 0, %s444
      %s448 = sphi 0, %s447
      %s464 = sphi 0, %s448
      %s470 = sphi 0, %s472
      %s473 = sphi 0, %s470
      %s474 = sphi 0, %s473
      %s490 = sphi 0, %s474
    $region4: #{_lambda_.6} parent=1 // loop_header_branch
      %29 = sbr.rel (%p27) target = $region8
    $region5: #{_lambda_.6} parent=1 // loop_body
      %s31 = ssub.s32 %s26, 1
      %s32 = ssub.s32 %s26, 2
      %s39 = sadd.s32 1, %s34
      %p40 = scmp.ge.s32.totalorder %s39, 2
      %s41 = scalar_select %p40, 0, %s39
      %s42 = sadd.s32 1, %s33
      %s43 = scalar_select %p40, %s42, %s33
      %p44 = scmp.ge.s32.totalorder %s43, 2
      %s45 = scalar_select %p44, 0, %s43
      %s46 = ssub.s32 %s33, %s45
      %p47 = scmp.eq.s32.totalorder %s46, 0
      %s49 = sadd.s32 %s48, 1
      %s50 = scalar_select %p47, %s48, %s49
      %p53 = pneg %p47
      %p54 = scmp.eq.s32.totalorder %s26, 3
      %p55 = por %p53, %p54
      %p56 = scmp.ne.s32.totalorder %s48, %s51
      %p57 = scmp.eq.s32.totalorder %s26, 0
      %p58 = por %p56, %p57
      %p59 = scmp.ne.s32.totalorder %s48, %s51
      %p60 = scmp.eq.s32.totalorder %s31, 3
      %p61 = por %p59, %p60
      %p62 = scmp.ne.s32.totalorder %s51, %s52
      %p63 = scmp.eq.s32.totalorder %s31, 0
      %p64 = por %p62, %p63
      %p65 = scmp.ne.s32.totalorder %s51, %s52
      %p66 = scmp.eq.s32.totalorder %s32, 3
      %p67 = por %p65, %p66
      %p69 = scmp.ne.s32.totalorder %s52, %s68
      %p70 = scmp.eq.s32.totalorder %s32, 0
      %p71 = por %p69, %p70
      %s73 = sadd.s32 %s72, 1
      %p76 = scmp.eq.s32.totalorder %s26, 3
      %p77 = scmp.ne.s32.totalorder %s72, %s74
      %p78 = scmp.eq.s32.totalorder %s26, 0
      %p79 = por %p77, %p78
      %p80 = scmp.ne.s32.totalorder %s72, %s74
      %p81 = scmp.eq.s32.totalorder %s31, 3
      %p82 = por %p80, %p81
      %p83 = scmp.ne.s32.totalorder %s74, %s75
      %p84 = scmp.eq.s32.totalorder %s31, 0
      %p85 = por %p83, %p84
      %p86 = scmp.ne.s32.totalorder %s74, %s75
      %p87 = scmp.eq.s32.totalorder %s32, 3
      %p88 = por %p86, %p87
      %p90 = scmp.ne.s32.totalorder %s75, %s89
      %p91 = scmp.eq.s32.totalorder %s32, 0
      %p92 = por %p90, %p91
      %s94 = sadd.s32 %s93, 1
      %p97 = scmp.eq.s32.totalorder %s26, 3
      %p98 = scmp.ne.s32.totalorder %s93, %s95
      %p99 = scmp.eq.s32.totalorder %s26, 0
      %p100 = por %p98, %p99
      %p101 = scmp.ne.s32.totalorder %s93, %s95
      %p102 = scmp.eq.s32.totalorder %s31, 3
      %p103 = por %p101, %p102
      %p104 = scmp.ne.s32.totalorder %s95, %s96
      %p105 = scmp.eq.s32.totalorder %s31, 0
      %p106 = por %p104, %p105
      %p107 = scmp.ne.s32.totalorder %s95, %s96
      %p108 = scmp.eq.s32.totalorder %s32, 3
      %p109 = por %p107, %p108
      %p111 = scmp.ne.s32.totalorder %s96, %s110
      %p112 = scmp.eq.s32.totalorder %s32, 0
      %p113 = por %p111, %p112
      %s115 = sadd.s32 %s114, 1
      %p118 = scmp.eq.s32.totalorder %s26, 3
      %p119 = scmp.ne.s32.totalorder %s114, %s116
      %p120 = scmp.eq.s32.totalorder %s26, 0
      %p121 = por %p119, %p120
      %p122 = scmp.ne.s32.totalorder %s114, %s116
      %p123 = scmp.eq.s32.totalorder %s31, 3
      %p124 = por %p122, %p123
      %p125 = scmp.ne.s32.totalorder %s116, %s117
      %p126 = scmp.eq.s32.totalorder %s31, 0
      %p127 = por %p125, %p126
      %p128 = scmp.ne.s32.totalorder %s116, %s117
      %p129 = scmp.eq.s32.totalorder %s32, 3
      %p130 = por %p128, %p129
      %p132 = scmp.ne.s32.totalorder %s117, %s131
      %p133 = scmp.eq.s32.totalorder %s32, 0
      %p134 = por %p132, %p133
      %s136 = sadd.s32 %s135, 1
      %p139 = scmp.eq.s32.totalorder %s26, 3
      %p140 = scmp.ne.s32.totalorder %s135, %s137
      %p141 = scmp.eq.s32.totalorder %s26, 0
      %p142 = por %p140, %p141
      %p143 = scmp.ne.s32.totalorder %s135, %s137
      %p144 = scmp.eq.s32.totalorder %s31, 3
      %p145 = por %p143, %p144
      %p146 = scmp.ne.s32.totalorder %s137, %s138
      %p147 = scmp.eq.s32.totalorder %s31, 0
      %p148 = por %p146, %p147
      %p149 = scmp.ne.s32.totalorder %s137, %s138
      %p150 = scmp.eq.s32.totalorder %s32, 3
      %p151 = por %p149, %p150
      %p153 = scmp.ne.s32.totalorder %s138, %s152
      %p154 = scmp.eq.s32.totalorder %s32, 0
      %p155 = por %p153, %p154
      %s156 = ssub.s32 %s34, %s41
      %p157 = scmp.eq.s32.totalorder %s156, 0
      %s159 = sadd.s32 %s158, 1
      %s160 = scalar_select %p157, %s158, %s159
      %p163 = pneg %p157
      %p164 = scmp.eq.s32.totalorder %s26, 3
      %p165 = por %p163, %p164
      %p166 = scmp.ne.s32.totalorder %s158, %s161
      %p167 = scmp.eq.s32.totalorder %s26, 0
      %p168 = por %p166, %p167
      %p169 = scmp.ne.s32.totalorder %s158, %s161
      %p170 = scmp.eq.s32.totalorder %s31, 3
      %p171 = por %p169, %p170
      %p172 = scmp.ne.s32.totalorder %s161, %s162
      %p173 = scmp.eq.s32.totalorder %s31, 0
      %p174 = por %p172, %p173
      %p175 = scmp.ne.s32.totalorder %s161, %s162
      %p176 = scmp.eq.s32.totalorder %s32, 3
      %p177 = por %p175, %p176
      %p179 = scmp.ne.s32.totalorder %s162, %s178
      %p180 = scmp.eq.s32.totalorder %s32, 0
      %p181 = por %p179, %p180
      %s182 = ssub.s32 %s34, %s41
      %p183 = scmp.eq.s32.totalorder %s182, 0
      %s185 = sadd.s32 %s184, 1
      %s186 = scalar_select %p183, %s184, %s185
      %p189 = pneg %p183
      %p190 = scmp.eq.s32.totalorder %s26, 3
      %p191 = por %p189, %p190
      %p192 = scmp.ne.s32.totalorder %s184, %s187
      %p193 = scmp.eq.s32.totalorder %s26, 0
      %p194 = por %p192, %p193
      %p195 = scmp.ne.s32.totalorder %s184, %s187
      %p196 = scmp.eq.s32.totalorder %s31, 3
      %p197 = por %p195, %p196
      %p198 = scmp.ne.s32.totalorder %s187, %s188
      %p199 = scmp.eq.s32.totalorder %s31, 0
      %p200 = por %p198, %p199
      %p201 = scmp.ne.s32.totalorder %s187, %s188
      %p202 = scmp.eq.s32.totalorder %s32, 3
      %p203 = por %p201, %p202
      %p205 = scmp.ne.s32.totalorder %s188, %s204
      %p206 = scmp.eq.s32.totalorder %s32, 0
      %p207 = por %p205, %p206
      %s208 = ssub.s32 %s34, %s41
      %p209 = scmp.eq.s32.totalorder %s208, 0
      %s211 = sadd.s32 %s210, 1
      %s212 = scalar_select %p209, %s210, %s211
      %p215 = pneg %p209
      %p216 = scmp.eq.s32.totalorder %s26, 3
      %p217 = por %p215, %p216
      %p218 = scmp.ne.s32.totalorder %s210, %s213
      %p219 = scmp.eq.s32.totalorder %s26, 0
      %p220 = por %p218, %p219
      %p221 = scmp.ne.s32.totalorder %s210, %s213
      %p222 = scmp.eq.s32.totalorder %s31, 3
      %p223 = por %p221, %p222
      %p224 = scmp.ne.s32.totalorder %s213, %s214
      %p225 = scmp.eq.s32.totalorder %s31, 0
      %p226 = por %p224, %p225
      %p227 = scmp.ne.s32.totalorder %s213, %s214
      %p228 = scmp.eq.s32.totalorder %s32, 3
      %p229 = por %p227, %p228
      %p231 = scmp.ne.s32.totalorder %s214, %s230
      %p232 = scmp.eq.s32.totalorder %s32, 0
      %p233 = por %p231, %p232
      %s234 = ssub.s32 %s34, %s41
      %p235 = scmp.eq.s32.totalorder %s234, 0
      %s237 = sadd.s32 %s236, 1
      %s238 = scalar_select %p235, %s236, %s237
      %p241 = pneg %p235
      %p242 = scmp.eq.s32.totalorder %s26, 3
      %p243 = por %p241, %p242
      %p244 = scmp.ne.s32.totalorder %s236, %s239
      %p245 = scmp.eq.s32.totalorder %s26, 0
      %p246 = por %p244, %p245
      %p247 = scmp.ne.s32.totalorder %s236, %s239
      %p248 = scmp.eq.s32.totalorder %s31, 3
      %p249 = por %p247, %p248
      %p250 = scmp.ne.s32.totalorder %s239, %s240
      %p251 = scmp.eq.s32.totalorder %s31, 0
      %p252 = por %p250, %p251
      %p253 = scmp.ne.s32.totalorder %s239, %s240
      %p254 = scmp.eq.s32.totalorder %s32, 3
      %p255 = por %p253, %p254
      %p257 = scmp.ne.s32.totalorder %s240, %s256
      %p258 = scmp.eq.s32.totalorder %s32, 0
      %p259 = por %p257, %p258
      %s260 = ssub.s32 %s34, %s41
      %p261 = scmp.eq.s32.totalorder %s260, 0
      %s263 = sadd.s32 %s262, 1
      %s264 = scalar_select %p261, %s262, %s263
      %p267 = pneg %p261
      %p268 = scmp.eq.s32.totalorder %s26, 3
      %p269 = por %p267, %p268
      %p270 = scmp.ne.s32.totalorder %s262, %s265
      %p271 = scmp.eq.s32.totalorder %s26, 0
      %p272 = por %p270, %p271
      %p273 = scmp.ne.s32.totalorder %s262, %s265
      %p274 = scmp.eq.s32.totalorder %s31, 3
      %p275 = por %p273, %p274
      %p276 = scmp.ne.s32.totalorder %s265, %s266
      %p277 = scmp.eq.s32.totalorder %s31, 0
      %p278 = por %p276, %p277
      %p279 = scmp.ne.s32.totalorder %s265, %s266
      %p280 = scmp.eq.s32.totalorder %s32, 3
      %p281 = por %p279, %p280
      %p283 = scmp.ne.s32.totalorder %s266, %s282
      %p284 = scmp.eq.s32.totalorder %s32, 0
      %p285 = por %p283, %p284
      %s286 = ssub.s32 %s34, %s41
      %p287 = scmp.eq.s32.totalorder %s286, 0
      %s289 = sadd.s32 %s288, 1
      %s290 = scalar_select %p287, %s288, %s289
      %p293 = pneg %p287
      %p294 = scmp.eq.s32.totalorder %s26, 3
      %p295 = por %p293, %p294
      %p296 = scmp.ne.s32.totalorder %s288, %s291
      %p297 = scmp.eq.s32.totalorder %s26, 0
      %p298 = por %p296, %p297
      %p299 = scmp.ne.s32.totalorder %s288, %s291
      %p300 = scmp.eq.s32.totalorder %s31, 3
      %p301 = por %p299, %p300
      %p302 = scmp.ne.s32.totalorder %s291, %s292
      %p303 = scmp.eq.s32.totalorder %s31, 0
      %p304 = por %p302, %p303
      %p305 = scmp.ne.s32.totalorder %s291, %s292
      %p306 = scmp.eq.s32.totalorder %s32, 3
      %p307 = por %p305, %p306
      %p309 = scmp.ne.s32.totalorder %s292, %s308
      %p310 = scmp.eq.s32.totalorder %s32, 0
      %p311 = por %p309, %p310
      %s312 = ssub.s32 %s34, %s41
      %p313 = scmp.eq.s32.totalorder %s312, 0
      %s315 = sadd.s32 %s314, 1
      %s316 = scalar_select %p313, %s314, %s315
      %p319 = pneg %p313
      %p320 = scmp.eq.s32.totalorder %s26, 3
      %p321 = por %p319, %p320
      %p322 = scmp.ne.s32.totalorder %s314, %s317
      %p323 = scmp.eq.s32.totalorder %s26, 0
      %p324 = por %p322, %p323
      %p325 = scmp.ne.s32.totalorder %s314, %s317
      %p326 = scmp.eq.s32.totalorder %s31, 3
      %p327 = por %p325, %p326
      %p328 = scmp.ne.s32.totalorder %s317, %s318
      %p329 = scmp.eq.s32.totalorder %s31, 0
      %p330 = por %p328, %p329
      %p331 = scmp.ne.s32.totalorder %s317, %s318
      %p332 = scmp.eq.s32.totalorder %s32, 3
      %p333 = por %p331, %p332
      %p335 = scmp.ne.s32.totalorder %s318, %s334
      %p336 = scmp.eq.s32.totalorder %s32, 0
      %p337 = por %p335, %p336
      %s338 = ssub.s32 %s34, %s41
      %p339 = scmp.eq.s32.totalorder %s338, 0
      %s341 = sadd.s32 %s340, 1
      %s342 = scalar_select %p339, %s340, %s341
      %p345 = pneg %p339
      %p346 = scmp.eq.s32.totalorder %s26, 3
      %p347 = por %p345, %p346
      %p348 = scmp.ne.s32.totalorder %s340, %s343
      %p349 = scmp.eq.s32.totalorder %s26, 0
      %p350 = por %p348, %p349
      %p351 = scmp.ne.s32.totalorder %s340, %s343
      %p352 = scmp.eq.s32.totalorder %s31, 3
      %p353 = por %p351, %p352
      %p354 = scmp.ne.s32.totalorder %s343, %s344
      %p355 = scmp.eq.s32.totalorder %s31, 0
      %p356 = por %p354, %p355
      %p357 = scmp.ne.s32.totalorder %s343, %s344
      %p358 = scmp.eq.s32.totalorder %s32, 3
      %p359 = por %p357, %p358
      %p361 = scmp.ne.s32.totalorder %s344, %s360
      %p362 = scmp.eq.s32.totalorder %s32, 0
      %p363 = por %p361, %p362
      %s364 = ssub.s32 %s34, %s41
      %p365 = scmp.eq.s32.totalorder %s364, 0
      %s367 = sadd.s32 %s366, 1
      %s368 = scalar_select %p365, %s366, %s367
      %p371 = pneg %p365
      %p372 = scmp.eq.s32.totalorder %s26, 3
      %p373 = por %p371, %p372
      %p374 = scmp.ne.s32.totalorder %s366, %s369
      %p375 = scmp.eq.s32.totalorder %s26, 0
      %p376 = por %p374, %p375
      %p377 = scmp.ne.s32.totalorder %s366, %s369
      %p378 = scmp.eq.s32.totalorder %s31, 3
      %p379 = por %p377, %p378
      %p380 = scmp.ne.s32.totalorder %s369, %s370
      %p381 = scmp.eq.s32.totalorder %s31, 0
      %p382 = por %p380, %p381
      %p383 = scmp.ne.s32.totalorder %s369, %s370
      %p384 = scmp.eq.s32.totalorder %s32, 3
      %p385 = por %p383, %p384
      %p387 = scmp.ne.s32.totalorder %s370, %s386
      %p388 = scmp.eq.s32.totalorder %s32, 0
      %p389 = por %p387, %p388
      %s390 = ssub.s32 %s34, %s41
      %p391 = scmp.eq.s32.totalorder %s390, 0
      %s393 = sadd.s32 %s392, 1
      %s394 = scalar_select %p391, %s392, %s393
      %p397 = pneg %p391
      %p398 = scmp.eq.s32.totalorder %s26, 3
      %p399 = por %p397, %p398
      %p400 = scmp.ne.s32.totalorder %s392, %s395
      %p401 = scmp.eq.s32.totalorder %s26, 0
      %p402 = por %p400, %p401
      %p403 = scmp.ne.s32.totalorder %s392, %s395
      %p404 = scmp.eq.s32.totalorder %s31, 3
      %p405 = por %p403, %p404
      %p406 = scmp.ne.s32.totalorder %s395, %s396
      %p407 = scmp.eq.s32.totalorder %s31, 0
      %p408 = por %p406, %p407
      %p409 = scmp.ne.s32.totalorder %s395, %s396
      %p410 = scmp.eq.s32.totalorder %s32, 3
      %p411 = por %p409, %p410
      %p413 = scmp.ne.s32.totalorder %s396, %s412
      %p414 = scmp.eq.s32.totalorder %s32, 0
      %p415 = por %p413, %p414
      %s416 = ssub.s32 %s34, %s41
      %p417 = scmp.eq.s32.totalorder %s416, 0
      %s419 = sadd.s32 %s418, 1
      %s420 = scalar_select %p417, %s418, %s419
      %p423 = pneg %p417
      %p424 = scmp.eq.s32.totalorder %s26, 3
      %p425 = por %p423, %p424
      %p426 = scmp.ne.s32.totalorder %s418, %s421
      %p427 = scmp.eq.s32.totalorder %s26, 0
      %p428 = por %p426, %p427
      %p429 = scmp.ne.s32.totalorder %s418, %s421
      %p430 = scmp.eq.s32.totalorder %s31, 3
      %p431 = por %p429, %p430
      %p432 = scmp.ne.s32.totalorder %s421, %s422
      %p433 = scmp.eq.s32.totalorder %s31, 0
      %p434 = por %p432, %p433
      %p435 = scmp.ne.s32.totalorder %s421, %s422
      %p436 = scmp.eq.s32.totalorder %s32, 3
      %p437 = por %p435, %p436
      %p439 = scmp.ne.s32.totalorder %s422, %s438
      %p440 = scmp.eq.s32.totalorder %s32, 0
      %p441 = por %p439, %p440
      %s442 = ssub.s32 %s34, %s41
      %p443 = scmp.eq.s32.totalorder %s442, 0
      %s445 = sadd.s32 %s444, 1
      %s446 = scalar_select %p443, %s444, %s445
      %p449 = pneg %p443
      %p450 = scmp.eq.s32.totalorder %s26, 3
      %p451 = por %p449, %p450
      %p452 = scmp.ne.s32.totalorder %s444, %s447
      %p453 = scmp.eq.s32.totalorder %s26, 0
      %p454 = por %p452, %p453
      %p455 = scmp.ne.s32.totalorder %s444, %s447
      %p456 = scmp.eq.s32.totalorder %s31, 3
      %p457 = por %p455, %p456
      %p458 = scmp.ne.s32.totalorder %s447, %s448
      %p459 = scmp.eq.s32.totalorder %s31, 0
      %p460 = por %p458, %p459
      %p461 = scmp.ne.s32.totalorder %s447, %s448
      %p462 = scmp.eq.s32.totalorder %s32, 3
      %p463 = por %p461, %p462
      %p465 = scmp.ne.s32.totalorder %s448, %s464
      %p466 = scmp.eq.s32.totalorder %s32, 0
      %p467 = por %p465, %p466
      %s468 = ssub.s32 %s33, %s45
      %p469 = scmp.eq.s32.totalorder %s468, 0
      %s471 = sadd.s32 %s470, 1
      %s472 = scalar_select %p469, %s470, %s471
      %p475 = pneg %p469
      %p476 = scmp.eq.s32.totalorder %s26, 3
      %p477 = por %p475, %p476
      %p478 = scmp.ne.s32.totalorder %s470, %s473
      %p479 = scmp.eq.s32.totalorder %s26, 0
      %p480 = por %p478, %p479
      %p481 = scmp.ne.s32.totalorder %s470, %s473
      %p482 = scmp.eq.s32.totalorder %s31, 3
      %p483 = por %p481, %p482
      %p484 = scmp.ne.s32.totalorder %s473, %s474
      %p485 = scmp.eq.s32.totalorder %s31, 0
      %p486 = por %p484, %p485
      %p487 = scmp.ne.s32.totalorder %s473, %s474
      %p488 = scmp.eq.s32.totalorder %s32, 3
      %p489 = por %p487, %p488
      %p491 = scmp.ne.s32.totalorder %s474, %s490
      %p492 = scmp.eq.s32.totalorder %s32, 0
      %p493 = por %p491, %p492
      %p494 = scmp.le.s32.totalorder 1, %s26
      %p495 = scmp.lt.s32.totalorder %s26, 5
      %p496 = pnand %p494, %p495
      %p497 = pneg %p496
      // Predicated region
      $region9: #{_lambda_.6} parent=5 // pred_check
        _
      $region10: #{_lambda_.6} parent=5 // pred_check_branch
        %499 = sbr.rel (%p496) target = $region12
      $region11: #{_lambda_.6} parent=5 // pred_region
        %s500 = ssub.s32 %s26, 1
        // Predicated region
        $region13: #{_lambda_.6} parent=11 // pred_check
          %p501 = pneg %p85
        $region14: #{_lambda_.6} parent=11 // pred_check_branch
          %503 = sbr.rel (%p501) target = $region16
        $region15: #{_lambda_.6} parent=11 // pred_region
          _
        $region16: #{_lambda_.6} parent=11 // pred_fallthru
          _
        // Predicated region
        $region17: #{_lambda_.6} parent=11 // pred_check
          %p504 = pneg %p106
        $region18: #{_lambda_.6} parent=11 // pred_check_branch
          %506 = sbr.rel (%p504) target = $region20
        $region19: #{_lambda_.6} parent=11 // pred_region
          _
        $region20: #{_lambda_.6} parent=11 // pred_fallthru
          _
        // Predicated region
        $region21: #{_lambda_.6} parent=11 // pred_check
          %p507 = pneg %p127
        $region22: #{_lambda_.6} parent=11 // pred_check_branch
          %509 = sbr.rel (%p507) target = $region24
        $region23: #{_lambda_.6} parent=11 // pred_region
          _
        $region24: #{_lambda_.6} parent=11 // pred_fallthru
          _
        // Predicated region
        $region25: #{_lambda_.6} parent=11 // pred_check
          %p510 = pneg %p148
        $region26: #{_lambda_.6} parent=11 // pred_check_branch
          %512 = sbr.rel (%p510) target = $region28
        $region27: #{_lambda_.6} parent=11 // pred_region
          _
        $region28: #{_lambda_.6} parent=11 // pred_fallthru
          _
      $region12: #{_lambda_.6} parent=5 // pred_fallthru
        _
      %p513 = scmp.lt.s32.totalorder %s26, 4
      // Predicated region
      $region29: #{_lambda_.6} parent=5 // pred_check
        %p514 = pneg %p513
      $region30: #{_lambda_.6} parent=5 // pred_check_branch
        %516 = sbr.rel (%p514) target = $region32
      $region31: #{_lambda_.6} parent=5 // pred_region
        // Predicated region
        $region33: #{_lambda_.6} parent=31 // pred_check
          %p517 = pneg %p58
        $region34: #{_lambda_.6} parent=31 // pred_check_branch
          %519 = sbr.rel (%p517) target = $region36
        $region35: #{_lambda_.6} parent=31 // pred_region
          %p520 = scmp.lt.s32.totalorder %s33, 1
          %s521 = scalar_select %p520, %s33, 1
          %s522 = smul.addr %s521, 3
          %s523 = smul.addr %s522, 8
          %s524 = scalar_lea.vmem %s0, %s523
        $region36: #{_lambda_.6} parent=31 // pred_fallthru
          _
        // Predicated region
        $region37: #{_lambda_.6} parent=31 // pred_check
          %p525 = pneg %p168
        $region38: #{_lambda_.6} parent=31 // pred_check_branch
          %527 = sbr.rel (%p525) target = $region40
        $region39: #{_lambda_.6} parent=31 // pred_region
          %p528 = scmp.lt.s32.totalorder %s34, 1
          %s529 = scalar_select %p528, %s34, 1
          %s530 = scalar_lea.vmem %s5, %s529
        $region40: #{_lambda_.6} parent=31 // pred_fallthru
          _
        // Predicated region
        $region41: #{_lambda_.6} parent=31 // pred_check
          %p531 = pneg %p194
        $region42: #{_lambda_.6} parent=31 // pred_check_branch
          %533 = sbr.rel (%p531) target = $region44
        $region43: #{_lambda_.6} parent=31 // pred_region
          %p534 = scmp.lt.s32.totalorder %s34, 1
          %s535 = scalar_select %p534, %s34, 1
          %s536 = scalar_lea.vmem %s6, %s535
        $region44: #{_lambda_.6} parent=31 // pred_fallthru
          _
        // Predicated region
        $region45: #{_lambda_.6} parent=31 // pred_check
          %p537 = pneg %p220
        $region46: #{_lambda_.6} parent=31 // pred_check_branch
          %539 = sbr.rel (%p537) target = $region48
        $region47: #{_lambda_.6} parent=31 // pred_region
          %s540 = sand.u32 %s210, 1
          %s541 = scalar_lea.sflag [#allocation4], %s540
          %s542 = sand.u32 %s210, 1
          %s543 = smul.addr %s542, 192
          %s544 = scalar_lea.vmem [#allocation3], %s543
          %s546 = ssub.s32 3072, 3072
          %547 = vsyncadd %s541, %s546
          %s548 = smul.addr %s34, 48
          %s549 = smul.addr %s548, 64
          %s550 = scalar_lea.hbm %s7, %s549
          %s551 = sshll.u32 %s544, 4
          %s552 = int_to_ptr.vmem [resolvable:$true] %s551
          %557 = dma.hbm_to_vmem [thread:$0]  %s550, 3072, %s552, %s541, 192, 192, 12
        $region48: #{_lambda_.6} parent=31 // pred_fallthru
          _
        // Predicated region
        $region49: #{_lambda_.6} parent=31 // pred_check
          %p558 = pneg %p246
        $region50: #{_lambda_.6} parent=31 // pred_check_branch
          %560 = sbr.rel (%p558) target = $region52
        $region51: #{_lambda_.6} parent=31 // pred_region
          %p561 = scmp.lt.s32.totalorder %s34, 1
          %s562 = scalar_select %p561, %s34, 1
          %s563 = smul.addr %s562, 3
          %s564 = scalar_lea.vmem %s8, %s563
        $region52: #{_lambda_.6} parent=31 // pred_fallthru
          _
        // Predicated region
        $region53: #{_lambda_.6} parent=31 // pred_check
          %p565 = pneg %p272
        $region54: #{_lambda_.6} parent=31 // pred_check_branch
          %567 = sbr.rel (%p565) target = $region56
        $region55: #{_lambda_.6} parent=31 // pred_region
          %p568 = scmp.lt.s32.totalorder %s34, 1
          %s569 = scalar_select %p568, %s34, 1
          %s570 = smul.addr %s569, 16
          %s571 = smul.addr %s570, 4
          %s572 = scalar_lea.vmem %s9, %s571
        $region56: #{_lambda_.6} parent=31 // pred_fallthru
          _
        // Predicated region
        $region57: #{_lambda_.6} parent=31 // pred_check
          %p573 = pneg %p298
        $region58: #{_lambda_.6} parent=31 // pred_check_branch
          %575 = sbr.rel (%p573) target = $region60
        $region59: #{_lambda_.6} parent=31 // pred_region
          %p576 = scmp.lt.s32.totalorder %s34, 1
          %s577 = scalar_select %p576, %s34, 1
          %s578 = scalar_lea.vmem %s10, %s577
        $region60: #{_lambda_.6} parent=31 // pred_fallthru
          _
        // Predicated region
        $region61: #{_lambda_.6} parent=31 // pred_check
          %p579 = pneg %p324
        $region62: #{_lambda_.6} parent=31 // pred_check_branch
          %581 = sbr.rel (%p579) target = $region64
        $region63: #{_lambda_.6} parent=31 // pred_region
          %p582 = scmp.lt.s32.totalorder %s34, 1
          %s583 = scalar_select %p582, %s34, 1
          %s584 = scalar_lea.vmem %s11, %s583
        $region64: #{_lambda_.6} parent=31 // pred_fallthru
          _
        // Predicated region
        $region65: #{_lambda_.6} parent=31 // pred_check
          %p585 = pneg %p350
        $region66: #{_lambda_.6} parent=31 // pred_check_branch
          %587 = sbr.rel (%p585) target = $region68
        $region67: #{_lambda_.6} parent=31 // pred_region
          %p588 = scmp.lt.s32.totalorder %s34, 1
          %s589 = scalar_select %p588, %s34, 1
          %s590 = scalar_lea.vmem %s12, %s589
        $region68: #{_lambda_.6} parent=31 // pred_fallthru
          _
        // Predicated region
        $region69: #{_lambda_.6} parent=31 // pred_check
          %p591 = pneg %p376
        $region70: #{_lambda_.6} parent=31 // pred_check_branch
          %593 = sbr.rel (%p591) target = $region72
        $region71: #{_lambda_.6} parent=31 // pred_region
          %p594 = scmp.lt.s32.totalorder %s34, 1
          %s595 = scalar_select %p594, %s34, 1
          %s596 = smul.addr %s595, 64
          %s597 = smul.addr %s596, 4
          %s598 = scalar_lea.vmem %s13, %s597
        $region72: #{_lambda_.6} parent=31 // pred_fallthru
          _
        // Predicated region
        $region73: #{_lambda_.6} parent=31 // pred_check
          %p599 = pneg %p402
        $region74: #{_lambda_.6} parent=31 // pred_check_branch
          %601 = sbr.rel (%p599) target = $region76
        $region75: #{_lambda_.6} parent=31 // pred_region
          %p602 = scmp.lt.s32.totalorder %s34, 1
          %s603 = scalar_select %p602, %s34, 1
          %s604 = smul.addr %s603, 4
          %s605 = scalar_lea.vmem %s14, %s604
        $region76: #{_lambda_.6} parent=31 // pred_fallthru
          _
        // Predicated region
        $region77: #{_lambda_.6} parent=31 // pred_check
          %p606 = pneg %p428
        $region78: #{_lambda_.6} parent=31 // pred_check_branch
          %608 = sbr.rel (%p606) target = $region80
        $region79: #{_lambda_.6} parent=31 // pred_region
          %p609 = scmp.lt.s32.totalorder %s34, 1
          %s610 = scalar_select %p609, %s34, 1
          %s611 = smul.addr %s610, 64
          %s612 = smul.addr %s611, 4
          %s613 = scalar_lea.vmem %s15, %s612
        $region80: #{_lambda_.6} parent=31 // pred_fallthru
          _
        // Predicated region
        $region81: #{_lambda_.6} parent=31 // pred_check
          %p614 = pneg %p454
        $region82: #{_lambda_.6} parent=31 // pred_check_branch
          %616 = sbr.rel (%p614) target = $region84
        $region83: #{_lambda_.6} parent=31 // pred_region
          %p617 = scmp.lt.s32.totalorder %s34, 1
          %s618 = scalar_select %p617, %s34, 1
          %s619 = scalar_lea.vmem %s16, %s618
        $region84: #{_lambda_.6} parent=31 // pred_fallthru
          _
      $region32: #{_lambda_.6} parent=5 // pred_fallthru
        _
      %p620 = scmp.le.s32.totalorder 1, %s26
      %p621 = scmp.lt.s32.totalorder %s26, 5
      %p622 = pnand %p620, %p621
      %p623 = pneg %p622
      // Predicated region
      $region85: #{_lambda_.6} parent=5 // pred_check
        _
      $region86: #{_lambda_.6} parent=5 // pred_check_branch
        %625 = sbr.rel (%p622) target = $region88
      $region87: #{_lambda_.6} parent=5 // pred_region
        %s626 = ssub.s32 %s26, 1
        %s627 = sand.u32 %s213, 1
        %s628 = scalar_lea.sflag [#allocation4], %s627
        %s629 = sand.u32 %s213, 1
        %s630 = smul.addr %s629, 192
        %s631 = scalar_lea.vmem [#allocation3], %s630
        // Predicated region
        $region89: #{_lambda_.6} parent=87 // pred_check
          %p632 = pneg %p226
        $region90: #{_lambda_.6} parent=87 // pred_check_branch
          %634 = sbr.rel (%p632) target = $region92
        $region91: #{_lambda_.6} parent=87 // pred_region
          %635 = dma.done %s628, 3072
        $region92: #{_lambda_.6} parent=87 // pred_fallthru
          _
        %p636 = scmp.lt.s32.totalorder %s35, 1
        %s637 = scalar_select %p636, %s35, 1
        %s638 = smul.addr %s637, 3
        %s639 = smul.addr %s638, 8
        %s640 = scalar_lea.vmem %s0, %s639
        %p641 = pneg %p64
        %p642 = pneg %p61
        %p643 = pneg %p85
        %p644 = pneg %p82
        %p645 = pneg %p106
        %p646 = pneg %p103
        %p647 = pneg %p127
        %p648 = pneg %p124
        %p649 = pneg %p148
        %p650 = pneg %p145
        %p651 = scmp.lt.s32.totalorder %s36, 1
        %s652 = scalar_select %p651, %s36, 1
        %s653 = scalar_lea.vmem %s5, %s652
        %p654 = pneg %p174
        %p655 = pneg %p171
        %p656 = scmp.lt.s32.totalorder %s36, 1
        %s657 = scalar_select %p656, %s36, 1
        %s658 = scalar_lea.vmem %s6, %s657
        %p659 = pneg %p200
        %p660 = pneg %p197
        %s661 = sand.u32 %s213, 1
        %s662 = scalar_lea.sflag [#allocation4], %s661
        %s663 = sand.u32 %s213, 1
        %s664 = smul.addr %s663, 192
        %s665 = scalar_lea.vmem [#allocation3], %s664
        %p666 = pneg %p226
        %p667 = pneg %p223
        %p668 = scmp.lt.s32.totalorder %s36, 1
        %s669 = scalar_select %p668, %s36, 1
        %s670 = smul.addr %s669, 3
        %s671 = scalar_lea.vmem %s8, %s670
        %p672 = pneg %p252
        %p673 = pneg %p249
        %p674 = scmp.lt.s32.totalorder %s36, 1
        %s675 = scalar_select %p674, %s36, 1
        %s676 = smul.addr %s675, 16
        %s677 = smul.addr %s676, 4
        %s678 = scalar_lea.vmem %s9, %s677
        %p679 = pneg %p278
        %p680 = pneg %p275
        %p681 = scmp.lt.s32.totalorder %s36, 1
        %s682 = scalar_select %p681, %s36, 1
        %s683 = scalar_lea.vmem %s10, %s682
        %p684 = pneg %p304
        %p685 = pneg %p301
        %p686 = scmp.lt.s32.totalorder %s36, 1
        %s687 = scalar_select %p686, %s36, 1
        %s688 = scalar_lea.vmem %s11, %s687
        %p689 = pneg %p330
        %p690 = pneg %p327
        %p691 = scmp.lt.s32.totalorder %s36, 1
        %s692 = scalar_select %p691, %s36, 1
        %s693 = scalar_lea.vmem %s12, %s692
        %p694 = pneg %p356
        %p695 = pneg %p353
        %p696 = scmp.lt.s32.totalorder %s36, 1
        %s697 = scalar_select %p696, %s36, 1
        %s698 = smul.addr %s697, 64
        %s699 = smul.addr %s698, 4
        %s700 = scalar_lea.vmem %s13, %s699
        %p701 = pneg %p382
        %p702 = pneg %p379
        %p703 = scmp.lt.s32.totalorder %s36, 1
        %s704 = scalar_select %p703, %s36, 1
        %s705 = smul.addr %s704, 4
        %s706 = scalar_lea.vmem %s14, %s705
        %p707 = pneg %p408
        %p708 = pneg %p405
        %p709 = scmp.lt.s32.totalorder %s36, 1
        %s710 = scalar_select %p709, %s36, 1
        %s711 = smul.addr %s710, 64
        %s712 = smul.addr %s711, 4
        %s713 = scalar_lea.vmem %s15, %s712
        %p714 = pneg %p434
        %p715 = pneg %p431
        %p716 = scmp.lt.s32.totalorder %s36, 1
        %s717 = scalar_select %p716, %s36, 1
        %s718 = scalar_lea.vmem %s16, %s717
        %p719 = pneg %p460
        %p720 = pneg %p457
        %p721 = pneg %p486
        %p722 = pneg %p483
        %p723 = scmp.lt.s32.totalorder %s35, 1
        %s724 = scalar_select %p723, %s35, 1
        %s725 = smul.addr %s724, 3
        %s726 = smul.addr %s725, 8
        %s727 = scalar_lea.vmem %s17, %s726
        %p728 = scmp.lt.s32.totalorder %s35, 1
        %s729 = scalar_select %p728, %s35, 1
        %s730 = smul.addr %s729, 3
        %s731 = smul.addr %s730, 8
        %s732 = scalar_lea.vmem %s0, %s731
        %p733 = scmp.lt.s32.totalorder %s36, 1
        %s734 = scalar_select %p733, %s36, 1
        %s735 = scalar_lea.vmem %s5, %s734
        %p736 = scmp.lt.s32.totalorder %s36, 1
        %s737 = scalar_select %p736, %s36, 1
        %s738 = scalar_lea.vmem %s6, %s737
        %p739 = scmp.lt.s32.totalorder %s36, 1
        %s740 = scalar_select %p739, %s36, 1
        %s741 = smul.addr %s740, 3
        %s742 = scalar_lea.vmem %s8, %s741
        %p743 = scmp.lt.s32.totalorder %s36, 1
        %s744 = scalar_select %p743, %s36, 1
        %s745 = smul.addr %s744, 16
        %s746 = smul.addr %s745, 4
        %s747 = scalar_lea.vmem %s9, %s746
        %p748 = scmp.lt.s32.totalorder %s36, 1
        %s749 = scalar_select %p748, %s36, 1
        %s750 = scalar_lea.vmem %s10, %s749
        %p751 = scmp.lt.s32.totalorder %s36, 1
        %s752 = scalar_select %p751, %s36, 1
        %s753 = scalar_lea.vmem %s11, %s752
        %p754 = scmp.lt.s32.totalorder %s36, 1
        %s755 = scalar_select %p754, %s36, 1
        %s756 = scalar_lea.vmem %s12, %s755
        %p757 = scmp.lt.s32.totalorder %s36, 1
        %s758 = scalar_select %p757, %s36, 1
        %s759 = smul.addr %s758, 64
        %s760 = smul.addr %s759, 4
        %s761 = scalar_lea.vmem %s13, %s760
        %p762 = scmp.lt.s32.totalorder %s36, 1
        %s763 = scalar_select %p762, %s36, 1
        %s764 = smul.addr %s763, 4
        %s765 = scalar_lea.vmem %s14, %s764
        %p766 = scmp.lt.s32.totalorder %s36, 1
        %s767 = scalar_select %p766, %s36, 1
        %s768 = smul.addr %s767, 64
        %s769 = smul.addr %s768, 4
        %s770 = scalar_lea.vmem %s15, %s769
        %p771 = scmp.lt.s32.totalorder %s36, 1
        %s772 = scalar_select %p771, %s36, 1
        %s773 = scalar_lea.vmem %s16, %s772
        %p774 = scmp.lt.s32.totalorder %s35, 1
        %s775 = scalar_select %p774, %s35, 1
        %s776 = smul.addr %s775, 3
        %s777 = smul.addr %s776, 8
        %s778 = scalar_lea.vmem %s17, %s777
        %p780 = scmp.eq.s32.totalorder %s36, 0
        // Predicated region
        $region93: #{_lambda_.6} parent=87 // pred_check
          %p781 = pneg %p780
        $region94: #{_lambda_.6} parent=87 // pred_check_branch
          %783 = sbr.rel (%p781) target = $region96
        $region95: #{_lambda_.6} parent=87 // pred_region
          %v784 = vld [vmem:[%s732] sm:$0xff]
          %v785 = vld [vmem:[%s732 + $0x8] sm:$0xff]
          %v786 = vld [vmem:[%s732 + $0x10] sm:$0xff]
          %v787 = vld [vmem:[%s1] sm:$0xff]
          %v788 = vld [vmem:[%s1 + $0x8] sm:$0xff]
          %v789 = vld [vmem:[%s1 + $0x10] sm:$0xff]
          %v790 = vadd.f32 %v784, %v787
          %v791 = vadd.f32 %v785, %v788
          %v792 = vadd.f32 %v786, %v789
          %v793 = vld [vmem:[%s3] sm:$0x1]
          %v794 = vld [vmem:[%s4] sm:$0x1]
          %795 = vadd.xlane.f32.xlu0 %v790
          %v796 = vpop.xlane.xlu0 %795
          %797 = vadd.xlane.f32.xlu0 %v791
          %v798 = vpop.xlane.xlu0 %797
          %799 = vadd.xlane.f32.xlu0 %v792
          %v800 = vpop.xlane.xlu0 %799
          %v801 = vrcp.pop 128.0
          %v802 = vmul.f32 %v796, %v801
          %v803 = vmul.f32 %v798, %v801
          %v804 = vmul.f32 %v800, %v801
          %v805 = vsub.f32 %v790, %v802
          %v806 = vsub.f32 %v791, %v803
          %v807 = vsub.f32 %v792, %v804
          %v808 = vmul.f32 %v805, %v805
          %v809 = vmul.f32 %v806, %v806
          %v810 = vmul.f32 %v807, %v807
          %811 = vadd.xlane.f32.xlu0 %v808
          %v812 = vpop.xlane.xlu0 %811
          %813 = vadd.xlane.f32.xlu0 %v809
          %v814 = vpop.xlane.xlu0 %813
          %815 = vadd.xlane.f32.xlu0 %v810
          %v816 = vpop.xlane.xlu0 %815
          %v817 = vmul.f32 %v812, %v801
          %v818 = vmul.f32 %v814, %v801
          %v819 = vmul.f32 %v816, %v801
          %v820 = vadd.f32 %v817, 1e-05
          %v821 = vadd.f32 %v818, 1e-05
          %v822 = vadd.f32 %v819, 1e-05
          %v823 = vrsqrt.pop %v820
          %v824 = vrsqrt.pop %v821
          %v825 = vrsqrt.pop %v822
          %v826 = vmul.f32 %v805, %v823
          %v827 = vmul.f32 %v806, %v824
          %v828 = vmul.f32 %v807, %v825
          %v830 = vlaneseq
          %v831 = vshrl.u32 %v830, 7
          %v832 = vsub.s32 0, %v831
          %v833 = vrot.slane %v793, %v832
          %v835 = vmul.f32 %v826, %v833
          %v836 = vmul.f32 %v827, %v833
          %v837 = vmul.f32 %v828, %v833
          %v839 = vlaneseq
          %v840 = vshrl.u32 %v839, 7
          %v841 = vsub.s32 0, %v840
          %v842 = vrot.slane %v794, %v841
          %v844 = vadd.f32 %v835, %v842
          %v845 = vadd.f32 %v836, %v842
          %v846 = vadd.f32 %v837, %v842
          %847 = vst [vmem:[#allocation2] sm:$0xff] %v844
          %848 = vst [vmem:[#allocation2 + $0x8] sm:$0xff] %v845
          %849 = vst [vmem:[#allocation2 + $0x10] sm:$0xff] %v846
        $region96: #{_lambda_.6} parent=87 // pred_fallthru
          _
        %v850 = vld [vmem:[#allocation2] sm:$0xff]
        %v851 = vld [vmem:[#allocation2 + $0x8] sm:$0xff]
        %v852 = vld [vmem:[#allocation2 + $0x10] sm:$0xff]
        %v853 = vld [vmem:[%s735] sm:$0x1]
        %v854 = vld [vmem:[%s738] sm:$0x1]
        %855 = vadd.xlane.f32.xlu0 %v850
        %v856 = vpop.xlane.xlu0 %855
        %857 = vadd.xlane.f32.xlu0 %v851
        %v858 = vpop.xlane.xlu0 %857
        %859 = vadd.xlane.f32.xlu0 %v852
        %v860 = vpop.xlane.xlu0 %859
        %v861 = vrcp.pop 128.0
        %v862 = vmul.f32 %v856, %v861
        %v863 = vmul.f32 %v858, %v861
        %v864 = vmul.f32 %v860, %v861
        %v865 = vsub.f32 %v850, %v862
        %v866 = vsub.f32 %v851, %v863
        %v867 = vsub.f32 %v852, %v864
        %v868 = vmul.f32 %v865, %v865
        %v869 = vmul.f32 %v866, %v866
        %v870 = vmul.f32 %v867, %v867
        %871 = vadd.xlane.f32.xlu0 %v868
        %v872 = vpop.xlane.xlu0 %871
        %873 = vadd.xlane.f32.xlu0 %v869
        %v874 = vpop.xlane.xlu0 %873
        %875 = vadd.xlane.f32.xlu0 %v870
        %v876 = vpop.xlane.xlu0 %875
        %v877 = vmul.f32 %v872, %v861
        %v878 = vmul.f32 %v874, %v861
        %v879 = vmul.f32 %v876, %v861
        %v880 = vadd.f32 %v877, 1e-05
        %v881 = vadd.f32 %v878, 1e-05
        %v882 = vadd.f32 %v879, 1e-05
        %v883 = vrsqrt.pop %v880
        %v884 = vrsqrt.pop %v881
        %v885 = vrsqrt.pop %v882
        %v886 = vmul.f32 %v865, %v883
        %v887 = vmul.f32 %v866, %v884
        %v888 = vmul.f32 %v867, %v885
        %v890 = vlaneseq
        %v891 = vshrl.u32 %v890, 7
        %v892 = vsub.s32 0, %v891
        %v893 = vrot.slane %v853, %v892
        %v895 = vmul.f32 %v886, %v893
        %v896 = vmul.f32 %v887, %v893
        %v897 = vmul.f32 %v888, %v893
        %v899 = vlaneseq
        %v900 = vshrl.u32 %v899, 7
        %v901 = vsub.s32 0, %v900
        %v902 = vrot.slane %v854, %v901
        %v904 = vadd.f32 %v895, %v902
        %v905 = vadd.f32 %v896, %v902
        %v906 = vadd.f32 %v897, %v902
        %v907 = vpack.c.bf16 %v905, %v904
        %v908 = vpack.c.bf16 %v906, %v906
        %v909 = vld [vmem:[%s631] sm:$0xff]
        %v910 = vld [vmem:[%s631 + $0x8] sm:$0xf]
        %v911 = vld [vmem:[%s631 + $0xc] sm:$0xff]
        %v912 = vld [vmem:[%s631 + $0x14] sm:$0xf]
        %v913 = vld [vmem:[%s631 + $0x18] sm:$0xff]
        %v914 = vld [vmem:[%s631 + $0x20] sm:$0xf]
        %v915 = vld [vmem:[%s631 + $0x24] sm:$0xff]
        %v916 = vld [vmem:[%s631 + $0x2c] sm:$0xf]
        %v917 = vld [vmem:[%s631 + $0x30] sm:$0xff]
        %v918 = vld [vmem:[%s631 + $0x38] sm:$0xf]
        %v919 = vld [vmem:[%s631 + $0x3c] sm:$0xff]
        %v920 = vld [vmem:[%s631 + $0x44] sm:$0xf]
        %v921 = vld [vmem:[%s631 + $0x48] sm:$0xff]
        %v922 = vld [vmem:[%s631 + $0x50] sm:$0xf]
        %v923 = vld [vmem:[%s631 + $0x54] sm:$0xff]
        %v924 = vld [vmem:[%s631 + $0x5c] sm:$0xf]
        %v925 = vld [vmem:[%s631 + $0x60] sm:$0xff]
        %v926 = vld [vmem:[%s631 + $0x68] sm:$0xf]
        %v927 = vld [vmem:[%s631 + $0x6c] sm:$0xff]
        %v928 = vld [vmem:[%s631 + $0x74] sm:$0xf]
        %v929 = vld [vmem:[%s631 + $0x78] sm:$0xff]
        %v930 = vld [vmem:[%s631 + $0x80] sm:$0xf]
        %v931 = vld [vmem:[%s631 + $0x84] sm:$0xff]
        %v932 = vld [vmem:[%s631 + $0x8c] sm:$0xf]
        %v933 = vld [vmem:[%s631 + $0x90] sm:$0xff]
        %v934 = vld [vmem:[%s631 + $0x98] sm:$0xf]
        %v935 = vld [vmem:[%s631 + $0x9c] sm:$0xff]
        %v936 = vld [vmem:[%s631 + $0xa4] sm:$0xf]
        %v937 = vld [vmem:[%s631 + $0xa8] sm:$0xff]
        %v938 = vld [vmem:[%s631 + $0xb0] sm:$0xf]
        %v939 = vld [vmem:[%s631 + $0xb4] sm:$0xff]
        %v940 = vld [vmem:[%s631 + $0xbc] sm:$0xf]
        %v941 = vld [vmem:[%s742] sm:$0x7]
        %v943 = vlaneseq
        %v944 = vshrl.u32 %v943, 7
        %v945 = vsub.s32 0, %v944
        %v946 = vrot.slane %v941, %v945
        %v947 = vlaneseq
        %v948 = vshrl.u32 %v947, 7
        %v949 = vsub.s32 1, %v948
        %v950 = vrot.slane %v941, %v949
        %v951 = vlaneseq
        %v952 = vshrl.u32 %v951, 7
        %v953 = vsub.s32 2, %v952
        %v954 = vrot.slane %v941, %v953
        %v990 = vunpack.c.l.b16 %v909
        %v991 = vunpack.c.h.b16 %v909
        %v992 = vunpack.c.l.b16 %v910
        %v993 = vunpack.c.l.b16 %v911
        %v994 = vunpack.c.h.b16 %v911
        %v995 = vunpack.c.l.b16 %v912
        %v996 = vunpack.c.l.b16 %v913
        %v997 = vunpack.c.h.b16 %v913
        %v998 = vunpack.c.l.b16 %v914
        %v999 = vunpack.c.l.b16 %v915
        %v1000 = vunpack.c.h.b16 %v915
        %v1001 = vunpack.c.l.b16 %v916
        %v1002 = vunpack.c.l.b16 %v917
        %v1003 = vunpack.c.h.b16 %v917
        %v1004 = vunpack.c.l.b16 %v918
        %v1005 = vunpack.c.l.b16 %v919
        %v1006 = vunpack.c.h.b16 %v919
        %v1007 = vunpack.c.l.b16 %v920
        %v1008 = vunpack.c.l.b16 %v921
        %v1009 = vunpack.c.h.b16 %v921
        %v1010 = vunpack.c.l.b16 %v922
        %v1011 = vunpack.c.l.b16 %v923
        %v1012 = vunpack.c.h.b16 %v923
        %v1013 = vunpack.c.l.b16 %v924
        %v1014 = vunpack.c.l.b16 %v925
        %v1015 = vunpack.c.h.b16 %v925
        %v1016 = vunpack.c.l.b16 %v926
        %v1017 = vunpack.c.l.b16 %v927
        %v1018 = vunpack.c.h.b16 %v927
        %v1019 = vunpack.c.l.b16 %v928
        %v1020 = vunpack.c.l.b16 %v929
        %v1021 = vunpack.c.h.b16 %v929
        %v1022 = vunpack.c.l.b16 %v930
        %v1023 = vunpack.c.l.b16 %v931
        %v1024 = vunpack.c.h.b16 %v931
        %v1025 = vunpack.c.l.b16 %v932
        %v1026 = vunpack.c.l.b16 %v933
        %v1027 = vunpack.c.h.b16 %v933
        %v1028 = vunpack.c.l.b16 %v934
        %v1029 = vunpack.c.l.b16 %v935
        %v1030 = vunpack.c.h.b16 %v935
        %v1031 = vunpack.c.l.b16 %v936
        %v1032 = vunpack.c.l.b16 %v937
        %v1033 = vunpack.c.h.b16 %v937
        %v1034 = vunpack.c.l.b16 %v938
        %v1035 = vunpack.c.l.b16 %v939
        %v1036 = vunpack.c.h.b16 %v939
        %v1037 = vunpack.c.l.b16 %v940
        %v1038 = vpack.c.b16 %v993, %v990
        %v1039 = vpack.c.b16 %v994, %v991
        %v1040 = vpack.c.b16 %v995, %v992
        %v1041 = vpack.c.b16 %v999, %v996
        %v1042 = vpack.c.b16 %v1000, %v997
        %v1043 = vpack.c.b16 %v1001, %v998
        %v1044 = vpack.c.b16 %v1005, %v1002
        %v1045 = vpack.c.b16 %v1006, %v1003
        %v1046 = vpack.c.b16 %v1007, %v1004
        %v1047 = vpack.c.b16 %v1011, %v1008
        %v1048 = vpack.c.b16 %v1012, %v1009
        %v1049 = vpack.c.b16 %v1013, %v1010
        %v1050 = vpack.c.b16 %v1017, %v1014
        %v1051 = vpack.c.b16 %v1018, %v1015
        %v1052 = vpack.c.b16 %v1019, %v1016
        %v1053 = vpack.c.b16 %v1023, %v1020
        %v1054 = vpack.c.b16 %v1024, %v1021
        %v1055 = vpack.c.b16 %v1025, %v1022
        %v1056 = vpack.c.b16 %v1029, %v1026
        %v1057 = vpack.c.b16 %v1030, %v1027
        %v1058 = vpack.c.b16 %v1031, %v1028
        %v1059 = vpack.c.b16 %v1035, %v1032
        %v1060 = vpack.c.b16 %v1036, %v1033
        %v1061 = vpack.c.b16 %v1037, %v1034
        %1086 = vmatprep.subr.bf16.mxu0 %v1060
        %1087 = vmatpush1.bf16.msra.mxu0 %v1059
        %1088 = vmatprep.subr.bf16.mxu0 %v1057
        %1089 = vmatpush1.bf16.msra.mxu0 %v1056
        %1090 = vmatprep.subr.bf16.mxu0 %v1054
        %1091 = vmatpush1.bf16.msra.mxu0 %v1053
        %1092 = vmatprep.subr.bf16.mxu0 %v1051
        %1093 = vmatpush1.bf16.msra.mxu0 %v1050
        %1094 = vmatprep.subr.bf16.mxu0 %v1048
        %1095 = vmatpush1.bf16.msra.mxu0 %v1047
        %1096 = vmatprep.subr.bf16.mxu0 %v1045
        %1097 = vmatpush1.bf16.msra.mxu0 %v1044
        %1098 = vmatprep.subr.bf16.mxu0 %v1042
        %1099 = vmatpush1.bf16.msra.mxu0 %v1041
        %1100 = vmatprep.subr.bf16.mxu0 %v1039
        %1101 = vmatpush1.bf16.msra.mxu0 %v1038
        %1102 = vmatprep.subr.bf16.mxu0 0
        %1103 = vmatpush2.bf16.msra.mxu0 0
        %1104 = vmatprep.subr.bf16.mxu0 0
        %1105 = vmatpush2.bf16.msra.mxu0 0
        %1106 = vmatprep.subr.bf16.mxu0 0
        %1107 = vmatpush2.bf16.msra.mxu0 0
        %1108 = vmatprep.subr.bf16.mxu0 0
        %1109 = vmatpush2.bf16.msra.mxu0 0
        %1110 = vmatprep.subr.bf16.mxu0 0
        %1111 = vmatpush2.bf16.msra.mxu0 0
        %1112 = vmatprep.subr.bf16.mxu0 0
        %1113 = vmatpush2.bf16.msra.mxu0 0
        %1114 = vmatprep.subr.bf16.mxu0 0
        %1115 = vmatpush2.bf16.msra.mxu0 0
        %1116 = vmatprep.subr.bf16.mxu0 0
        %1117 = vmatpush2.bf16.msra.mxu0 0
        %1118 = vmatprep.mubr.bf16.mxu0 0
        %1119 = vmatmul.mubr.bf16.gmra.mxu0 %v907
        %v1120 = vpop.f32.mrf.mxu0
        %v1121 = vadd.f32 %v946, %v1120
        %v1122 = vpop.f32.mrf.mxu0
        %v1123 = vadd.f32 %v950, %v1122
        %v1124 = vpop.f32.mrf.mxu0
        %v1125 = vadd.f32 %v946, %v1124
        %v1126 = vpop.f32.mrf.mxu0
        %v1127 = vadd.f32 %v950, %v1126
        %1128 = vmatprep.mubr.bf16.mxu0 0
        %1129 = vmatmul.mubr.bf16.gmra.mxu0 %v908
        %v1130 = vpop.f32.mrf.mxu0
        %v1131 = vadd.f32 %v946, %v1130
        %v1132 = vpop.f32.mrf.mxu0
        %v1133 = vadd.f32 %v950, %v1132
        %v1134 = vpop.f32.mrf.mxu0
        %v1135 = vpop.f32.mrf.mxu0
        %1136 = vdwg.mxu0
        %1137 = vmatprep.subr.bf16.mxu0 0
        %1138 = vmatpush1.bf16.msra.mxu0 %v1061
        %1139 = vmatprep.subr.bf16.mxu0 0
        %1140 = vmatpush1.bf16.msra.mxu0 %v1058
        %1141 = vmatprep.subr.bf16.mxu0 0
        %1142 = vmatpush1.bf16.msra.mxu0 %v1055
        %1143 = vmatprep.subr.bf16.mxu0 0
        %1144 = vmatpush1.bf16.msra.mxu0 %v1052
        %1145 = vmatprep.subr.bf16.mxu0 0
        %1146 = vmatpush1.bf16.msra.mxu0 %v1049
        %1147 = vmatprep.subr.bf16.mxu0 0
        %1148 = vmatpush1.bf16.msra.mxu0 %v1046
        %1149 = vmatprep.subr.bf16.mxu0 0
        %1150 = vmatpush1.bf16.msra.mxu0 %v1043
        %1151 = vmatprep.subr.bf16.mxu0 0
        %1152 = vmatpush1.bf16.msra.mxu0 %v1040
        %1153 = vmatprep.subr.bf16.mxu0 0
        %1154 = vmatpush2.bf16.msra.mxu0 0
        %1155 = vmatprep.subr.bf16.mxu0 0
        %1156 = vmatpush2.bf16.msra.mxu0 0
        %1157 = vmatprep.subr.bf16.mxu0 0
        %1158 = vmatpush2.bf16.msra.mxu0 0
        %1159 = vmatprep.subr.bf16.mxu0 0
        %1160 = vmatpush2.bf16.msra.mxu0 0
        %1161 = vmatprep.subr.bf16.mxu0 0
        %1162 = vmatpush2.bf16.msra.mxu0 0
        %1163 = vmatprep.subr.bf16.mxu0 0
        %1164 = vmatpush2.bf16.msra.mxu0 0
        %1165 = vmatprep.subr.bf16.mxu0 0
        %1166 = vmatpush2.bf16.msra.mxu0 0
        %1167 = vmatprep.subr.bf16.mxu0 0
        %1168 = vmatpush2.bf16.msra.mxu0 0
        %1169 = vmatprep.mubr.bf16.mxu0 0
        %1170 = vmatmul.mubr.bf16.gmra.mxu0 %v907
        %v1171 = vpop.f32.mrf.mxu0
        %v1172 = vadd.f32 %v954, %v1171
        %v1173 = vpop.f32.mrf.mxu0
        %v1174 = vpop.f32.mrf.mxu0
        %v1175 = vadd.f32 %v954, %v1174
        %v1176 = vpop.f32.mrf.mxu0
        %1177 = vmatprep.mubr.bf16.mxu0 0
        %1178 = vmatmul.mubr.bf16.gmra.mxu0 %v908
        %v1179 = vpop.f32.mrf.mxu0
        %v1180 = vadd.f32 %v954, %v1179
        %v1181 = vpop.f32.mrf.mxu0
        %v1182 = vpop.f32.mrf.mxu0
        %v1183 = vpop.f32.mrf.mxu0
        %1184 = vdwg.mxu0
        %v1185 = vpack.c.bf16 %v1125, %v1121
        %v1186 = vpack.c.bf16 %v1127, %v1123
        %v1187 = vpack.c.bf16 %v1175, %v1172
        %v1188 = vpack.c.bf16 %v1131, %v1131
        %v1189 = vpack.c.bf16 %v1133, %v1133
        %v1190 = vpack.c.bf16 %v1180, %v1180
        %vm1191 = vcmask 523264
        %v1193 = vsel %vm1191, %v1185, 0
        %v1196 = vsel %vm1191, %v1188, 0
        %v1199 = vsel %vm1191, %v1186, 0
        %v1202 = vsel %vm1191, %v1189, 0
        %1204 = vmatprep.subr.bf16.mxu0 0
        %1205 = vmatpush1.bf16.xpose.msra.mxu0 0
        %1206 = vmatprep.subr.bf16.mxu0 0
        %1207 = vmatpush1.bf16.xpose.msra.mxu0 0
        %1208 = vmatprep.subr.bf16.mxu0 0
        %1209 = vmatpush1.bf16.xpose.msra.mxu0 0
        %1210 = vmatprep.subr.bf16.mxu0 0
        %1211 = vmatpush1.bf16.xpose.msra.mxu0 0
        %1212 = vmatprep.subr.bf16.mxu0 0
        %1213 = vmatpush1.bf16.xpose.msra.mxu0 0
        %1214 = vmatprep.subr.bf16.mxu0 0
        %1215 = vmatpush1.bf16.xpose.msra.mxu0 0
        %1216 = vmatprep.subr.bf16.mxu0 0
        %1217 = vmatpush1.bf16.xpose.msra.mxu0 %v1202
        %1218 = vmatprep.subr.bf16.mxu0 0
        %1219 = vmatpush1.bf16.xpose.msra.mxu0 %v1199
        %1220 = vmatprep.subr.bf16.mxu0 0
        %1221 = vmatpush2.bf16.xpose.msra.mxu0 0
        %1222 = vmatprep.subr.bf16.mxu0 0
        %1223 = vmatpush2.bf16.xpose.msra.mxu0 0
        %1224 = vmatprep.subr.bf16.mxu0 0
        %1225 = vmatpush2.bf16.xpose.msra.mxu0 0
        %1226 = vmatprep.subr.bf16.mxu0 0
        %1227 = vmatpush2.bf16.xpose.msra.mxu0 0
        %1228 = vmatprep.subr.bf16.mxu0 0
        %1229 = vmatpush2.bf16.xpose.msra.mxu0 0
        %1230 = vmatprep.subr.bf16.mxu0 0
        %1231 = vmatpush2.bf16.xpose.msra.mxu0 0
        %1232 = vmatprep.subr.bf16.mxu0 0
        %1233 = vmatpush2.bf16.xpose.msra.mxu0 0
        %1234 = vmatprep.subr.bf16.mxu0 0
        %1235 = vmatpush2.bf16.xpose.msra.mxu0 0
        %1236 = vmatprep.mubr.bf16.mxu0 0
        %1237 = vmatmul.mubr.bf16.gmra.mxu0 %v1193
        %v1238 = vpop.f32.mrf.mxu0
        %v1239 = vadd.f32 0.0, %v1238
        %v1240 = vpop.f32.mrf.mxu0
        %v1241 = vpop.f32.mrf.mxu0
        %v1242 = vadd.f32 0.0, %v1241
        %v1243 = vpop.f32.mrf.mxu0
        %1244 = vmatprep.mubr.bf16.mxu0 0
        %1245 = vmatmul.mubr.bf16.gmra.mxu0 %v1196
        %v1246 = vpop.f32.mrf.mxu0
        %v1247 = vadd.f32 0.0, %v1246
        %v1248 = vpop.f32.mrf.mxu0
        %v1249 = vpop.f32.mrf.mxu0
        %v1250 = vpop.f32.mrf.mxu0
        %1251 = vdwg.mxu0
        %v1252 = vmul.f32 %v1239, 0.125
        %v1253 = vmul.f32 %v1242, 0.125
        %v1254 = vmul.f32 %v1247, 0.125
        %v1255 = vld [vmem:[%s2] sm:$0xff]
        %v1256 = vld [vmem:[%s2 + $0x8] sm:$0xff]
        %v1257 = vld [vmem:[%s2 + $0x10] sm:$0xff]
        %v1258 = vadd.f32 %v1252, %v1255
        %v1259 = vadd.f32 %v1253, %v1256
        %v1260 = vadd.f32 %v1254, %v1257
        %vm1261 = vcmask 195584
        %v1262 = vsel %vm1261, %v1258, -inf
        %1263 = vmax.xlane.f32.xlu0 %v1262
        %v1264 = vpop.xlane.xlu0 %1263
        %v1265 = vsel %vm1261, %v1259, -inf
        %1266 = vmax.xlane.f32.xlu0 %v1265
        %v1267 = vpop.xlane.xlu0 %1266
        %v1268 = vsel %vm1261, %v1260, -inf
        %1269 = vmax.xlane.f32.xlu0 %v1268
        %v1270 = vpop.xlane.xlu0 %1269
        %v1271 = vsub.f32 %v1258, %v1264
        %v1272 = vsub.f32 %v1259, %v1267
        %v1273 = vsub.f32 %v1260, %v1270
        %v1274 = vmul.f32 %v1271, 1.442695
        %v1275 = vpow.pop %v1274
        %v1276 = vmul.f32 %v1272, 1.442695
        %v1277 = vpow.pop %v1276
        %v1278 = vmul.f32 %v1273, 1.442695
        %v1279 = vpow.pop %v1278
        %v1280 = vsel %vm1261, %v1275, 0.0
        %1281 = vadd.xlane.f32.xlu0 %v1280
        %v1282 = vpop.xlane.xlu0 %1281
        %v1283 = vsel %vm1261, %v1277, 0.0
        %1284 = vadd.xlane.f32.xlu0 %v1283
        %v1285 = vpop.xlane.xlu0 %1284
        %v1286 = vsel %vm1261, %v1279, 0.0
        %1287 = vadd.xlane.f32.xlu0 %v1286
        %v1288 = vpop.xlane.xlu0 %1287
        %v1289 = vrcp.pop %v1282
        %v1290 = vrcp.pop %v1285
        %v1291 = vrcp.pop %v1288
        %v1292 = vmul.f32 %v1275, %v1289
        %v1293 = vmul.f32 %v1277, %v1290
        %v1294 = vmul.f32 %v1279, %v1291
        %v1295 = vpack.c.bf16 %v1293, %v1292
        %v1296 = vpack.c.bf16 %v1294, %v1294
        %v1298 = vsel %vm1261, %v1295, 0
        %v1301 = vsel %vm1261, %v1296, 0
        %vm1303 = vcmask 1043456
        %v1305 = vsel %vm1303, %v1190, 0
        %1307 = vmatprep.subr.bf16.mxu0 0
        %1308 = vmatpush1.bf16.msra.mxu0 0
        %1309 = vmatprep.subr.bf16.mxu0 0
        %1310 = vmatpush1.bf16.msra.mxu0 0
        %1311 = vmatprep.subr.bf16.mxu0 0
        %1312 = vmatpush1.bf16.msra.mxu0 0
        %1313 = vmatprep.subr.bf16.mxu0 0
        %1314 = vmatpush1.bf16.msra.mxu0 0
        %1315 = vmatprep.subr.bf16.mxu0 0
        %1316 = vmatpush1.bf16.msra.mxu0 0
        %1317 = vmatprep.subr.bf16.mxu0 0
        %1318 = vmatpush1.bf16.msra.mxu0 0
        %1319 = vmatprep.subr.bf16.mxu0 0
        %1320 = vmatpush1.bf16.msra.mxu0 %v1305
        %1321 = vmatprep.subr.bf16.mxu0 0
        %1322 = vmatpush1.bf16.msra.mxu0 %v1187
        %1323 = vmatprep.subr.bf16.mxu0 0
        %1324 = vmatpush2.bf16.msra.mxu0 0
        %1325 = vmatprep.subr.bf16.mxu0 0
        %1326 = vmatpush2.bf16.msra.mxu0 0
        %1327 = vmatprep.subr.bf16.mxu0 0
        %1328 = vmatpush2.bf16.msra.mxu0 0
        %1329 = vmatprep.subr.bf16.mxu0 0
        %1330 = vmatpush2.bf16.msra.mxu0 0
        %1331 = vmatprep.subr.bf16.mxu0 0
        %1332 = vmatpush2.bf16.msra.mxu0 0
        %1333 = vmatprep.subr.bf16.mxu0 0
        %1334 = vmatpush2.bf16.msra.mxu0 0
        %1335 = vmatprep.subr.bf16.mxu0 0
        %1336 = vmatpush2.bf16.msra.mxu0 0
        %1337 = vmatprep.subr.bf16.mxu0 0
        %1338 = vmatpush2.bf16.msra.mxu0 0
        %1339 = vmatprep.mubr.bf16.mxu0 0
        %1340 = vmatmul.mubr.bf16.gmra.mxu0 %v1298
        %v1341 = vpop.f32.mrf.mxu0
        %v1342 = vadd.f32 0.0, %v1341
        %v1343 = vpop.f32.mrf.mxu0
        %v1344 = vpop.f32.mrf.mxu0
        %v1345 = vadd.f32 0.0, %v1344
        %v1346 = vpop.f32.mrf.mxu0
        %1347 = vmatprep.mubr.bf16.mxu0 0
        %1348 = vmatmul.mubr.bf16.gmra.mxu0 %v1301
        %v1349 = vpop.f32.mrf.mxu0
        %v1350 = vadd.f32 0.0, %v1349
        %v1351 = vpop.f32.mrf.mxu0
        %v1352 = vpop.f32.mrf.mxu0
        %v1353 = vpop.f32.mrf.mxu0
        %1354 = vdwg.mxu0
        %1357 = vrot.lane.b32.xlu0 %v1185, 64
        %v1358 = vpop.permute.xlu0 %1357
        %1359 = vrot.lane.b32.xlu0 %v1188, 64
        %v1360 = vpop.permute.xlu0 %1359
        %1363 = vrot.lane.b32.xlu0 %v1186, 64
        %v1364 = vpop.permute.xlu0 %1363
        %1365 = vrot.lane.b32.xlu0 %v1189, 64
        %v1366 = vpop.permute.xlu0 %1365
        %v1368 = vsel %vm1191, %v1358, 0
        %v1371 = vsel %vm1191, %v1360, 0
        %v1374 = vsel %vm1191, %v1364, 0
        %v1377 = vsel %vm1191, %v1366, 0
        %1379 = vmatprep.subr.bf16.mxu0 0
        %1380 = vmatpush1.bf16.xpose.msra.mxu0 0
        %1381 = vmatprep.subr.bf16.mxu0 0
        %1382 = vmatpush1.bf16.xpose.msra.mxu0 0
        %1383 = vmatprep.subr.bf16.mxu0 0
        %1384 = vmatpush1.bf16.xpose.msra.mxu0 0
        %1385 = vmatprep.subr.bf16.mxu0 0
        %1386 = vmatpush1.bf16.xpose.msra.mxu0 0
        %1387 = vmatprep.subr.bf16.mxu0 0
        %1388 = vmatpush1.bf16.xpose.msra.mxu0 0
        %1389 = vmatprep.subr.bf16.mxu0 0
        %1390 = vmatpush1.bf16.xpose.msra.mxu0 0
        %1391 = vmatprep.subr.bf16.mxu0 0
        %1392 = vmatpush1.bf16.xpose.msra.mxu0 %v1377
        %1393 = vmatprep.subr.bf16.mxu0 0
        %1394 = vmatpush1.bf16.xpose.msra.mxu0 %v1374
        %1395 = vmatprep.subr.bf16.mxu0 0
        %1396 = vmatpush2.bf16.xpose.msra.mxu0 0
        %1397 = vmatprep.subr.bf16.mxu0 0
        %1398 = vmatpush2.bf16.xpose.msra.mxu0 0
        %1399 = vmatprep.subr.bf16.mxu0 0
        %1400 = vmatpush2.bf16.xpose.msra.mxu0 0
        %1401 = vmatprep.subr.bf16.mxu0 0
        %1402 = vmatpush2.bf16.xpose.msra.mxu0 0
        %1403 = vmatprep.subr.bf16.mxu0 0
        %1404 = vmatpush2.bf16.xpose.msra.mxu0 0
        %1405 = vmatprep.subr.bf16.mxu0 0
        %1406 = vmatpush2.bf16.xpose.msra.mxu0 0
        %1407 = vmatprep.subr.bf16.mxu0 0
        %1408 = vmatpush2.bf16.xpose.msra.mxu0 0
        %1409 = vmatprep.subr.bf16.mxu0 0
        %1410 = vmatpush2.bf16.xpose.msra.mxu0 0
        %1411 = vmatprep.mubr.bf16.mxu0 0
        %1412 = vmatmul.mubr.bf16.gmra.mxu0 %v1368
        %v1413 = vpop.f32.mrf.mxu0
        %v1414 = vadd.f32 0.0, %v1413
        %v1415 = vpop.f32.mrf.mxu0
        %v1416 = vpop.f32.mrf.mxu0
        %v1417 = vadd.f32 0.0, %v1416
        %v1418 = vpop.f32.mrf.mxu0
        %1419 = vmatprep.mubr.bf16.mxu0 0
        %1420 = vmatmul.mubr.bf16.gmra.mxu0 %v1371
        %v1421 = vpop.f32.mrf.mxu0
        %v1422 = vadd.f32 0.0, %v1421
        %v1423 = vpop.f32.mrf.mxu0
        %v1424 = vpop.f32.mrf.mxu0
        %v1425 = vpop.f32.mrf.mxu0
        %1426 = vdwg.mxu0
        %v1427 = vmul.f32 %v1414, 0.125
        %v1428 = vmul.f32 %v1417, 0.125
        %v1429 = vmul.f32 %v1422, 0.125
        %v1430 = vld [vmem:[%s2] sm:$0xff]
        %v1431 = vld [vmem:[%s2 + $0x8] sm:$0xff]
        %v1432 = vld [vmem:[%s2 + $0x10] sm:$0xff]
        %v1433 = vadd.f32 %v1427, %v1430
        %v1434 = vadd.f32 %v1428, %v1431
        %v1435 = vadd.f32 %v1429, %v1432
        %v1436 = vsel %vm1261, %v1433, -inf
        %1437 = vmax.xlane.f32.xlu0 %v1436
        %v1438 = vpop.xlane.xlu0 %1437
        %v1439 = vsel %vm1261, %v1434, -inf
        %1440 = vmax.xlane.f32.xlu0 %v1439
        %v1441 = vpop.xlane.xlu0 %1440
        %v1442 = vsel %vm1261, %v1435, -inf
        %1443 = vmax.xlane.f32.xlu0 %v1442
        %v1444 = vpop.xlane.xlu0 %1443
        %v1445 = vsub.f32 %v1433, %v1438
        %v1446 = vsub.f32 %v1434, %v1441
        %v1447 = vsub.f32 %v1435, %v1444
        %v1448 = vmul.f32 %v1445, 1.442695
        %v1449 = vpow.pop %v1448
        %v1450 = vmul.f32 %v1446, 1.442695
        %v1451 = vpow.pop %v1450
        %v1452 = vmul.f32 %v1447, 1.442695
        %v1453 = vpow.pop %v1452
        %v1454 = vsel %vm1261, %v1449, 0.0
        %1455 = vadd.xlane.f32.xlu0 %v1454
        %v1456 = vpop.xlane.xlu0 %1455
        %v1457 = vsel %vm1261, %v1451, 0.0
        %1458 = vadd.xlane.f32.xlu0 %v1457
        %v1459 = vpop.xlane.xlu0 %1458
        %v1460 = vsel %vm1261, %v1453, 0.0
        %1461 = vadd.xlane.f32.xlu0 %v1460
        %v1462 = vpop.xlane.xlu0 %1461
        %v1463 = vrcp.pop %v1456
        %v1464 = vrcp.pop %v1459
        %v1465 = vrcp.pop %v1462
        %v1466 = vmul.f32 %v1449, %v1463
        %v1467 = vmul.f32 %v1451, %v1464
        %v1468 = vmul.f32 %v1453, %v1465
        %v1469 = vpack.c.bf16 %v1467, %v1466
        %v1470 = vpack.c.bf16 %v1468, %v1468
        %1473 = vrot.lane.b32.xlu0 %v1187, 64
        %v1474 = vpop.permute.xlu0 %1473
        %1475 = vrot.lane.b32.xlu0 %v1190, 64
        %v1476 = vpop.permute.xlu0 %1475
        %v1479 = vsel %vm1261, %v1469, 0
        %v1482 = vsel %vm1261, %v1470, 0
        %v1485 = vsel %vm1303, %v1476, 0
        %1487 = vmatprep.subr.bf16.mxu0 0
        %1488 = vmatpush1.bf16.msra.mxu0 0
        %1489 = vmatprep.subr.bf16.mxu0 0
        %1490 = vmatpush1.bf16.msra.mxu0 0
        %1491 = vmatprep.subr.bf16.mxu0 0
        %1492 = vmatpush1.bf16.msra.mxu0 0
        %1493 = vmatprep.subr.bf16.mxu0 0
        %1494 = vmatpush1.bf16.msra.mxu0 0
        %1495 = vmatprep.subr.bf16.mxu0 0
        %1496 = vmatpush1.bf16.msra.mxu0 0
        %1497 = vmatprep.subr.bf16.mxu0 0
        %1498 = vmatpush1.bf16.msra.mxu0 0
        %1499 = vmatprep.subr.bf16.mxu0 0
        %1500 = vmatpush1.bf16.msra.mxu0 %v1485
        %1501 = vmatprep.subr.bf16.mxu0 0
        %1502 = vmatpush1.bf16.msra.mxu0 %v1474
        %1503 = vmatprep.subr.bf16.mxu0 0
        %1504 = vmatpush2.bf16.msra.mxu0 0
        %1505 = vmatprep.subr.bf16.mxu0 0
        %1506 = vmatpush2.bf16.msra.mxu0 0
        %1507 = vmatprep.subr.bf16.mxu0 0
        %1508 = vmatpush2.bf16.msra.mxu0 0
        %1509 = vmatprep.subr.bf16.mxu0 0
        %1510 = vmatpush2.bf16.msra.mxu0 0
        %1511 = vmatprep.subr.bf16.mxu0 0
        %1512 = vmatpush2.bf16.msra.mxu0 0
        %1513 = vmatprep.subr.bf16.mxu0 0
        %1514 = vmatpush2.bf16.msra.mxu0 0
        %1515 = vmatprep.subr.bf16.mxu0 0
        %1516 = vmatpush2.bf16.msra.mxu0 0
        %1517 = vmatprep.subr.bf16.mxu0 0
        %1518 = vmatpush2.bf16.msra.mxu0 0
        %1519 = vmatprep.mubr.bf16.mxu0 0
        %1520 = vmatmul.mubr.bf16.gmra.mxu0 %v1479
        %v1521 = vpop.f32.mrf.mxu0
        %v1522 = vadd.f32 0.0, %v1521
        %v1523 = vpop.f32.mrf.mxu0
        %v1524 = vpop.f32.mrf.mxu0
        %v1525 = vadd.f32 0.0, %v1524
        %v1526 = vpop.f32.mrf.mxu0
        %1527 = vmatprep.mubr.bf16.mxu0 0
        %1528 = vmatmul.mubr.bf16.gmra.mxu0 %v1482
        %v1529 = vpop.f32.mrf.mxu0
        %v1530 = vadd.f32 0.0, %v1529
        %v1531 = vpop.f32.mrf.mxu0
        %v1532 = vpop.f32.mrf.mxu0
        %v1533 = vpop.f32.mrf.mxu0
        %1534 = vdwg.mxu0
        %1538 = vrot.lane.b32.xlu0 %v1522, 64
        %v1539 = vpop.permute.xlu0 %1538
        %1540 = vrot.lane.b32.xlu0 %v1525, 64
        %v1541 = vpop.permute.xlu0 %1540
        %1542 = vrot.lane.b32.xlu0 %v1530, 64
        %v1543 = vpop.permute.xlu0 %1542
        %v1547 = vsel %vm1191, %v1342, %v1539
        %v1548 = vsel %vm1191, %v1345, %v1541
        %v1549 = vsel %vm1191, %v1350, %v1543
        %v1550 = vpack.c.bf16 %v1548, %v1547
        %v1551 = vpack.c.bf16 %v1549, %v1549
        %v1552 = vld [vmem:[%s747] sm:$0xf]
        %v1553 = vld [vmem:[%s747 + $0x4] sm:$0xf]
        %v1554 = vld [vmem:[%s747 + $0x8] sm:$0xf]
        %v1555 = vld [vmem:[%s747 + $0xc] sm:$0xf]
        %v1556 = vld [vmem:[%s747 + $0x10] sm:$0xf]
        %v1557 = vld [vmem:[%s747 + $0x14] sm:$0xf]
        %v1558 = vld [vmem:[%s747 + $0x18] sm:$0xf]
        %v1559 = vld [vmem:[%s747 + $0x1c] sm:$0xf]
        %v1560 = vld [vmem:[%s747 + $0x20] sm:$0xf]
        %v1561 = vld [vmem:[%s747 + $0x24] sm:$0xf]
        %v1562 = vld [vmem:[%s747 + $0x28] sm:$0xf]
        %v1563 = vld [vmem:[%s747 + $0x2c] sm:$0xf]
        %v1564 = vld [vmem:[%s747 + $0x30] sm:$0xf]
        %v1565 = vld [vmem:[%s747 + $0x34] sm:$0xf]
        %v1566 = vld [vmem:[%s747 + $0x38] sm:$0xf]
        %v1567 = vld [vmem:[%s747 + $0x3c] sm:$0xf]
        %v1568 = vld [vmem:[%s750] sm:$0x1]
        %v1570 = vlaneseq
        %v1571 = vshrl.u32 %v1570, 7
        %v1572 = vsub.s32 0, %v1571
        %v1573 = vrot.slane %v1568, %v1572
        %v1591 = vunpack.c.l.b16 %v1552
        %v1592 = vunpack.c.l.b16 %v1553
        %v1593 = vunpack.c.l.b16 %v1554
        %v1594 = vunpack.c.l.b16 %v1555
        %v1595 = vunpack.c.l.b16 %v1556
        %v1596 = vunpack.c.l.b16 %v1557
        %v1597 = vunpack.c.l.b16 %v1558
        %v1598 = vunpack.c.l.b16 %v1559
        %v1599 = vunpack.c.l.b16 %v1560
        %v1600 = vunpack.c.l.b16 %v1561
        %v1601 = vunpack.c.l.b16 %v1562
        %v1602 = vunpack.c.l.b16 %v1563
        %v1603 = vunpack.c.l.b16 %v1564
        %v1604 = vunpack.c.l.b16 %v1565
        %v1605 = vunpack.c.l.b16 %v1566
        %v1606 = vunpack.c.l.b16 %v1567
        %v1607 = vpack.c.b16 %v1592, %v1591
        %v1608 = vpack.c.b16 %v1594, %v1593
        %v1609 = vpack.c.b16 %v1596, %v1595
        %v1610 = vpack.c.b16 %v1598, %v1597
        %v1611 = vpack.c.b16 %v1600, %v1599
        %v1612 = vpack.c.b16 %v1602, %v1601
        %v1613 = vpack.c.b16 %v1604, %v1603
        %v1614 = vpack.c.b16 %v1606, %v1605
        %1623 = vmatprep.subr.bf16.mxu0 0
        %1624 = vmatpush1.bf16.msra.mxu0 %v1614
        %1625 = vmatprep.subr.bf16.mxu0 0
        %1626 = vmatpush1.bf16.msra.mxu0 %v1613
        %1627 = vmatprep.subr.bf16.mxu0 0
        %1628 = vmatpush1.bf16.msra.mxu0 %v1612
        %1629 = vmatprep.subr.bf16.mxu0 0
        %1630 = vmatpush1.bf16.msra.mxu0 %v1611
        %1631 = vmatprep.subr.bf16.mxu0 0
        %1632 = vmatpush1.bf16.msra.mxu0 %v1610
        %1633 = vmatprep.subr.bf16.mxu0 0
        %1634 = vmatpush1.bf16.msra.mxu0 %v1609
        %1635 = vmatprep.subr.bf16.mxu0 0
        %1636 = vmatpush1.bf16.msra.mxu0 %v1608
        %1637 = vmatprep.subr.bf16.mxu0 0
        %1638 = vmatpush1.bf16.msra.mxu0 %v1607
        %1639 = vmatprep.subr.bf16.mxu0 0
        %1640 = vmatpush2.bf16.msra.mxu0 0
        %1641 = vmatprep.subr.bf16.mxu0 0
        %1642 = vmatpush2.bf16.msra.mxu0 0
        %1643 = vmatprep.subr.bf16.mxu0 0
        %1644 = vmatpush2.bf16.msra.mxu0 0
        %1645 = vmatprep.subr.bf16.mxu0 0
        %1646 = vmatpush2.bf16.msra.mxu0 0
        %1647 = vmatprep.subr.bf16.mxu0 0
        %1648 = vmatpush2.bf16.msra.mxu0 0
        %1649 = vmatprep.subr.bf16.mxu0 0
        %1650 = vmatpush2.bf16.msra.mxu0 0
        %1651 = vmatprep.subr.bf16.mxu0 0
        %1652 = vmatpush2.bf16.msra.mxu0 0
        %1653 = vmatprep.subr.bf16.mxu0 0
        %1654 = vmatpush2.bf16.msra.mxu0 0
        %1655 = vmatprep.mubr.bf16.mxu0 0
        %1656 = vmatmul.mubr.bf16.gmra.mxu0 %v1550
        %v1657 = vpop.f32.mrf.mxu0
        %v1658 = vadd.f32 %v1573, %v1657
        %v1659 = vpop.f32.mrf.mxu0
        %v1660 = vpop.f32.mrf.mxu0
        %v1661 = vadd.f32 %v1573, %v1660
        %v1662 = vpop.f32.mrf.mxu0
        %1663 = vmatprep.mubr.bf16.mxu0 0
        %1664 = vmatmul.mubr.bf16.gmra.mxu0 %v1551
        %v1665 = vpop.f32.mrf.mxu0
        %v1666 = vadd.f32 %v1573, %v1665
        %v1667 = vpop.f32.mrf.mxu0
        %v1668 = vpop.f32.mrf.mxu0
        %v1669 = vpop.f32.mrf.mxu0
        %1670 = vdwg.mxu0
        %v1671 = vadd.f32 %v850, %v1658
        %v1672 = vadd.f32 %v851, %v1661
        %v1673 = vadd.f32 %v852, %v1666
        %v1674 = vld [vmem:[%s753] sm:$0x1]
        %v1675 = vld [vmem:[%s756] sm:$0x1]
        %1676 = vadd.xlane.f32.xlu0 %v1671
        %v1677 = vpop.xlane.xlu0 %1676
        %1678 = vadd.xlane.f32.xlu0 %v1672
        %v1679 = vpop.xlane.xlu0 %1678
        %1680 = vadd.xlane.f32.xlu0 %v1673
        %v1681 = vpop.xlane.xlu0 %1680
        %v1682 = vmul.f32 %v1677, %v861
        %v1683 = vmul.f32 %v1679, %v861
        %v1684 = vmul.f32 %v1681, %v861
        %v1685 = vsub.f32 %v1671, %v1682
        %v1686 = vsub.f32 %v1672, %v1683
        %v1687 = vsub.f32 %v1673, %v1684
        %v1688 = vmul.f32 %v1685, %v1685
        %v1689 = vmul.f32 %v1686, %v1686
        %v1690 = vmul.f32 %v1687, %v1687
        %1691 = vadd.xlane.f32.xlu0 %v1688
        %v1692 = vpop.xlane.xlu0 %1691
        %1693 = vadd.xlane.f32.xlu0 %v1689
        %v1694 = vpop.xlane.xlu0 %1693
        %1695 = vadd.xlane.f32.xlu0 %v1690
        %v1696 = vpop.xlane.xlu0 %1695
        %v1697 = vmul.f32 %v1692, %v861
        %v1698 = vmul.f32 %v1694, %v861
        %v1699 = vmul.f32 %v1696, %v861
        %v1700 = vadd.f32 %v1697, 1e-05
        %v1701 = vadd.f32 %v1698, 1e-05
        %v1702 = vadd.f32 %v1699, 1e-05
        %v1703 = vrsqrt.pop %v1700
        %v1704 = vrsqrt.pop %v1701
        %v1705 = vrsqrt.pop %v1702
        %v1706 = vmul.f32 %v1685, %v1703
        %v1707 = vmul.f32 %v1686, %v1704
        %v1708 = vmul.f32 %v1687, %v1705
        %v1710 = vlaneseq
        %v1711 = vshrl.u32 %v1710, 7
        %v1712 = vsub.s32 0, %v1711
        %v1713 = vrot.slane %v1674, %v1712
        %v1715 = vmul.f32 %v1706, %v1713
        %v1716 = vmul.f32 %v1707, %v1713
        %v1717 = vmul.f32 %v1708, %v1713
        %v1719 = vlaneseq
        %v1720 = vshrl.u32 %v1719, 7
        %v1721 = vsub.s32 0, %v1720
        %v1722 = vrot.slane %v1675, %v1721
        %v1724 = vadd.f32 %v1715, %v1722
        %v1725 = vadd.f32 %v1716, %v1722
        %v1726 = vadd.f32 %v1717, %v1722
        %v1727 = vpack.c.bf16 %v1725, %v1724
        %v1728 = vpack.c.bf16 %v1726, %v1726
        %v1729 = vld [vmem:[%s761] sm:$0xff]
        %v1730 = vld [vmem:[%s761 + $0x8] sm:$0xff]
        %v1731 = vld [vmem:[%s761 + $0x10] sm:$0xff]
        %v1732 = vld [vmem:[%s761 + $0x18] sm:$0xff]
        %v1733 = vld [vmem:[%s761 + $0x20] sm:$0xff]
        %v1734 = vld [vmem:[%s761 + $0x28] sm:$0xff]
        %v1735 = vld [vmem:[%s761 + $0x30] sm:$0xff]
        %v1736 = vld [vmem:[%s761 + $0x38] sm:$0xff]
        %v1737 = vld [vmem:[%s761 + $0x40] sm:$0xff]
        %v1738 = vld [vmem:[%s761 + $0x48] sm:$0xff]
        %v1739 = vld [vmem:[%s761 + $0x50] sm:$0xff]
        %v1740 = vld [vmem:[%s761 + $0x58] sm:$0xff]
        %v1741 = vld [vmem:[%s761 + $0x60] sm:$0xff]
        %v1742 = vld [vmem:[%s761 + $0x68] sm:$0xff]
        %v1743 = vld [vmem:[%s761 + $0x70] sm:$0xff]
        %v1744 = vld [vmem:[%s761 + $0x78] sm:$0xff]
        %v1745 = vld [vmem:[%s761 + $0x80] sm:$0xff]
        %v1746 = vld [vmem:[%s761 + $0x88] sm:$0xff]
        %v1747 = vld [vmem:[%s761 + $0x90] sm:$0xff]
        %v1748 = vld [vmem:[%s761 + $0x98] sm:$0xff]
        %v1749 = vld [vmem:[%s761 + $0xa0] sm:$0xff]
        %v1750 = vld [vmem:[%s761 + $0xa8] sm:$0xff]
        %v1751 = vld [vmem:[%s761 + $0xb0] sm:$0xff]
        %v1752 = vld [vmem:[%s761 + $0xb8] sm:$0xff]
        %v1753 = vld [vmem:[%s761 + $0xc0] sm:$0xff]
        %v1754 = vld [vmem:[%s761 + $0xc8] sm:$0xff]
        %v1755 = vld [vmem:[%s761 + $0xd0] sm:$0xff]
        %v1756 = vld [vmem:[%s761 + $0xd8] sm:$0xff]
        %v1757 = vld [vmem:[%s761 + $0xe0] sm:$0xff]
        %v1758 = vld [vmem:[%s761 + $0xe8] sm:$0xff]
        %v1759 = vld [vmem:[%s761 + $0xf0] sm:$0xff]
        %v1760 = vld [vmem:[%s761 + $0xf8] sm:$0xff]
        %v1761 = vld [vmem:[%s765] sm:$0xf]
        %v1763 = vlaneseq
        %v1764 = vshrl.u32 %v1763, 7
        %v1765 = vsub.s32 0, %v1764
        %v1766 = vrot.slane %v1761, %v1765
        %v1767 = vlaneseq
        %v1768 = vshrl.u32 %v1767, 7
        %v1769 = vsub.s32 1, %v1768
        %v1770 = vrot.slane %v1761, %v1769
        %v1771 = vlaneseq
        %v1772 = vshrl.u32 %v1771, 7
        %v1773 = vsub.s32 2, %v1772
        %v1774 = vrot.slane %v1761, %v1773
        %v1775 = vlaneseq
        %v1776 = vshrl.u32 %v1775, 7
        %v1777 = vsub.s32 3, %v1776
        %v1778 = vrot.slane %v1761, %v1777
        %v1815 = vunpack.c.l.b16 %v1729
        %v1816 = vunpack.c.h.b16 %v1729
        %v1817 = vunpack.c.l.b16 %v1730
        %v1818 = vunpack.c.h.b16 %v1730
        %v1819 = vunpack.c.l.b16 %v1731
        %v1820 = vunpack.c.h.b16 %v1731
        %v1821 = vunpack.c.l.b16 %v1732
        %v1822 = vunpack.c.h.b16 %v1732
        %v1823 = vunpack.c.l.b16 %v1733
        %v1824 = vunpack.c.h.b16 %v1733
        %v1825 = vunpack.c.l.b16 %v1734
        %v1826 = vunpack.c.h.b16 %v1734
        %v1827 = vunpack.c.l.b16 %v1735
        %v1828 = vunpack.c.h.b16 %v1735
        %v1829 = vunpack.c.l.b16 %v1736
        %v1830 = vunpack.c.h.b16 %v1736
        %v1831 = vunpack.c.l.b16 %v1737
        %v1832 = vunpack.c.h.b16 %v1737
        %v1833 = vunpack.c.l.b16 %v1738
        %v1834 = vunpack.c.h.b16 %v1738
        %v1835 = vunpack.c.l.b16 %v1739
        %v1836 = vunpack.c.h.b16 %v1739
        %v1837 = vunpack.c.l.b16 %v1740
        %v1838 = vunpack.c.h.b16 %v1740
        %v1839 = vunpack.c.l.b16 %v1741
        %v1840 = vunpack.c.h.b16 %v1741
        %v1841 = vunpack.c.l.b16 %v1742
        %v1842 = vunpack.c.h.b16 %v1742
        %v1843 = vunpack.c.l.b16 %v1743
        %v1844 = vunpack.c.h.b16 %v1743
        %v1845 = vunpack.c.l.b16 %v1744
        %v1846 = vunpack.c.h.b16 %v1744
        %v1847 = vunpack.c.l.b16 %v1745
        %v1848 = vunpack.c.h.b16 %v1745
        %v1849 = vunpack.c.l.b16 %v1746
        %v1850 = vunpack.c.h.b16 %v1746
        %v1851 = vunpack.c.l.b16 %v1747
        %v1852 = vunpack.c.h.b16 %v1747
        %v1853 = vunpack.c.l.b16 %v1748
        %v1854 = vunpack.c.h.b16 %v1748
        %v1855 = vunpack.c.l.b16 %v1749
        %v1856 = vunpack.c.h.b16 %v1749
        %v1857 = vunpack.c.l.b16 %v1750
        %v1858 = vunpack.c.h.b16 %v1750
        %v1859 = vunpack.c.l.b16 %v1751
        %v1860 = vunpack.c.h.b16 %v1751
        %v1861 = vunpack.c.l.b16 %v1752
        %v1862 = vunpack.c.h.b16 %v1752
        %v1863 = vunpack.c.l.b16 %v1753
        %v1864 = vunpack.c.h.b16 %v1753
        %v1865 = vunpack.c.l.b16 %v1754
        %v1866 = vunpack.c.h.b16 %v1754
        %v1867 = vunpack.c.l.b16 %v1755
        %v1868 = vunpack.c.h.b16 %v1755
        %v1869 = vunpack.c.l.b16 %v1756
        %v1870 = vunpack.c.h.b16 %v1756
        %v1871 = vunpack.c.l.b16 %v1757
        %v1872 = vunpack.c.h.b16 %v1757
        %v1873 = vunpack.c.l.b16 %v1758
        %v1874 = vunpack.c.h.b16 %v1758
        %v1875 = vunpack.c.l.b16 %v1759
        %v1876 = vunpack.c.h.b16 %v1759
        %v1877 = vunpack.c.l.b16 %v1760
        %v1878 = vunpack.c.h.b16 %v1760
        %v1879 = vpack.c.b16 %v1819, %v1815
        %v1880 = vpack.c.b16 %v1820, %v1816
        %v1881 = vpack.c.b16 %v1821, %v1817
        %v1882 = vpack.c.b16 %v1822, %v1818
        %v1883 = vpack.c.b16 %v1827, %v1823
        %v1884 = vpack.c.b16 %v1828, %v1824
        %v1885 = vpack.c.b16 %v1829, %v1825
        %v1886 = vpack.c.b16 %v1830, %v1826
        %v1887 = vpack.c.b16 %v1835, %v1831
        %v1888 = vpack.c.b16 %v1836, %v1832
        %v1889 = vpack.c.b16 %v1837, %v1833
        %v1890 = vpack.c.b16 %v1838, %v1834
        %v1891 = vpack.c.b16 %v1843, %v1839
        %v1892 = vpack.c.b16 %v1844, %v1840
        %v1893 = vpack.c.b16 %v1845, %v1841
        %v1894 = vpack.c.b16 %v1846, %v1842
        %v1895 = vpack.c.b16 %v1851, %v1847
        %v1896 = vpack.c.b16 %v1852, %v1848
        %v1897 = vpack.c.b16 %v1853, %v1849
        %v1898 = vpack.c.b16 %v1854, %v1850
        %v1899 = vpack.c.b16 %v1859, %v1855
        %v1900 = vpack.c.b16 %v1860, %v1856
        %v1901 = vpack.c.b16 %v1861, %v1857
        %v1902 = vpack.c.b16 %v1862, %v1858
        %v1903 = vpack.c.b16 %v1867, %v1863
        %v1904 = vpack.c.b16 %v1868, %v1864
        %v1905 = vpack.c.b16 %v1869, %v1865
        %v1906 = vpack.c.b16 %v1870, %v1866
        %v1907 = vpack.c.b16 %v1875, %v1871
        %v1908 = vpack.c.b16 %v1876, %v1872
        %v1909 = vpack.c.b16 %v1877, %v1873
        %v1910 = vpack.c.b16 %v1878, %v1874
        %1943 = vmatprep.subr.bf16.mxu0 %v1908
        %1944 = vmatpush1.bf16.msra.mxu0 %v1907
        %1945 = vmatprep.subr.bf16.mxu0 %v1904
        %1946 = vmatpush1.bf16.msra.mxu0 %v1903
        %1947 = vmatprep.subr.bf16.mxu0 %v1900
        %1948 = vmatpush1.bf16.msra.mxu0 %v1899
        %1949 = vmatprep.subr.bf16.mxu0 %v1896
        %1950 = vmatpush1.bf16.msra.mxu0 %v1895
        %1951 = vmatprep.subr.bf16.mxu0 %v1892
        %1952 = vmatpush1.bf16.msra.mxu0 %v1891
        %1953 = vmatprep.subr.bf16.mxu0 %v1888
        %1954 = vmatpush1.bf16.msra.mxu0 %v1887
        %1955 = vmatprep.subr.bf16.mxu0 %v1884
        %1956 = vmatpush1.bf16.msra.mxu0 %v1883
        %1957 = vmatprep.subr.bf16.mxu0 %v1880
        %1958 = vmatpush1.bf16.msra.mxu0 %v1879
        %1959 = vmatprep.subr.bf16.mxu0 0
        %1960 = vmatpush2.bf16.msra.mxu0 0
        %1961 = vmatprep.subr.bf16.mxu0 0
        %1962 = vmatpush2.bf16.msra.mxu0 0
        %1963 = vmatprep.subr.bf16.mxu0 0
        %1964 = vmatpush2.bf16.msra.mxu0 0
        %1965 = vmatprep.subr.bf16.mxu0 0
        %1966 = vmatpush2.bf16.msra.mxu0 0
        %1967 = vmatprep.subr.bf16.mxu0 0
        %1968 = vmatpush2.bf16.msra.mxu0 0
        %1969 = vmatprep.subr.bf16.mxu0 0
        %1970 = vmatpush2.bf16.msra.mxu0 0
        %1971 = vmatprep.subr.bf16.mxu0 0
        %1972 = vmatpush2.bf16.msra.mxu0 0
        %1973 = vmatprep.subr.bf16.mxu0 0
        %1974 = vmatpush2.bf16.msra.mxu0 0
        %1975 = vmatprep.mubr.bf16.mxu0 0
        %1976 = vmatmul.mubr.bf16.gmra.mxu0 %v1727
        %v1977 = vpop.f32.mrf.mxu0
        %v1978 = vadd.f32 %v1766, %v1977
        %v1979 = vpop.f32.mrf.mxu0
        %v1980 = vadd.f32 %v1770, %v1979
        %v1981 = vpop.f32.mrf.mxu0
        %v1982 = vadd.f32 %v1766, %v1981
        %v1983 = vpop.f32.mrf.mxu0
        %v1984 = vadd.f32 %v1770, %v1983
        %1985 = vmatprep.mubr.bf16.mxu0 0
        %1986 = vmatmul.mubr.bf16.gmra.mxu0 %v1728
        %v1987 = vpop.f32.mrf.mxu0
        %v1988 = vadd.f32 %v1766, %v1987
        %v1989 = vpop.f32.mrf.mxu0
        %v1990 = vadd.f32 %v1770, %v1989
        %v1991 = vpop.f32.mrf.mxu0
        %v1992 = vpop.f32.mrf.mxu0
        %1993 = vdwg.mxu0
        %1994 = vmatprep.subr.bf16.mxu0 %v1910
        %1995 = vmatpush1.bf16.msra.mxu0 %v1909
        %1996 = vmatprep.subr.bf16.mxu0 %v1906
        %1997 = vmatpush1.bf16.msra.mxu0 %v1905
        %1998 = vmatprep.subr.bf16.mxu0 %v1902
        %1999 = vmatpush1.bf16.msra.mxu0 %v1901
        %2000 = vmatprep.subr.bf16.mxu0 %v1898
        %2001 = vmatpush1.bf16.msra.mxu0 %v1897
        %2002 = vmatprep.subr.bf16.mxu0 %v1894
        %2003 = vmatpush1.bf16.msra.mxu0 %v1893
        %2004 = vmatprep.subr.bf16.mxu0 %v1890
        %2005 = vmatpush1.bf16.msra.mxu0 %v1889
        %2006 = vmatprep.subr.bf16.mxu0 %v1886
        %2007 = vmatpush1.bf16.msra.mxu0 %v1885
        %2008 = vmatprep.subr.bf16.mxu0 %v1882
        %2009 = vmatpush1.bf16.msra.mxu0 %v1881
        %2010 = vmatprep.subr.bf16.mxu0 0
        %2011 = vmatpush2.bf16.msra.mxu0 0
        %2012 = vmatprep.subr.bf16.mxu0 0
        %2013 = vmatpush2.bf16.msra.mxu0 0
        %2014 = vmatprep.subr.bf16.mxu0 0
        %2015 = vmatpush2.bf16.msra.mxu0 0
        %2016 = vmatprep.subr.bf16.mxu0 0
        %2017 = vmatpush2.bf16.msra.mxu0 0
        %2018 = vmatprep.subr.bf16.mxu0 0
        %2019 = vmatpush2.bf16.msra.mxu0 0
        %2020 = vmatprep.subr.bf16.mxu0 0
        %2021 = vmatpush2.bf16.msra.mxu0 0
        %2022 = vmatprep.subr.bf16.mxu0 0
        %2023 = vmatpush2.bf16.msra.mxu0 0
        %2024 = vmatprep.subr.bf16.mxu0 0
        %2025 = vmatpush2.bf16.msra.mxu0 0
        %2026 = vmatprep.mubr.bf16.mxu0 0
        %2027 = vmatmul.mubr.bf16.gmra.mxu0 %v1727
        %v2028 = vpop.f32.mrf.mxu0
        %v2029 = vadd.f32 %v1774, %v2028
        %v2030 = vpop.f32.mrf.mxu0
        %v2031 = vadd.f32 %v1778, %v2030
        %v2032 = vpop.f32.mrf.mxu0
        %v2033 = vadd.f32 %v1774, %v2032
        %v2034 = vpop.f32.mrf.mxu0
        %v2035 = vadd.f32 %v1778, %v2034
        %2036 = vmatprep.mubr.bf16.mxu0 0
        %2037 = vmatmul.mubr.bf16.gmra.mxu0 %v1728
        %v2038 = vpop.f32.mrf.mxu0
        %v2039 = vadd.f32 %v1774, %v2038
        %v2040 = vpop.f32.mrf.mxu0
        %v2041 = vadd.f32 %v1778, %v2040
        %v2042 = vpop.f32.mrf.mxu0
        %v2043 = vpop.f32.mrf.mxu0
        %2044 = vdwg.mxu0
        %v2045 = vmul.f32 %v1978, 1.702
        %v2046 = vmul.f32 %v1980, 1.702
        %v2047 = vmul.f32 %v2029, 1.702
        %v2048 = vmul.f32 %v2031, 1.702
        %v2049 = vmul.f32 %v1982, 1.702
        %v2050 = vmul.f32 %v1984, 1.702
        %v2051 = vmul.f32 %v2033, 1.702
        %v2052 = vmul.f32 %v2035, 1.702
        %v2053 = vmul.f32 %v1988, 1.702
        %v2054 = vmul.f32 %v1990, 1.702
        %v2055 = vmul.f32 %v2039, 1.702
        %v2056 = vmul.f32 %v2041, 1.702
        %v2057 = vxor.u32 %v2045, 2147483648
        %v2058 = vxor.u32 %v2046, 2147483648
        %v2059 = vxor.u32 %v2047, 2147483648
        %v2060 = vxor.u32 %v2048, 2147483648
        %v2061 = vxor.u32 %v2049, 2147483648
        %v2062 = vxor.u32 %v2050, 2147483648
        %v2063 = vxor.u32 %v2051, 2147483648
        %v2064 = vxor.u32 %v2052, 2147483648
        %v2065 = vxor.u32 %v2053, 2147483648
        %v2066 = vxor.u32 %v2054, 2147483648
        %v2067 = vxor.u32 %v2055, 2147483648
        %v2068 = vxor.u32 %v2056, 2147483648
        %v2069 = vmul.f32 %v2057, 1.442695
        %v2070 = vpow.pop %v2069
        %v2071 = vmul.f32 %v2058, 1.442695
        %v2072 = vpow.pop %v2071
        %v2073 = vmul.f32 %v2059, 1.442695
        %v2074 = vpow.pop %v2073
        %v2075 = vmul.f32 %v2060, 1.442695
        %v2076 = vpow.pop %v2075
        %v2077 = vmul.f32 %v2061, 1.442695
        %v2078 = vpow.pop %v2077
        %v2079 = vmul.f32 %v2062, 1.442695
        %v2080 = vpow.pop %v2079
        %v2081 = vmul.f32 %v2063, 1.442695
        %v2082 = vpow.pop %v2081
        %v2083 = vmul.f32 %v2064, 1.442695
        %v2084 = vpow.pop %v2083
        %v2085 = vmul.f32 %v2065, 1.442695
        %v2086 = vpow.pop %v2085
        %v2087 = vmul.f32 %v2066, 1.442695
        %v2088 = vpow.pop %v2087
        %v2089 = vmul.f32 %v2067, 1.442695
        %v2090 = vpow.pop %v2089
        %v2091 = vmul.f32 %v2068, 1.442695
        %v2092 = vpow.pop %v2091
        %v2093 = vadd.f32 %v2070, 1.0
        %v2094 = vadd.f32 %v2072, 1.0
        %v2095 = vadd.f32 %v2074, 1.0
        %v2096 = vadd.f32 %v2076, 1.0
        %v2097 = vadd.f32 %v2078, 1.0
        %v2098 = vadd.f32 %v2080, 1.0
        %v2099 = vadd.f32 %v2082, 1.0
        %v2100 = vadd.f32 %v2084, 1.0
        %v2101 = vadd.f32 %v2086, 1.0
        %v2102 = vadd.f32 %v2088, 1.0
        %v2103 = vadd.f32 %v2090, 1.0
        %v2104 = vadd.f32 %v2092, 1.0
        %v2105 = vrcp.pop %v2093
        %v2106 = vmul.f32 1.0, %v2105
        %v2107 = vrcp.pop %v2094
        %v2108 = vmul.f32 1.0, %v2107
        %v2109 = vrcp.pop %v2095
        %v2110 = vmul.f32 1.0, %v2109
        %v2111 = vrcp.pop %v2096
        %v2112 = vmul.f32 1.0, %v2111
        %v2113 = vrcp.pop %v2097
        %v2114 = vmul.f32 1.0, %v2113
        %v2115 = vrcp.pop %v2098
        %v2116 = vmul.f32 1.0, %v2115
        %v2117 = vrcp.pop %v2099
        %v2118 = vmul.f32 1.0, %v2117
        %v2119 = vrcp.pop %v2100
        %v2120 = vmul.f32 1.0, %v2119
        %v2121 = vrcp.pop %v2101
        %v2122 = vmul.f32 1.0, %v2121
        %v2123 = vrcp.pop %v2102
        %v2124 = vmul.f32 1.0, %v2123
        %v2125 = vrcp.pop %v2103
        %v2126 = vmul.f32 1.0, %v2125
        %v2127 = vrcp.pop %v2104
        %v2128 = vmul.f32 1.0, %v2127
        %v2129 = vmul.f32 %v1978, %v2106
        %v2130 = vmul.f32 %v1980, %v2108
        %v2131 = vmul.f32 %v2029, %v2110
        %v2132 = vmul.f32 %v2031, %v2112
        %v2133 = vmul.f32 %v1982, %v2114
        %v2134 = vmul.f32 %v1984, %v2116
        %v2135 = vmul.f32 %v2033, %v2118
        %v2136 = vmul.f32 %v2035, %v2120
        %v2137 = vmul.f32 %v1988, %v2122
        %v2138 = vmul.f32 %v1990, %v2124
        %v2139 = vmul.f32 %v2039, %v2126
        %v2140 = vmul.f32 %v2041, %v2128
        %v2141 = vpack.c.bf16 %v2133, %v2129
        %v2142 = vpack.c.bf16 %v2134, %v2130
        %v2143 = vpack.c.bf16 %v2135, %v2131
        %v2144 = vpack.c.bf16 %v2136, %v2132
        %v2145 = vpack.c.bf16 %v2137, %v2137
        %v2146 = vpack.c.bf16 %v2138, %v2138
        %v2147 = vpack.c.bf16 %v2139, %v2139
        %v2148 = vpack.c.bf16 %v2140, %v2140
        %v2149 = vld [vmem:[%s770] sm:$0xf]
        %v2150 = vld [vmem:[%s770 + $0x4] sm:$0xf]
        %v2151 = vld [vmem:[%s770 + $0x8] sm:$0xf]
        %v2152 = vld [vmem:[%s770 + $0xc] sm:$0xf]
        %v2153 = vld [vmem:[%s770 + $0x10] sm:$0xf]
        %v2154 = vld [vmem:[%s770 + $0x14] sm:$0xf]
        %v2155 = vld [vmem:[%s770 + $0x18] sm:$0xf]
        %v2156 = vld [vmem:[%s770 + $0x1c] sm:$0xf]
        %v2157 = vld [vmem:[%s770 + $0x20] sm:$0xf]
        %v2158 = vld [vmem:[%s770 + $0x24] sm:$0xf]
        %v2159 = vld [vmem:[%s770 + $0x28] sm:$0xf]
        %v2160 = vld [vmem:[%s770 + $0x2c] sm:$0xf]
        %v2161 = vld [vmem:[%s770 + $0x30] sm:$0xf]
        %v2162 = vld [vmem:[%s770 + $0x34] sm:$0xf]
        %v2163 = vld [vmem:[%s770 + $0x38] sm:$0xf]
        %v2164 = vld [vmem:[%s770 + $0x3c] sm:$0xf]
        %v2165 = vld [vmem:[%s770 + $0x40] sm:$0xf]
        %v2166 = vld [vmem:[%s770 + $0x44] sm:$0xf]
        %v2167 = vld [vmem:[%s770 + $0x48] sm:$0xf]
        %v2168 = vld [vmem:[%s770 + $0x4c] sm:$0xf]
        %v2169 = vld [vmem:[%s770 + $0x50] sm:$0xf]
        %v2170 = vld [vmem:[%s770 + $0x54] sm:$0xf]
        %v2171 = vld [vmem:[%s770 + $0x58] sm:$0xf]
        %v2172 = vld [vmem:[%s770 + $0x5c] sm:$0xf]
        %v2173 = vld [vmem:[%s770 + $0x60] sm:$0xf]
        %v2174 = vld [vmem:[%s770 + $0x64] sm:$0xf]
        %v2175 = vld [vmem:[%s770 + $0x68] sm:$0xf]
        %v2176 = vld [vmem:[%s770 + $0x6c] sm:$0xf]
        %v2177 = vld [vmem:[%s770 + $0x70] sm:$0xf]
        %v2178 = vld [vmem:[%s770 + $0x74] sm:$0xf]
        %v2179 = vld [vmem:[%s770 + $0x78] sm:$0xf]
        %v2180 = vld [vmem:[%s770 + $0x7c] sm:$0xf]
        %v2181 = vld [vmem:[%s770 + $0x80] sm:$0xf]
        %v2182 = vld [vmem:[%s770 + $0x84] sm:$0xf]
        %v2183 = vld [vmem:[%s770 + $0x88] sm:$0xf]
        %v2184 = vld [vmem:[%s770 + $0x8c] sm:$0xf]
        %v2185 = vld [vmem:[%s770 + $0x90] sm:$0xf]
        %v2186 = vld [vmem:[%s770 + $0x94] sm:$0xf]
        %v2187 = vld [vmem:[%s770 + $0x98] sm:$0xf]
        %v2188 = vld [vmem:[%s770 + $0x9c] sm:$0xf]
        %v2189 = vld [vmem:[%s770 + $0xa0] sm:$0xf]
        %v2190 = vld [vmem:[%s770 + $0xa4] sm:$0xf]
        %v2191 = vld [vmem:[%s770 + $0xa8] sm:$0xf]
        %v2192 = vld [vmem:[%s770 + $0xac] sm:$0xf]
        %v2193 = vld [vmem:[%s770 + $0xb0] sm:$0xf]
        %v2194 = vld [vmem:[%s770 + $0xb4] sm:$0xf]
        %v2195 = vld [vmem:[%s770 + $0xb8] sm:$0xf]
        %v2196 = vld [vmem:[%s770 + $0xbc] sm:$0xf]
        %v2197 = vld [vmem:[%s770 + $0xc0] sm:$0xf]
        %v2198 = vld [vmem:[%s770 + $0xc4] sm:$0xf]
        %v2199 = vld [vmem:[%s770 + $0xc8] sm:$0xf]
        %v2200 = vld [vmem:[%s770 + $0xcc] sm:$0xf]
        %v2201 = vld [vmem:[%s770 + $0xd0] sm:$0xf]
        %v2202 = vld [vmem:[%s770 + $0xd4] sm:$0xf]
        %v2203 = vld [vmem:[%s770 + $0xd8] sm:$0xf]
        %v2204 = vld [vmem:[%s770 + $0xdc] sm:$0xf]
        %v2205 = vld [vmem:[%s770 + $0xe0] sm:$0xf]
        %v2206 = vld [vmem:[%s770 + $0xe4] sm:$0xf]
        %v2207 = vld [vmem:[%s770 + $0xe8] sm:$0xf]
        %v2208 = vld [vmem:[%s770 + $0xec] sm:$0xf]
        %v2209 = vld [vmem:[%s770 + $0xf0] sm:$0xf]
        %v2210 = vld [vmem:[%s770 + $0xf4] sm:$0xf]
        %v2211 = vld [vmem:[%s770 + $0xf8] sm:$0xf]
        %v2212 = vld [vmem:[%s770 + $0xfc] sm:$0xf]
        %v2213 = vld [vmem:[%s773] sm:$0x1]
        %v2215 = vlaneseq
        %v2216 = vshrl.u32 %v2215, 7
        %v2217 = vsub.s32 0, %v2216
        %v2218 = vrot.slane %v2213, %v2217
        %v2284 = vunpack.c.l.b16 %v2149
        %v2285 = vunpack.c.l.b16 %v2150
        %v2286 = vunpack.c.l.b16 %v2151
        %v2287 = vunpack.c.l.b16 %v2152
        %v2288 = vunpack.c.l.b16 %v2153
        %v2289 = vunpack.c.l.b16 %v2154
        %v2290 = vunpack.c.l.b16 %v2155
        %v2291 = vunpack.c.l.b16 %v2156
        %v2292 = vunpack.c.l.b16 %v2157
        %v2293 = vunpack.c.l.b16 %v2158
        %v2294 = vunpack.c.l.b16 %v2159
        %v2295 = vunpack.c.l.b16 %v2160
        %v2296 = vunpack.c.l.b16 %v2161
        %v2297 = vunpack.c.l.b16 %v2162
        %v2298 = vunpack.c.l.b16 %v2163
        %v2299 = vunpack.c.l.b16 %v2164
        %v2300 = vunpack.c.l.b16 %v2165
        %v2301 = vunpack.c.l.b16 %v2166
        %v2302 = vunpack.c.l.b16 %v2167
        %v2303 = vunpack.c.l.b16 %v2168
        %v2304 = vunpack.c.l.b16 %v2169
        %v2305 = vunpack.c.l.b16 %v2170
        %v2306 = vunpack.c.l.b16 %v2171
        %v2307 = vunpack.c.l.b16 %v2172
        %v2308 = vunpack.c.l.b16 %v2173
        %v2309 = vunpack.c.l.b16 %v2174
        %v2310 = vunpack.c.l.b16 %v2175
        %v2311 = vunpack.c.l.b16 %v2176
        %v2312 = vunpack.c.l.b16 %v2177
        %v2313 = vunpack.c.l.b16 %v2178
        %v2314 = vunpack.c.l.b16 %v2179
        %v2315 = vunpack.c.l.b16 %v2180
        %v2316 = vunpack.c.l.b16 %v2181
        %v2317 = vunpack.c.l.b16 %v2182
        %v2318 = vunpack.c.l.b16 %v2183
        %v2319 = vunpack.c.l.b16 %v2184
        %v2320 = vunpack.c.l.b16 %v2185
        %v2321 = vunpack.c.l.b16 %v2186
        %v2322 = vunpack.c.l.b16 %v2187
        %v2323 = vunpack.c.l.b16 %v2188
        %v2324 = vunpack.c.l.b16 %v2189
        %v2325 = vunpack.c.l.b16 %v2190
        %v2326 = vunpack.c.l.b16 %v2191
        %v2327 = vunpack.c.l.b16 %v2192
        %v2328 = vunpack.c.l.b16 %v2193
        %v2329 = vunpack.c.l.b16 %v2194
        %v2330 = vunpack.c.l.b16 %v2195
        %v2331 = vunpack.c.l.b16 %v2196
        %v2332 = vunpack.c.l.b16 %v2197
        %v2333 = vunpack.c.l.b16 %v2198
        %v2334 = vunpack.c.l.b16 %v2199
        %v2335 = vunpack.c.l.b16 %v2200
        %v2336 = vunpack.c.l.b16 %v2201
        %v2337 = vunpack.c.l.b16 %v2202
        %v2338 = vunpack.c.l.b16 %v2203
        %v2339 = vunpack.c.l.b16 %v2204
        %v2340 = vunpack.c.l.b16 %v2205
        %v2341 = vunpack.c.l.b16 %v2206
        %v2342 = vunpack.c.l.b16 %v2207
        %v2343 = vunpack.c.l.b16 %v2208
        %v2344 = vunpack.c.l.b16 %v2209
        %v2345 = vunpack.c.l.b16 %v2210
        %v2346 = vunpack.c.l.b16 %v2211
        %v2347 = vunpack.c.l.b16 %v2212
        %v2348 = vpack.c.b16 %v2285, %v2284
        %v2349 = vpack.c.b16 %v2287, %v2286
        %v2350 = vpack.c.b16 %v2289, %v2288
        %v2351 = vpack.c.b16 %v2291, %v2290
        %v2352 = vpack.c.b16 %v2293, %v2292
        %v2353 = vpack.c.b16 %v2295, %v2294
        %v2354 = vpack.c.b16 %v2297, %v2296
        %v2355 = vpack.c.b16 %v2299, %v2298
        %v2356 = vpack.c.b16 %v2301, %v2300
        %v2357 = vpack.c.b16 %v2303, %v2302
        %v2358 = vpack.c.b16 %v2305, %v2304
        %v2359 = vpack.c.b16 %v2307, %v2306
        %v2360 = vpack.c.b16 %v2309, %v2308
        %v2361 = vpack.c.b16 %v2311, %v2310
        %v2362 = vpack.c.b16 %v2313, %v2312
        %v2363 = vpack.c.b16 %v2315, %v2314
        %v2364 = vpack.c.b16 %v2317, %v2316
        %v2365 = vpack.c.b16 %v2319, %v2318
        %v2366 = vpack.c.b16 %v2321, %v2320
        %v2367 = vpack.c.b16 %v2323, %v2322
        %v2368 = vpack.c.b16 %v2325, %v2324
        %v2369 = vpack.c.b16 %v2327, %v2326
        %v2370 = vpack.c.b16 %v2329, %v2328
        %v2371 = vpack.c.b16 %v2331, %v2330
        %v2372 = vpack.c.b16 %v2333, %v2332
        %v2373 = vpack.c.b16 %v2335, %v2334
        %v2374 = vpack.c.b16 %v2337, %v2336
        %v2375 = vpack.c.b16 %v2339, %v2338
        %v2376 = vpack.c.b16 %v2341, %v2340
        %v2377 = vpack.c.b16 %v2343, %v2342
        %v2378 = vpack.c.b16 %v2345, %v2344
        %v2379 = vpack.c.b16 %v2347, %v2346
        %2412 = vmatprep.subr.bf16.mxu0 0
        %2413 = vmatpush1.bf16.msra.mxu0 %v2355
        %2414 = vmatprep.subr.bf16.mxu0 0
        %2415 = vmatpush1.bf16.msra.mxu0 %v2354
        %2416 = vmatprep.subr.bf16.mxu0 0
        %2417 = vmatpush1.bf16.msra.mxu0 %v2353
        %2418 = vmatprep.subr.bf16.mxu0 0
        %2419 = vmatpush1.bf16.msra.mxu0 %v2352
        %2420 = vmatprep.subr.bf16.mxu0 0
        %2421 = vmatpush1.bf16.msra.mxu0 %v2351
        %2422 = vmatprep.subr.bf16.mxu0 0
        %2423 = vmatpush1.bf16.msra.mxu0 %v2350
        %2424 = vmatprep.subr.bf16.mxu0 0
        %2425 = vmatpush1.bf16.msra.mxu0 %v2349
        %2426 = vmatprep.subr.bf16.mxu0 0
        %2427 = vmatpush1.bf16.msra.mxu0 %v2348
        %2428 = vmatprep.subr.bf16.mxu0 0
        %2429 = vmatpush2.bf16.msra.mxu0 %v2363
        %2430 = vmatprep.subr.bf16.mxu0 0
        %2431 = vmatpush2.bf16.msra.mxu0 %v2362
        %2432 = vmatprep.subr.bf16.mxu0 0
        %2433 = vmatpush2.bf16.msra.mxu0 %v2361
        %2434 = vmatprep.subr.bf16.mxu0 0
        %2435 = vmatpush2.bf16.msra.mxu0 %v2360
        %2436 = vmatprep.subr.bf16.mxu0 0
        %2437 = vmatpush2.bf16.msra.mxu0 %v2359
        %2438 = vmatprep.subr.bf16.mxu0 0
        %2439 = vmatpush2.bf16.msra.mxu0 %v2358
        %2440 = vmatprep.subr.bf16.mxu0 0
        %2441 = vmatpush2.bf16.msra.mxu0 %v2357
        %2442 = vmatprep.subr.bf16.mxu0 0
        %2443 = vmatpush2.bf16.msra.mxu0 %v2356
        %2444 = vmatprep.mubr.bf16.mxu0 %v2142
        %2445 = vmatmul.mubr.bf16.gmra.mxu0 %v2141
        %v2446 = vpop.f32.mrf.mxu0
        %v2447 = vadd.f32 %v2218, %v2446
        %v2448 = vpop.f32.mrf.mxu0
        %v2449 = vpop.f32.mrf.mxu0
        %v2450 = vadd.f32 %v2218, %v2449
        %v2451 = vpop.f32.mrf.mxu0
        %2452 = vmatprep.mubr.bf16.mxu0 %v2146
        %2453 = vmatmul.mubr.bf16.gmra.mxu0 %v2145
        %v2454 = vpop.f32.mrf.mxu0
        %v2455 = vadd.f32 %v2218, %v2454
        %v2456 = vpop.f32.mrf.mxu0
        %v2457 = vpop.f32.mrf.mxu0
        %v2458 = vpop.f32.mrf.mxu0
        %2459 = vdwg.mxu0
        %2460 = vmatprep.subr.bf16.mxu0 0
        %2461 = vmatpush1.bf16.msra.mxu0 %v2371
        %2462 = vmatprep.subr.bf16.mxu0 0
        %2463 = vmatpush1.bf16.msra.mxu0 %v2370
        %2464 = vmatprep.subr.bf16.mxu0 0
        %2465 = vmatpush1.bf16.msra.mxu0 %v2369
        %2466 = vmatprep.subr.bf16.mxu0 0
        %2467 = vmatpush1.bf16.msra.mxu0 %v2368
        %2468 = vmatprep.subr.bf16.mxu0 0
        %2469 = vmatpush1.bf16.msra.mxu0 %v2367
        %2470 = vmatprep.subr.bf16.mxu0 0
        %2471 = vmatpush1.bf16.msra.mxu0 %v2366
        %2472 = vmatprep.subr.bf16.mxu0 0
        %2473 = vmatpush1.bf16.msra.mxu0 %v2365
        %2474 = vmatprep.subr.bf16.mxu0 0
        %2475 = vmatpush1.bf16.msra.mxu0 %v2364
        %2476 = vmatprep.subr.bf16.mxu0 0
        %2477 = vmatpush2.bf16.msra.mxu0 %v2379
        %2478 = vmatprep.subr.bf16.mxu0 0
        %2479 = vmatpush2.bf16.msra.mxu0 %v2378
        %2480 = vmatprep.subr.bf16.mxu0 0
        %2481 = vmatpush2.bf16.msra.mxu0 %v2377
        %2482 = vmatprep.subr.bf16.mxu0 0
        %2483 = vmatpush2.bf16.msra.mxu0 %v2376
        %2484 = vmatprep.subr.bf16.mxu0 0
        %2485 = vmatpush2.bf16.msra.mxu0 %v2375
        %2486 = vmatprep.subr.bf16.mxu0 0
        %2487 = vmatpush2.bf16.msra.mxu0 %v2374
        %2488 = vmatprep.subr.bf16.mxu0 0
        %2489 = vmatpush2.bf16.msra.mxu0 %v2373
        %2490 = vmatprep.subr.bf16.mxu0 0
        %2491 = vmatpush2.bf16.msra.mxu0 %v2372
        %2492 = vmatprep.mubr.bf16.mxu0 %v2144
        %2493 = vmatmul.mubr.bf16.gmra.mxu0 %v2143
        %v2494 = vpop.f32.mrf.mxu0
        %v2495 = vadd.f32 %v2447, %v2494
        %v2496 = vpop.f32.mrf.mxu0
        %v2497 = vpop.f32.mrf.mxu0
        %v2498 = vadd.f32 %v2450, %v2497
        %v2499 = vpop.f32.mrf.mxu0
        %2500 = vmatprep.mubr.bf16.mxu0 %v2148
        %2501 = vmatmul.mubr.bf16.gmra.mxu0 %v2147
        %v2502 = vpop.f32.mrf.mxu0
        %v2503 = vadd.f32 %v2455, %v2502
        %v2504 = vpop.f32.mrf.mxu0
        %v2505 = vpop.f32.mrf.mxu0
        %v2506 = vpop.f32.mrf.mxu0
        %2507 = vdwg.mxu0
        %v2508 = vadd.f32 %v1671, %v2495
        %v2509 = vadd.f32 %v1672, %v2498
        %v2510 = vadd.f32 %v1673, %v2503
        %2511 = vst [vmem:[#allocation2] sm:$0xff] %v2508
        %2512 = vst [vmem:[#allocation2 + $0x8] sm:$0xff] %v2509
        %2513 = vst [vmem:[#allocation2 + $0x10] sm:$0xff] %v2510
        %p2514 = scmp.eq.s32.totalorder %s36, 1
        // Predicated region
        $region97: #{_lambda_.6} parent=87 // pred_check
          %p2515 = pneg %p2514
        $region98: #{_lambda_.6} parent=87 // pred_check_branch
          %2517 = sbr.rel (%p2515) target = $region100
        $region99: #{_lambda_.6} parent=87 // pred_region
          %2518 = vst [vmem:[%s778] sm:$0xff] %v2508
          %2519 = vst [vmem:[%s778 + $0x8] sm:$0xff] %v2509
          %2520 = vst [vmem:[%s778 + $0x10] sm:$0xff] %v2510
        $region100: #{_lambda_.6} parent=87 // pred_fallthru
          _
        %p2521 = scmp.lt.s32.totalorder %s35, 1
        %s2522 = scalar_select %p2521, %s35, 1
        %s2523 = smul.addr %s2522, 3
        %s2524 = smul.addr %s2523, 8
        %s2525 = scalar_lea.vmem %s17, %s2524
        // Predicated region
        $region101: #{_lambda_.6} parent=87 // pred_check
          %p2526 = pneg %p483
        $region102: #{_lambda_.6} parent=87 // pred_check_branch
          %2528 = sbr.rel (%p2526) target = $region104
        $region103: #{_lambda_.6} parent=87 // pred_region
          _
        $region104: #{_lambda_.6} parent=87 // pred_fallthru
          _
      $region88: #{_lambda_.6} parent=5 // pred_fallthru
        _
      %p2529 = scmp.le.s32.totalorder 2, %s26
      // Predicated region
      $region105: #{_lambda_.6} parent=5 // pred_check
        %p2530 = pneg %p2529
      $region106: #{_lambda_.6} parent=5 // pred_check_branch
        %2532 = sbr.rel (%p2530) target = $region108
      $region107: #{_lambda_.6} parent=5 // pred_region
        %s2533 = ssub.s32 %s26, 2
        // Predicated region
        $region109: #{_lambda_.6} parent=107 // pred_check
          %p2534 = pneg %p489
        $region110: #{_lambda_.6} parent=107 // pred_check_branch
          %2536 = sbr.rel (%p2534) target = $region112
        $region111: #{_lambda_.6} parent=107 // pred_region
          %p2537 = scmp.lt.s32.totalorder %s37, 1
          %s2538 = scalar_select %p2537, %s37, 1
          %s2539 = smul.addr %s2538, 3
          %s2540 = smul.addr %s2539, 8
          %s2541 = scalar_lea.vmem %s17, %s2540
        $region112: #{_lambda_.6} parent=107 // pred_fallthru
          _
      $region108: #{_lambda_.6} parent=5 // pred_fallthru
        _
    $region6: #{_lambda_.6} parent=1 // loop_footer
      %s30 = sadd.s32 1, %s26
    $region7: #{_lambda_.6} parent=1 // loop_footer_branch
      %25 = sbr.rel target = $region3
    $region8: #{_lambda_.6} parent=1 // loop_exit
      _
    %2542 = vsyncpa [#allocation4], 1
    %s2543 = scalar_lea.sflag [#allocation4], 1
    %2544 = vsyncpa %s2543, 1

// kernel: _lambda_.8
$region0: #{_lambda_.8}
  #allocation0 [shape = 'u32[]', space=smem, size = 0x4, offset = 0x4, fixed_abs, tag = 'smem constant byte address 0x4 - core index']
  #allocation1 [shape = 'u32[144,128]{1,0:T(1,128)}', space=vmem, size = 0x12000, scoped, tag = 'internal scratch']
  #allocation2 [shape = 'f32[16,128]{1,0:T(8,128)}', space=vmem, size = 0x2000, scoped, tag = 'scratch operand']
  %s0 = inlined_call_operand.vmem [shape: f32[4,8,128], index: 0, kind: input, shape index: {}]
  %s1 = inlined_call_operand.vmem [shape: f32[8,128], index: 1, kind: input, shape index: {}]
  %s2 = inlined_call_operand.vmem [shape: f32[8,8], index: 2, kind: input, shape index: {}]
  %s3 = inlined_call_operand.vmem [shape: f32[1,128], index: 3, kind: input, shape index: {}]
  %s4 = inlined_call_operand.vmem [shape: f32[1,128], index: 4, kind: input, shape index: {}]
  %s5 = inlined_call_operand.vmem [shape: f32[2,1,128], index: 5, kind: input, shape index: {}]
  %s6 = inlined_call_operand.vmem [shape: f32[2,1,128], index: 6, kind: input, shape index: {}]
  %s7 = inlined_call_operand.vmem [shape: bf16[2,128,384], index: 7, kind: input, shape index: {}]
  %s8 = inlined_call_operand.vmem [shape: f32[2,1,384], index: 8, kind: input, shape index: {}]
  %s9 = inlined_call_operand.vmem [shape: bf16[2,128,128], index: 9, kind: input, shape index: {}]
  %s10 = inlined_call_operand.vmem [shape: f32[2,1,128], index: 10, kind: input, shape index: {}]
  %s11 = inlined_call_operand.vmem [shape: f32[2,1,128], index: 11, kind: input, shape index: {}]
  %s12 = inlined_call_operand.vmem [shape: f32[2,1,128], index: 12, kind: input, shape index: {}]
  %s13 = inlined_call_operand.vmem [shape: bf16[2,128,512], index: 13, kind: input, shape index: {}]
  %s14 = inlined_call_operand.vmem [shape: f32[2,1,512], index: 14, kind: input, shape index: {}]
  %s15 = inlined_call_operand.vmem [shape: bf16[2,512,128], index: 15, kind: input, shape index: {}]
  %s16 = inlined_call_operand.vmem [shape: f32[2,1,128], index: 16, kind: input, shape index: {}]
  %s17 = inlined_call_operand.vmem [shape: f32[4,8,128], index: 17, kind: output, shape index: {}]
  %s18 = sld [smem:[#allocation0]]
  $region109: #{_lambda_.8} parent=0
    _
  %s20 = ssub.s32 1, %s18
  %s21 = scalar_select 0, %s20, %s18
  loop: start=0, step=1, limit=6
  $region2: #{_lambda_.8} parent=0 // loop_pre_header
    _
  $region3: #{_lambda_.8} parent=0 // loop_header
    %s23 = sphi 0, %s27
    %p24 = scmp.ge.s32.totalorder %s23, 6
    %s30 = sphi 0, %s42
    %s31 = sphi 0, %s38
    %s32 = sphi 0, %s30
    %s33 = sphi 0, %s31
    %s34 = sphi 0, %s32
    %s35 = sphi 0, %s33
    %s45 = sphi 0, %s47
    %s48 = sphi 0, %s45
    %s49 = sphi 0, %s48
    %s65 = sphi 0, %s49
    %s69 = sphi 0, %s69
    %s71 = sphi 0, %s69
    %s72 = sphi 0, %s71
    %s86 = sphi 0, %s72
    %s90 = sphi 0, %s90
    %s92 = sphi 0, %s90
    %s93 = sphi 0, %s92
    %s107 = sphi 0, %s93
    %s111 = sphi 0, %s111
    %s113 = sphi 0, %s111
    %s114 = sphi 0, %s113
    %s128 = sphi 0, %s114
    %s132 = sphi 0, %s132
    %s134 = sphi 0, %s132
    %s135 = sphi 0, %s134
    %s149 = sphi 0, %s135
    %s155 = sphi 0, %s157
    %s158 = sphi 0, %s155
    %s159 = sphi 0, %s158
    %s175 = sphi 0, %s159
    %s181 = sphi 0, %s183
    %s184 = sphi 0, %s181
    %s185 = sphi 0, %s184
    %s201 = sphi 0, %s185
    %s207 = sphi 0, %s209
    %s210 = sphi 0, %s207
    %s211 = sphi 0, %s210
    %s227 = sphi 0, %s211
    %s233 = sphi 0, %s235
    %s236 = sphi 0, %s233
    %s237 = sphi 0, %s236
    %s253 = sphi 0, %s237
    %s259 = sphi 0, %s261
    %s262 = sphi 0, %s259
    %s263 = sphi 0, %s262
    %s279 = sphi 0, %s263
    %s285 = sphi 0, %s287
    %s288 = sphi 0, %s285
    %s289 = sphi 0, %s288
    %s305 = sphi 0, %s289
    %s311 = sphi 0, %s313
    %s314 = sphi 0, %s311
    %s315 = sphi 0, %s314
    %s331 = sphi 0, %s315
    %s337 = sphi 0, %s339
    %s340 = sphi 0, %s337
    %s341 = sphi 0, %s340
    %s357 = sphi 0, %s341
    %s363 = sphi 0, %s365
    %s366 = sphi 0, %s363
    %s367 = sphi 0, %s366
    %s383 = sphi 0, %s367
    %s389 = sphi 0, %s391
    %s392 = sphi 0, %s389
    %s393 = sphi 0, %s392
    %s409 = sphi 0, %s393
    %s415 = sphi 0, %s417
    %s418 = sphi 0, %s415
    %s419 = sphi 0, %s418
    %s435 = sphi 0, %s419
    %s441 = sphi 0, %s443
    %s444 = sphi 0, %s441
    %s445 = sphi 0, %s444
    %s461 = sphi 0, %s445
    %s467 = sphi 0, %s469
    %s470 = sphi 0, %s467
    %s471 = sphi 0, %s470
    %s487 = sphi 0, %s471
  $region4: #{_lambda_.8} parent=0 // loop_header_branch
    %26 = sbr.rel (%p24) target = $region8
  $region5: #{_lambda_.8} parent=0 // loop_body
    %s28 = ssub.s32 %s23, 1
    %s29 = ssub.s32 %s23, 2
    %s36 = sadd.s32 1, %s31
    %p37 = scmp.ge.s32.totalorder %s36, 2
    %s38 = scalar_select %p37, 0, %s36
    %s39 = sadd.s32 1, %s30
    %s40 = scalar_select %p37, %s39, %s30
    %p41 = scmp.ge.s32.totalorder %s40, 2
    %s42 = scalar_select %p41, 0, %s40
    %s43 = ssub.s32 %s30, %s42
    %p44 = scmp.eq.s32.totalorder %s43, 0
    %s46 = sadd.s32 %s45, 1
    %s47 = scalar_select %p44, %s45, %s46
    %p50 = pneg %p44
    %p51 = scmp.eq.s32.totalorder %s23, 3
    %p52 = por %p50, %p51
    %p53 = scmp.ne.s32.totalorder %s45, %s48
    %p54 = scmp.eq.s32.totalorder %s23, 0
    %p55 = por %p53, %p54
    %p56 = scmp.ne.s32.totalorder %s45, %s48
    %p57 = scmp.eq.s32.totalorder %s28, 3
    %p58 = por %p56, %p57
    %p59 = scmp.ne.s32.totalorder %s48, %s49
    %p60 = scmp.eq.s32.totalorder %s28, 0
    %p61 = por %p59, %p60
    %p62 = scmp.ne.s32.totalorder %s48, %s49
    %p63 = scmp.eq.s32.totalorder %s29, 3
    %p64 = por %p62, %p63
    %p66 = scmp.ne.s32.totalorder %s49, %s65
    %p67 = scmp.eq.s32.totalorder %s29, 0
    %p68 = por %p66, %p67
    %s70 = sadd.s32 %s69, 1
    %p73 = scmp.eq.s32.totalorder %s23, 3
    %p74 = scmp.ne.s32.totalorder %s69, %s71
    %p75 = scmp.eq.s32.totalorder %s23, 0
    %p76 = por %p74, %p75
    %p77 = scmp.ne.s32.totalorder %s69, %s71
    %p78 = scmp.eq.s32.totalorder %s28, 3
    %p79 = por %p77, %p78
    %p80 = scmp.ne.s32.totalorder %s71, %s72
    %p81 = scmp.eq.s32.totalorder %s28, 0
    %p82 = por %p80, %p81
    %p83 = scmp.ne.s32.totalorder %s71, %s72
    %p84 = scmp.eq.s32.totalorder %s29, 3
    %p85 = por %p83, %p84
    %p87 = scmp.ne.s32.totalorder %s72, %s86
    %p88 = scmp.eq.s32.totalorder %s29, 0
    %p89 = por %p87, %p88
    %s91 = sadd.s32 %s90, 1
    %p94 = scmp.eq.s32.totalorder %s23, 3
    %p95 = scmp.ne.s32.totalorder %s90, %s92
    %p96 = scmp.eq.s32.totalorder %s23, 0
    %p97 = por %p95, %p96
    %p98 = scmp.ne.s32.totalorder %s90, %s92
    %p99 = scmp.eq.s32.totalorder %s28, 3
    %p100 = por %p98, %p99
    %p101 = scmp.ne.s32.totalorder %s92, %s93
    %p102 = scmp.eq.s32.totalorder %s28, 0
    %p103 = por %p101, %p102
    %p104 = scmp.ne.s32.totalorder %s92, %s93
    %p105 = scmp.eq.s32.totalorder %s29, 3
    %p106 = por %p104, %p105
    %p108 = scmp.ne.s32.totalorder %s93, %s107
    %p109 = scmp.eq.s32.totalorder %s29, 0
    %p110 = por %p108, %p109
    %s112 = sadd.s32 %s111, 1
    %p115 = scmp.eq.s32.totalorder %s23, 3
    %p116 = scmp.ne.s32.totalorder %s111, %s113
    %p117 = scmp.eq.s32.totalorder %s23, 0
    %p118 = por %p116, %p117
    %p119 = scmp.ne.s32.totalorder %s111, %s113
    %p120 = scmp.eq.s32.totalorder %s28, 3
    %p121 = por %p119, %p120
    %p122 = scmp.ne.s32.totalorder %s113, %s114
    %p123 = scmp.eq.s32.totalorder %s28, 0
    %p124 = por %p122, %p123
    %p125 = scmp.ne.s32.totalorder %s113, %s114
    %p126 = scmp.eq.s32.totalorder %s29, 3
    %p127 = por %p125, %p126
    %p129 = scmp.ne.s32.totalorder %s114, %s128
    %p130 = scmp.eq.s32.totalorder %s29, 0
    %p131 = por %p129, %p130
    %s133 = sadd.s32 %s132, 1
    %p136 = scmp.eq.s32.totalorder %s23, 3
    %p137 = scmp.ne.s32.totalorder %s132, %s134
    %p138 = scmp.eq.s32.totalorder %s23, 0
    %p139 = por %p137, %p138
    %p140 = scmp.ne.s32.totalorder %s132, %s134
    %p141 = scmp.eq.s32.totalorder %s28, 3
    %p142 = por %p140, %p141
    %p143 = scmp.ne.s32.totalorder %s134, %s135
    %p144 = scmp.eq.s32.totalorder %s28, 0
    %p145 = por %p143, %p144
    %p146 = scmp.ne.s32.totalorder %s134, %s135
    %p147 = scmp.eq.s32.totalorder %s29, 3
    %p148 = por %p146, %p147
    %p150 = scmp.ne.s32.totalorder %s135, %s149
    %p151 = scmp.eq.s32.totalorder %s29, 0
    %p152 = por %p150, %p151
    %s153 = ssub.s32 %s31, %s38
    %p154 = scmp.eq.s32.totalorder %s153, 0
    %s156 = sadd.s32 %s155, 1
    %s157 = scalar_select %p154, %s155, %s156
    %p160 = pneg %p154
    %p161 = scmp.eq.s32.totalorder %s23, 3
    %p162 = por %p160, %p161
    %p163 = scmp.ne.s32.totalorder %s155, %s158
    %p164 = scmp.eq.s32.totalorder %s23, 0
    %p165 = por %p163, %p164
    %p166 = scmp.ne.s32.totalorder %s155, %s158
    %p167 = scmp.eq.s32.totalorder %s28, 3
    %p168 = por %p166, %p167
    %p169 = scmp.ne.s32.totalorder %s158, %s159
    %p170 = scmp.eq.s32.totalorder %s28, 0
    %p171 = por %p169, %p170
    %p172 = scmp.ne.s32.totalorder %s158, %s159
    %p173 = scmp.eq.s32.totalorder %s29, 3
    %p174 = por %p172, %p173
    %p176 = scmp.ne.s32.totalorder %s159, %s175
    %p177 = scmp.eq.s32.totalorder %s29, 0
    %p178 = por %p176, %p177
    %s179 = ssub.s32 %s31, %s38
    %p180 = scmp.eq.s32.totalorder %s179, 0
    %s182 = sadd.s32 %s181, 1
    %s183 = scalar_select %p180, %s181, %s182
    %p186 = pneg %p180
    %p187 = scmp.eq.s32.totalorder %s23, 3
    %p188 = por %p186, %p187
    %p189 = scmp.ne.s32.totalorder %s181, %s184
    %p190 = scmp.eq.s32.totalorder %s23, 0
    %p191 = por %p189, %p190
    %p192 = scmp.ne.s32.totalorder %s181, %s184
    %p193 = scmp.eq.s32.totalorder %s28, 3
    %p194 = por %p192, %p193
    %p195 = scmp.ne.s32.totalorder %s184, %s185
    %p196 = scmp.eq.s32.totalorder %s28, 0
    %p197 = por %p195, %p196
    %p198 = scmp.ne.s32.totalorder %s184, %s185
    %p199 = scmp.eq.s32.totalorder %s29, 3
    %p200 = por %p198, %p199
    %p202 = scmp.ne.s32.totalorder %s185, %s201
    %p203 = scmp.eq.s32.totalorder %s29, 0
    %p204 = por %p202, %p203
    %s205 = ssub.s32 %s31, %s38
    %p206 = scmp.eq.s32.totalorder %s205, 0
    %s208 = sadd.s32 %s207, 1
    %s209 = scalar_select %p206, %s207, %s208
    %p212 = pneg %p206
    %p213 = scmp.eq.s32.totalorder %s23, 3
    %p214 = por %p212, %p213
    %p215 = scmp.ne.s32.totalorder %s207, %s210
    %p216 = scmp.eq.s32.totalorder %s23, 0
    %p217 = por %p215, %p216
    %p218 = scmp.ne.s32.totalorder %s207, %s210
    %p219 = scmp.eq.s32.totalorder %s28, 3
    %p220 = por %p218, %p219
    %p221 = scmp.ne.s32.totalorder %s210, %s211
    %p222 = scmp.eq.s32.totalorder %s28, 0
    %p223 = por %p221, %p222
    %p224 = scmp.ne.s32.totalorder %s210, %s211
    %p225 = scmp.eq.s32.totalorder %s29, 3
    %p226 = por %p224, %p225
    %p228 = scmp.ne.s32.totalorder %s211, %s227
    %p229 = scmp.eq.s32.totalorder %s29, 0
    %p230 = por %p228, %p229
    %s231 = ssub.s32 %s31, %s38
    %p232 = scmp.eq.s32.totalorder %s231, 0
    %s234 = sadd.s32 %s233, 1
    %s235 = scalar_select %p232, %s233, %s234
    %p238 = pneg %p232
    %p239 = scmp.eq.s32.totalorder %s23, 3
    %p240 = por %p238, %p239
    %p241 = scmp.ne.s32.totalorder %s233, %s236
    %p242 = scmp.eq.s32.totalorder %s23, 0
    %p243 = por %p241, %p242
    %p244 = scmp.ne.s32.totalorder %s233, %s236
    %p245 = scmp.eq.s32.totalorder %s28, 3
    %p246 = por %p244, %p245
    %p247 = scmp.ne.s32.totalorder %s236, %s237
    %p248 = scmp.eq.s32.totalorder %s28, 0
    %p249 = por %p247, %p248
    %p250 = scmp.ne.s32.totalorder %s236, %s237
    %p251 = scmp.eq.s32.totalorder %s29, 3
    %p252 = por %p250, %p251
    %p254 = scmp.ne.s32.totalorder %s237, %s253
    %p255 = scmp.eq.s32.totalorder %s29, 0
    %p256 = por %p254, %p255
    %s257 = ssub.s32 %s31, %s38
    %p258 = scmp.eq.s32.totalorder %s257, 0
    %s260 = sadd.s32 %s259, 1
    %s261 = scalar_select %p258, %s259, %s260
    %p264 = pneg %p258
    %p265 = scmp.eq.s32.totalorder %s23, 3
    %p266 = por %p264, %p265
    %p267 = scmp.ne.s32.totalorder %s259, %s262
    %p268 = scmp.eq.s32.totalorder %s23, 0
    %p269 = por %p267, %p268
    %p270 = scmp.ne.s32.totalorder %s259, %s262
    %p271 = scmp.eq.s32.totalorder %s28, 3
    %p272 = por %p270, %p271
    %p273 = scmp.ne.s32.totalorder %s262, %s263
    %p274 = scmp.eq.s32.totalorder %s28, 0
    %p275 = por %p273, %p274
    %p276 = scmp.ne.s32.totalorder %s262, %s263
    %p277 = scmp.eq.s32.totalorder %s29, 3
    %p278 = por %p276, %p277
    %p280 = scmp.ne.s32.totalorder %s263, %s279
    %p281 = scmp.eq.s32.totalorder %s29, 0
    %p282 = por %p280, %p281
    %s283 = ssub.s32 %s31, %s38
    %p284 = scmp.eq.s32.totalorder %s283, 0
    %s286 = sadd.s32 %s285, 1
    %s287 = scalar_select %p284, %s285, %s286
    %p290 = pneg %p284
    %p291 = scmp.eq.s32.totalorder %s23, 3
    %p292 = por %p290, %p291
    %p293 = scmp.ne.s32.totalorder %s285, %s288
    %p294 = scmp.eq.s32.totalorder %s23, 0
    %p295 = por %p293, %p294
    %p296 = scmp.ne.s32.totalorder %s285, %s288
    %p297 = scmp.eq.s32.totalorder %s28, 3
    %p298 = por %p296, %p297
    %p299 = scmp.ne.s32.totalorder %s288, %s289
    %p300 = scmp.eq.s32.totalorder %s28, 0
    %p301 = por %p299, %p300
    %p302 = scmp.ne.s32.totalorder %s288, %s289
    %p303 = scmp.eq.s32.totalorder %s29, 3
    %p304 = por %p302, %p303
    %p306 = scmp.ne.s32.totalorder %s289, %s305
    %p307 = scmp.eq.s32.totalorder %s29, 0
    %p308 = por %p306, %p307
    %s309 = ssub.s32 %s31, %s38
    %p310 = scmp.eq.s32.totalorder %s309, 0
    %s312 = sadd.s32 %s311, 1
    %s313 = scalar_select %p310, %s311, %s312
    %p316 = pneg %p310
    %p317 = scmp.eq.s32.totalorder %s23, 3
    %p318 = por %p316, %p317
    %p319 = scmp.ne.s32.totalorder %s311, %s314
    %p320 = scmp.eq.s32.totalorder %s23, 0
    %p321 = por %p319, %p320
    %p322 = scmp.ne.s32.totalorder %s311, %s314
    %p323 = scmp.eq.s32.totalorder %s28, 3
    %p324 = por %p322, %p323
    %p325 = scmp.ne.s32.totalorder %s314, %s315
    %p326 = scmp.eq.s32.totalorder %s28, 0
    %p327 = por %p325, %p326
    %p328 = scmp.ne.s32.totalorder %s314, %s315
    %p329 = scmp.eq.s32.totalorder %s29, 3
    %p330 = por %p328, %p329
    %p332 = scmp.ne.s32.totalorder %s315, %s331
    %p333 = scmp.eq.s32.totalorder %s29, 0
    %p334 = por %p332, %p333
    %s335 = ssub.s32 %s31, %s38
    %p336 = scmp.eq.s32.totalorder %s335, 0
    %s338 = sadd.s32 %s337, 1
    %s339 = scalar_select %p336, %s337, %s338
    %p342 = pneg %p336
    %p343 = scmp.eq.s32.totalorder %s23, 3
    %p344 = por %p342, %p343
    %p345 = scmp.ne.s32.totalorder %s337, %s340
    %p346 = scmp.eq.s32.totalorder %s23, 0
    %p347 = por %p345, %p346
    %p348 = scmp.ne.s32.totalorder %s337, %s340
    %p349 = scmp.eq.s32.totalorder %s28, 3
    %p350 = por %p348, %p349
    %p351 = scmp.ne.s32.totalorder %s340, %s341
    %p352 = scmp.eq.s32.totalorder %s28, 0
    %p353 = por %p351, %p352
    %p354 = scmp.ne.s32.totalorder %s340, %s341
    %p355 = scmp.eq.s32.totalorder %s29, 3
    %p356 = por %p354, %p355
    %p358 = scmp.ne.s32.totalorder %s341, %s357
    %p359 = scmp.eq.s32.totalorder %s29, 0
    %p360 = por %p358, %p359
    %s361 = ssub.s32 %s31, %s38
    %p362 = scmp.eq.s32.totalorder %s361, 0
    %s364 = sadd.s32 %s363, 1
    %s365 = scalar_select %p362, %s363, %s364
    %p368 = pneg %p362
    %p369 = scmp.eq.s32.totalorder %s23, 3
    %p370 = por %p368, %p369
    %p371 = scmp.ne.s32.totalorder %s363, %s366
    %p372 = scmp.eq.s32.totalorder %s23, 0
    %p373 = por %p371, %p372
    %p374 = scmp.ne.s32.totalorder %s363, %s366
    %p375 = scmp.eq.s32.totalorder %s28, 3
    %p376 = por %p374, %p375
    %p377 = scmp.ne.s32.totalorder %s366, %s367
    %p378 = scmp.eq.s32.totalorder %s28, 0
    %p379 = por %p377, %p378
    %p380 = scmp.ne.s32.totalorder %s366, %s367
    %p381 = scmp.eq.s32.totalorder %s29, 3
    %p382 = por %p380, %p381
    %p384 = scmp.ne.s32.totalorder %s367, %s383
    %p385 = scmp.eq.s32.totalorder %s29, 0
    %p386 = por %p384, %p385
    %s387 = ssub.s32 %s31, %s38
    %p388 = scmp.eq.s32.totalorder %s387, 0
    %s390 = sadd.s32 %s389, 1
    %s391 = scalar_select %p388, %s389, %s390
    %p394 = pneg %p388
    %p395 = scmp.eq.s32.totalorder %s23, 3
    %p396 = por %p394, %p395
    %p397 = scmp.ne.s32.totalorder %s389, %s392
    %p398 = scmp.eq.s32.totalorder %s23, 0
    %p399 = por %p397, %p398
    %p400 = scmp.ne.s32.totalorder %s389, %s392
    %p401 = scmp.eq.s32.totalorder %s28, 3
    %p402 = por %p400, %p401
    %p403 = scmp.ne.s32.totalorder %s392, %s393
    %p404 = scmp.eq.s32.totalorder %s28, 0
    %p405 = por %p403, %p404
    %p406 = scmp.ne.s32.totalorder %s392, %s393
    %p407 = scmp.eq.s32.totalorder %s29, 3
    %p408 = por %p406, %p407
    %p410 = scmp.ne.s32.totalorder %s393, %s409
    %p411 = scmp.eq.s32.totalorder %s29, 0
    %p412 = por %p410, %p411
    %s413 = ssub.s32 %s31, %s38
    %p414 = scmp.eq.s32.totalorder %s413, 0
    %s416 = sadd.s32 %s415, 1
    %s417 = scalar_select %p414, %s415, %s416
    %p420 = pneg %p414
    %p421 = scmp.eq.s32.totalorder %s23, 3
    %p422 = por %p420, %p421
    %p423 = scmp.ne.s32.totalorder %s415, %s418
    %p424 = scmp.eq.s32.totalorder %s23, 0
    %p425 = por %p423, %p424
    %p426 = scmp.ne.s32.totalorder %s415, %s418
    %p427 = scmp.eq.s32.totalorder %s28, 3
    %p428 = por %p426, %p427
    %p429 = scmp.ne.s32.totalorder %s418, %s419
    %p430 = scmp.eq.s32.totalorder %s28, 0
    %p431 = por %p429, %p430
    %p432 = scmp.ne.s32.totalorder %s418, %s419
    %p433 = scmp.eq.s32.totalorder %s29, 3
    %p434 = por %p432, %p433
    %p436 = scmp.ne.s32.totalorder %s419, %s435
    %p437 = scmp.eq.s32.totalorder %s29, 0
    %p438 = por %p436, %p437
    %s439 = ssub.s32 %s31, %s38
    %p440 = scmp.eq.s32.totalorder %s439, 0
    %s442 = sadd.s32 %s441, 1
    %s443 = scalar_select %p440, %s441, %s442
    %p446 = pneg %p440
    %p447 = scmp.eq.s32.totalorder %s23, 3
    %p448 = por %p446, %p447
    %p449 = scmp.ne.s32.totalorder %s441, %s444
    %p450 = scmp.eq.s32.totalorder %s23, 0
    %p451 = por %p449, %p450
    %p452 = scmp.ne.s32.totalorder %s441, %s444
    %p453 = scmp.eq.s32.totalorder %s28, 3
    %p454 = por %p452, %p453
    %p455 = scmp.ne.s32.totalorder %s444, %s445
    %p456 = scmp.eq.s32.totalorder %s28, 0
    %p457 = por %p455, %p456
    %p458 = scmp.ne.s32.totalorder %s444, %s445
    %p459 = scmp.eq.s32.totalorder %s29, 3
    %p460 = por %p458, %p459
    %p462 = scmp.ne.s32.totalorder %s445, %s461
    %p463 = scmp.eq.s32.totalorder %s29, 0
    %p464 = por %p462, %p463
    %s465 = ssub.s32 %s30, %s42
    %p466 = scmp.eq.s32.totalorder %s465, 0
    %s468 = sadd.s32 %s467, 1
    %s469 = scalar_select %p466, %s467, %s468
    %p472 = pneg %p466
    %p473 = scmp.eq.s32.totalorder %s23, 3
    %p474 = por %p472, %p473
    %p475 = scmp.ne.s32.totalorder %s467, %s470
    %p476 = scmp.eq.s32.totalorder %s23, 0
    %p477 = por %p475, %p476
    %p478 = scmp.ne.s32.totalorder %s467, %s470
    %p479 = scmp.eq.s32.totalorder %s28, 3
    %p480 = por %p478, %p479
    %p481 = scmp.ne.s32.totalorder %s470, %s471
    %p482 = scmp.eq.s32.totalorder %s28, 0
    %p483 = por %p481, %p482
    %p484 = scmp.ne.s32.totalorder %s470, %s471
    %p485 = scmp.eq.s32.totalorder %s29, 3
    %p486 = por %p484, %p485
    %p488 = scmp.ne.s32.totalorder %s471, %s487
    %p489 = scmp.eq.s32.totalorder %s29, 0
    %p490 = por %p488, %p489
    %p491 = scmp.le.s32.totalorder 1, %s23
    %p492 = scmp.lt.s32.totalorder %s23, 5
    %p493 = pnand %p491, %p492
    %p494 = pneg %p493
    // Predicated region
    $region9: #{_lambda_.8} parent=5 // pred_check
      _
    $region10: #{_lambda_.8} parent=5 // pred_check_branch
      %496 = sbr.rel (%p493) target = $region12
    $region11: #{_lambda_.8} parent=5 // pred_region
      %s497 = ssub.s32 %s23, 1
      // Predicated region
      $region13: #{_lambda_.8} parent=11 // pred_check
        %p498 = pneg %p82
      $region14: #{_lambda_.8} parent=11 // pred_check_branch
        %500 = sbr.rel (%p498) target = $region16
      $region15: #{_lambda_.8} parent=11 // pred_region
        _
      $region16: #{_lambda_.8} parent=11 // pred_fallthru
        _
      // Predicated region
      $region17: #{_lambda_.8} parent=11 // pred_check
        %p501 = pneg %p103
      $region18: #{_lambda_.8} parent=11 // pred_check_branch
        %503 = sbr.rel (%p501) target = $region20
      $region19: #{_lambda_.8} parent=11 // pred_region
        _
      $region20: #{_lambda_.8} parent=11 // pred_fallthru
        _
      // Predicated region
      $region21: #{_lambda_.8} parent=11 // pred_check
        %p504 = pneg %p124
      $region22: #{_lambda_.8} parent=11 // pred_check_branch
        %506 = sbr.rel (%p504) target = $region24
      $region23: #{_lambda_.8} parent=11 // pred_region
        _
      $region24: #{_lambda_.8} parent=11 // pred_fallthru
        _
      // Predicated region
      $region25: #{_lambda_.8} parent=11 // pred_check
        %p507 = pneg %p145
      $region26: #{_lambda_.8} parent=11 // pred_check_branch
        %509 = sbr.rel (%p507) target = $region28
      $region27: #{_lambda_.8} parent=11 // pred_region
        _
      $region28: #{_lambda_.8} parent=11 // pred_fallthru
        _
    $region12: #{_lambda_.8} parent=5 // pred_fallthru
      _
    %p510 = scmp.lt.s32.totalorder %s23, 4
    // Predicated region
    $region29: #{_lambda_.8} parent=5 // pred_check
      %p511 = pneg %p510
    $region30: #{_lambda_.8} parent=5 // pred_check_branch
      %513 = sbr.rel (%p511) target = $region32
    $region31: #{_lambda_.8} parent=5 // pred_region
      // Predicated region
      $region33: #{_lambda_.8} parent=31 // pred_check
        %p514 = pneg %p55
      $region34: #{_lambda_.8} parent=31 // pred_check_branch
        %516 = sbr.rel (%p514) target = $region36
      $region35: #{_lambda_.8} parent=31 // pred_region
        %s517 = smul.u32 2, %s30
        %p518 = scmp.lt.s32.totalorder %s517, 3
        %s519 = scalar_select %p518, %s517, 3
        %s520 = smul.addr %s519, 8
        %s521 = scalar_lea.vmem %s0, %s520
        %s522 = smul.u32 2, %s30
      $region36: #{_lambda_.8} parent=31 // pred_fallthru
        _
      // Predicated region
      $region37: #{_lambda_.8} parent=31 // pred_check
        %p523 = pneg %p165
      $region38: #{_lambda_.8} parent=31 // pred_check_branch
        %525 = sbr.rel (%p523) target = $region40
      $region39: #{_lambda_.8} parent=31 // pred_region
        %p526 = scmp.lt.s32.totalorder %s31, 1
        %s527 = scalar_select %p526, %s31, 1
        %s528 = scalar_lea.vmem %s5, %s527
      $region40: #{_lambda_.8} parent=31 // pred_fallthru
        _
      // Predicated region
      $region41: #{_lambda_.8} parent=31 // pred_check
        %p529 = pneg %p191
      $region42: #{_lambda_.8} parent=31 // pred_check_branch
        %531 = sbr.rel (%p529) target = $region44
      $region43: #{_lambda_.8} parent=31 // pred_region
        %p532 = scmp.lt.s32.totalorder %s31, 1
        %s533 = scalar_select %p532, %s31, 1
        %s534 = scalar_lea.vmem %s6, %s533
      $region44: #{_lambda_.8} parent=31 // pred_fallthru
        _
      // Predicated region
      $region45: #{_lambda_.8} parent=31 // pred_check
        %p535 = pneg %p217
      $region46: #{_lambda_.8} parent=31 // pred_check_branch
        %537 = sbr.rel (%p535) target = $region48
      $region47: #{_lambda_.8} parent=31 // pred_region
        %p538 = scmp.lt.s32.totalorder %s31, 1
        %s539 = scalar_select %p538, %s31, 1
        %s540 = smul.addr %s539, 48
        %s541 = smul.addr %s540, 4
        %s542 = scalar_lea.vmem %s7, %s541
      $region48: #{_lambda_.8} parent=31 // pred_fallthru
        _
      // Predicated region
      $region49: #{_lambda_.8} parent=31 // pred_check
        %p543 = pneg %p243
      $region50: #{_lambda_.8} parent=31 // pred_check_branch
        %545 = sbr.rel (%p543) target = $region52
      $region51: #{_lambda_.8} parent=31 // pred_region
        %p546 = scmp.lt.s32.totalorder %s31, 1
        %s547 = scalar_select %p546, %s31, 1
        %s548 = smul.addr %s547, 3
        %s549 = scalar_lea.vmem %s8, %s548
      $region52: #{_lambda_.8} parent=31 // pred_fallthru
        _
      // Predicated region
      $region53: #{_lambda_.8} parent=31 // pred_check
        %p550 = pneg %p269
      $region54: #{_lambda_.8} parent=31 // pred_check_branch
        %552 = sbr.rel (%p550) target = $region56
      $region55: #{_lambda_.8} parent=31 // pred_region
        %p553 = scmp.lt.s32.totalorder %s31, 1
        %s554 = scalar_select %p553, %s31, 1
        %s555 = smul.addr %s554, 16
        %s556 = smul.addr %s555, 4
        %s557 = scalar_lea.vmem %s9, %s556
      $region56: #{_lambda_.8} parent=31 // pred_fallthru
        _
      // Predicated region
      $region57: #{_lambda_.8} parent=31 // pred_check
        %p558 = pneg %p295
      $region58: #{_lambda_.8} parent=31 // pred_check_branch
        %560 = sbr.rel (%p558) target = $region60
      $region59: #{_lambda_.8} parent=31 // pred_region
        %p561 = scmp.lt.s32.totalorder %s31, 1
        %s562 = scalar_select %p561, %s31, 1
        %s563 = scalar_lea.vmem %s10, %s562
      $region60: #{_lambda_.8} parent=31 // pred_fallthru
        _
      // Predicated region
      $region61: #{_lambda_.8} parent=31 // pred_check
        %p564 = pneg %p321
      $region62: #{_lambda_.8} parent=31 // pred_check_branch
        %566 = sbr.rel (%p564) target = $region64
      $region63: #{_lambda_.8} parent=31 // pred_region
        %p567 = scmp.lt.s32.totalorder %s31, 1
        %s568 = scalar_select %p567, %s31, 1
        %s569 = scalar_lea.vmem %s11, %s568
      $region64: #{_lambda_.8} parent=31 // pred_fallthru
        _
      // Predicated region
      $region65: #{_lambda_.8} parent=31 // pred_check
        %p570 = pneg %p347
      $region66: #{_lambda_.8} parent=31 // pred_check_branch
        %572 = sbr.rel (%p570) target = $region68
      $region67: #{_lambda_.8} parent=31 // pred_region
        %p573 = scmp.lt.s32.totalorder %s31, 1
        %s574 = scalar_select %p573, %s31, 1
        %s575 = scalar_lea.vmem %s12, %s574
      $region68: #{_lambda_.8} parent=31 // pred_fallthru
        _
      // Predicated region
      $region69: #{_lambda_.8} parent=31 // pred_check
        %p576 = pneg %p373
      $region70: #{_lambda_.8} parent=31 // pred_check_branch
        %578 = sbr.rel (%p576) target = $region72
      $region71: #{_lambda_.8} parent=31 // pred_region
        %p579 = scmp.lt.s32.totalorder %s31, 1
        %s580 = scalar_select %p579, %s31, 1
        %s581 = smul.addr %s580, 64
        %s582 = smul.addr %s581, 4
        %s583 = scalar_lea.vmem %s13, %s582
      $region72: #{_lambda_.8} parent=31 // pred_fallthru
        _
      // Predicated region
      $region73: #{_lambda_.8} parent=31 // pred_check
        %p584 = pneg %p399
      $region74: #{_lambda_.8} parent=31 // pred_check_branch
        %586 = sbr.rel (%p584) target = $region76
      $region75: #{_lambda_.8} parent=31 // pred_region
        %p587 = scmp.lt.s32.totalorder %s31, 1
        %s588 = scalar_select %p587, %s31, 1
        %s589 = smul.addr %s588, 4
        %s590 = scalar_lea.vmem %s14, %s589
      $region76: #{_lambda_.8} parent=31 // pred_fallthru
        _
      // Predicated region
      $region77: #{_lambda_.8} parent=31 // pred_check
        %p591 = pneg %p425
      $region78: #{_lambda_.8} parent=31 // pred_check_branch
        %593 = sbr.rel (%p591) target = $region80
      $region79: #{_lambda_.8} parent=31 // pred_region
        %p594 = scmp.lt.s32.totalorder %s31, 1
        %s595 = scalar_select %p594, %s31, 1
        %s596 = smul.addr %s595, 64
        %s597 = smul.addr %s596, 4
        %s598 = scalar_lea.vmem %s15, %s597
      $region80: #{_lambda_.8} parent=31 // pred_fallthru
        _
      // Predicated region
      $region81: #{_lambda_.8} parent=31 // pred_check
        %p599 = pneg %p451
      $region82: #{_lambda_.8} parent=31 // pred_check_branch
        %601 = sbr.rel (%p599) target = $region84
      $region83: #{_lambda_.8} parent=31 // pred_region
        %p602 = scmp.lt.s32.totalorder %s31, 1
        %s603 = scalar_select %p602, %s31, 1
        %s604 = scalar_lea.vmem %s16, %s603
      $region84: #{_lambda_.8} parent=31 // pred_fallthru
        _
    $region32: #{_lambda_.8} parent=5 // pred_fallthru
      _
    %p605 = scmp.le.s32.totalorder 1, %s23
    %p606 = scmp.lt.s32.totalorder %s23, 5
    %p607 = pnand %p605, %p606
    %p608 = pneg %p607
    // Predicated region
    $region85: #{_lambda_.8} parent=5 // pred_check
      _
    $region86: #{_lambda_.8} parent=5 // pred_check_branch
      %610 = sbr.rel (%p607) target = $region88
    $region87: #{_lambda_.8} parent=5 // pred_region
      %s611 = ssub.s32 %s23, 1
      %s612 = smul.u32 2, %s32
      %p613 = scmp.lt.s32.totalorder %s612, 3
      %s614 = scalar_select %p613, %s612, 3
      %s615 = smul.addr %s614, 8
      %s616 = scalar_lea.vmem %s0, %s615
      %p617 = pneg %p61
      %p618 = pneg %p58
      %p619 = pneg %p82
      %p620 = pneg %p79
      %p621 = pneg %p103
      %p622 = pneg %p100
      %p623 = pneg %p124
      %p624 = pneg %p121
      %p625 = pneg %p145
      %p626 = pneg %p142
      %p627 = scmp.lt.s32.totalorder %s33, 1
      %s628 = scalar_select %p627, %s33, 1
      %s629 = scalar_lea.vmem %s5, %s628
      %p630 = pneg %p171
      %p631 = pneg %p168
      %p632 = scmp.lt.s32.totalorder %s33, 1
      %s633 = scalar_select %p632, %s33, 1
      %s634 = scalar_lea.vmem %s6, %s633
      %p635 = pneg %p197
      %p636 = pneg %p194
      %p637 = scmp.lt.s32.totalorder %s33, 1
      %s638 = scalar_select %p637, %s33, 1
      %s639 = smul.addr %s638, 48
      %s640 = smul.addr %s639, 4
      %s641 = scalar_lea.vmem %s7, %s640
      %p642 = pneg %p223
      %p643 = pneg %p220
      %p644 = scmp.lt.s32.totalorder %s33, 1
      %s645 = scalar_select %p644, %s33, 1
      %s646 = smul.addr %s645, 3
      %s647 = scalar_lea.vmem %s8, %s646
      %p648 = pneg %p249
      %p649 = pneg %p246
      %p650 = scmp.lt.s32.totalorder %s33, 1
      %s651 = scalar_select %p650, %s33, 1
      %s652 = smul.addr %s651, 16
      %s653 = smul.addr %s652, 4
      %s654 = scalar_lea.vmem %s9, %s653
      %p655 = pneg %p275
      %p656 = pneg %p272
      %p657 = scmp.lt.s32.totalorder %s33, 1
      %s658 = scalar_select %p657, %s33, 1
      %s659 = scalar_lea.vmem %s10, %s658
      %p660 = pneg %p301
      %p661 = pneg %p298
      %p662 = scmp.lt.s32.totalorder %s33, 1
      %s663 = scalar_select %p662, %s33, 1
      %s664 = scalar_lea.vmem %s11, %s663
      %p665 = pneg %p327
      %p666 = pneg %p324
      %p667 = scmp.lt.s32.totalorder %s33, 1
      %s668 = scalar_select %p667, %s33, 1
      %s669 = scalar_lea.vmem %s12, %s668
      %p670 = pneg %p353
      %p671 = pneg %p350
      %p672 = scmp.lt.s32.totalorder %s33, 1
      %s673 = scalar_select %p672, %s33, 1
      %s674 = smul.addr %s673, 64
      %s675 = smul.addr %s674, 4
      %s676 = scalar_lea.vmem %s13, %s675
      %p677 = pneg %p379
      %p678 = pneg %p376
      %p679 = scmp.lt.s32.totalorder %s33, 1
      %s680 = scalar_select %p679, %s33, 1
      %s681 = smul.addr %s680, 4
      %s682 = scalar_lea.vmem %s14, %s681
      %p683 = pneg %p405
      %p684 = pneg %p402
      %p685 = scmp.lt.s32.totalorder %s33, 1
      %s686 = scalar_select %p685, %s33, 1
      %s687 = smul.addr %s686, 64
      %s688 = smul.addr %s687, 4
      %s689 = scalar_lea.vmem %s15, %s688
      %p690 = pneg %p431
      %p691 = pneg %p428
      %p692 = scmp.lt.s32.totalorder %s33, 1
      %s693 = scalar_select %p692, %s33, 1
      %s694 = scalar_lea.vmem %s16, %s693
      %p695 = pneg %p457
      %p696 = pneg %p454
      %p697 = pneg %p483
      %p698 = pneg %p480
      %s699 = smul.u32 2, %s32
      %p700 = scmp.lt.s32.totalorder %s699, 3
      %s701 = scalar_select %p700, %s699, 3
      %s702 = smul.addr %s701, 8
      %s703 = scalar_lea.vmem %s17, %s702
      %s704 = smul.u32 2, %s32
      %p705 = scmp.lt.s32.totalorder %s704, 3
      %s706 = scalar_select %p705, %s704, 3
      %s707 = smul.addr %s706, 8
      %s708 = scalar_lea.vmem %s0, %s707
      %s709 = smul.u32 2, %s32
      %p710 = scmp.lt.s32.totalorder %s33, 1
      %s711 = scalar_select %p710, %s33, 1
      %s712 = scalar_lea.vmem %s5, %s711
      %p713 = scmp.lt.s32.totalorder %s33, 1
      %s714 = scalar_select %p713, %s33, 1
      %s715 = scalar_lea.vmem %s6, %s714
      %p716 = scmp.lt.s32.totalorder %s33, 1
      %s717 = scalar_select %p716, %s33, 1
      %s718 = smul.addr %s717, 48
      %s719 = smul.addr %s718, 4
      %s720 = scalar_lea.vmem %s7, %s719
      %p721 = scmp.lt.s32.totalorder %s33, 1
      %s722 = scalar_select %p721, %s33, 1
      %s723 = smul.addr %s722, 3
      %s724 = scalar_lea.vmem %s8, %s723
      %p725 = scmp.lt.s32.totalorder %s33, 1
      %s726 = scalar_select %p725, %s33, 1
      %s727 = smul.addr %s726, 16
      %s728 = smul.addr %s727, 4
      %s729 = scalar_lea.vmem %s9, %s728
      %p730 = scmp.lt.s32.totalorder %s33, 1
      %s731 = scalar_select %p730, %s33, 1
      %s732 = scalar_lea.vmem %s10, %s731
      %p733 = scmp.lt.s32.totalorder %s33, 1
      %s734 = scalar_select %p733, %s33, 1
      %s735 = scalar_lea.vmem %s11, %s734
      %p736 = scmp.lt.s32.totalorder %s33, 1
      %s737 = scalar_select %p736, %s33, 1
      %s738 = scalar_lea.vmem %s12, %s737
      %p739 = scmp.lt.s32.totalorder %s33, 1
      %s740 = scalar_select %p739, %s33, 1
      %s741 = smul.addr %s740, 64
      %s742 = smul.addr %s741, 4
      %s743 = scalar_lea.vmem %s13, %s742
      %p744 = scmp.lt.s32.totalorder %s33, 1
      %s745 = scalar_select %p744, %s33, 1
      %s746 = smul.addr %s745, 4
      %s747 = scalar_lea.vmem %s14, %s746
      %p748 = scmp.lt.s32.totalorder %s33, 1
      %s749 = scalar_select %p748, %s33, 1
      %s750 = smul.addr %s749, 64
      %s751 = smul.addr %s750, 4
      %s752 = scalar_lea.vmem %s15, %s751
      %p753 = scmp.lt.s32.totalorder %s33, 1
      %s754 = scalar_select %p753, %s33, 1
      %s755 = scalar_lea.vmem %s16, %s754
      %s756 = smul.u32 2, %s32
      %p757 = scmp.lt.s32.totalorder %s756, 3
      %s758 = scalar_select %p757, %s756, 3
      %s759 = smul.addr %s758, 8
      %s760 = scalar_lea.vmem %s17, %s759
      %s761 = smul.u32 2, %s32
      %p763 = scmp.eq.s32.totalorder %s33, 0
      // Predicated region
      $region89: #{_lambda_.8} parent=87 // pred_check
        %p764 = pneg %p763
      $region90: #{_lambda_.8} parent=87 // pred_check_branch
        %766 = sbr.rel (%p764) target = $region92
      $region91: #{_lambda_.8} parent=87 // pred_region
        %v767 = vld [vmem:[%s708] sm:$0xff]
        %v768 = vld [vmem:[%s708 + $0x8] sm:$0xff]
        %v769 = vld [vmem:[%s1] sm:$0xff]
        %v770 = vadd.f32 %v767, %v769
        %v771 = vadd.f32 %v768, %v769
        %772 = vst [vmem:[#allocation2] sm:$0xff] %v770
        %773 = vst [vmem:[#allocation2 + $0x8] sm:$0xff] %v771
      $region92: #{_lambda_.8} parent=87 // pred_fallthru
        _
      %v774 = vld [vmem:[#allocation2] sm:$0xff]
      %v775 = vld [vmem:[#allocation2 + $0x8] sm:$0xff]
      %v776 = vld [vmem:[%s712] sm:$0x1]
      %v777 = vld [vmem:[%s715] sm:$0x1]
      %778 = vadd.xlane.f32.xlu0 %v774
      %v779 = vpop.xlane.xlu0 %778
      %780 = vadd.xlane.f32.xlu0 %v775
      %v781 = vpop.xlane.xlu0 %780
      %v782 = vrcp.pop 128.0
      %v783 = vmul.f32 %v779, %v782
      %v784 = vmul.f32 %v781, %v782
      %v785 = vsub.f32 %v774, %v783
      %v786 = vsub.f32 %v775, %v784
      %v787 = vmul.f32 %v785, %v785
      %v788 = vmul.f32 %v786, %v786
      %789 = vadd.xlane.f32.xlu0 %v787
      %v790 = vpop.xlane.xlu0 %789
      %791 = vadd.xlane.f32.xlu0 %v788
      %v792 = vpop.xlane.xlu0 %791
      %v793 = vmul.f32 %v790, %v782
      %v794 = vmul.f32 %v792, %v782
      %v795 = vadd.f32 %v793, 1e-05
      %v796 = vadd.f32 %v794, 1e-05
      %v797 = vrsqrt.pop %v795
      %v798 = vrsqrt.pop %v796
      %v799 = vmul.f32 %v785, %v797
      %v800 = vmul.f32 %v786, %v798
      %v802 = vlaneseq
      %v803 = vshrl.u32 %v802, 7
      %v804 = vsub.s32 0, %v803
      %v805 = vrot.slane %v776, %v804
      %v807 = vmul.f32 %v799, %v805
      %v808 = vmul.f32 %v800, %v805
      %v810 = vlaneseq
      %v811 = vshrl.u32 %v810, 7
      %v812 = vsub.s32 0, %v811
      %v813 = vrot.slane %v777, %v812
      %v815 = vadd.f32 %v807, %v813
      %v816 = vadd.f32 %v808, %v813
      %v817 = vpack.c.bf16 %v816, %v815
      %v818 = vld [vmem:[%s720] sm:$0xff]
      %v819 = vld [vmem:[%s720 + $0x8] sm:$0xf]
      %v820 = vld [vmem:[%s720 + $0xc] sm:$0xff]
      %v821 = vld [vmem:[%s720 + $0x14] sm:$0xf]
      %v822 = vld [vmem:[%s720 + $0x18] sm:$0xff]
      %v823 = vld [vmem:[%s720 + $0x20] sm:$0xf]
      %v824 = vld [vmem:[%s720 + $0x24] sm:$0xff]
      %v825 = vld [vmem:[%s720 + $0x2c] sm:$0xf]
      %v826 = vld [vmem:[%s720 + $0x30] sm:$0xff]
      %v827 = vld [vmem:[%s720 + $0x38] sm:$0xf]
      %v828 = vld [vmem:[%s720 + $0x3c] sm:$0xff]
      %v829 = vld [vmem:[%s720 + $0x44] sm:$0xf]
      %v830 = vld [vmem:[%s720 + $0x48] sm:$0xff]
      %v831 = vld [vmem:[%s720 + $0x50] sm:$0xf]
      %v832 = vld [vmem:[%s720 + $0x54] sm:$0xff]
      %v833 = vld [vmem:[%s720 + $0x5c] sm:$0xf]
      %v834 = vld [vmem:[%s720 + $0x60] sm:$0xff]
      %v835 = vld [vmem:[%s720 + $0x68] sm:$0xf]
      %v836 = vld [vmem:[%s720 + $0x6c] sm:$0xff]
      %v837 = vld [vmem:[%s720 + $0x74] sm:$0xf]
      %v838 = vld [vmem:[%s720 + $0x78] sm:$0xff]
      %v839 = vld [vmem:[%s720 + $0x80] sm:$0xf]
      %v840 = vld [vmem:[%s720 + $0x84] sm:$0xff]
      %v841 = vld [vmem:[%s720 + $0x8c] sm:$0xf]
      %v842 = vld [vmem:[%s720 + $0x90] sm:$0xff]
      %v843 = vld [vmem:[%s720 + $0x98] sm:$0xf]
      %v844 = vld [vmem:[%s720 + $0x9c] sm:$0xff]
      %v845 = vld [vmem:[%s720 + $0xa4] sm:$0xf]
      %v846 = vld [vmem:[%s720 + $0xa8] sm:$0xff]
      %v847 = vld [vmem:[%s720 + $0xb0] sm:$0xf]
      %v848 = vld [vmem:[%s720 + $0xb4] sm:$0xff]
      %v849 = vld [vmem:[%s720 + $0xbc] sm:$0xf]
      %v850 = vld [vmem:[%s724] sm:$0x7]
      %v852 = vlaneseq
      %v853 = vshrl.u32 %v852, 7
      %v854 = vsub.s32 0, %v853
      %v855 = vrot.slane %v850, %v854
      %v856 = vlaneseq
      %v857 = vshrl.u32 %v856, 7
      %v858 = vsub.s32 1, %v857
      %v859 = vrot.slane %v850, %v858
      %v860 = vlaneseq
      %v861 = vshrl.u32 %v860, 7
      %v862 = vsub.s32 2, %v861
      %v863 = vrot.slane %v850, %v862
      %v899 = vunpack.c.l.b16 %v818
      %v900 = vunpack.c.h.b16 %v818
      %v901 = vunpack.c.l.b16 %v819
      %v902 = vunpack.c.l.b16 %v820
      %v903 = vunpack.c.h.b16 %v820
      %v904 = vunpack.c.l.b16 %v821
      %v905 = vunpack.c.l.b16 %v822
      %v906 = vunpack.c.h.b16 %v822
      %v907 = vunpack.c.l.b16 %v823
      %v908 = vunpack.c.l.b16 %v824
      %v909 = vunpack.c.h.b16 %v824
      %v910 = vunpack.c.l.b16 %v825
      %v911 = vunpack.c.l.b16 %v826
      %v912 = vunpack.c.h.b16 %v826
      %v913 = vunpack.c.l.b16 %v827
      %v914 = vunpack.c.l.b16 %v828
      %v915 = vunpack.c.h.b16 %v828
      %v916 = vunpack.c.l.b16 %v829
      %v917 = vunpack.c.l.b16 %v830
      %v918 = vunpack.c.h.b16 %v830
      %v919 = vunpack.c.l.b16 %v831
      %v920 = vunpack.c.l.b16 %v832
      %v921 = vunpack.c.h.b16 %v832
      %v922 = vunpack.c.l.b16 %v833
      %v923 = vunpack.c.l.b16 %v834
      %v924 = vunpack.c.h.b16 %v834
      %v925 = vunpack.c.l.b16 %v835
      %v926 = vunpack.c.l.b16 %v836
      %v927 = vunpack.c.h.b16 %v836
      %v928 = vunpack.c.l.b16 %v837
      %v929 = vunpack.c.l.b16 %v838
      %v930 = vunpack.c.h.b16 %v838
      %v931 = vunpack.c.l.b16 %v839
      %v932 = vunpack.c.l.b16 %v840
      %v933 = vunpack.c.h.b16 %v840
      %v934 = vunpack.c.l.b16 %v841
      %v935 = vunpack.c.l.b16 %v842
      %v936 = vunpack.c.h.b16 %v842
      %v937 = vunpack.c.l.b16 %v843
      %v938 = vunpack.c.l.b16 %v844
      %v939 = vunpack.c.h.b16 %v844
      %v940 = vunpack.c.l.b16 %v845
      %v941 = vunpack.c.l.b16 %v846
      %v942 = vunpack.c.h.b16 %v846
      %v943 = vunpack.c.l.b16 %v847
      %v944 = vunpack.c.l.b16 %v848
      %v945 = vunpack.c.h.b16 %v848
      %v946 = vunpack.c.l.b16 %v849
      %v947 = vpack.c.b16 %v902, %v899
      %v948 = vpack.c.b16 %v903, %v900
      %v949 = vpack.c.b16 %v904, %v901
      %v950 = vpack.c.b16 %v908, %v905
      %v951 = vpack.c.b16 %v909, %v906
      %v952 = vpack.c.b16 %v910, %v907
      %v953 = vpack.c.b16 %v914, %v911
      %v954 = vpack.c.b16 %v915, %v912
      %v955 = vpack.c.b16 %v916, %v913
      %v956 = vpack.c.b16 %v920, %v917
      %v957 = vpack.c.b16 %v921, %v918
      %v958 = vpack.c.b16 %v922, %v919
      %v959 = vpack.c.b16 %v926, %v923
      %v960 = vpack.c.b16 %v927, %v924
      %v961 = vpack.c.b16 %v928, %v925
      %v962 = vpack.c.b16 %v932, %v929
      %v963 = vpack.c.b16 %v933, %v930
      %v964 = vpack.c.b16 %v934, %v931
      %v965 = vpack.c.b16 %v938, %v935
      %v966 = vpack.c.b16 %v939, %v936
      %v967 = vpack.c.b16 %v940, %v937
      %v968 = vpack.c.b16 %v944, %v941
      %v969 = vpack.c.b16 %v945, %v942
      %v970 = vpack.c.b16 %v946, %v943
      %995 = vmatprep.subr.bf16.mxu0 %v969
      %996 = vmatpush1.bf16.msra.mxu0 %v968
      %997 = vmatprep.subr.bf16.mxu0 %v966
      %998 = vmatpush1.bf16.msra.mxu0 %v965
      %999 = vmatprep.subr.bf16.mxu0 %v963
      %1000 = vmatpush1.bf16.msra.mxu0 %v962
      %1001 = vmatprep.subr.bf16.mxu0 %v960
      %1002 = vmatpush1.bf16.msra.mxu0 %v959
      %1003 = vmatprep.subr.bf16.mxu0 %v957
      %1004 = vmatpush1.bf16.msra.mxu0 %v956
      %1005 = vmatprep.subr.bf16.mxu0 %v954
      %1006 = vmatpush1.bf16.msra.mxu0 %v953
      %1007 = vmatprep.subr.bf16.mxu0 %v951
      %1008 = vmatpush1.bf16.msra.mxu0 %v950
      %1009 = vmatprep.subr.bf16.mxu0 %v948
      %1010 = vmatpush1.bf16.msra.mxu0 %v947
      %1011 = vmatprep.subr.bf16.mxu0 0
      %1012 = vmatpush2.bf16.msra.mxu0 0
      %1013 = vmatprep.subr.bf16.mxu0 0
      %1014 = vmatpush2.bf16.msra.mxu0 0
      %1015 = vmatprep.subr.bf16.mxu0 0
      %1016 = vmatpush2.bf16.msra.mxu0 0
      %1017 = vmatprep.subr.bf16.mxu0 0
      %1018 = vmatpush2.bf16.msra.mxu0 0
      %1019 = vmatprep.subr.bf16.mxu0 0
      %1020 = vmatpush2.bf16.msra.mxu0 0
      %1021 = vmatprep.subr.bf16.mxu0 0
      %1022 = vmatpush2.bf16.msra.mxu0 0
      %1023 = vmatprep.subr.bf16.mxu0 0
      %1024 = vmatpush2.bf16.msra.mxu0 0
      %1025 = vmatprep.subr.bf16.mxu0 0
      %1026 = vmatpush2.bf16.msra.mxu0 0
      %1027 = vmatprep.mubr.bf16.mxu0 0
      %1028 = vmatmul.mubr.bf16.gmra.mxu0 %v817
      %v1029 = vpop.f32.mrf.mxu0
      %v1030 = vadd.f32 %v855, %v1029
      %v1031 = vpop.f32.mrf.mxu0
      %v1032 = vadd.f32 %v859, %v1031
      %v1033 = vpop.f32.mrf.mxu0
      %v1034 = vadd.f32 %v855, %v1033
      %v1035 = vpop.f32.mrf.mxu0
      %v1036 = vadd.f32 %v859, %v1035
      %1037 = vdwg.mxu0
      %1038 = vmatprep.subr.bf16.mxu0 0
      %1039 = vmatpush1.bf16.msra.mxu0 %v970
      %1040 = vmatprep.subr.bf16.mxu0 0
      %1041 = vmatpush1.bf16.msra.mxu0 %v967
      %1042 = vmatprep.subr.bf16.mxu0 0
      %1043 = vmatpush1.bf16.msra.mxu0 %v964
      %1044 = vmatprep.subr.bf16.mxu0 0
      %1045 = vmatpush1.bf16.msra.mxu0 %v961
      %1046 = vmatprep.subr.bf16.mxu0 0
      %1047 = vmatpush1.bf16.msra.mxu0 %v958
      %1048 = vmatprep.subr.bf16.mxu0 0
      %1049 = vmatpush1.bf16.msra.mxu0 %v955
      %1050 = vmatprep.subr.bf16.mxu0 0
      %1051 = vmatpush1.bf16.msra.mxu0 %v952
      %1052 = vmatprep.subr.bf16.mxu0 0
      %1053 = vmatpush1.bf16.msra.mxu0 %v949
      %1054 = vmatprep.subr.bf16.mxu0 0
      %1055 = vmatpush2.bf16.msra.mxu0 0
      %1056 = vmatprep.subr.bf16.mxu0 0
      %1057 = vmatpush2.bf16.msra.mxu0 0
      %1058 = vmatprep.subr.bf16.mxu0 0
      %1059 = vmatpush2.bf16.msra.mxu0 0
      %1060 = vmatprep.subr.bf16.mxu0 0
      %1061 = vmatpush2.bf16.msra.mxu0 0
      %1062 = vmatprep.subr.bf16.mxu0 0
      %1063 = vmatpush2.bf16.msra.mxu0 0
      %1064 = vmatprep.subr.bf16.mxu0 0
      %1065 = vmatpush2.bf16.msra.mxu0 0
      %1066 = vmatprep.subr.bf16.mxu0 0
      %1067 = vmatpush2.bf16.msra.mxu0 0
      %1068 = vmatprep.subr.bf16.mxu0 0
      %1069 = vmatpush2.bf16.msra.mxu0 0
      %1070 = vmatprep.mubr.bf16.mxu0 0
      %1071 = vmatmul.mubr.bf16.gmra.mxu0 %v817
      %v1072 = vpop.f32.mrf.mxu0
      %v1073 = vadd.f32 %v863, %v1072
      %v1074 = vpop.f32.mrf.mxu0
      %v1075 = vpop.f32.mrf.mxu0
      %v1076 = vadd.f32 %v863, %v1075
      %v1077 = vpop.f32.mrf.mxu0
      %1078 = vdwg.mxu0
      %v1079 = vpack.c.bf16 %v1034, %v1030
      %v1080 = vpack.c.bf16 %v1036, %v1032
      %v1081 = vpack.c.bf16 %v1076, %v1073
      %v1083 = vunpack.c.l.b16 %v1079
      %v1084 = vunpack.c.h.b16 %v1079
      %v1085 = vpack.c.b16 %v1083, %v1083
      %v1086 = vpack.c.b16 %v1084, %v1084
      %v1088 = vunpack.c.l.b16 %v1080
      %v1089 = vunpack.c.h.b16 %v1080
      %v1090 = vpack.c.b16 %v1088, %v1088
      %v1091 = vpack.c.b16 %v1089, %v1089
      %v1093 = vunpack.c.l.b16 %v1081
      %v1094 = vunpack.c.h.b16 %v1081
      %v1095 = vpack.c.b16 %v1093, %v1093
      %v1096 = vpack.c.b16 %v1094, %v1094
      %vm1097 = vcmask 523264
      %v1099 = vsel %vm1097, %v1085, 0
      %v1102 = vsel %vm1097, %v1090, 0
      %1104 = vmatprep.subr.bf16.mxu0 0
      %1105 = vmatpush1.bf16.xpose.msra.mxu0 0
      %1106 = vmatprep.subr.bf16.mxu0 0
      %1107 = vmatpush1.bf16.xpose.msra.mxu0 0
      %1108 = vmatprep.subr.bf16.mxu0 0
      %1109 = vmatpush1.bf16.xpose.msra.mxu0 0
      %1110 = vmatprep.subr.bf16.mxu0 0
      %1111 = vmatpush1.bf16.xpose.msra.mxu0 0
      %1112 = vmatprep.subr.bf16.mxu0 0
      %1113 = vmatpush1.bf16.xpose.msra.mxu0 0
      %1114 = vmatprep.subr.bf16.mxu0 0
      %1115 = vmatpush1.bf16.xpose.msra.mxu0 0
      %1116 = vmatprep.subr.bf16.mxu0 0
      %1117 = vmatpush1.bf16.xpose.msra.mxu0 0
      %1118 = vmatprep.subr.bf16.mxu0 0
      %1119 = vmatpush1.bf16.xpose.msra.mxu0 %v1102
      %1120 = vmatprep.subr.bf16.mxu0 0
      %1121 = vmatpush2.bf16.xpose.msra.mxu0 0
      %1122 = vmatprep.subr.bf16.mxu0 0
      %1123 = vmatpush2.bf16.xpose.msra.mxu0 0
      %1124 = vmatprep.subr.bf16.mxu0 0
      %1125 = vmatpush2.bf16.xpose.msra.mxu0 0
      %1126 = vmatprep.subr.bf16.mxu0 0
      %1127 = vmatpush2.bf16.xpose.msra.mxu0 0
      %1128 = vmatprep.subr.bf16.mxu0 0
      %1129 = vmatpush2.bf16.xpose.msra.mxu0 0
      %1130 = vmatprep.subr.bf16.mxu0 0
      %1131 = vmatpush2.bf16.xpose.msra.mxu0 0
      %1132 = vmatprep.subr.bf16.mxu0 0
      %1133 = vmatpush2.bf16.xpose.msra.mxu0 0
      %1134 = vmatprep.subr.bf16.mxu0 0
      %1135 = vmatpush2.bf16.xpose.msra.mxu0 0
      %1136 = vmatprep.mubr.bf16.mxu0 0
      %1137 = vmatmul.mubr.bf16.gmra.mxu0 %v1099
      %v1138 = vpop.f32.mrf.mxu0
      %v1139 = vadd.f32 0.0, %v1138
      %v1140 = vpop.f32.mrf.mxu0
      %v1141 = vpop.f32.mrf.mxu0
      %v1142 = vpop.f32.mrf.mxu0
      %1143 = vdwg.mxu0
      %v1145 = vsel %vm1097, %v1086, 0
      %v1148 = vsel %vm1097, %v1091, 0
      %1150 = vmatprep.subr.bf16.mxu0 0
      %1151 = vmatpush1.bf16.xpose.msra.mxu0 0
      %1152 = vmatprep.subr.bf16.mxu0 0
      %1153 = vmatpush1.bf16.xpose.msra.mxu0 0
      %1154 = vmatprep.subr.bf16.mxu0 0
      %1155 = vmatpush1.bf16.xpose.msra.mxu0 0
      %1156 = vmatprep.subr.bf16.mxu0 0
      %1157 = vmatpush1.bf16.xpose.msra.mxu0 0
      %1158 = vmatprep.subr.bf16.mxu0 0
      %1159 = vmatpush1.bf16.xpose.msra.mxu0 0
      %1160 = vmatprep.subr.bf16.mxu0 0
      %1161 = vmatpush1.bf16.xpose.msra.mxu0 0
      %1162 = vmatprep.subr.bf16.mxu0 0
      %1163 = vmatpush1.bf16.xpose.msra.mxu0 0
      %1164 = vmatprep.subr.bf16.mxu0 0
      %1165 = vmatpush1.bf16.xpose.msra.mxu0 %v1148
      %1166 = vmatprep.subr.bf16.mxu0 0
      %1167 = vmatpush2.bf16.xpose.msra.mxu0 0
      %1168 = vmatprep.subr.bf16.mxu0 0
      %1169 = vmatpush2.bf16.xpose.msra.mxu0 0
      %1170 = vmatprep.subr.bf16.mxu0 0
      %1171 = vmatpush2.bf16.xpose.msra.mxu0 0
      %1172 = vmatprep.subr.bf16.mxu0 0
      %1173 = vmatpush2.bf16.xpose.msra.mxu0 0
      %1174 = vmatprep.subr.bf16.mxu0 0
      %1175 = vmatpush2.bf16.xpose.msra.mxu0 0
      %1176 = vmatprep.subr.bf16.mxu0 0
      %1177 = vmatpush2.bf16.xpose.msra.mxu0 0
      %1178 = vmatprep.subr.bf16.mxu0 0
      %1179 = vmatpush2.bf16.xpose.msra.mxu0 0
      %1180 = vmatprep.subr.bf16.mxu0 0
      %1181 = vmatpush2.bf16.xpose.msra.mxu0 0
      %1182 = vmatprep.mubr.bf16.mxu0 0
      %1183 = vmatmul.mubr.bf16.gmra.mxu0 %v1145
      %v1184 = vpop.f32.mrf.mxu0
      %v1185 = vadd.f32 0.0, %v1184
      %v1186 = vpop.f32.mrf.mxu0
      %v1187 = vpop.f32.mrf.mxu0
      %v1188 = vpop.f32.mrf.mxu0
      %1189 = vdwg.mxu0
      %v1190 = vmul.f32 %v1139, 0.125
      %v1191 = vmul.f32 %v1185, 0.125
      %v1192 = vld [vmem:[%s2] sm:$0xff]
      %v1193 = vadd.f32 %v1190, %v1192
      %v1194 = vadd.f32 %v1191, %v1192
      %vm1195 = vcmask 64512
      %v1196 = vsel %vm1195, %v1193, -inf
      %1197 = vmax.xlane.f32.xlu0 %v1196
      %v1198 = vpop.xlane.xlu0 %1197
      %v1199 = vsel %vm1195, %v1194, -inf
      %1200 = vmax.xlane.f32.xlu0 %v1199
      %v1201 = vpop.xlane.xlu0 %1200
      %v1202 = vsub.f32 %v1193, %v1198
      %v1203 = vsub.f32 %v1194, %v1201
      %v1204 = vmul.f32 %v1202, 1.442695
      %v1205 = vpow.pop %v1204
      %v1206 = vmul.f32 %v1203, 1.442695
      %v1207 = vpow.pop %v1206
      %v1208 = vsel %vm1195, %v1205, 0.0
      %1209 = vadd.xlane.f32.xlu0 %v1208
      %v1210 = vpop.xlane.xlu0 %1209
      %v1211 = vsel %vm1195, %v1207, 0.0
      %1212 = vadd.xlane.f32.xlu0 %v1211
      %v1213 = vpop.xlane.xlu0 %1212
      %v1214 = vrcp.pop %v1210
      %v1215 = vrcp.pop %v1213
      %v1216 = vmul.f32 %v1205, %v1214
      %v1217 = vmul.f32 %v1207, %v1215
      %v1218 = vpack.c.bf16 %v1216, %v1216
      %v1219 = vpack.c.bf16 %v1217, %v1217
      %v1221 = vsel %vm1195, %v1218, 0
      %vm1223 = vcmask 1043456
      %v1225 = vsel %vm1223, %v1095, 0
      %1227 = vmatprep.subr.bf16.mxu0 0
      %1228 = vmatpush1.bf16.msra.mxu0 0
      %1229 = vmatprep.subr.bf16.mxu0 0
      %1230 = vmatpush1.bf16.msra.mxu0 0
      %1231 = vmatprep.subr.bf16.mxu0 0
      %1232 = vmatpush1.bf16.msra.mxu0 0
      %1233 = vmatprep.subr.bf16.mxu0 0
      %1234 = vmatpush1.bf16.msra.mxu0 0
      %1235 = vmatprep.subr.bf16.mxu0 0
      %1236 = vmatpush1.bf16.msra.mxu0 0
      %1237 = vmatprep.subr.bf16.mxu0 0
      %1238 = vmatpush1.bf16.msra.mxu0 0
      %1239 = vmatprep.subr.bf16.mxu0 0
      %1240 = vmatpush1.bf16.msra.mxu0 0
      %1241 = vmatprep.subr.bf16.mxu0 0
      %1242 = vmatpush1.bf16.msra.mxu0 %v1225
      %1243 = vmatprep.subr.bf16.mxu0 0
      %1244 = vmatpush2.bf16.msra.mxu0 0
      %1245 = vmatprep.subr.bf16.mxu0 0
      %1246 = vmatpush2.bf16.msra.mxu0 0
      %1247 = vmatprep.subr.bf16.mxu0 0
      %1248 = vmatpush2.bf16.msra.mxu0 0
      %1249 = vmatprep.subr.bf16.mxu0 0
      %1250 = vmatpush2.bf16.msra.mxu0 0
      %1251 = vmatprep.subr.bf16.mxu0 0
      %1252 = vmatpush2.bf16.msra.mxu0 0
      %1253 = vmatprep.subr.bf16.mxu0 0
      %1254 = vmatpush2.bf16.msra.mxu0 0
      %1255 = vmatprep.subr.bf16.mxu0 0
      %1256 = vmatpush2.bf16.msra.mxu0 0
      %1257 = vmatprep.subr.bf16.mxu0 0
      %1258 = vmatpush2.bf16.msra.mxu0 0
      %1259 = vmatprep.mubr.bf16.mxu0 0
      %1260 = vmatmul.mubr.bf16.gmra.mxu0 %v1221
      %v1261 = vpop.f32.mrf.mxu0
      %v1262 = vadd.f32 0.0, %v1261
      %v1263 = vpop.f32.mrf.mxu0
      %v1264 = vpop.f32.mrf.mxu0
      %v1265 = vpop.f32.mrf.mxu0
      %1266 = vdwg.mxu0
      %v1268 = vsel %vm1195, %v1219, 0
      %v1271 = vsel %vm1223, %v1096, 0
      %1273 = vmatprep.subr.bf16.mxu0 0
      %1274 = vmatpush1.bf16.msra.mxu0 0
      %1275 = vmatprep.subr.bf16.mxu0 0
      %1276 = vmatpush1.bf16.msra.mxu0 0
      %1277 = vmatprep.subr.bf16.mxu0 0
      %1278 = vmatpush1.bf16.msra.mxu0 0
      %1279 = vmatprep.subr.bf16.mxu0 0
      %1280 = vmatpush1.bf16.msra.mxu0 0
      %1281 = vmatprep.subr.bf16.mxu0 0
      %1282 = vmatpush1.bf16.msra.mxu0 0
      %1283 = vmatprep.subr.bf16.mxu0 0
      %1284 = vmatpush1.bf16.msra.mxu0 0
      %1285 = vmatprep.subr.bf16.mxu0 0
      %1286 = vmatpush1.bf16.msra.mxu0 0
      %1287 = vmatprep.subr.bf16.mxu0 0
      %1288 = vmatpush1.bf16.msra.mxu0 %v1271
      %1289 = vmatprep.subr.bf16.mxu0 0
      %1290 = vmatpush2.bf16.msra.mxu0 0
      %1291 = vmatprep.subr.bf16.mxu0 0
      %1292 = vmatpush2.bf16.msra.mxu0 0
      %1293 = vmatprep.subr.bf16.mxu0 0
      %1294 = vmatpush2.bf16.msra.mxu0 0
      %1295 = vmatprep.subr.bf16.mxu0 0
      %1296 = vmatpush2.bf16.msra.mxu0 0
      %1297 = vmatprep.subr.bf16.mxu0 0
      %1298 = vmatpush2.bf16.msra.mxu0 0
      %1299 = vmatprep.subr.bf16.mxu0 0
      %1300 = vmatpush2.bf16.msra.mxu0 0
      %1301 = vmatprep.subr.bf16.mxu0 0
      %1302 = vmatpush2.bf16.msra.mxu0 0
      %1303 = vmatprep.subr.bf16.mxu0 0
      %1304 = vmatpush2.bf16.msra.mxu0 0
      %1305 = vmatprep.mubr.bf16.mxu0 0
      %1306 = vmatmul.mubr.bf16.gmra.mxu0 %v1268
      %v1307 = vpop.f32.mrf.mxu0
      %v1308 = vadd.f32 0.0, %v1307
      %v1309 = vpop.f32.mrf.mxu0
      %v1310 = vpop.f32.mrf.mxu0
      %v1311 = vpop.f32.mrf.mxu0
      %1312 = vdwg.mxu0
      %1313 = vrot.lane.b32.xlu0 %v1085, 64
      %v1314 = vpop.permute.xlu0 %1313
      %1315 = vrot.lane.b32.xlu0 %v1090, 64
      %v1316 = vpop.permute.xlu0 %1315
      %v1318 = vsel %vm1097, %v1314, 0
      %v1321 = vsel %vm1097, %v1316, 0
      %1323 = vmatprep.subr.bf16.mxu0 0
      %1324 = vmatpush1.bf16.xpose.msra.mxu0 0
      %1325 = vmatprep.subr.bf16.mxu0 0
      %1326 = vmatpush1.bf16.xpose.msra.mxu0 0
      %1327 = vmatprep.subr.bf16.mxu0 0
      %1328 = vmatpush1.bf16.xpose.msra.mxu0 0
      %1329 = vmatprep.subr.bf16.mxu0 0
      %1330 = vmatpush1.bf16.xpose.msra.mxu0 0
      %1331 = vmatprep.subr.bf16.mxu0 0
      %1332 = vmatpush1.bf16.xpose.msra.mxu0 0
      %1333 = vmatprep.subr.bf16.mxu0 0
      %1334 = vmatpush1.bf16.xpose.msra.mxu0 0
      %1335 = vmatprep.subr.bf16.mxu0 0
      %1336 = vmatpush1.bf16.xpose.msra.mxu0 0
      %1337 = vmatprep.subr.bf16.mxu0 0
      %1338 = vmatpush1.bf16.xpose.msra.mxu0 %v1321
      %1339 = vmatprep.subr.bf16.mxu0 0
      %1340 = vmatpush2.bf16.xpose.msra.mxu0 0
      %1341 = vmatprep.subr.bf16.mxu0 0
      %1342 = vmatpush2.bf16.xpose.msra.mxu0 0
      %1343 = vmatprep.subr.bf16.mxu0 0
      %1344 = vmatpush2.bf16.xpose.msra.mxu0 0
      %1345 = vmatprep.subr.bf16.mxu0 0
      %1346 = vmatpush2.bf16.xpose.msra.mxu0 0
      %1347 = vmatprep.subr.bf16.mxu0 0
      %1348 = vmatpush2.bf16.xpose.msra.mxu0 0
      %1349 = vmatprep.subr.bf16.mxu0 0
      %1350 = vmatpush2.bf16.xpose.msra.mxu0 0
      %1351 = vmatprep.subr.bf16.mxu0 0
      %1352 = vmatpush2.bf16.xpose.msra.mxu0 0
      %1353 = vmatprep.subr.bf16.mxu0 0
      %1354 = vmatpush2.bf16.xpose.msra.mxu0 0
      %1355 = vmatprep.mubr.bf16.mxu0 0
      %1356 = vmatmul.mubr.bf16.gmra.mxu0 %v1318
      %v1357 = vpop.f32.mrf.mxu0
      %v1358 = vadd.f32 0.0, %v1357
      %v1359 = vpop.f32.mrf.mxu0
      %v1360 = vpop.f32.mrf.mxu0
      %v1361 = vpop.f32.mrf.mxu0
      %1362 = vdwg.mxu0
      %1363 = vrot.lane.b32.xlu0 %v1086, 64
      %v1364 = vpop.permute.xlu0 %1363
      %1365 = vrot.lane.b32.xlu0 %v1091, 64
      %v1366 = vpop.permute.xlu0 %1365
      %v1368 = vsel %vm1097, %v1364, 0
      %v1371 = vsel %vm1097, %v1366, 0
      %1373 = vmatprep.subr.bf16.mxu0 0
      %1374 = vmatpush1.bf16.xpose.msra.mxu0 0
      %1375 = vmatprep.subr.bf16.mxu0 0
      %1376 = vmatpush1.bf16.xpose.msra.mxu0 0
      %1377 = vmatprep.subr.bf16.mxu0 0
      %1378 = vmatpush1.bf16.xpose.msra.mxu0 0
      %1379 = vmatprep.subr.bf16.mxu0 0
      %1380 = vmatpush1.bf16.xpose.msra.mxu0 0
      %1381 = vmatprep.subr.bf16.mxu0 0
      %1382 = vmatpush1.bf16.xpose.msra.mxu0 0
      %1383 = vmatprep.subr.bf16.mxu0 0
      %1384 = vmatpush1.bf16.xpose.msra.mxu0 0
      %1385 = vmatprep.subr.bf16.mxu0 0
      %1386 = vmatpush1.bf16.xpose.msra.mxu0 0
      %1387 = vmatprep.subr.bf16.mxu0 0
      %1388 = vmatpush1.bf16.xpose.msra.mxu0 %v1371
      %1389 = vmatprep.subr.bf16.mxu0 0
      %1390 = vmatpush2.bf16.xpose.msra.mxu0 0
      %1391 = vmatprep.subr.bf16.mxu0 0
      %1392 = vmatpush2.bf16.xpose.msra.mxu0 0
      %1393 = vmatprep.subr.bf16.mxu0 0
      %1394 = vmatpush2.bf16.xpose.msra.mxu0 0
      %1395 = vmatprep.subr.bf16.mxu0 0
      %1396 = vmatpush2.bf16.xpose.msra.mxu0 0
      %1397 = vmatprep.subr.bf16.mxu0 0
      %1398 = vmatpush2.bf16.xpose.msra.mxu0 0
      %1399 = vmatprep.subr.bf16.mxu0 0
      %1400 = vmatpush2.bf16.xpose.msra.mxu0 0
      %1401 = vmatprep.subr.bf16.mxu0 0
      %1402 = vmatpush2.bf16.xpose.msra.mxu0 0
      %1403 = vmatprep.subr.bf16.mxu0 0
      %1404 = vmatpush2.bf16.xpose.msra.mxu0 0
      %1405 = vmatprep.mubr.bf16.mxu0 0
      %1406 = vmatmul.mubr.bf16.gmra.mxu0 %v1368
      %v1407 = vpop.f32.mrf.mxu0
      %v1408 = vadd.f32 0.0, %v1407
      %v1409 = vpop.f32.mrf.mxu0
      %v1410 = vpop.f32.mrf.mxu0
      %v1411 = vpop.f32.mrf.mxu0
      %1412 = vdwg.mxu0
      %v1413 = vmul.f32 %v1358, 0.125
      %v1414 = vmul.f32 %v1408, 0.125
      %v1415 = vld [vmem:[%s2] sm:$0xff]
      %v1416 = vadd.f32 %v1413, %v1415
      %v1417 = vadd.f32 %v1414, %v1415
      %v1418 = vsel %vm1195, %v1416, -inf
      %1419 = vmax.xlane.f32.xlu0 %v1418
      %v1420 = vpop.xlane.xlu0 %1419
      %v1421 = vsel %vm1195, %v1417, -inf
      %1422 = vmax.xlane.f32.xlu0 %v1421
      %v1423 = vpop.xlane.xlu0 %1422
      %v1424 = vsub.f32 %v1416, %v1420
      %v1425 = vsub.f32 %v1417, %v1423
      %v1426 = vmul.f32 %v1424, 1.442695
      %v1427 = vpow.pop %v1426
      %v1428 = vmul.f32 %v1425, 1.442695
      %v1429 = vpow.pop %v1428
      %v1430 = vsel %vm1195, %v1427, 0.0
      %1431 = vadd.xlane.f32.xlu0 %v1430
      %v1432 = vpop.xlane.xlu0 %1431
      %v1433 = vsel %vm1195, %v1429, 0.0
      %1434 = vadd.xlane.f32.xlu0 %v1433
      %v1435 = vpop.xlane.xlu0 %1434
      %v1436 = vrcp.pop %v1432
      %v1437 = vrcp.pop %v1435
      %v1438 = vmul.f32 %v1427, %v1436
      %v1439 = vmul.f32 %v1429, %v1437
      %v1440 = vpack.c.bf16 %v1438, %v1438
      %v1441 = vpack.c.bf16 %v1439, %v1439
      %1442 = vrot.lane.b32.xlu0 %v1095, 64
      %v1443 = vpop.permute.xlu0 %1442
      %v1445 = vsel %vm1195, %v1440, 0
      %v1448 = vsel %vm1223, %v1443, 0
      %1450 = vmatprep.subr.bf16.mxu0 0
      %1451 = vmatpush1.bf16.msra.mxu0 0
      %1452 = vmatprep.subr.bf16.mxu0 0
      %1453 = vmatpush1.bf16.msra.mxu0 0
      %1454 = vmatprep.subr.bf16.mxu0 0
      %1455 = vmatpush1.bf16.msra.mxu0 0
      %1456 = vmatprep.subr.bf16.mxu0 0
      %1457 = vmatpush1.bf16.msra.mxu0 0
      %1458 = vmatprep.subr.bf16.mxu0 0
      %1459 = vmatpush1.bf16.msra.mxu0 0
      %1460 = vmatprep.subr.bf16.mxu0 0
      %1461 = vmatpush1.bf16.msra.mxu0 0
      %1462 = vmatprep.subr.bf16.mxu0 0
      %1463 = vmatpush1.bf16.msra.mxu0 0
      %1464 = vmatprep.subr.bf16.mxu0 0
      %1465 = vmatpush1.bf16.msra.mxu0 %v1448
      %1466 = vmatprep.subr.bf16.mxu0 0
      %1467 = vmatpush2.bf16.msra.mxu0 0
      %1468 = vmatprep.subr.bf16.mxu0 0
      %1469 = vmatpush2.bf16.msra.mxu0 0
      %1470 = vmatprep.subr.bf16.mxu0 0
      %1471 = vmatpush2.bf16.msra.mxu0 0
      %1472 = vmatprep.subr.bf16.mxu0 0
      %1473 = vmatpush2.bf16.msra.mxu0 0
      %1474 = vmatprep.subr.bf16.mxu0 0
      %1475 = vmatpush2.bf16.msra.mxu0 0
      %1476 = vmatprep.subr.bf16.mxu0 0
      %1477 = vmatpush2.bf16.msra.mxu0 0
      %1478 = vmatprep.subr.bf16.mxu0 0
      %1479 = vmatpush2.bf16.msra.mxu0 0
      %1480 = vmatprep.subr.bf16.mxu0 0
      %1481 = vmatpush2.bf16.msra.mxu0 0
      %1482 = vmatprep.mubr.bf16.mxu0 0
      %1483 = vmatmul.mubr.bf16.gmra.mxu0 %v1445
      %v1484 = vpop.f32.mrf.mxu0
      %v1485 = vadd.f32 0.0, %v1484
      %v1486 = vpop.f32.mrf.mxu0
      %v1487 = vpop.f32.mrf.mxu0
      %v1488 = vpop.f32.mrf.mxu0
      %1489 = vdwg.mxu0
      %1490 = vrot.lane.b32.xlu0 %v1096, 64
      %v1491 = vpop.permute.xlu0 %1490
      %v1493 = vsel %vm1195, %v1441, 0
      %v1496 = vsel %vm1223, %v1491, 0
      %1498 = vmatprep.subr.bf16.mxu0 0
      %1499 = vmatpush1.bf16.msra.mxu0 0
      %1500 = vmatprep.subr.bf16.mxu0 0
      %1501 = vmatpush1.bf16.msra.mxu0 0
      %1502 = vmatprep.subr.bf16.mxu0 0
      %1503 = vmatpush1.bf16.msra.mxu0 0
      %1504 = vmatprep.subr.bf16.mxu0 0
      %1505 = vmatpush1.bf16.msra.mxu0 0
      %1506 = vmatprep.subr.bf16.mxu0 0
      %1507 = vmatpush1.bf16.msra.mxu0 0
      %1508 = vmatprep.subr.bf16.mxu0 0
      %1509 = vmatpush1.bf16.msra.mxu0 0
      %1510 = vmatprep.subr.bf16.mxu0 0
      %1511 = vmatpush1.bf16.msra.mxu0 0
      %1512 = vmatprep.subr.bf16.mxu0 0
      %1513 = vmatpush1.bf16.msra.mxu0 %v1496
      %1514 = vmatprep.subr.bf16.mxu0 0
      %1515 = vmatpush2.bf16.msra.mxu0 0
      %1516 = vmatprep.subr.bf16.mxu0 0
      %1517 = vmatpush2.bf16.msra.mxu0 0
      %1518 = vmatprep.subr.bf16.mxu0 0
      %1519 = vmatpush2.bf16.msra.mxu0 0
      %1520 = vmatprep.subr.bf16.mxu0 0
      %1521 = vmatpush2.bf16.msra.mxu0 0
      %1522 = vmatprep.subr.bf16.mxu0 0
      %1523 = vmatpush2.bf16.msra.mxu0 0
      %1524 = vmatprep.subr.bf16.mxu0 0
      %1525 = vmatpush2.bf16.msra.mxu0 0
      %1526 = vmatprep.subr.bf16.mxu0 0
      %1527 = vmatpush2.bf16.msra.mxu0 0
      %1528 = vmatprep.subr.bf16.mxu0 0
      %1529 = vmatpush2.bf16.msra.mxu0 0
      %1530 = vmatprep.mubr.bf16.mxu0 0
      %1531 = vmatmul.mubr.bf16.gmra.mxu0 %v1493
      %v1532 = vpop.f32.mrf.mxu0
      %v1533 = vadd.f32 0.0, %v1532
      %v1534 = vpop.f32.mrf.mxu0
      %v1535 = vpop.f32.mrf.mxu0
      %v1536 = vpop.f32.mrf.mxu0
      %1537 = vdwg.mxu0
      %1540 = vrot.lane.b32.xlu0 %v1485, 64
      %v1541 = vpop.permute.xlu0 %1540
      %1542 = vrot.lane.b32.xlu0 %v1533, 64
      %v1543 = vpop.permute.xlu0 %1542
      %v1546 = vsel %vm1097, %v1262, %v1541
      %v1547 = vsel %vm1097, %v1308, %v1543
      %v1548 = vpack.c.bf16 %v1547, %v1546
      %v1549 = vld [vmem:[%s729] sm:$0xf]
      %v1550 = vld [vmem:[%s729 + $0x4] sm:$0xf]
      %v1551 = vld [vmem:[%s729 + $0x8] sm:$0xf]
      %v1552 = vld [vmem:[%s729 + $0xc] sm:$0xf]
      %v1553 = vld [vmem:[%s729 + $0x10] sm:$0xf]
      %v1554 = vld [vmem:[%s729 + $0x14] sm:$0xf]
      %v1555 = vld [vmem:[%s729 + $0x18] sm:$0xf]
      %v1556 = vld [vmem:[%s729 + $0x1c] sm:$0xf]
      %v1557 = vld [vmem:[%s729 + $0x20] sm:$0xf]
      %v1558 = vld [vmem:[%s729 + $0x24] sm:$0xf]
      %v1559 = vld [vmem:[%s729 + $0x28] sm:$0xf]
      %v1560 = vld [vmem:[%s729 + $0x2c] sm:$0xf]
      %v1561 = vld [vmem:[%s729 + $0x30] sm:$0xf]
      %v1562 = vld [vmem:[%s729 + $0x34] sm:$0xf]
      %v1563 = vld [vmem:[%s729 + $0x38] sm:$0xf]
      %v1564 = vld [vmem:[%s729 + $0x3c] sm:$0xf]
      %v1565 = vld [vmem:[%s732] sm:$0x1]
      %v1567 = vlaneseq
      %v1568 = vshrl.u32 %v1567, 7
      %v1569 = vsub.s32 0, %v1568
      %v1570 = vrot.slane %v1565, %v1569
      %v1588 = vunpack.c.l.b16 %v1549
      %v1589 = vunpack.c.l.b16 %v1550
      %v1590 = vunpack.c.l.b16 %v1551
      %v1591 = vunpack.c.l.b16 %v1552
      %v1592 = vunpack.c.l.b16 %v1553
      %v1593 = vunpack.c.l.b16 %v1554
      %v1594 = vunpack.c.l.b16 %v1555
      %v1595 = vunpack.c.l.b16 %v1556
      %v1596 = vunpack.c.l.b16 %v1557
      %v1597 = vunpack.c.l.b16 %v1558
      %v1598 = vunpack.c.l.b16 %v1559
      %v1599 = vunpack.c.l.b16 %v1560
      %v1600 = vunpack.c.l.b16 %v1561
      %v1601 = vunpack.c.l.b16 %v1562
      %v1602 = vunpack.c.l.b16 %v1563
      %v1603 = vunpack.c.l.b16 %v1564
      %v1604 = vpack.c.b16 %v1589, %v1588
      %v1605 = vpack.c.b16 %v1591, %v1590
      %v1606 = vpack.c.b16 %v1593, %v1592
      %v1607 = vpack.c.b16 %v1595, %v1594
      %v1608 = vpack.c.b16 %v1597, %v1596
      %v1609 = vpack.c.b16 %v1599, %v1598
      %v1610 = vpack.c.b16 %v1601, %v1600
      %v1611 = vpack.c.b16 %v1603, %v1602
      %1620 = vmatprep.subr.bf16.mxu0 0
      %1621 = vmatpush1.bf16.msra.mxu0 %v1611
      %1622 = vmatprep.subr.bf16.mxu0 0
      %1623 = vmatpush1.bf16.msra.mxu0 %v1610
      %1624 = vmatprep.subr.bf16.mxu0 0
      %1625 = vmatpush1.bf16.msra.mxu0 %v1609
      %1626 = vmatprep.subr.bf16.mxu0 0
      %1627 = vmatpush1.bf16.msra.mxu0 %v1608
      %1628 = vmatprep.subr.bf16.mxu0 0
      %1629 = vmatpush1.bf16.msra.mxu0 %v1607
      %1630 = vmatprep.subr.bf16.mxu0 0
      %1631 = vmatpush1.bf16.msra.mxu0 %v1606
      %1632 = vmatprep.subr.bf16.mxu0 0
      %1633 = vmatpush1.bf16.msra.mxu0 %v1605
      %1634 = vmatprep.subr.bf16.mxu0 0
      %1635 = vmatpush1.bf16.msra.mxu0 %v1604
      %1636 = vmatprep.subr.bf16.mxu0 0
      %1637 = vmatpush2.bf16.msra.mxu0 0
      %1638 = vmatprep.subr.bf16.mxu0 0
      %1639 = vmatpush2.bf16.msra.mxu0 0
      %1640 = vmatprep.subr.bf16.mxu0 0
      %1641 = vmatpush2.bf16.msra.mxu0 0
      %1642 = vmatprep.subr.bf16.mxu0 0
      %1643 = vmatpush2.bf16.msra.mxu0 0
      %1644 = vmatprep.subr.bf16.mxu0 0
      %1645 = vmatpush2.bf16.msra.mxu0 0
      %1646 = vmatprep.subr.bf16.mxu0 0
      %1647 = vmatpush2.bf16.msra.mxu0 0
      %1648 = vmatprep.subr.bf16.mxu0 0
      %1649 = vmatpush2.bf16.msra.mxu0 0
      %1650 = vmatprep.subr.bf16.mxu0 0
      %1651 = vmatpush2.bf16.msra.mxu0 0
      %1652 = vmatprep.mubr.bf16.mxu0 0
      %1653 = vmatmul.mubr.bf16.gmra.mxu0 %v1548
      %v1654 = vpop.f32.mrf.mxu0
      %v1655 = vadd.f32 %v1570, %v1654
      %v1656 = vpop.f32.mrf.mxu0
      %v1657 = vpop.f32.mrf.mxu0
      %v1658 = vadd.f32 %v1570, %v1657
      %v1659 = vpop.f32.mrf.mxu0
      %1660 = vdwg.mxu0
      %v1661 = vadd.f32 %v774, %v1655
      %v1662 = vadd.f32 %v775, %v1658
      %v1663 = vld [vmem:[%s735] sm:$0x1]
      %v1664 = vld [vmem:[%s738] sm:$0x1]
      %1665 = vadd.xlane.f32.xlu0 %v1661
      %v1666 = vpop.xlane.xlu0 %1665
      %1667 = vadd.xlane.f32.xlu0 %v1662
      %v1668 = vpop.xlane.xlu0 %1667
      %v1669 = vmul.f32 %v1666, %v782
      %v1670 = vmul.f32 %v1668, %v782
      %v1671 = vsub.f32 %v1661, %v1669
      %v1672 = vsub.f32 %v1662, %v1670
      %v1673 = vmul.f32 %v1671, %v1671
      %v1674 = vmul.f32 %v1672, %v1672
      %1675 = vadd.xlane.f32.xlu0 %v1673
      %v1676 = vpop.xlane.xlu0 %1675
      %1677 = vadd.xlane.f32.xlu0 %v1674
      %v1678 = vpop.xlane.xlu0 %1677
      %v1679 = vmul.f32 %v1676, %v782
      %v1680 = vmul.f32 %v1678, %v782
      %v1681 = vadd.f32 %v1679, 1e-05
      %v1682 = vadd.f32 %v1680, 1e-05
      %v1683 = vrsqrt.pop %v1681
      %v1684 = vrsqrt.pop %v1682
      %v1685 = vmul.f32 %v1671, %v1683
      %v1686 = vmul.f32 %v1672, %v1684
      %v1688 = vlaneseq
      %v1689 = vshrl.u32 %v1688, 7
      %v1690 = vsub.s32 0, %v1689
      %v1691 = vrot.slane %v1663, %v1690
      %v1693 = vmul.f32 %v1685, %v1691
      %v1694 = vmul.f32 %v1686, %v1691
      %v1696 = vlaneseq
      %v1697 = vshrl.u32 %v1696, 7
      %v1698 = vsub.s32 0, %v1697
      %v1699 = vrot.slane %v1664, %v1698
      %v1701 = vadd.f32 %v1693, %v1699
      %v1702 = vadd.f32 %v1694, %v1699
      %v1703 = vpack.c.bf16 %v1702, %v1701
      %v1704 = vld [vmem:[%s743] sm:$0xff]
      %v1705 = vld [vmem:[%s743 + $0x8] sm:$0xff]
      %v1706 = vld [vmem:[%s743 + $0x10] sm:$0xff]
      %v1707 = vld [vmem:[%s743 + $0x18] sm:$0xff]
      %v1708 = vld [vmem:[%s743 + $0x20] sm:$0xff]
      %v1709 = vld [vmem:[%s743 + $0x28] sm:$0xff]
      %v1710 = vld [vmem:[%s743 + $0x30] sm:$0xff]
      %v1711 = vld [vmem:[%s743 + $0x38] sm:$0xff]
      %v1712 = vld [vmem:[%s743 + $0x40] sm:$0xff]
      %v1713 = vld [vmem:[%s743 + $0x48] sm:$0xff]
      %v1714 = vld [vmem:[%s743 + $0x50] sm:$0xff]
      %v1715 = vld [vmem:[%s743 + $0x58] sm:$0xff]
      %v1716 = vld [vmem:[%s743 + $0x60] sm:$0xff]
      %v1717 = vld [vmem:[%s743 + $0x68] sm:$0xff]
      %v1718 = vld [vmem:[%s743 + $0x70] sm:$0xff]
      %v1719 = vld [vmem:[%s743 + $0x78] sm:$0xff]
      %v1720 = vld [vmem:[%s743 + $0x80] sm:$0xff]
      %v1721 = vld [vmem:[%s743 + $0x88] sm:$0xff]
      %v1722 = vld [vmem:[%s743 + $0x90] sm:$0xff]
      %v1723 = vld [vmem:[%s743 + $0x98] sm:$0xff]
      %v1724 = vld [vmem:[%s743 + $0xa0] sm:$0xff]
      %v1725 = vld [vmem:[%s743 + $0xa8] sm:$0xff]
      %v1726 = vld [vmem:[%s743 + $0xb0] sm:$0xff]
      %v1727 = vld [vmem:[%s743 + $0xb8] sm:$0xff]
      %v1728 = vld [vmem:[%s743 + $0xc0] sm:$0xff]
      %v1729 = vld [vmem:[%s743 + $0xc8] sm:$0xff]
      %v1730 = vld [vmem:[%s743 + $0xd0] sm:$0xff]
      %v1731 = vld [vmem:[%s743 + $0xd8] sm:$0xff]
      %v1732 = vld [vmem:[%s743 + $0xe0] sm:$0xff]
      %v1733 = vld [vmem:[%s743 + $0xe8] sm:$0xff]
      %v1734 = vld [vmem:[%s743 + $0xf0] sm:$0xff]
      %v1735 = vld [vmem:[%s743 + $0xf8] sm:$0xff]
      %v1736 = vld [vmem:[%s747] sm:$0xf]
      %v1738 = vlaneseq
      %v1739 = vshrl.u32 %v1738, 7
      %v1740 = vsub.s32 0, %v1739
      %v1741 = vrot.slane %v1736, %v1740
      %v1742 = vlaneseq
      %v1743 = vshrl.u32 %v1742, 7
      %v1744 = vsub.s32 1, %v1743
      %v1745 = vrot.slane %v1736, %v1744
      %v1746 = vlaneseq
      %v1747 = vshrl.u32 %v1746, 7
      %v1748 = vsub.s32 2, %v1747
      %v1749 = vrot.slane %v1736, %v1748
      %v1750 = vlaneseq
      %v1751 = vshrl.u32 %v1750, 7
      %v1752 = vsub.s32 3, %v1751
      %v1753 = vrot.slane %v1736, %v1752
      %v1790 = vunpack.c.l.b16 %v1704
      %v1791 = vunpack.c.h.b16 %v1704
      %v1792 = vunpack.c.l.b16 %v1705
      %v1793 = vunpack.c.h.b16 %v1705
      %v1794 = vunpack.c.l.b16 %v1706
      %v1795 = vunpack.c.h.b16 %v1706
      %v1796 = vunpack.c.l.b16 %v1707
      %v1797 = vunpack.c.h.b16 %v1707
      %v1798 = vunpack.c.l.b16 %v1708
      %v1799 = vunpack.c.h.b16 %v1708
      %v1800 = vunpack.c.l.b16 %v1709
      %v1801 = vunpack.c.h.b16 %v1709
      %v1802 = vunpack.c.l.b16 %v1710
      %v1803 = vunpack.c.h.b16 %v1710
      %v1804 = vunpack.c.l.b16 %v1711
      %v1805 = vunpack.c.h.b16 %v1711
      %v1806 = vunpack.c.l.b16 %v1712
      %v1807 = vunpack.c.h.b16 %v1712
      %v1808 = vunpack.c.l.b16 %v1713
      %v1809 = vunpack.c.h.b16 %v1713
      %v1810 = vunpack.c.l.b16 %v1714
      %v1811 = vunpack.c.h.b16 %v1714
      %v1812 = vunpack.c.l.b16 %v1715
      %v1813 = vunpack.c.h.b16 %v1715
      %v1814 = vunpack.c.l.b16 %v1716
      %v1815 = vunpack.c.h.b16 %v1716
      %v1816 = vunpack.c.l.b16 %v1717
      %v1817 = vunpack.c.h.b16 %v1717
      %v1818 = vunpack.c.l.b16 %v1718
      %v1819 = vunpack.c.h.b16 %v1718
      %v1820 = vunpack.c.l.b16 %v1719
      %v1821 = vunpack.c.h.b16 %v1719
      %v1822 = vunpack.c.l.b16 %v1720
      %v1823 = vunpack.c.h.b16 %v1720
      %v1824 = vunpack.c.l.b16 %v1721
      %v1825 = vunpack.c.h.b16 %v1721
      %v1826 = vunpack.c.l.b16 %v1722
      %v1827 = vunpack.c.h.b16 %v1722
      %v1828 = vunpack.c.l.b16 %v1723
      %v1829 = vunpack.c.h.b16 %v1723
      %v1830 = vunpack.c.l.b16 %v1724
      %v1831 = vunpack.c.h.b16 %v1724
      %v1832 = vunpack.c.l.b16 %v1725
      %v1833 = vunpack.c.h.b16 %v1725
      %v1834 = vunpack.c.l.b16 %v1726
      %v1835 = vunpack.c.h.b16 %v1726
      %v1836 = vunpack.c.l.b16 %v1727
      %v1837 = vunpack.c.h.b16 %v1727
      %v1838 = vunpack.c.l.b16 %v1728
      %v1839 = vunpack.c.h.b16 %v1728
      %v1840 = vunpack.c.l.b16 %v1729
      %v1841 = vunpack.c.h.b16 %v1729
      %v1842 = vunpack.c.l.b16 %v1730
      %v1843 = vunpack.c.h.b16 %v1730
      %v1844 = vunpack.c.l.b16 %v1731
      %v1845 = vunpack.c.h.b16 %v1731
      %v1846 = vunpack.c.l.b16 %v1732
      %v1847 = vunpack.c.h.b16 %v1732
      %v1848 = vunpack.c.l.b16 %v1733
      %v1849 = vunpack.c.h.b16 %v1733
      %v1850 = vunpack.c.l.b16 %v1734
      %v1851 = vunpack.c.h.b16 %v1734
      %v1852 = vunpack.c.l.b16 %v1735
      %v1853 = vunpack.c.h.b16 %v1735
      %v1854 = vpack.c.b16 %v1794, %v1790
      %v1855 = vpack.c.b16 %v1795, %v1791
      %v1856 = vpack.c.b16 %v1796, %v1792
      %v1857 = vpack.c.b16 %v1797, %v1793
      %v1858 = vpack.c.b16 %v1802, %v1798
      %v1859 = vpack.c.b16 %v1803, %v1799
      %v1860 = vpack.c.b16 %v1804, %v1800
      %v1861 = vpack.c.b16 %v1805, %v1801
      %v1862 = vpack.c.b16 %v1810, %v1806
      %v1863 = vpack.c.b16 %v1811, %v1807
      %v1864 = vpack.c.b16 %v1812, %v1808
      %v1865 = vpack.c.b16 %v1813, %v1809
      %v1866 = vpack.c.b16 %v1818, %v1814
      %v1867 = vpack.c.b16 %v1819, %v1815
      %v1868 = vpack.c.b16 %v1820, %v1816
      %v1869 = vpack.c.b16 %v1821, %v1817
      %v1870 = vpack.c.b16 %v1826, %v1822
      %v1871 = vpack.c.b16 %v1827, %v1823
      %v1872 = vpack.c.b16 %v1828, %v1824
      %v1873 = vpack.c.b16 %v1829, %v1825
      %v1874 = vpack.c.b16 %v1834, %v1830
      %v1875 = vpack.c.b16 %v1835, %v1831
      %v1876 = vpack.c.b16 %v1836, %v1832
      %v1877 = vpack.c.b16 %v1837, %v1833
      %v1878 = vpack.c.b16 %v1842, %v1838
      %v1879 = vpack.c.b16 %v1843, %v1839
      %v1880 = vpack.c.b16 %v1844, %v1840
      %v1881 = vpack.c.b16 %v1845, %v1841
      %v1882 = vpack.c.b16 %v1850, %v1846
      %v1883 = vpack.c.b16 %v1851, %v1847
      %v1884 = vpack.c.b16 %v1852, %v1848
      %v1885 = vpack.c.b16 %v1853, %v1849
      %1918 = vmatprep.subr.bf16.mxu0 %v1883
      %1919 = vmatpush1.bf16.msra.mxu0 %v1882
      %1920 = vmatprep.subr.bf16.mxu0 %v1879
      %1921 = vmatpush1.bf16.msra.mxu0 %v1878
      %1922 = vmatprep.subr.bf16.mxu0 %v1875
      %1923 = vmatpush1.bf16.msra.mxu0 %v1874
      %1924 = vmatprep.subr.bf16.mxu0 %v1871
      %1925 = vmatpush1.bf16.msra.mxu0 %v1870
      %1926 = vmatprep.subr.bf16.mxu0 %v1867
      %1927 = vmatpush1.bf16.msra.mxu0 %v1866
      %1928 = vmatprep.subr.bf16.mxu0 %v1863
      %1929 = vmatpush1.bf16.msra.mxu0 %v1862
      %1930 = vmatprep.subr.bf16.mxu0 %v1859
      %1931 = vmatpush1.bf16.msra.mxu0 %v1858
      %1932 = vmatprep.subr.bf16.mxu0 %v1855
      %1933 = vmatpush1.bf16.msra.mxu0 %v1854
      %1934 = vmatprep.subr.bf16.mxu0 0
      %1935 = vmatpush2.bf16.msra.mxu0 0
      %1936 = vmatprep.subr.bf16.mxu0 0
      %1937 = vmatpush2.bf16.msra.mxu0 0
      %1938 = vmatprep.subr.bf16.mxu0 0
      %1939 = vmatpush2.bf16.msra.mxu0 0
      %1940 = vmatprep.subr.bf16.mxu0 0
      %1941 = vmatpush2.bf16.msra.mxu0 0
      %1942 = vmatprep.subr.bf16.mxu0 0
      %1943 = vmatpush2.bf16.msra.mxu0 0
      %1944 = vmatprep.subr.bf16.mxu0 0
      %1945 = vmatpush2.bf16.msra.mxu0 0
      %1946 = vmatprep.subr.bf16.mxu0 0
      %1947 = vmatpush2.bf16.msra.mxu0 0
      %1948 = vmatprep.subr.bf16.mxu0 0
      %1949 = vmatpush2.bf16.msra.mxu0 0
      %1950 = vmatprep.mubr.bf16.mxu0 0
      %1951 = vmatmul.mubr.bf16.gmra.mxu0 %v1703
      %v1952 = vpop.f32.mrf.mxu0
      %v1953 = vadd.f32 %v1741, %v1952
      %v1954 = vpop.f32.mrf.mxu0
      %v1955 = vadd.f32 %v1745, %v1954
      %v1956 = vpop.f32.mrf.mxu0
      %v1957 = vadd.f32 %v1741, %v1956
      %v1958 = vpop.f32.mrf.mxu0
      %v1959 = vadd.f32 %v1745, %v1958
      %1960 = vdwg.mxu0
      %1961 = vmatprep.subr.bf16.mxu0 %v1885
      %1962 = vmatpush1.bf16.msra.mxu0 %v1884
      %1963 = vmatprep.subr.bf16.mxu0 %v1881
      %1964 = vmatpush1.bf16.msra.mxu0 %v1880
      %1965 = vmatprep.subr.bf16.mxu0 %v1877
      %1966 = vmatpush1.bf16.msra.mxu0 %v1876
      %1967 = vmatprep.subr.bf16.mxu0 %v1873
      %1968 = vmatpush1.bf16.msra.mxu0 %v1872
      %1969 = vmatprep.subr.bf16.mxu0 %v1869
      %1970 = vmatpush1.bf16.msra.mxu0 %v1868
      %1971 = vmatprep.subr.bf16.mxu0 %v1865
      %1972 = vmatpush1.bf16.msra.mxu0 %v1864
      %1973 = vmatprep.subr.bf16.mxu0 %v1861
      %1974 = vmatpush1.bf16.msra.mxu0 %v1860
      %1975 = vmatprep.subr.bf16.mxu0 %v1857
      %1976 = vmatpush1.bf16.msra.mxu0 %v1856
      %1977 = vmatprep.subr.bf16.mxu0 0
      %1978 = vmatpush2.bf16.msra.mxu0 0
      %1979 = vmatprep.subr.bf16.mxu0 0
      %1980 = vmatpush2.bf16.msra.mxu0 0
      %1981 = vmatprep.subr.bf16.mxu0 0
      %1982 = vmatpush2.bf16.msra.mxu0 0
      %1983 = vmatprep.subr.bf16.mxu0 0
      %1984 = vmatpush2.bf16.msra.mxu0 0
      %1985 = vmatprep.subr.bf16.mxu0 0
      %1986 = vmatpush2.bf16.msra.mxu0 0
      %1987 = vmatprep.subr.bf16.mxu0 0
      %1988 = vmatpush2.bf16.msra.mxu0 0
      %1989 = vmatprep.subr.bf16.mxu0 0
      %1990 = vmatpush2.bf16.msra.mxu0 0
      %1991 = vmatprep.subr.bf16.mxu0 0
      %1992 = vmatpush2.bf16.msra.mxu0 0
      %1993 = vmatprep.mubr.bf16.mxu0 0
      %1994 = vmatmul.mubr.bf16.gmra.mxu0 %v1703
      %v1995 = vpop.f32.mrf.mxu0
      %v1996 = vadd.f32 %v1749, %v1995
      %v1997 = vpop.f32.mrf.mxu0
      %v1998 = vadd.f32 %v1753, %v1997
      %v1999 = vpop.f32.mrf.mxu0
      %v2000 = vadd.f32 %v1749, %v1999
      %v2001 = vpop.f32.mrf.mxu0
      %v2002 = vadd.f32 %v1753, %v2001
      %2003 = vdwg.mxu0
      %v2004 = vmul.f32 %v1953, 1.702
      %v2005 = vmul.f32 %v1955, 1.702
      %v2006 = vmul.f32 %v1996, 1.702
      %v2007 = vmul.f32 %v1998, 1.702
      %v2008 = vmul.f32 %v1957, 1.702
      %v2009 = vmul.f32 %v1959, 1.702
      %v2010 = vmul.f32 %v2000, 1.702
      %v2011 = vmul.f32 %v2002, 1.702
      %v2012 = vxor.u32 %v2004, 2147483648
      %v2013 = vxor.u32 %v2005, 2147483648
      %v2014 = vxor.u32 %v2006, 2147483648
      %v2015 = vxor.u32 %v2007, 2147483648
      %v2016 = vxor.u32 %v2008, 2147483648
      %v2017 = vxor.u32 %v2009, 2147483648
      %v2018 = vxor.u32 %v2010, 2147483648
      %v2019 = vxor.u32 %v2011, 2147483648
      %v2020 = vmul.f32 %v2012, 1.442695
      %v2021 = vpow.pop %v2020
      %v2022 = vmul.f32 %v2013, 1.442695
      %v2023 = vpow.pop %v2022
      %v2024 = vmul.f32 %v2014, 1.442695
      %v2025 = vpow.pop %v2024
      %v2026 = vmul.f32 %v2015, 1.442695
      %v2027 = vpow.pop %v2026
      %v2028 = vmul.f32 %v2016, 1.442695
      %v2029 = vpow.pop %v2028
      %v2030 = vmul.f32 %v2017, 1.442695
      %v2031 = vpow.pop %v2030
      %v2032 = vmul.f32 %v2018, 1.442695
      %v2033 = vpow.pop %v2032
      %v2034 = vmul.f32 %v2019, 1.442695
      %v2035 = vpow.pop %v2034
      %v2036 = vadd.f32 %v2021, 1.0
      %v2037 = vadd.f32 %v2023, 1.0
      %v2038 = vadd.f32 %v2025, 1.0
      %v2039 = vadd.f32 %v2027, 1.0
      %v2040 = vadd.f32 %v2029, 1.0
      %v2041 = vadd.f32 %v2031, 1.0
      %v2042 = vadd.f32 %v2033, 1.0
      %v2043 = vadd.f32 %v2035, 1.0
      %v2044 = vrcp.pop %v2036
      %v2045 = vmul.f32 1.0, %v2044
      %v2046 = vrcp.pop %v2037
      %v2047 = vmul.f32 1.0, %v2046
      %v2048 = vrcp.pop %v2038
      %v2049 = vmul.f32 1.0, %v2048
      %v2050 = vrcp.pop %v2039
      %v2051 = vmul.f32 1.0, %v2050
      %v2052 = vrcp.pop %v2040
      %v2053 = vmul.f32 1.0, %v2052
      %v2054 = vrcp.pop %v2041
      %v2055 = vmul.f32 1.0, %v2054
      %v2056 = vrcp.pop %v2042
      %v2057 = vmul.f32 1.0, %v2056
      %v2058 = vrcp.pop %v2043
      %v2059 = vmul.f32 1.0, %v2058
      %v2060 = vmul.f32 %v1953, %v2045
      %v2061 = vmul.f32 %v1955, %v2047
      %v2062 = vmul.f32 %v1996, %v2049
      %v2063 = vmul.f32 %v1998, %v2051
      %v2064 = vmul.f32 %v1957, %v2053
      %v2065 = vmul.f32 %v1959, %v2055
      %v2066 = vmul.f32 %v2000, %v2057
      %v2067 = vmul.f32 %v2002, %v2059
      %v2068 = vpack.c.bf16 %v2064, %v2060
      %v2069 = vpack.c.bf16 %v2065, %v2061
      %v2070 = vpack.c.bf16 %v2066, %v2062
      %v2071 = vpack.c.bf16 %v2067, %v2063
      %v2072 = vld [vmem:[%s752] sm:$0xf]
      %v2073 = vld [vmem:[%s752 + $0x4] sm:$0xf]
      %v2074 = vld [vmem:[%s752 + $0x8] sm:$0xf]
      %v2075 = vld [vmem:[%s752 + $0xc] sm:$0xf]
      %v2076 = vld [vmem:[%s752 + $0x10] sm:$0xf]
      %v2077 = vld [vmem:[%s752 + $0x14] sm:$0xf]
      %v2078 = vld [vmem:[%s752 + $0x18] sm:$0xf]
      %v2079 = vld [vmem:[%s752 + $0x1c] sm:$0xf]
      %v2080 = vld [vmem:[%s752 + $0x20] sm:$0xf]
      %v2081 = vld [vmem:[%s752 + $0x24] sm:$0xf]
      %v2082 = vld [vmem:[%s752 + $0x28] sm:$0xf]
      %v2083 = vld [vmem:[%s752 + $0x2c] sm:$0xf]
      %v2084 = vld [vmem:[%s752 + $0x30] sm:$0xf]
      %v2085 = vld [vmem:[%s752 + $0x34] sm:$0xf]
      %v2086 = vld [vmem:[%s752 + $0x38] sm:$0xf]
      %v2087 = vld [vmem:[%s752 + $0x3c] sm:$0xf]
      %v2088 = vld [vmem:[%s752 + $0x40] sm:$0xf]
      %v2089 = vld [vmem:[%s752 + $0x44] sm:$0xf]
      %v2090 = vld [vmem:[%s752 + $0x48] sm:$0xf]
      %v2091 = vld [vmem:[%s752 + $0x4c] sm:$0xf]
      %v2092 = vld [vmem:[%s752 + $0x50] sm:$0xf]
      %v2093 = vld [vmem:[%s752 + $0x54] sm:$0xf]
      %v2094 = vld [vmem:[%s752 + $0x58] sm:$0xf]
      %v2095 = vld [vmem:[%s752 + $0x5c] sm:$0xf]
      %v2096 = vld [vmem:[%s752 + $0x60] sm:$0xf]
      %v2097 = vld [vmem:[%s752 + $0x64] sm:$0xf]
      %v2098 = vld [vmem:[%s752 + $0x68] sm:$0xf]
      %v2099 = vld [vmem:[%s752 + $0x6c] sm:$0xf]
      %v2100 = vld [vmem:[%s752 + $0x70] sm:$0xf]
      %v2101 = vld [vmem:[%s752 + $0x74] sm:$0xf]
      %v2102 = vld [vmem:[%s752 + $0x78] sm:$0xf]
      %v2103 = vld [vmem:[%s752 + $0x7c] sm:$0xf]
      %v2104 = vld [vmem:[%s752 + $0x80] sm:$0xf]
      %v2105 = vld [vmem:[%s752 + $0x84] sm:$0xf]
      %v2106 = vld [vmem:[%s752 + $0x88] sm:$0xf]
      %v2107 = vld [vmem:[%s752 + $0x8c] sm:$0xf]
      %v2108 = vld [vmem:[%s752 + $0x90] sm:$0xf]
      %v2109 = vld [vmem:[%s752 + $0x94] sm:$0xf]
      %v2110 = vld [vmem:[%s752 + $0x98] sm:$0xf]
      %v2111 = vld [vmem:[%s752 + $0x9c] sm:$0xf]
      %v2112 = vld [vmem:[%s752 + $0xa0] sm:$0xf]
      %v2113 = vld [vmem:[%s752 + $0xa4] sm:$0xf]
      %v2114 = vld [vmem:[%s752 + $0xa8] sm:$0xf]
      %v2115 = vld [vmem:[%s752 + $0xac] sm:$0xf]
      %v2116 = vld [vmem:[%s752 + $0xb0] sm:$0xf]
      %v2117 = vld [vmem:[%s752 + $0xb4] sm:$0xf]
      %v2118 = vld [vmem:[%s752 + $0xb8] sm:$0xf]
      %v2119 = vld [vmem:[%s752 + $0xbc] sm:$0xf]
      %v2120 = vld [vmem:[%s752 + $0xc0] sm:$0xf]
      %v2121 = vld [vmem:[%s752 + $0xc4] sm:$0xf]
      %v2122 = vld [vmem:[%s752 + $0xc8] sm:$0xf]
      %v2123 = vld [vmem:[%s752 + $0xcc] sm:$0xf]
      %v2124 = vld [vmem:[%s752 + $0xd0] sm:$0xf]
      %v2125 = vld [vmem:[%s752 + $0xd4] sm:$0xf]
      %v2126 = vld [vmem:[%s752 + $0xd8] sm:$0xf]
      %v2127 = vld [vmem:[%s752 + $0xdc] sm:$0xf]
      %v2128 = vld [vmem:[%s752 + $0xe0] sm:$0xf]
      %v2129 = vld [vmem:[%s752 + $0xe4] sm:$0xf]
      %v2130 = vld [vmem:[%s752 + $0xe8] sm:$0xf]
      %v2131 = vld [vmem:[%s752 + $0xec] sm:$0xf]
      %v2132 = vld [vmem:[%s752 + $0xf0] sm:$0xf]
      %v2133 = vld [vmem:[%s752 + $0xf4] sm:$0xf]
      %v2134 = vld [vmem:[%s752 + $0xf8] sm:$0xf]
      %v2135 = vld [vmem:[%s752 + $0xfc] sm:$0xf]
      %v2136 = vld [vmem:[%s755] sm:$0x1]
      %v2138 = vlaneseq
      %v2139 = vshrl.u32 %v2138, 7
      %v2140 = vsub.s32 0, %v2139
      %v2141 = vrot.slane %v2136, %v2140
      %v2207 = vunpack.c.l.b16 %v2072
      %v2208 = vunpack.c.l.b16 %v2073
      %v2209 = vunpack.c.l.b16 %v2074
      %v2210 = vunpack.c.l.b16 %v2075
      %v2211 = vunpack.c.l.b16 %v2076
      %v2212 = vunpack.c.l.b16 %v2077
      %v2213 = vunpack.c.l.b16 %v2078
      %v2214 = vunpack.c.l.b16 %v2079
      %v2215 = vunpack.c.l.b16 %v2080
      %v2216 = vunpack.c.l.b16 %v2081
      %v2217 = vunpack.c.l.b16 %v2082
      %v2218 = vunpack.c.l.b16 %v2083
      %v2219 = vunpack.c.l.b16 %v2084
      %v2220 = vunpack.c.l.b16 %v2085
      %v2221 = vunpack.c.l.b16 %v2086
      %v2222 = vunpack.c.l.b16 %v2087
      %v2223 = vunpack.c.l.b16 %v2088
      %v2224 = vunpack.c.l.b16 %v2089
      %v2225 = vunpack.c.l.b16 %v2090
      %v2226 = vunpack.c.l.b16 %v2091
      %v2227 = vunpack.c.l.b16 %v2092
      %v2228 = vunpack.c.l.b16 %v2093
      %v2229 = vunpack.c.l.b16 %v2094
      %v2230 = vunpack.c.l.b16 %v2095
      %v2231 = vunpack.c.l.b16 %v2096
      %v2232 = vunpack.c.l.b16 %v2097
      %v2233 = vunpack.c.l.b16 %v2098
      %v2234 = vunpack.c.l.b16 %v2099
      %v2235 = vunpack.c.l.b16 %v2100
      %v2236 = vunpack.c.l.b16 %v2101
      %v2237 = vunpack.c.l.b16 %v2102
      %v2238 = vunpack.c.l.b16 %v2103
      %v2239 = vunpack.c.l.b16 %v2104
      %v2240 = vunpack.c.l.b16 %v2105
      %v2241 = vunpack.c.l.b16 %v2106
      %v2242 = vunpack.c.l.b16 %v2107
      %v2243 = vunpack.c.l.b16 %v2108
      %v2244 = vunpack.c.l.b16 %v2109
      %v2245 = vunpack.c.l.b16 %v2110
      %v2246 = vunpack.c.l.b16 %v2111
      %v2247 = vunpack.c.l.b16 %v2112
      %v2248 = vunpack.c.l.b16 %v2113
      %v2249 = vunpack.c.l.b16 %v2114
      %v2250 = vunpack.c.l.b16 %v2115
      %v2251 = vunpack.c.l.b16 %v2116
      %v2252 = vunpack.c.l.b16 %v2117
      %v2253 = vunpack.c.l.b16 %v2118
      %v2254 = vunpack.c.l.b16 %v2119
      %v2255 = vunpack.c.l.b16 %v2120
      %v2256 = vunpack.c.l.b16 %v2121
      %v2257 = vunpack.c.l.b16 %v2122
      %v2258 = vunpack.c.l.b16 %v2123
      %v2259 = vunpack.c.l.b16 %v2124
      %v2260 = vunpack.c.l.b16 %v2125
      %v2261 = vunpack.c.l.b16 %v2126
      %v2262 = vunpack.c.l.b16 %v2127
      %v2263 = vunpack.c.l.b16 %v2128
      %v2264 = vunpack.c.l.b16 %v2129
      %v2265 = vunpack.c.l.b16 %v2130
      %v2266 = vunpack.c.l.b16 %v2131
      %v2267 = vunpack.c.l.b16 %v2132
      %v2268 = vunpack.c.l.b16 %v2133
      %v2269 = vunpack.c.l.b16 %v2134
      %v2270 = vunpack.c.l.b16 %v2135
      %v2271 = vpack.c.b16 %v2208, %v2207
      %v2272 = vpack.c.b16 %v2210, %v2209
      %v2273 = vpack.c.b16 %v2212, %v2211
      %v2274 = vpack.c.b16 %v2214, %v2213
      %v2275 = vpack.c.b16 %v2216, %v2215
      %v2276 = vpack.c.b16 %v2218, %v2217
      %v2277 = vpack.c.b16 %v2220, %v2219
      %v2278 = vpack.c.b16 %v2222, %v2221
      %v2279 = vpack.c.b16 %v2224, %v2223
      %v2280 = vpack.c.b16 %v2226, %v2225
      %v2281 = vpack.c.b16 %v2228, %v2227
      %v2282 = vpack.c.b16 %v2230, %v2229
      %v2283 = vpack.c.b16 %v2232, %v2231
      %v2284 = vpack.c.b16 %v2234, %v2233
      %v2285 = vpack.c.b16 %v2236, %v2235
      %v2286 = vpack.c.b16 %v2238, %v2237
      %v2287 = vpack.c.b16 %v2240, %v2239
      %v2288 = vpack.c.b16 %v2242, %v2241
      %v2289 = vpack.c.b16 %v2244, %v2243
      %v2290 = vpack.c.b16 %v2246, %v2245
      %v2291 = vpack.c.b16 %v2248, %v2247
      %v2292 = vpack.c.b16 %v2250, %v2249
      %v2293 = vpack.c.b16 %v2252, %v2251
      %v2294 = vpack.c.b16 %v2254, %v2253
      %v2295 = vpack.c.b16 %v2256, %v2255
      %v2296 = vpack.c.b16 %v2258, %v2257
      %v2297 = vpack.c.b16 %v2260, %v2259
      %v2298 = vpack.c.b16 %v2262, %v2261
      %v2299 = vpack.c.b16 %v2264, %v2263
      %v2300 = vpack.c.b16 %v2266, %v2265
      %v2301 = vpack.c.b16 %v2268, %v2267
      %v2302 = vpack.c.b16 %v2270, %v2269
      %2335 = vmatprep.subr.bf16.mxu0 0
      %2336 = vmatpush1.bf16.msra.mxu0 %v2278
      %2337 = vmatprep.subr.bf16.mxu0 0
      %2338 = vmatpush1.bf16.msra.mxu0 %v2277
      %2339 = vmatprep.subr.bf16.mxu0 0
      %2340 = vmatpush1.bf16.msra.mxu0 %v2276
      %2341 = vmatprep.subr.bf16.mxu0 0
      %2342 = vmatpush1.bf16.msra.mxu0 %v2275
      %2343 = vmatprep.subr.bf16.mxu0 0
      %2344 = vmatpush1.bf16.msra.mxu0 %v2274
      %2345 = vmatprep.subr.bf16.mxu0 0
      %2346 = vmatpush1.bf16.msra.mxu0 %v2273
      %2347 = vmatprep.subr.bf16.mxu0 0
      %2348 = vmatpush1.bf16.msra.mxu0 %v2272
      %2349 = vmatprep.subr.bf16.mxu0 0
      %2350 = vmatpush1.bf16.msra.mxu0 %v2271
      %2351 = vmatprep.subr.bf16.mxu0 0
      %2352 = vmatpush2.bf16.msra.mxu0 %v2286
      %2353 = vmatprep.subr.bf16.mxu0 0
      %2354 = vmatpush2.bf16.msra.mxu0 %v2285
      %2355 = vmatprep.subr.bf16.mxu0 0
      %2356 = vmatpush2.bf16.msra.mxu0 %v2284
      %2357 = vmatprep.subr.bf16.mxu0 0
      %2358 = vmatpush2.bf16.msra.mxu0 %v2283
      %2359 = vmatprep.subr.bf16.mxu0 0
      %2360 = vmatpush2.bf16.msra.mxu0 %v2282
      %2361 = vmatprep.subr.bf16.mxu0 0
      %2362 = vmatpush2.bf16.msra.mxu0 %v2281
      %2363 = vmatprep.subr.bf16.mxu0 0
      %2364 = vmatpush2.bf16.msra.mxu0 %v2280
      %2365 = vmatprep.subr.bf16.mxu0 0
      %2366 = vmatpush2.bf16.msra.mxu0 %v2279
      %2367 = vmatprep.mubr.bf16.mxu0 %v2069
      %2368 = vmatmul.mubr.bf16.gmra.mxu0 %v2068
      %v2369 = vpop.f32.mrf.mxu0
      %v2370 = vadd.f32 %v2141, %v2369
      %v2371 = vpop.f32.mrf.mxu0
      %v2372 = vpop.f32.mrf.mxu0
      %v2373 = vadd.f32 %v2141, %v2372
      %v2374 = vpop.f32.mrf.mxu0
      %2375 = vdwg.mxu0
      %2376 = vmatprep.subr.bf16.mxu0 0
      %2377 = vmatpush1.bf16.msra.mxu0 %v2294
      %2378 = vmatprep.subr.bf16.mxu0 0
      %2379 = vmatpush1.bf16.msra.mxu0 %v2293
      %2380 = vmatprep.subr.bf16.mxu0 0
      %2381 = vmatpush1.bf16.msra.mxu0 %v2292
      %2382 = vmatprep.subr.bf16.mxu0 0
      %2383 = vmatpush1.bf16.msra.mxu0 %v2291
      %2384 = vmatprep.subr.bf16.mxu0 0
      %2385 = vmatpush1.bf16.msra.mxu0 %v2290
      %2386 = vmatprep.subr.bf16.mxu0 0
      %2387 = vmatpush1.bf16.msra.mxu0 %v2289
      %2388 = vmatprep.subr.bf16.mxu0 0
      %2389 = vmatpush1.bf16.msra.mxu0 %v2288
      %2390 = vmatprep.subr.bf16.mxu0 0
      %2391 = vmatpush1.bf16.msra.mxu0 %v2287
      %2392 = vmatprep.subr.bf16.mxu0 0
      %2393 = vmatpush2.bf16.msra.mxu0 %v2302
      %2394 = vmatprep.subr.bf16.mxu0 0
      %2395 = vmatpush2.bf16.msra.mxu0 %v2301
      %2396 = vmatprep.subr.bf16.mxu0 0
      %2397 = vmatpush2.bf16.msra.mxu0 %v2300
      %2398 = vmatprep.subr.bf16.mxu0 0
      %2399 = vmatpush2.bf16.msra.mxu0 %v2299
      %2400 = vmatprep.subr.bf16.mxu0 0
      %2401 = vmatpush2.bf16.msra.mxu0 %v2298
      %2402 = vmatprep.subr.bf16.mxu0 0
      %2403 = vmatpush2.bf16.msra.mxu0 %v2297
      %2404 = vmatprep.subr.bf16.mxu0 0
      %2405 = vmatpush2.bf16.msra.mxu0 %v2296
      %2406 = vmatprep.subr.bf16.mxu0 0
      %2407 = vmatpush2.bf16.msra.mxu0 %v2295
      %2408 = vmatprep.mubr.bf16.mxu0 %v2071
      %2409 = vmatmul.mubr.bf16.gmra.mxu0 %v2070
      %v2410 = vpop.f32.mrf.mxu0
      %v2411 = vadd.f32 %v2370, %v2410
      %v2412 = vpop.f32.mrf.mxu0
      %v2413 = vpop.f32.mrf.mxu0
      %v2414 = vadd.f32 %v2373, %v2413
      %v2415 = vpop.f32.mrf.mxu0
      %2416 = vdwg.mxu0
      %v2417 = vadd.f32 %v1661, %v2411
      %v2418 = vadd.f32 %v1662, %v2414
      %2419 = vst [vmem:[#allocation2] sm:$0xff] %v2417
      %2420 = vst [vmem:[#allocation2 + $0x8] sm:$0xff] %v2418
      %p2421 = scmp.eq.s32.totalorder %s33, 1
      // Predicated region
      $region93: #{_lambda_.8} parent=87 // pred_check
        %p2422 = pneg %p2421
      $region94: #{_lambda_.8} parent=87 // pred_check_branch
        %2424 = sbr.rel (%p2422) target = $region96
      $region95: #{_lambda_.8} parent=87 // pred_region
        %2425 = vst [vmem:[%s760] sm:$0xff] %v2417
        %2426 = vst [vmem:[%s760 + $0x8] sm:$0xff] %v2418
      $region96: #{_lambda_.8} parent=87 // pred_fallthru
        _
      %s2427 = smul.u32 2, %s32
      %p2428 = scmp.lt.s32.totalorder %s2427, 3
      %s2429 = scalar_select %p2428, %s2427, 3
      %s2430 = smul.addr %s2429, 8
      %s2431 = scalar_lea.vmem %s17, %s2430
      // Predicated region
      $region97: #{_lambda_.8} parent=87 // pred_check
        %p2432 = pneg %p480
      $region98: #{_lambda_.8} parent=87 // pred_check_branch
        %2434 = sbr.rel (%p2432) target = $region100
      $region99: #{_lambda_.8} parent=87 // pred_region
        %s2435 = smul.u32 2, %s32
      $region100: #{_lambda_.8} parent=87 // pred_fallthru
        _
    $region88: #{_lambda_.8} parent=5 // pred_fallthru
      _
    %p2436 = scmp.le.s32.totalorder 2, %s23
    // Predicated region
    $region101: #{_lambda_.8} parent=5 // pred_check
      %p2437 = pneg %p2436
    $region102: #{_lambda_.8} parent=5 // pred_check_branch
      %2439 = sbr.rel (%p2437) target = $region104
    $region103: #{_lambda_.8} parent=5 // pred_region
      %s2440 = ssub.s32 %s23, 2
      // Predicated region
      $region105: #{_lambda_.8} parent=103 // pred_check
        %p2441 = pneg %p486
      $region106: #{_lambda_.8} parent=103 // pred_check_branch
        %2443 = sbr.rel (%p2441) target = $region108
      $region107: #{_lambda_.8} parent=103 // pred_region
        %s2444 = smul.u32 2, %s34
        %p2445 = scmp.lt.s32.totalorder %s2444, 3
        %s2446 = scalar_select %p2445, %s2444, 3
        %s2447 = smul.addr %s2446, 8
        %s2448 = scalar_lea.vmem %s17, %s2447
      $region108: #{_lambda_.8} parent=103 // pred_fallthru
        _
    $region104: #{_lambda_.8} parent=5 // pred_fallthru
      _
  $region6: #{_lambda_.8} parent=0 // loop_footer
    %s27 = sadd.s32 1, %s23
  $region7: #{_lambda_.8} parent=0 // loop_footer_branch
    %22 = sbr.rel target = $region3
  $region8: #{_lambda_.8} parent=0 // loop_exit
    _

</llo_original>
